<compile_context>
chip_gen: v5e
topology: v5e:2x2
jax: 0.10.0
libtpu: 0.0.40
codegen_flags: <defaults>
</compile_context>

<pallas_src>
import functools
import math

import jax
import jax.numpy as jnp
from jax.experimental import pallas as pl
from jax.experimental.pallas import tpu as pltpu

_PARALLEL = pltpu.CompilerParams(dimension_semantics=("parallel",))


# ------------------------------ in-kernel helpers ------------------------------

def _layernorm(y, g, b, eps=1e-5):
    mu = jnp.mean(y, axis=-1, keepdims=True)
    yc = y - mu
    var = jnp.mean(yc * yc, axis=-1, keepdims=True)
    return yc * jax.lax.rsqrt(var + eps) * g + b


def _conv3_circular(x, w_flat):
    """k=3 circular conv as ONE matmul.
    x: (L, Cin) f32; w_flat: (3*Cin, Cout) bf16 laid out [prev | center | next]."""
    L = x.shape[0]
    xp = pltpu.roll(x, 1, 0)        # x[(l-1) % L]  (XLU sublane rotate, no permutation matmul)
    xn = pltpu.roll(x, L - 1, 0)    # x[(l+1) % L]
    xcat = jnp.concatenate([xp, x, xn], axis=-1).astype(jnp.bfloat16)
    return jnp.dot(xcat, w_flat, preferred_element_type=jnp.float32)


def _mha(q_all, k_all, v_all, wo, bo, *, n_heads, d_k, d_v, scale, neg=None):
    """Softmax attention for all heads; single fused output-projection matmul."""
    heads = []
    for h in range(n_heads):                                    # static unroll (H small)
        q = q_all[:, h * d_k:(h + 1) * d_k].astype(jnp.bfloat16)
        k = k_all[:, h * d_k:(h + 1) * d_k].astype(jnp.bfloat16)
        v = v_all[:, h * d_v:(h + 1) * d_v].astype(jnp.bfloat16)
        s = jax.lax.dot_general(q, k, (((1,), (1,)), ((), ())),
                                preferred_element_type=jnp.float32) * scale
        if neg is not None:
            s = s + neg
        m = jnp.max(s, axis=-1, keepdims=True)
        p = jnp.exp(s - m)
        p = p / jnp.sum(p, axis=-1, keepdims=True)              # exact normalization
        heads.append(jnp.dot(p.astype(jnp.bfloat16), v,
                             preferred_element_type=jnp.float32))
    # (Lq, H*dv) buffer -> one (Lq,H*dv)@(H*dv,D) projection (contraction dim H*dv, not dv)
    o_cat = jnp.concatenate(heads, axis=-1).astype(jnp.bfloat16)
    return jnp.dot(o_cat, wo, preferred_element_type=jnp.float32) + bo


def _self_attn_ln(x, w_qkv, b_qkv, wo, bo, g, b, *, n_heads, d_k, d_v, scale, neg=None):
    nq = n_heads * d_k
    qkv = jnp.dot(x.astype(jnp.bfloat16), w_qkv,
                  preferred_element_type=jnp.float32) + b_qkv    # fused QKV matmul
    att = _mha(qkv[:, :nq], qkv[:, nq:2 * nq], qkv[:, 2 * nq:], wo, bo,
               n_heads=n_heads, d_k=d_k, d_v=d_v, scale=scale, neg=neg)
    return _layernorm(x + att, g, b)


def _cross_attn_ln(xq, xkv, w_q, b_q, w_kv, b_kv, wo, bo, g, b, *,
                   n_heads, d_k, d_v, scale):
    nq = n_heads * d_k
    q_all = jnp.dot(xq.astype(jnp.bfloat16), w_q,
                    preferred_element_type=jnp.float32) + b_q
    kv = jnp.dot(xkv.astype(jnp.bfloat16), w_kv,
                 preferred_element_type=jnp.float32) + b_kv      # fused KV matmul
    att = _mha(q_all, kv[:, :nq], kv[:, nq:], wo, bo,
               n_heads=n_heads, d_k=d_k, d_v=d_v, scale=scale)
    return _layernorm(xq + att, g, b)


def _ffn_ln(x, w1, b1, w2, b2, g, b):
    h = jnp.maximum(jnp.dot(x.astype(jnp.bfloat16), w1,
                            preferred_element_type=jnp.float32) + b1, 0.0)
    z = jnp.dot(h.astype(jnp.bfloat16), w2, preferred_element_type=jnp.float32) + b2
    return _layernorm(x + z, g, b)


# ------------------------------ Pallas kernels ---------------------------------

def _embed_kernel(x_ref, mark_ref, w_ref, bias_ref, o_ref):
    """Token conv (k=3 circular) + time-feature linear + positional enc, one matmul."""
    x = x_ref[0]
    L = x.shape[0]
    xp = pltpu.roll(x, 1, 0)
    xn = pltpu.roll(x, L - 1, 0)
    feat = jnp.concatenate([xp, x, xn, mark_ref[0]], axis=-1).astype(jnp.bfloat16)
    o_ref[0] = jnp.dot(feat, w_ref[...],
                       preferred_element_type=jnp.float32) + bias_ref[...]


def _enc_layer_core(x, refs, *, n_heads, d_k, d_v, scale):
    (wqkv, bqkv, wo, bo, g1, b1, w1, c1, w2, c2, g2, b2) = refs
    x = _self_attn_ln(x, wqkv[...], bqkv[...], wo[...], bo[...], g1[...], b1[...],
                      n_heads=n_heads, d_k=d_k, d_v=d_v, scale=scale)
    return _ffn_ln(x, w1[...], c1[...], w2[...], c2[...], g2[...], b2[...])


def _enc_layer_distill_kernel(x_ref, *refs, n_heads, d_k, d_v, scale):
    """attn + LN + FFN + LN + (circular conv, folded BN, ELU, MaxPool k=3 s=2 p=1)."""
    *core_refs, cw_ref, csc_ref, csh_ref, o_ref, pool_ref = refs
    x = _enc_layer_core(x_ref[0], core_refs,
                        n_heads=n_heads, d_k=d_k, d_v=d_v, scale=scale)
    y = _conv3_circular(x, cw_ref[...]) * csc_ref[...] + csh_ref[...]
    y = jnp.where(y > 0, y, jnp.exp(jnp.minimum(y, 0.0)) - 1.0)          # ELU
    pool_ref[...] = y                                                    # stage in VMEM
    L = y.shape[0]
    half = L // 2
    center = pool_ref[pl.ds(0, half, stride=2), :]                       # y[2j]
    right = pool_ref[pl.ds(1, half, stride=2), :]                        # y[2j+1]
    left = pltpu.roll(right, 1, 0)                                       # y[2j-1]
    row = jax.lax.broadcasted_iota(jnp.int32, left.shape, 0)
    left = jnp.where(row == 0, -1e30, left)                              # finite pad sentinel
    o_ref[0] = jnp.maximum(jnp.maximum(center, right), left)


def _enc_layer_final_kernel(x_ref, *refs, n_heads, d_k, d_v, scale):
    """attn + LN + FFN + LN + final encoder LayerNorm (fused epilogue)."""
    *core_refs, gn_ref, bn_ref, o_ref = refs
    x = _enc_layer_core(x_ref[0], core_refs,
                        n_heads=n_heads, d_k=d_k, d_v=d_v, scale=scale)
    o_ref[0] = _layernorm(x, gn_ref[...], bn_ref[...])


def _dec_layer_body(y, enc, neg, refs, *, n_heads, d_k, d_v, scale):
    (swqkv, sbqkv, swo, sbo, g1, b1,
     cwq, cbq, cwkv, cbkv, cwo, cbo, g2, b2,
     w1, c1, w2, c2, g3, b3) = refs
    y = _self_attn_ln(y, swqkv[...], sbqkv[...], swo[...], sbo[...], g1[...], b1[...],
                      n_heads=n_heads, d_k=d_k, d_v=d_v, scale=scale, neg=neg)
    y = _cross_attn_ln(y, enc, cwq[...], cbq[...], cwkv[...], cbkv[...],
                       cwo[...], cbo[...], g2[...], b2[...],
                       n_heads=n_heads, d_k=d_k, d_v=d_v, scale=scale)
    return _ffn_ln(y, w1[...], c1[...], w2[...], c2[...], g3[...], b3[...])


def _dec_layer_kernel(y_ref, enc_ref, neg_ref, *refs, n_heads, d_k, d_v, scale):
    *w_refs, o_ref = refs
    o_ref[0] = _dec_layer_body(y_ref[0], enc_ref[0], neg_ref[...], w_refs,
                               n_heads=n_heads, d_k=d_k, d_v=d_v, scale=scale)


def _dec_layer_proj_kernel(y_ref, enc_ref, neg_ref, *refs, n_heads, d_k, d_v, scale):
    """masked self-attn + cross-attn + FFN + final decoder LayerNorm + projection."""
    *w_refs, gn_ref, bn_ref, pw_ref, pb_ref, o_ref = refs
    y = _dec_layer_body(y_ref[0], enc_ref[0], neg_ref[...], w_refs,
                        n_heads=n_heads, d_k=d_k, d_v=d_v, scale=scale)
    y = _layernorm(y, gn_ref[...], bn_ref[...])
    o_ref[0] = jnp.dot(y.astype(jnp.bfloat16), pw_ref[...],
                       preferred_element_type=jnp.float32) + pb_ref[...]


# ------------------------------ wrappers ----------------------------------------

def _rep(a):
    """BlockSpec for an operand replicated across the batch grid."""
    return pl.BlockSpec(a.shape, lambda i, n=a.ndim: (0,) * n)


def _call_layer(kernel, out_shape, batched, weights, scratch_shapes=()):
    """Batch on a 'parallel' grid axis; batched inputs get (1, ...) blocks,
    weights are replicated (fetched once thanks to constant block indices)."""
    B = batched[0][0].shape[0]
    in_specs, args = [], []
    for arr, blk in batched:
        in_specs.append(pl.BlockSpec(blk, lambda i, n=len(blk) - 1: (i,) + (0,) * n))
        args.append(arr)
    for w in weights:
        in_specs.append(_rep(w))
        args.append(w)
    oblk = (1,) + out_shape.shape[1:]
    return pl.pallas_call(
        kernel,
        out_shape=out_shape,
        grid=(B,),
        in_specs=in_specs,
        out_specs=pl.BlockSpec(oblk, lambda i, n=len(oblk) - 1: (i,) + (0,) * n),
        scratch_shapes=list(scratch_shapes),
        compiler_params=_PARALLEL,
    )(*args)


def _attn_kw(cfg):
    return dict(n_heads=cfg["n_heads"], d_k=cfg["d_k"], d_v=cfg["d_v"],
                scale=1.0 / math.sqrt(cfg["d_k"]))


def embed(x, mark, w_emb, bias):
    B, L, Cf = x.shape
    Cm = mark.shape[2]
    D = w_emb.shape[1]
    return _call_layer(_embed_kernel,
                       jax.ShapeDtypeStruct((B, L, D), jnp.float32),
                       [(x, (1, L, Cf)), (mark, (1, L, Cm))],
                       [w_emb, bias])


def enc_layer_distill(x, weights, cfg):
    B, L, D = x.shape
    assert L % 2 == 0, "distill maxpool (k=3, s=2, p=1) requires an even sequence length"
    kern = functools.partial(_enc_layer_distill_kernel, **_attn_kw(cfg))
    return _call_layer(kern, jax.ShapeDtypeStruct((B, L // 2, D), jnp.float32),
                       [(x, (1, L, D))], weights,
                       scratch_shapes=[pltpu.VMEM((L, D), jnp.float32)])


def enc_layer_final(x, weights, cfg):
    B, L, D = x.shape
    kern = functools.partial(_enc_layer_final_kernel, **_attn_kw(cfg))
    return _call_layer(kern, jax.ShapeDtypeStruct((B, L, D), jnp.float32),
                       [(x, (1, L, D))], weights)


def dec_layer(y, enc, neg, weights, cfg, proj_dim=None):
    B, Ld, D = y.shape
    Le = enc.shape[1]
    if proj_dim is None:
        kern = functools.partial(_dec_layer_kernel, **_attn_kw(cfg))
        out = jax.ShapeDtypeStruct((B, Ld, D), jnp.float32)
    else:
        kern = functools.partial(_dec_layer_proj_kernel, **_attn_kw(cfg))
        out = jax.ShapeDtypeStruct((B, Ld, proj_dim), jnp.float32)
    return _call_layer(kern, out,
                       [(y, (1, Ld, D)), (enc, (1, Le, D))],
                       [neg] + list(weights))


# ------------------------------ model forward -----------------------------------

def positional_encoding(L, d_model):
    pos = jnp.arange(L, dtype=jnp.float32)[:, None]
    i = jnp.arange(0, d_model, 2, dtype=jnp.float32)
    div = jnp.exp(i * (-math.log(10000.0) / d_model))
    pe = jnp.zeros((L, d_model), jnp.float32)
    pe = pe.at[:, 0::2].set(jnp.sin(pos * div))
    pe = pe.at[:, 1::2].set(jnp.cos(pos * div))
    return pe


def causal_neg_mask(L):
    r = jnp.arange(L, dtype=jnp.int32)[:, None]
    c = jnp.arange(L, dtype=jnp.int32)[None, :]
    return jnp.where(c > r, -1e9, 0.0).astype(jnp.float32)


def informer_forward(p, enc_x, enc_mark, dec_in, dec_mark, cfg):
    D = cfg["d_model"]
    Le = enc_x.shape[1]
    Ld = dec_in.shape[1]

    # -------- encoder --------
    x = embed(enc_x, enc_mark, p["enc_emb_w"],
              positional_encoding(Le, D) + p["enc_emb_mark_b"])
    for li in range(cfg["e_layer"]):
        a = f"enc{li}_"
        common = (p[a + "attn_w_qkv"], p[a + "attn_b_qkv"], p[a + "attn_wo"], p[a + "attn_bo"],
                  p[a + "ln1_g"], p[a + "ln1_b"],
                  p[a + "ff1_w"], p[a + "ff1_b"], p[a + "ff2_w"], p[a + "ff2_b"],
                  p[a + "ln2_g"], p[a + "ln2_b"])
        if li < cfg["e_layer"] - 1:
            c = f"enc_conv{li}_"
            bn_scale = p[c + "bn_g"] * jax.lax.rsqrt(p[c + "bn_var"] + 1e-5)
            bn_shift = p[c + "bn_b"] - bn_scale * p[c + "bn_mean"] + bn_scale * p[c + "conv_b"]
            x = enc_layer_distill(x, common + (p[c + "conv_w"], bn_scale, bn_shift), cfg)
        else:
            x = enc_layer_final(x, common + (p["enc_norm_g"], p["enc_norm_b"]), cfg)
    enc_out = x

    # -------- decoder --------
    y = embed(dec_in, dec_mark, p["dec_emb_w"],
              positional_encoding(Ld, D) + p["dec_emb_mark_b"])
    neg = causal_neg_mask(Ld)
    for li in range(cfg["d_layer"]):
        a = f"dec{li}_"
        w = (p[a + "self_w_qkv"], p[a + "self_b_qkv"], p[a + "self_wo"], p[a + "self_bo"],
             p[a + "ln1_g"], p[a + "ln1_b"],
             p[a + "cross_w_q"], p[a + "cross_b_q"], p[a + "cross_w_kv"], p[a + "cross_b_kv"],
             p[a + "cross_wo"], p[a + "cross_bo"], p[a + "ln2_g"], p[a + "ln2_b"],
             p[a + "ff1_w"], p[a + "ff1_b"], p[a + "ff2_w"], p[a + "ff2_b"],
             p[a + "ln3_g"], p[a + "ln3_b"])
        if li == cfg["d_layer"] - 1:
            w = w + (p["dec_norm_g"], p["dec_norm_b"], p["proj_w"], p["proj_b"])
            y = dec_layer(y, enc_out, neg, w, cfg, proj_dim=cfg["d_feature"])
        else:
            y = dec_layer(y, enc_out, neg, w, cfg)
    return y


# ------------------------------ deterministic init -------------------------------

def init_params(key, cfg):
    Cf, Cm = cfg["d_feature"], cfg["d_mark"]
    D, F = cfg["d_model"], cfg["d_ff"]
    H, dk, dv = cfg["n_heads"], cfg["d_k"], cfg["d_v"]
    p = {}
    cnt = [0]

    def rnd(*shape):                       # matmul weights stored bf16 (MXU-native)
        cnt[0] += 1
        w = 0.02 * jax.random.normal(jax.random.fold_in(key, cnt[0]), shape, jnp.float32)
        return w.astype(jnp.bfloat16)

    def zeros(*shape):
        return jnp.zeros(shape, jnp.float32)

    def ones(*shape):
        return jnp.ones(shape, jnp.float32)

    for pref in ("enc_emb_", "dec_emb_"):
        p[pref + "w"] = rnd(3 * Cf + Cm, D)      # [prev tap | center | next | mark linear]
        p[pref + "mark_b"] = zeros(1, D)

    def add_self_attn(pref):
        p[pref + "w_qkv"] = rnd(D, H * (2 * dk + dv))   # [Wq | Wk | Wv] fused
        p[pref + "b_qkv"] = zeros(1, H * (2 * dk + dv))
        p[pref + "wo"] = rnd(H * dv, D)
        p[pref + "bo"] = zeros(1, D)

    for li in range(cfg["e_layer"]):
        a = f"enc{li}_"
        add_self_attn(a + "attn_")
        p[a + "ln1_g"] = ones(1, D); p[a + "ln1_b"] = zeros(1, D)
        p[a + "ff1_w"] = rnd(D, F); p[a + "ff1_b"] = zeros(1, F)
        p[a + "ff2_w"] = rnd(F, D); p[a + "ff2_b"] = zeros(1, D)
        p[a + "ln2_g"] = ones(1, D); p[a + "ln2_b"] = zeros(1, D)
    for li in range(cfg["e_layer"] - 1):
        c = f"enc_conv{li}_"
        p[c + "conv_w"] = rnd(3 * D, D)
        p[c + "conv_b"] = zeros(1, D)
        p[c + "bn_g"] = ones(1, D); p[c + "bn_b"] = zeros(1, D)
        p[c + "bn_mean"] = zeros(1, D); p[c + "bn_var"] = ones(1, D)
    p["enc_norm_g"] = ones(1, D); p["enc_norm_b"] = zeros(1, D)

    for li in range(cfg["d_layer"]):
        a = f"dec{li}_"
        add_self_attn(a + "self_")
        p[a + "ln1_g"] = ones(1, D); p[a + "ln1_b"] = zeros(1, D)
        p[a + "cross_w_q"] = rnd(D, H * dk)
        p[a + "cross_b_q"] = zeros(1, H * dk)
        p[a + "cross_w_kv"] = rnd(D, H * (dk + dv))      # [Wk | Wv] fused
        p[a + "cross_b_kv"] = zeros(1, H * (dk + dv))
        p[a + "cross_wo"] = rnd(H * dv, D)
        p[a + "cross_bo"] = zeros(1, D)
        p[a + "ln2_g"] = ones(1, D); p[a + "ln2_b"] = zeros(1, D)
        p[a + "ff1_w"] = rnd(D, F); p[a + "ff1_b"] = zeros(1, F)
        p[a + "ff2_w"] = rnd(F, D); p[a + "ff2_b"] = zeros(1, D)
        p[a + "ln3_g"] = ones(1, D); p[a + "ln3_b"] = zeros(1, D)
    p["dec_norm_g"] = ones(1, D); p["dec_norm_b"] = zeros(1, D)

    p["proj_w"] = rnd(D, Cf)
    p["proj_b"] = zeros(1, Cf)
    return p


# ------------------------------ main ----------------------------------------------

if __name__ == "__main__":
    cfg = dict(d_feature=4, d_mark=4, d_model=32, d_ff=32, n_heads=4,
               d_k=8, d_v=8, e_layer=2, d_layer=1, e_stack=1, c=5)
    key = jax.random.PRNGKey(0)
    params = init_params(key, cfg)

    B, L_enc, L_dec = 2, 16, 8
    ks = jax.random.split(jax.random.fold_in(key, 12345), 4)
    enc_x = jax.random.normal(ks[0], (B, L_enc, cfg["d_feature"]), jnp.float32)
    enc_mark = jax.random.normal(ks[1], (B, L_enc, cfg["d_mark"]), jnp.float32)
    dec_in = jax.random.normal(ks[2], (B, L_dec, cfg["d_feature"]), jnp.float32)
    dec_mark = jax.random.normal(ks[3], (B, L_dec, cfg["d_mark"]), jnp.float32)

    fwd = jax.jit(lambda a, b, c, d: informer_forward(params, a, b, c, d, cfg))
    out = jax.block_until_ready(fwd(enc_x, enc_mark, dec_in, dec_mark))

    assert out.shape == (B, L_dec, cfg["d_feature"]), out.shape
    assert bool(jnp.all(jnp.isfinite(out)))
    print("KERNEL_OK")
</pallas_src>

<mosaic_0001>
module attributes {stable_mosaic.version = 11 : i64} {
  func.func @_embed_kernel(%arg0: i32, %arg1: memref<1x16x4xf32, #tpu.memory_space<vmem>>, %arg2: memref<1x16x4xf32, #tpu.memory_space<vmem>>, %arg3: memref<16x32xbf16, #tpu.memory_space<vmem>>, %arg4: memref<16x32xf32, #tpu.memory_space<vmem>>, %arg5: memref<1x16x32xf32, #tpu.memory_space<vmem>>) attributes {dimension_semantics = [#tpu.dimension_semantics<parallel>], iteration_bounds = array<i64: 2>, scalar_prefetch = 0 : i64, scratch_operands = 0 : i64, tpu.core_type = #tpu.core_type<tc>, window_params = [{transform_indices = @transform_0, window_bounds = array<i64: 1, 16, 4>}, {transform_indices = @transform_1, window_bounds = array<i64: 1, 16, 4>}, {pipeline_mode = #tpu.pipeline_mode<synchronous>, transform_indices = @transform_2, window_bounds = array<i64: 16, 32>}, {pipeline_mode = #tpu.pipeline_mode<synchronous>, transform_indices = @transform_3, window_bounds = array<i64: 16, 32>}, {transform_indices = @transform_4, window_bounds = array<i64: 1, 16, 32>}]} {
    %c0 = arith.constant 0 : index
    %c0_0 = arith.constant 0 : index
    %c0_1 = arith.constant 0 : index
    %0 = vector.load %arg1[%c0, %c0_0, %c0_1] : memref<1x16x4xf32, #tpu.memory_space<vmem>>, vector<1x16x4xf32>
    %1 = vector.shape_cast %0 : vector<1x16x4xf32> to vector<16x4xf32>
    %c1_i32 = arith.constant 1 : i32
    %2 = tpu.dynamic_rotate %1 by %c1_i32 dim 0 : vector<16x4xf32>, i32 -> vector<16x4xf32>
    %c15_i32 = arith.constant 15 : i32
    %3 = tpu.dynamic_rotate %1 by %c15_i32 dim 0 : vector<16x4xf32>, i32 -> vector<16x4xf32>
    %c0_2 = arith.constant 0 : index
    %c0_3 = arith.constant 0 : index
    %c0_4 = arith.constant 0 : index
    %4 = vector.load %arg2[%c0_2, %c0_3, %c0_4] : memref<1x16x4xf32, #tpu.memory_space<vmem>>, vector<1x16x4xf32>
    %5 = vector.shape_cast %4 : vector<1x16x4xf32> to vector<16x4xf32>
    %6 = tpu.concatenate %2, %1, %3, %5 in 1 : vector<16x4xf32>, vector<16x4xf32>, vector<16x4xf32>, vector<16x4xf32> -> vector<16x16xf32>
    %7 = arith.truncf %6 : vector<16x16xf32> to vector<16x16xbf16>
    %c0_5 = arith.constant 0 : index
    %c0_6 = arith.constant 0 : index
    %8 = vector.load %arg3[%c0_5, %c0_6] : memref<16x32xbf16, #tpu.memory_space<vmem>>, vector<16x32xbf16>
    %cst = arith.constant dense<0.000000e+00> : vector<16x32xf32>
    %9 = tpu.matmul %7, %8, %cst {dimension_numbers = #tpu.dot_dimension_numbers<[1], [0], [0], [1], [0, 0, 1, 1], [], []>} : vector<16x16xbf16>, vector<16x32xbf16>, vector<16x32xf32> -> vector<16x32xf32>
    %c0_7 = arith.constant 0 : index
    %c0_8 = arith.constant 0 : index
    %10 = vector.load %arg4[%c0_7, %c0_8] : memref<16x32xf32, #tpu.memory_space<vmem>>, vector<16x32xf32>
    %11 = arith.addf %9, %10 : vector<16x32xf32>
    %c0_9 = arith.constant 0 : index
    %c0_10 = arith.constant 0 : index
    %c0_11 = arith.constant 0 : index
    %12 = vector.load %arg5[%c0_9, %c0_10, %c0_11] : memref<1x16x32xf32, #tpu.memory_space<vmem>>, vector<1x16x32xf32>
    %13 = vector.shape_cast %12 : vector<1x16x32xf32> to vector<16x32xf32>
    %14 = vector.shape_cast %11 : vector<16x32xf32> to vector<1x16x32xf32>
    tpu.vector_store %arg5[%c0_9, %c0_10, %c0_11], %14 {strides = array<i32>} : memref<1x16x32xf32, #tpu.memory_space<vmem>>, vector<1x16x32xf32>,
    return
  }
  func.func @transform_0(%arg0: i32) -> (i32, i32, i32) {
    %c0_i32 = arith.constant 0 : i32
    %c0_i32_0 = arith.constant 0 : i32
    %c0_i32_1 = arith.constant 0 : i32
    return %arg0, %c0_i32, %c0_i32_0 : i32, i32, i32
  }
  func.func @transform_1(%arg0: i32) -> (i32, i32, i32) {
    %c0_i32 = arith.constant 0 : i32
    %c0_i32_0 = arith.constant 0 : i32
    %c0_i32_1 = arith.constant 0 : i32
    return %arg0, %c0_i32, %c0_i32_0 : i32, i32, i32
  }
  func.func @transform_2(%arg0: i32) -> (i32, i32) {
    %c0_i32 = arith.constant 0 : i32
    %c0_i32_0 = arith.constant 0 : i32
    %c0_i32_1 = arith.constant 0 : i32
    return %c0_i32, %c0_i32_0 : i32, i32
  }
  func.func @transform_3(%arg0: i32) -> (i32, i32) {
    %c0_i32 = arith.constant 0 : i32
    %c0_i32_0 = arith.constant 0 : i32
    %c0_i32_1 = arith.constant 0 : i32
    return %c0_i32, %c0_i32_0 : i32, i32
  }
  func.func @transform_4(%arg0: i32) -> (i32, i32, i32) {
    %c0_i32 = arith.constant 0 : i32
    %c0_i32_0 = arith.constant 0 : i32
    %c0_i32_1 = arith.constant 0 : i32
    return %arg0, %c0_i32, %c0_i32_0 : i32, i32, i32
  }
}

module attributes {stable_mosaic.version = 11 : i64} {
  func.func @_enc_layer_distill_kernel(%arg0: i32, %arg1: memref<1x16x32xf32, #tpu.memory_space<vmem>>, %arg2: memref<32x96xbf16, #tpu.memory_space<vmem>>, %arg3: memref<1x96xf32, #tpu.memory_space<vmem>>, %arg4: memref<32x32xbf16, #tpu.memory_space<vmem>>, %arg5: memref<1x32xf32, #tpu.memory_space<vmem>>, %arg6: memref<1x32xf32, #tpu.memory_space<vmem>>, %arg7: memref<1x32xf32, #tpu.memory_space<vmem>>, %arg8: memref<32x32xbf16, #tpu.memory_space<vmem>>, %arg9: memref<1x32xf32, #tpu.memory_space<vmem>>, %arg10: memref<32x32xbf16, #tpu.memory_space<vmem>>, %arg11: memref<1x32xf32, #tpu.memory_space<vmem>>, %arg12: memref<1x32xf32, #tpu.memory_space<vmem>>, %arg13: memref<1x32xf32, #tpu.memory_space<vmem>>, %arg14: memref<96x32xbf16, #tpu.memory_space<vmem>>, %arg15: memref<1x32xf32, #tpu.memory_space<vmem>>, %arg16: memref<1x32xf32, #tpu.memory_space<vmem>>, %arg17: memref<1x8x32xf32, #tpu.memory_space<vmem>>, %arg18: memref<16x32xf32, #tpu.memory_space<vmem>>) attributes {dimension_semantics = [#tpu.dimension_semantics<parallel>], iteration_bounds = array<i64: 2>, scalar_prefetch = 0 : i64, scratch_operands = 1 : i64, tpu.core_type = #tpu.core_type<tc>, window_params = [{transform_indices = @transform_0, window_bounds = array<i64: 1, 16, 32>}, {pipeline_mode = #tpu.pipeline_mode<synchronous>, transform_indices = @transform_1, window_bounds = array<i64: 32, 96>}, {pipeline_mode = #tpu.pipeline_mode<synchronous>, transform_indices = @transform_2, window_bounds = array<i64: 1, 96>}, {pipeline_mode = #tpu.pipeline_mode<synchronous>, transform_indices = @transform_3, window_bounds = array<i64: 32, 32>}, {pipeline_mode = #tpu.pipeline_mode<synchronous>, transform_indices = @transform_4, window_bounds = array<i64: 1, 32>}, {pipeline_mode = #tpu.pipeline_mode<synchronous>, transform_indices = @transform_5, window_bounds = array<i64: 1, 32>}, {pipeline_mode = #tpu.pipeline_mode<synchronous>, transform_indices = @transform_6, window_bounds = array<i64: 1, 32>}, {pipeline_mode = #tpu.pipeline_mode<synchronous>, transform_indices = @transform_7, window_bounds = array<i64: 32, 32>}, {pipeline_mode = #tpu.pipeline_mode<synchronous>, transform_indices = @transform_8, window_bounds = array<i64: 1, 32>}, {pipeline_mode = #tpu.pipeline_mode<synchronous>, transform_indices = @transform_9, window_bounds = array<i64: 32, 32>}, {pipeline_mode = #tpu.pipeline_mode<synchronous>, transform_indices = @transform_10, window_bounds = array<i64: 1, 32>}, {pipeline_mode = #tpu.pipeline_mode<synchronous>, transform_indices = @transform_11, window_bounds = array<i64: 1, 32>}, {pipeline_mode = #tpu.pipeline_mode<synchronous>, transform_indices = @transform_12, window_bounds = array<i64: 1, 32>}, {pipeline_mode = #tpu.pipeline_mode<synchronous>, transform_indices = @transform_13, window_bounds = array<i64: 96, 32>}, {pipeline_mode = #tpu.pipeline_mode<synchronous>, transform_indices = @transform_14, window_bounds = array<i64: 1, 32>}, {pipeline_mode = #tpu.pipeline_mode<synchronous>, transform_indices = @transform_15, window_bounds = array<i64: 1, 32>}, {transform_indices = @transform_16, window_bounds = array<i64: 1, 8, 32>}]} {
    %c0 = arith.constant 0 : index
    %c0_0 = arith.constant 0 : index
    %c0_1 = arith.constant 0 : index
    %0 = vector.load %arg1[%c0, %c0_0, %c0_1] : memref<1x16x32xf32, #tpu.memory_space<vmem>>, vector<1x16x32xf32>
    %1 = vector.shape_cast %0 : vector<1x16x32xf32> to vector<16x32xf32>
    %c0_2 = arith.constant 0 : index
    %c0_3 = arith.constant 0 : index
    %2 = vector.load %arg2[%c0_2, %c0_3] : memref<32x96xbf16, #tpu.memory_space<vmem>>, vector<32x96xbf16>
    %c0_4 = arith.constant 0 : index
    %c0_5 = arith.constant 0 : index
    %3 = vector.load %arg3[%c0_4, %c0_5] : memref<1x96xf32, #tpu.memory_space<vmem>>, vector<1x96xf32>
    %c0_6 = arith.constant 0 : index
    %c0_7 = arith.constant 0 : index
    %4 = vector.load %arg4[%c0_6, %c0_7] : memref<32x32xbf16, #tpu.memory_space<vmem>>, vector<32x32xbf16>
    %c0_8 = arith.constant 0 : index
    %c0_9 = arith.constant 0 : index
    %5 = vector.load %arg5[%c0_8, %c0_9] : memref<1x32xf32, #tpu.memory_space<vmem>>, vector<1x32xf32>
    %c0_10 = arith.constant 0 : index
    %c0_11 = arith.constant 0 : index
    %6 = vector.load %arg6[%c0_10, %c0_11] : memref<1x32xf32, #tpu.memory_space<vmem>>, vector<1x32xf32>
    %c0_12 = arith.constant 0 : index
    %c0_13 = arith.constant 0 : index
    %7 = vector.load %arg7[%c0_12, %c0_13] : memref<1x32xf32, #tpu.memory_space<vmem>>, vector<1x32xf32>
    %8 = arith.truncf %1 : vector<16x32xf32> to vector<16x32xbf16>
    %cst = arith.constant dense<0.000000e+00> : vector<16x96xf32>
    %9 = tpu.matmul %8, %2, %cst {dimension_numbers = #tpu.dot_dimension_numbers<[1], [0], [0], [1], [0, 0, 1, 1], [], []>} : vector<16x32xbf16>, vector<32x96xbf16>, vector<16x96xf32> -> vector<16x96xf32>
    %10 = vector.broadcast %3 : vector<1x96xf32> to vector<16x96xf32>
    %11 = arith.addf %9, %10 : vector<16x96xf32>
    %12 = vector.extract_strided_slice %11 {offsets = [0, 0], sizes = [16, 32], strides = [1, 1]} : vector<16x96xf32> to vector<16x32xf32>
    %13 = vector.extract_strided_slice %11 {offsets = [0, 32], sizes = [16, 32], strides = [1, 1]} : vector<16x96xf32> to vector<16x32xf32>
    %14 = vector.extract_strided_slice %11 {offsets = [0, 64], sizes = [16, 32], strides = [1, 1]} : vector<16x96xf32> to vector<16x32xf32>
    %15 = vector.extract_strided_slice %12 {offsets = [0, 0], sizes = [16, 8], strides = [1, 1]} : vector<16x32xf32> to vector<16x8xf32>
    %16 = arith.truncf %15 : vector<16x8xf32> to vector<16x8xbf16>
    %17 = vector.extract_strided_slice %13 {offsets = [0, 0], sizes = [16, 8], strides = [1, 1]} : vector<16x32xf32> to vector<16x8xf32>
    %18 = arith.truncf %17 : vector<16x8xf32> to vector<16x8xbf16>
    %19 = vector.extract_strided_slice %14 {offsets = [0, 0], sizes = [16, 8], strides = [1, 1]} : vector<16x32xf32> to vector<16x8xf32>
    %20 = arith.truncf %19 : vector<16x8xf32> to vector<16x8xbf16>
    %cst_14 = arith.constant dense<0.000000e+00> : vector<16x16xf32>
    %21 = tpu.matmul %16, %18, %cst_14 {dimension_numbers = #tpu.dot_dimension_numbers<[1], [1], [0], [0], [0, 0, 1, 0], [], []>} : vector<16x8xbf16>, vector<16x8xbf16>, vector<16x16xf32> -> vector<16x16xf32>
    %cst_15 = arith.constant 0.353553385 : f32
    %22 = vector.broadcast %cst_15 : f32 to vector<16x16xf32>
    %23 = arith.mulf %21, %22 : vector<16x16xf32>
    %cst_16 = arith.constant dense<0xFF800000> : vector<16xf32>
    %24 = vector.multi_reduction <maximumf>, %23, %cst_16 [1] : vector<16x16xf32> to vector<16xf32>
    %25 = vector.shape_cast %24 : vector<16xf32> to vector<16x1xf32>
    %26 = vector.broadcast %25 : vector<16x1xf32> to vector<16x16xf32>
    %27 = arith.subf %23, %26 : vector<16x16xf32>
    %28 = math.exp %27 : vector<16x16xf32>
    %cst_17 = arith.constant dense<0.000000e+00> : vector<16xf32>
    %29 = vector.multi_reduction <add>, %28, %cst_17 [1] : vector<16x16xf32> to vector<16xf32>
    %30 = vector.shape_cast %29 : vector<16xf32> to vector<16x1xf32>
    %31 = vector.broadcast %30 : vector<16x1xf32> to vector<16x16xf32>
    %32 = arith.divf %28, %31 : vector<16x16xf32>
    %33 = arith.truncf %32 : vector<16x16xf32> to vector<16x16xbf16>
    %cst_18 = arith.constant dense<0.000000e+00> : vector<16x8xf32>
    %34 = tpu.matmul %33, %20, %cst_18 {dimension_numbers = #tpu.dot_dimension_numbers<[1], [0], [0], [1], [0, 0, 1, 1], [], []>} : vector<16x16xbf16>, vector<16x8xbf16>, vector<16x8xf32> -> vector<16x8xf32>
    %35 = vector.extract_strided_slice %12 {offsets = [0, 8], sizes = [16, 8], strides = [1, 1]} : vector<16x32xf32> to vector<16x8xf32>
    %36 = arith.truncf %35 : vector<16x8xf32> to vector<16x8xbf16>
    %37 = vector.extract_strided_slice %13 {offsets = [0, 8], sizes = [16, 8], strides = [1, 1]} : vector<16x32xf32> to vector<16x8xf32>
    %38 = arith.truncf %37 : vector<16x8xf32> to vector<16x8xbf16>
    %39 = vector.extract_strided_slice %14 {offsets = [0, 8], sizes = [16, 8], strides = [1, 1]} : vector<16x32xf32> to vector<16x8xf32>
    %40 = arith.truncf %39 : vector<16x8xf32> to vector<16x8xbf16>
    %cst_19 = arith.constant dense<0.000000e+00> : vector<16x16xf32>
    %41 = tpu.matmul %36, %38, %cst_19 {dimension_numbers = #tpu.dot_dimension_numbers<[1], [1], [0], [0], [0, 0, 1, 0], [], []>} : vector<16x8xbf16>, vector<16x8xbf16>, vector<16x16xf32> -> vector<16x16xf32>
    %cst_20 = arith.constant 0.353553385 : f32
    %42 = vector.broadcast %cst_20 : f32 to vector<16x16xf32>
    %43 = arith.mulf %41, %42 : vector<16x16xf32>
    %cst_21 = arith.constant dense<0xFF800000> : vector<16xf32>
    %44 = vector.multi_reduction <maximumf>, %43, %cst_21 [1] : vector<16x16xf32> to vector<16xf32>
    %45 = vector.shape_cast %44 : vector<16xf32> to vector<16x1xf32>
    %46 = vector.broadcast %45 : vector<16x1xf32> to vector<16x16xf32>
    %47 = arith.subf %43, %46 : vector<16x16xf32>
    %48 = math.exp %47 : vector<16x16xf32>
    %cst_22 = arith.constant dense<0.000000e+00> : vector<16xf32>
    %49 = vector.multi_reduction <add>, %48, %cst_22 [1] : vector<16x16xf32> to vector<16xf32>
    %50 = vector.shape_cast %49 : vector<16xf32> to vector<16x1xf32>
    %51 = vector.broadcast %50 : vector<16x1xf32> to vector<16x16xf32>
    %52 = arith.divf %48, %51 : vector<16x16xf32>
    %53 = arith.truncf %52 : vector<16x16xf32> to vector<16x16xbf16>
    %cst_23 = arith.constant dense<0.000000e+00> : vector<16x8xf32>
    %54 = tpu.matmul %53, %40, %cst_23 {dimension_numbers = #tpu.dot_dimension_numbers<[1], [0], [0], [1], [0, 0, 1, 1], [], []>} : vector<16x16xbf16>, vector<16x8xbf16>, vector<16x8xf32> -> vector<16x8xf32>
    %55 = vector.extract_strided_slice %12 {offsets = [0, 16], sizes = [16, 8], strides = [1, 1]} : vector<16x32xf32> to vector<16x8xf32>
    %56 = arith.truncf %55 : vector<16x8xf32> to vector<16x8xbf16>
    %57 = vector.extract_strided_slice %13 {offsets = [0, 16], sizes = [16, 8], strides = [1, 1]} : vector<16x32xf32> to vector<16x8xf32>
    %58 = arith.truncf %57 : vector<16x8xf32> to vector<16x8xbf16>
    %59 = vector.extract_strided_slice %14 {offsets = [0, 16], sizes = [16, 8], strides = [1, 1]} : vector<16x32xf32> to vector<16x8xf32>
    %60 = arith.truncf %59 : vector<16x8xf32> to vector<16x8xbf16>
    %cst_24 = arith.constant dense<0.000000e+00> : vector<16x16xf32>
    %61 = tpu.matmul %56, %58, %cst_24 {dimension_numbers = #tpu.dot_dimension_numbers<[1], [1], [0], [0], [0, 0, 1, 0], [], []>} : vector<16x8xbf16>, vector<16x8xbf16>, vector<16x16xf32> -> vector<16x16xf32>
    %cst_25 = arith.constant 0.353553385 : f32
    %62 = vector.broadcast %cst_25 : f32 to vector<16x16xf32>
    %63 = arith.mulf %61, %62 : vector<16x16xf32>
    %cst_26 = arith.constant dense<0xFF800000> : vector<16xf32>
    %64 = vector.multi_reduction <maximumf>, %63, %cst_26 [1] : vector<16x16xf32> to vector<16xf32>
    %65 = vector.shape_cast %64 : vector<16xf32> to vector<16x1xf32>
    %66 = vector.broadcast %65 : vector<16x1xf32> to vector<16x16xf32>
    %67 = arith.subf %63, %66 : vector<16x16xf32>
    %68 = math.exp %67 : vector<16x16xf32>
    %cst_27 = arith.constant dense<0.000000e+00> : vector<16xf32>
    %69 = vector.multi_reduction <add>, %68, %cst_27 [1] : vector<16x16xf32> to vector<16xf32>
    %70 = vector.shape_cast %69 : vector<16xf32> to vector<16x1xf32>
    %71 = vector.broadcast %70 : vector<16x1xf32> to vector<16x16xf32>
    %72 = arith.divf %68, %71 : vector<16x16xf32>
    %73 = arith.truncf %72 : vector<16x16xf32> to vector<16x16xbf16>
    %cst_28 = arith.constant dense<0.000000e+00> : vector<16x8xf32>
    %74 = tpu.matmul %73, %60, %cst_28 {dimension_numbers = #tpu.dot_dimension_numbers<[1], [0], [0], [1], [0, 0, 1, 1], [], []>} : vector<16x16xbf16>, vector<16x8xbf16>, vector<16x8xf32> -> vector<16x8xf32>
    %75 = vector.extract_strided_slice %12 {offsets = [0, 24], sizes = [16, 8], strides = [1, 1]} : vector<16x32xf32> to vector<16x8xf32>
    %76 = arith.truncf %75 : vector<16x8xf32> to vector<16x8xbf16>
    %77 = vector.extract_strided_slice %13 {offsets = [0, 24], sizes = [16, 8], strides = [1, 1]} : vector<16x32xf32> to vector<16x8xf32>
    %78 = arith.truncf %77 : vector<16x8xf32> to vector<16x8xbf16>
    %79 = vector.extract_strided_slice %14 {offsets = [0, 24], sizes = [16, 8], strides = [1, 1]} : vector<16x32xf32> to vector<16x8xf32>
    %80 = arith.truncf %79 : vector<16x8xf32> to vector<16x8xbf16>
    %cst_29 = arith.constant dense<0.000000e+00> : vector<16x16xf32>
    %81 = tpu.matmul %76, %78, %cst_29 {dimension_numbers = #tpu.dot_dimension_numbers<[1], [1], [0], [0], [0, 0, 1, 0], [], []>} : vector<16x8xbf16>, vector<16x8xbf16>, vector<16x16xf32> -> vector<16x16xf32>
    %cst_30 = arith.constant 0.353553385 : f32
    %82 = vector.broadcast %cst_30 : f32 to vector<16x16xf32>
    %83 = arith.mulf %81, %82 : vector<16x16xf32>
    %cst_31 = arith.constant dense<0xFF800000> : vector<16xf32>
    %84 = vector.multi_reduction <maximumf>, %83, %cst_31 [1] : vector<16x16xf32> to vector<16xf32>
    %85 = vector.shape_cast %84 : vector<16xf32> to vector<16x1xf32>
    %86 = vector.broadcast %85 : vector<16x1xf32> to vector<16x16xf32>
    %87 = arith.subf %83, %86 : vector<16x16xf32>
    %88 = math.exp %87 : vector<16x16xf32>
    %cst_32 = arith.constant dense<0.000000e+00> : vector<16xf32>
    %89 = vector.multi_reduction <add>, %88, %cst_32 [1] : vector<16x16xf32> to vector<16xf32>
    %90 = vector.shape_cast %89 : vector<16xf32> to vector<16x1xf32>
    %91 = vector.broadcast %90 : vector<16x1xf32> to vector<16x16xf32>
    %92 = arith.divf %88, %91 : vector<16x16xf32>
    %93 = arith.truncf %92 : vector<16x16xf32> to vector<16x16xbf16>
    %cst_33 = arith.constant dense<0.000000e+00> : vector<16x8xf32>
    %94 = tpu.matmul %93, %80, %cst_33 {dimension_numbers = #tpu.dot_dimension_numbers<[1], [0], [0], [1], [0, 0, 1, 1], [], []>} : vector<16x16xbf16>, vector<16x8xbf16>, vector<16x8xf32> -> vector<16x8xf32>
    %95 = tpu.concatenate %34, %54, %74, %94 in 1 : vector<16x8xf32>, vector<16x8xf32>, vector<16x8xf32>, vector<16x8xf32> -> vector<16x32xf32>
    %96 = arith.truncf %95 : vector<16x32xf32> to vector<16x32xbf16>
    %cst_34 = arith.constant dense<0.000000e+00> : vector<16x32xf32>
    %97 = tpu.matmul %96, %4, %cst_34 {dimension_numbers = #tpu.dot_dimension_numbers<[1], [0], [0], [1], [0, 0, 1, 1], [], []>} : vector<16x32xbf16>, vector<32x32xbf16>, vector<16x32xf32> -> vector<16x32xf32>
    %98 = vector.broadcast %5 : vector<1x32xf32> to vector<16x32xf32>
    %99 = arith.addf %97, %98 : vector<16x32xf32>
    %100 = arith.addf %1, %99 : vector<16x32xf32>
    %cst_35 = arith.constant dense<0.000000e+00> : vector<16xf32>
    %101 = vector.multi_reduction <add>, %100, %cst_35 [1] : vector<16x32xf32> to vector<16xf32>
    %102 = vector.shape_cast %101 : vector<16xf32> to vector<16x1xf32>
    %cst_36 = arith.constant 3.200000e+01 : f32
    %103 = vector.broadcast %cst_36 : f32 to vector<16x1xf32>
    %104 = arith.divf %102, %103 : vector<16x1xf32>
    %105 = vector.broadcast %104 : vector<16x1xf32> to vector<16x32xf32>
    %106 = arith.subf %100, %105 : vector<16x32xf32>
    %107 = arith.mulf %106, %106 : vector<16x32xf32>
    %cst_37 = arith.constant dense<0.000000e+00> : vector<16xf32>
    %108 = vector.multi_reduction <add>, %107, %cst_37 [1] : vector<16x32xf32> to vector<16xf32>
    %109 = vector.shape_cast %108 : vector<16xf32> to vector<16x1xf32>
    %cst_38 = arith.constant 3.200000e+01 : f32
    %110 = vector.broadcast %cst_38 : f32 to vector<16x1xf32>
    %111 = arith.divf %109, %110 : vector<16x1xf32>
    %cst_39 = arith.constant 9.99999974E-6 : f32
    %112 = vector.broadcast %cst_39 : f32 to vector<16x1xf32>
    %113 = arith.addf %111, %112 : vector<16x1xf32>
    %114 = math.rsqrt %113 : vector<16x1xf32>
    %115 = vector.broadcast %114 : vector<16x1xf32> to vector<16x32xf32>
    %116 = arith.mulf %106, %115 : vector<16x32xf32>
    %117 = vector.broadcast %6 : vector<1x32xf32> to vector<16x32xf32>
    %118 = arith.mulf %116, %117 : vector<16x32xf32>
    %119 = vector.broadcast %7 : vector<1x32xf32> to vector<16x32xf32>
    %120 = arith.addf %118, %119 : vector<16x32xf32>
    %c0_40 = arith.constant 0 : index
    %c0_41 = arith.constant 0 : index
    %121 = vector.load %arg8[%c0_40, %c0_41] : memref<32x32xbf16, #tpu.memory_space<vmem>>, vector<32x32xbf16>
    %c0_42 = arith.constant 0 : index
    %c0_43 = arith.constant 0 : index
    %122 = vector.load %arg9[%c0_42, %c0_43] : memref<1x32xf32, #tpu.memory_space<vmem>>, vector<1x32xf32>
    %c0_44 = arith.constant 0 : index
    %c0_45 = arith.constant 0 : index
    %123 = vector.load %arg10[%c0_44, %c0_45] : memref<32x32xbf16, #tpu.memory_space<vmem>>, vector<32x32xbf16>
    %c0_46 = arith.constant 0 : index
    %c0_47 = arith.constant 0 : index
    %124 = vector.load %arg11[%c0_46, %c0_47] : memref<1x32xf32, #tpu.memory_space<vmem>>, vector<1x32xf32>
    %c0_48 = arith.constant 0 : index
    %c0_49 = arith.constant 0 : index
    %125 = vector.load %arg12[%c0_48, %c0_49] : memref<1x32xf32, #tpu.memory_space<vmem>>, vector<1x32xf32>
    %c0_50 = arith.constant 0 : index
    %c0_51 = arith.constant 0 : index
    %126 = vector.load %arg13[%c0_50, %c0_51] : memref<1x32xf32, #tpu.memory_space<vmem>>, vector<1x32xf32>
    %127 = arith.truncf %120 : vector<16x32xf32> to vector<16x32xbf16>
    %cst_52 = arith.constant dense<0.000000e+00> : vector<16x32xf32>
    %128 = tpu.matmul %127, %121, %cst_52 {dimension_numbers = #tpu.dot_dimension_numbers<[1], [0], [0], [1], [0, 0, 1, 1], [], []>} : vector<16x32xbf16>, vector<32x32xbf16>, vector<16x32xf32> -> vector<16x32xf32>
    %129 = vector.broadcast %122 : vector<1x32xf32> to vector<16x32xf32>
    %130 = arith.addf %128, %129 : vector<16x32xf32>
    %cst_53 = arith.constant 0.000000e+00 : f32
    %131 = vector.broadcast %cst_53 : f32 to vector<16x32xf32>
    %132 = arith.maximumf %130, %131 : vector<16x32xf32>
    %133 = arith.truncf %132 : vector<16x32xf32> to vector<16x32xbf16>
    %cst_54 = arith.constant dense<0.000000e+00> : vector<16x32xf32>
    %134 = tpu.matmul %133, %123, %cst_54 {dimension_numbers = #tpu.dot_dimension_numbers<[1], [0], [0], [1], [0, 0, 1, 1], [], []>} : vector<16x32xbf16>, vector<32x32xbf16>, vector<16x32xf32> -> vector<16x32xf32>
    %135 = vector.broadcast %124 : vector<1x32xf32> to vector<16x32xf32>
    %136 = arith.addf %134, %135 : vector<16x32xf32>
    %137 = arith.addf %120, %136 : vector<16x32xf32>
    %cst_55 = arith.constant dense<0.000000e+00> : vector<16xf32>
    %138 = vector.multi_reduction <add>, %137, %cst_55 [1] : vector<16x32xf32> to vector<16xf32>
    %139 = vector.shape_cast %138 : vector<16xf32> to vector<16x1xf32>
    %cst_56 = arith.constant 3.200000e+01 : f32
    %140 = vector.broadcast %cst_56 : f32 to vector<16x1xf32>
    %141 = arith.divf %139, %140 : vector<16x1xf32>
    %142 = vector.broadcast %141 : vector<16x1xf32> to vector<16x32xf32>
    %143 = arith.subf %137, %142 : vector<16x32xf32>
    %144 = arith.mulf %143, %143 : vector<16x32xf32>
    %cst_57 = arith.constant dense<0.000000e+00> : vector<16xf32>
    %145 = vector.multi_reduction <add>, %144, %cst_57 [1] : vector<16x32xf32> to vector<16xf32>
    %146 = vector.shape_cast %145 : vector<16xf32> to vector<16x1xf32>
    %cst_58 = arith.constant 3.200000e+01 : f32
    %147 = vector.broadcast %cst_58 : f32 to vector<16x1xf32>
    %148 = arith.divf %146, %147 : vector<16x1xf32>
    %cst_59 = arith.constant 9.99999974E-6 : f32
    %149 = vector.broadcast %cst_59 : f32 to vector<16x1xf32>
    %150 = arith.addf %148, %149 : vector<16x1xf32>
    %151 = math.rsqrt %150 : vector<16x1xf32>
    %152 = vector.broadcast %151 : vector<16x1xf32> to vector<16x32xf32>
    %153 = arith.mulf %143, %152 : vector<16x32xf32>
    %154 = vector.broadcast %125 : vector<1x32xf32> to vector<16x32xf32>
    %155 = arith.mulf %153, %154 : vector<16x32xf32>
    %156 = vector.broadcast %126 : vector<1x32xf32> to vector<16x32xf32>
    %157 = arith.addf %155, %156 : vector<16x32xf32>
    %c0_60 = arith.constant 0 : index
    %c0_61 = arith.constant 0 : index
    %158 = vector.load %arg14[%c0_60, %c0_61] : memref<96x32xbf16, #tpu.memory_space<vmem>>, vector<96x32xbf16>
    %c1_i32 = arith.constant 1 : i32
    %159 = tpu.dynamic_rotate %157 by %c1_i32 dim 0 : vector<16x32xf32>, i32 -> vector<16x32xf32>
    %c15_i32 = arith.constant 15 : i32
    %160 = tpu.dynamic_rotate %157 by %c15_i32 dim 0 : vector<16x32xf32>, i32 -> vector<16x32xf32>
    %161 = tpu.concatenate %159, %157, %160 in 1 : vector<16x32xf32>, vector<16x32xf32>, vector<16x32xf32> -> vector<16x96xf32>
    %162 = arith.truncf %161 : vector<16x96xf32> to vector<16x96xbf16>
    %cst_62 = arith.constant dense<0.000000e+00> : vector<16x32xf32>
    %163 = tpu.matmul %162, %158, %cst_62 {dimension_numbers = #tpu.dot_dimension_numbers<[1], [0], [0], [1], [0, 0, 1, 1], [], []>} : vector<16x96xbf16>, vector<96x32xbf16>, vector<16x32xf32> -> vector<16x32xf32>
    %c0_63 = arith.constant 0 : index
    %c0_64 = arith.constant 0 : index
    %164 = vector.load %arg15[%c0_63, %c0_64] : memref<1x32xf32, #tpu.memory_space<vmem>>, vector<1x32xf32>
    %165 = vector.broadcast %164 : vector<1x32xf32> to vector<16x32xf32>
    %166 = arith.mulf %163, %165 : vector<16x32xf32>
    %c0_65 = arith.constant 0 : index
    %c0_66 = arith.constant 0 : index
    %167 = vector.load %arg16[%c0_65, %c0_66] : memref<1x32xf32, #tpu.memory_space<vmem>>, vector<1x32xf32>
    %168 = vector.broadcast %167 : vector<1x32xf32> to vector<16x32xf32>
    %169 = arith.addf %166, %168 : vector<16x32xf32>
    %cst_67 = arith.constant 0.000000e+00 : f32
    %170 = vector.broadcast %cst_67 : f32 to vector<16x32xf32>
    %171 = arith.cmpf ogt, %169, %170 : vector<16x32xf32>
    %cst_68 = arith.constant 0.000000e+00 : f32
    %172 = vector.broadcast %cst_68 : f32 to vector<16x32xf32>
    %173 = arith.minimumf %169, %172 : vector<16x32xf32>
    %174 = math.exp %173 : vector<16x32xf32>
    %cst_69 = arith.constant 1.000000e+00 : f32
    %175 = vector.broadcast %cst_69 : f32 to vector<16x32xf32>
    %176 = arith.subf %174, %175 : vector<16x32xf32>
    %177 = arith.select %171, %169, %176 : vector<16x32xi1>, vector<16x32xf32>
    %c0_70 = arith.constant 0 : index
    %c0_71 = arith.constant 0 : index
    %178 = vector.load %arg18[%c0_70, %c0_71] : memref<16x32xf32, #tpu.memory_space<vmem>>, vector<16x32xf32>
    tpu.vector_store %arg18[%c0_70, %c0_71], %177 {strides = array<i32>} : memref<16x32xf32, #tpu.memory_space<vmem>>, vector<16x32xf32>,
    %c0_72 = arith.constant 0 : index
    %c0_73 = arith.constant 0 : index
    %179 = tpu.strided_load %arg18[%c0_72, %c0_73] {strides = array<i32: 2, 1>} : memref<16x32xf32, #tpu.memory_space<vmem>>, vector<8x32xf32>
    %c1 = arith.constant 1 : index
    %c0_74 = arith.constant 0 : index
    %180 = tpu.strided_load %arg18[%c1, %c0_74] {strides = array<i32: 2, 1>} : memref<16x32xf32, #tpu.memory_space<vmem>>, vector<8x32xf32>
    %c1_i32_75 = arith.constant 1 : i32
    %181 = tpu.dynamic_rotate %180 by %c1_i32_75 dim 0 : vector<8x32xf32>, i32 -> vector<8x32xf32>
    %182 = tpu.iota {dimensions = array<i32: 0>} : vector<8x32xi32>
    %c0_i32 = arith.constant 0 : i32
    %183 = vector.broadcast %c0_i32 : i32 to vector<8x32xi32>
    %184 = arith.cmpi eq, %182, %183 : vector<8x32xi32>
    %cst_76 = arith.constant -1.000000e+30 : f32
    %185 = vector.broadcast %cst_76 : f32 to vector<8x32xf32>
    %186 = arith.select %184, %185, %181 : vector<8x32xi1>, vector<8x32xf32>
    %187 = arith.maximumf %179, %180 : vector<8x32xf32>
    %188 = arith.maximumf %187, %186 : vector<8x32xf32>
    %c0_77 = arith.constant 0 : index
    %c0_78 = arith.constant 0 : index
    %c0_79 = arith.constant 0 : index
    %189 = vector.load %arg17[%c0_77, %c0_78, %c0_79] : memref<1x8x32xf32, #tpu.memory_space<vmem>>, vector<1x8x32xf32>
    %190 = vector.shape_cast %189 : vector<1x8x32xf32> to vector<8x32xf32>
    %191 = vector.shape_cast %188 : vector<8x32xf32> to vector<1x8x32xf32>
    tpu.vector_store %arg17[%c0_77, %c0_78, %c0_79], %191 {strides = array<i32>} : memref<1x8x32xf32, #tpu.memory_space<vmem>>, vector<1x8x32xf32>,
    return
  }
  func.func @transform_0(%arg0: i32) -> (i32, i32, i32) {
    %c0_i32 = arith.constant 0 : i32
    %c0_i32_0 = arith.constant 0 : i32
    %c0_i32_1 = arith.constant 0 : i32
    return %arg0, %c0_i32, %c0_i32_0 : i32, i32, i32
  }
  func.func @transform_1(%arg0: i32) -> (i32, i32) {
    %c0_i32 = arith.constant 0 : i32
    %c0_i32_0 = arith.constant 0 : i32
    %c0_i32_1 = arith.constant 0 : i32
    return %c0_i32, %c0_i32_0 : i32, i32
  }
  func.func @transform_2(%arg0: i32) -> (i32, i32) {
    %c0_i32 = arith.constant 0 : i32
    %c0_i32_0 = arith.constant 0 : i32
    %c0_i32_1 = arith.constant 0 : i32
    return %c0_i32, %c0_i32_0 : i32, i32
  }
  func.func @transform_3(%arg0: i32) -> (i32, i32) {
    %c0_i32 = arith.constant 0 : i32
    %c0_i32_0 = arith.constant 0 : i32
    %c0_i32_1 = arith.constant 0 : i32
    return %c0_i32, %c0_i32_0 : i32, i32
  }
  func.func @transform_4(%arg0: i32) -> (i32, i32) {
    %c0_i32 = arith.constant 0 : i32
    %c0_i32_0 = arith.constant 0 : i32
    %c0_i32_1 = arith.constant 0 : i32
    return %c0_i32, %c0_i32_0 : i32, i32
  }
  func.func @transform_5(%arg0: i32) -> (i32, i32) {
    %c0_i32 = arith.constant 0 : i32
    %c0_i32_0 = arith.constant 0 : i32
    %c0_i32_1 = arith.constant 0 : i32
    return %c0_i32, %c0_i32_0 : i32, i32
  }
  func.func @transform_6(%arg0: i32) -> (i32, i32) {
    %c0_i32 = arith.constant 0 : i32
    %c0_i32_0 = arith.constant 0 : i32
    %c0_i32_1 = arith.constant 0 : i32
    return %c0_i32, %c0_i32_0 : i32, i32
  }
  func.func @transform_7(%arg0: i32) -> (i32, i32) {
    %c0_i32 = arith.constant 0 : i32
    %c0_i32_0 = arith.constant 0 : i32
    %c0_i32_1 = arith.constant 0 : i32
    return %c0_i32, %c0_i32_0 : i32, i32
  }
  func.func @transform_8(%arg0: i32) -> (i32, i32) {
    %c0_i32 = arith.constant 0 : i32
    %c0_i32_0 = arith.constant 0 : i32
    %c0_i32_1 = arith.constant 0 : i32
    return %c0_i32, %c0_i32_0 : i32, i32
  }
  func.func @transform_9(%arg0: i32) -> (i32, i32) {
    %c0_i32 = arith.constant 0 : i32
    %c0_i32_0 = arith.constant 0 : i32
    %c0_i32_1 = arith.constant 0 : i32
    return %c0_i32, %c0_i32_0 : i32, i32
  }
  func.func @transform_10(%arg0: i32) -> (i32, i32) {
    %c0_i32 = arith.constant 0 : i32
    %c0_i32_0 = arith.constant 0 : i32
    %c0_i32_1 = arith.constant 0 : i32
    return %c0_i32, %c0_i32_0 : i32, i32
  }
  func.func @transform_11(%arg0: i32) -> (i32, i32) {
    %c0_i32 = arith.constant 0 : i32
    %c0_i32_0 = arith.constant 0 : i32
    %c0_i32_1 = arith.constant 0 : i32
    return %c0_i32, %c0_i32_0 : i32, i32
  }
  func.func @transform_12(%arg0: i32) -> (i32, i32) {
    %c0_i32 = arith.constant 0 : i32
    %c0_i32_0 = arith.constant 0 : i32
    %c0_i32_1 = arith.constant 0 : i32
    return %c0_i32, %c0_i32_0 : i32, i32
  }
  func.func @transform_13(%arg0: i32) -> (i32, i32) {
    %c0_i32 = arith.constant 0 : i32
    %c0_i32_0 = arith.constant 0 : i32
    %c0_i32_1 = arith.constant 0 : i32
    return %c0_i32, %c0_i32_0 : i32, i32
  }
  func.func @transform_14(%arg0: i32) -> (i32, i32) {
    %c0_i32 = arith.constant 0 : i32
    %c0_i32_0 = arith.constant 0 : i32
    %c0_i32_1 = arith.constant 0 : i32
    return %c0_i32, %c0_i32_0 : i32, i32
  }
  func.func @transform_15(%arg0: i32) -> (i32, i32) {
    %c0_i32 = arith.constant 0 : i32
    %c0_i32_0 = arith.constant 0 : i32
    %c0_i32_1 = arith.constant 0 : i32
    return %c0_i32, %c0_i32_0 : i32, i32
  }
  func.func @transform_16(%arg0: i32) -> (i32, i32, i32) {
    %c0_i32 = arith.constant 0 : i32
    %c0_i32_0 = arith.constant 0 : i32
    %c0_i32_1 = arith.constant 0 : i32
    return %arg0, %c0_i32, %c0_i32_0 : i32, i32, i32
  }
}

module attributes {stable_mosaic.version = 11 : i64} {
  func.func @_enc_layer_final_kernel(%arg0: i32, %arg1: memref<1x8x32xf32, #tpu.memory_space<vmem>>, %arg2: memref<32x96xbf16, #tpu.memory_space<vmem>>, %arg3: memref<1x96xf32, #tpu.memory_space<vmem>>, %arg4: memref<32x32xbf16, #tpu.memory_space<vmem>>, %arg5: memref<1x32xf32, #tpu.memory_space<vmem>>, %arg6: memref<1x32xf32, #tpu.memory_space<vmem>>, %arg7: memref<1x32xf32, #tpu.memory_space<vmem>>, %arg8: memref<32x32xbf16, #tpu.memory_space<vmem>>, %arg9: memref<1x32xf32, #tpu.memory_space<vmem>>, %arg10: memref<32x32xbf16, #tpu.memory_space<vmem>>, %arg11: memref<1x32xf32, #tpu.memory_space<vmem>>, %arg12: memref<1x32xf32, #tpu.memory_space<vmem>>, %arg13: memref<1x32xf32, #tpu.memory_space<vmem>>, %arg14: memref<1x32xf32, #tpu.memory_space<vmem>>, %arg15: memref<1x32xf32, #tpu.memory_space<vmem>>, %arg16: memref<1x8x32xf32, #tpu.memory_space<vmem>>) attributes {dimension_semantics = [#tpu.dimension_semantics<parallel>], iteration_bounds = array<i64: 2>, scalar_prefetch = 0 : i64, scratch_operands = 0 : i64, tpu.core_type = #tpu.core_type<tc>, window_params = [{transform_indices = @transform_0, window_bounds = array<i64: 1, 8, 32>}, {pipeline_mode = #tpu.pipeline_mode<synchronous>, transform_indices = @transform_1, window_bounds = array<i64: 32, 96>}, {pipeline_mode = #tpu.pipeline_mode<synchronous>, transform_indices = @transform_2, window_bounds = array<i64: 1, 96>}, {pipeline_mode = #tpu.pipeline_mode<synchronous>, transform_indices = @transform_3, window_bounds = array<i64: 32, 32>}, {pipeline_mode = #tpu.pipeline_mode<synchronous>, transform_indices = @transform_4, window_bounds = array<i64: 1, 32>}, {pipeline_mode = #tpu.pipeline_mode<synchronous>, transform_indices = @transform_5, window_bounds = array<i64: 1, 32>}, {pipeline_mode = #tpu.pipeline_mode<synchronous>, transform_indices = @transform_6, window_bounds = array<i64: 1, 32>}, {pipeline_mode = #tpu.pipeline_mode<synchronous>, transform_indices = @transform_7, window_bounds = array<i64: 32, 32>}, {pipeline_mode = #tpu.pipeline_mode<synchronous>, transform_indices = @transform_8, window_bounds = array<i64: 1, 32>}, {pipeline_mode = #tpu.pipeline_mode<synchronous>, transform_indices = @transform_9, window_bounds = array<i64: 32, 32>}, {pipeline_mode = #tpu.pipeline_mode<synchronous>, transform_indices = @transform_10, window_bounds = array<i64: 1, 32>}, {pipeline_mode = #tpu.pipeline_mode<synchronous>, transform_indices = @transform_11, window_bounds = array<i64: 1, 32>}, {pipeline_mode = #tpu.pipeline_mode<synchronous>, transform_indices = @transform_12, window_bounds = array<i64: 1, 32>}, {pipeline_mode = #tpu.pipeline_mode<synchronous>, transform_indices = @transform_13, window_bounds = array<i64: 1, 32>}, {pipeline_mode = #tpu.pipeline_mode<synchronous>, transform_indices = @transform_14, window_bounds = array<i64: 1, 32>}, {transform_indices = @transform_15, window_bounds = array<i64: 1, 8, 32>}]} {
    %c0 = arith.constant 0 : index
    %c0_0 = arith.constant 0 : index
    %c0_1 = arith.constant 0 : index
    %0 = vector.load %arg1[%c0, %c0_0, %c0_1] : memref<1x8x32xf32, #tpu.memory_space<vmem>>, vector<1x8x32xf32>
    %1 = vector.shape_cast %0 : vector<1x8x32xf32> to vector<8x32xf32>
    %c0_2 = arith.constant 0 : index
    %c0_3 = arith.constant 0 : index
    %2 = vector.load %arg2[%c0_2, %c0_3] : memref<32x96xbf16, #tpu.memory_space<vmem>>, vector<32x96xbf16>
    %c0_4 = arith.constant 0 : index
    %c0_5 = arith.constant 0 : index
    %3 = vector.load %arg3[%c0_4, %c0_5] : memref<1x96xf32, #tpu.memory_space<vmem>>, vector<1x96xf32>
    %c0_6 = arith.constant 0 : index
    %c0_7 = arith.constant 0 : index
    %4 = vector.load %arg4[%c0_6, %c0_7] : memref<32x32xbf16, #tpu.memory_space<vmem>>, vector<32x32xbf16>
    %c0_8 = arith.constant 0 : index
    %c0_9 = arith.constant 0 : index
    %5 = vector.load %arg5[%c0_8, %c0_9] : memref<1x32xf32, #tpu.memory_space<vmem>>, vector<1x32xf32>
    %c0_10 = arith.constant 0 : index
    %c0_11 = arith.constant 0 : index
    %6 = vector.load %arg6[%c0_10, %c0_11] : memref<1x32xf32, #tpu.memory_space<vmem>>, vector<1x32xf32>
    %c0_12 = arith.constant 0 : index
    %c0_13 = arith.constant 0 : index
    %7 = vector.load %arg7[%c0_12, %c0_13] : memref<1x32xf32, #tpu.memory_space<vmem>>, vector<1x32xf32>
    %8 = arith.truncf %1 : vector<8x32xf32> to vector<8x32xbf16>
    %cst = arith.constant dense<0.000000e+00> : vector<8x96xf32>
    %9 = tpu.matmul %8, %2, %cst {dimension_numbers = #tpu.dot_dimension_numbers<[1], [0], [0], [1], [0, 0, 1, 1], [], []>} : vector<8x32xbf16>, vector<32x96xbf16>, vector<8x96xf32> -> vector<8x96xf32>
    %10 = vector.broadcast %3 : vector<1x96xf32> to vector<8x96xf32>
    %11 = arith.addf %9, %10 : vector<8x96xf32>
    %12 = vector.extract_strided_slice %11 {offsets = [0, 0], sizes = [8, 32], strides = [1, 1]} : vector<8x96xf32> to vector<8x32xf32>
    %13 = vector.extract_strided_slice %11 {offsets = [0, 32], sizes = [8, 32], strides = [1, 1]} : vector<8x96xf32> to vector<8x32xf32>
    %14 = vector.extract_strided_slice %11 {offsets = [0, 64], sizes = [8, 32], strides = [1, 1]} : vector<8x96xf32> to vector<8x32xf32>
    %15 = vector.extract_strided_slice %12 {offsets = [0, 0], sizes = [8, 8], strides = [1, 1]} : vector<8x32xf32> to vector<8x8xf32>
    %16 = arith.truncf %15 : vector<8x8xf32> to vector<8x8xbf16>
    %17 = vector.extract_strided_slice %13 {offsets = [0, 0], sizes = [8, 8], strides = [1, 1]} : vector<8x32xf32> to vector<8x8xf32>
    %18 = arith.truncf %17 : vector<8x8xf32> to vector<8x8xbf16>
    %19 = vector.extract_strided_slice %14 {offsets = [0, 0], sizes = [8, 8], strides = [1, 1]} : vector<8x32xf32> to vector<8x8xf32>
    %20 = arith.truncf %19 : vector<8x8xf32> to vector<8x8xbf16>
    %cst_14 = arith.constant dense<0.000000e+00> : vector<8x8xf32>
    %21 = tpu.matmul %16, %18, %cst_14 {dimension_numbers = #tpu.dot_dimension_numbers<[1], [1], [0], [0], [0, 0, 1, 0], [], []>} : vector<8x8xbf16>, vector<8x8xbf16>, vector<8x8xf32> -> vector<8x8xf32>
    %cst_15 = arith.constant 0.353553385 : f32
    %22 = vector.broadcast %cst_15 : f32 to vector<8x8xf32>
    %23 = arith.mulf %21, %22 : vector<8x8xf32>
    %cst_16 = arith.constant dense<0xFF800000> : vector<8xf32>
    %24 = vector.multi_reduction <maximumf>, %23, %cst_16 [1] : vector<8x8xf32> to vector<8xf32>
    %25 = vector.shape_cast %24 : vector<8xf32> to vector<8x1xf32>
    %26 = vector.broadcast %25 : vector<8x1xf32> to vector<8x8xf32>
    %27 = arith.subf %23, %26 : vector<8x8xf32>
    %28 = math.exp %27 : vector<8x8xf32>
    %cst_17 = arith.constant dense<0.000000e+00> : vector<8xf32>
    %29 = vector.multi_reduction <add>, %28, %cst_17 [1] : vector<8x8xf32> to vector<8xf32>
    %30 = vector.shape_cast %29 : vector<8xf32> to vector<8x1xf32>
    %31 = vector.broadcast %30 : vector<8x1xf32> to vector<8x8xf32>
    %32 = arith.divf %28, %31 : vector<8x8xf32>
    %33 = arith.truncf %32 : vector<8x8xf32> to vector<8x8xbf16>
    %cst_18 = arith.constant dense<0.000000e+00> : vector<8x8xf32>
    %34 = tpu.matmul %33, %20, %cst_18 {dimension_numbers = #tpu.dot_dimension_numbers<[1], [0], [0], [1], [0, 0, 1, 1], [], []>} : vector<8x8xbf16>, vector<8x8xbf16>, vector<8x8xf32> -> vector<8x8xf32>
    %35 = vector.extract_strided_slice %12 {offsets = [0, 8], sizes = [8, 8], strides = [1, 1]} : vector<8x32xf32> to vector<8x8xf32>
    %36 = arith.truncf %35 : vector<8x8xf32> to vector<8x8xbf16>
    %37 = vector.extract_strided_slice %13 {offsets = [0, 8], sizes = [8, 8], strides = [1, 1]} : vector<8x32xf32> to vector<8x8xf32>
    %38 = arith.truncf %37 : vector<8x8xf32> to vector<8x8xbf16>
    %39 = vector.extract_strided_slice %14 {offsets = [0, 8], sizes = [8, 8], strides = [1, 1]} : vector<8x32xf32> to vector<8x8xf32>
    %40 = arith.truncf %39 : vector<8x8xf32> to vector<8x8xbf16>
    %cst_19 = arith.constant dense<0.000000e+00> : vector<8x8xf32>
    %41 = tpu.matmul %36, %38, %cst_19 {dimension_numbers = #tpu.dot_dimension_numbers<[1], [1], [0], [0], [0, 0, 1, 0], [], []>} : vector<8x8xbf16>, vector<8x8xbf16>, vector<8x8xf32> -> vector<8x8xf32>
    %cst_20 = arith.constant 0.353553385 : f32
    %42 = vector.broadcast %cst_20 : f32 to vector<8x8xf32>
    %43 = arith.mulf %41, %42 : vector<8x8xf32>
    %cst_21 = arith.constant dense<0xFF800000> : vector<8xf32>
    %44 = vector.multi_reduction <maximumf>, %43, %cst_21 [1] : vector<8x8xf32> to vector<8xf32>
    %45 = vector.shape_cast %44 : vector<8xf32> to vector<8x1xf32>
    %46 = vector.broadcast %45 : vector<8x1xf32> to vector<8x8xf32>
    %47 = arith.subf %43, %46 : vector<8x8xf32>
    %48 = math.exp %47 : vector<8x8xf32>
    %cst_22 = arith.constant dense<0.000000e+00> : vector<8xf32>
    %49 = vector.multi_reduction <add>, %48, %cst_22 [1] : vector<8x8xf32> to vector<8xf32>
    %50 = vector.shape_cast %49 : vector<8xf32> to vector<8x1xf32>
    %51 = vector.broadcast %50 : vector<8x1xf32> to vector<8x8xf32>
    %52 = arith.divf %48, %51 : vector<8x8xf32>
    %53 = arith.truncf %52 : vector<8x8xf32> to vector<8x8xbf16>
    %cst_23 = arith.constant dense<0.000000e+00> : vector<8x8xf32>
    %54 = tpu.matmul %53, %40, %cst_23 {dimension_numbers = #tpu.dot_dimension_numbers<[1], [0], [0], [1], [0, 0, 1, 1], [], []>} : vector<8x8xbf16>, vector<8x8xbf16>, vector<8x8xf32> -> vector<8x8xf32>
    %55 = vector.extract_strided_slice %12 {offsets = [0, 16], sizes = [8, 8], strides = [1, 1]} : vector<8x32xf32> to vector<8x8xf32>
    %56 = arith.truncf %55 : vector<8x8xf32> to vector<8x8xbf16>
    %57 = vector.extract_strided_slice %13 {offsets = [0, 16], sizes = [8, 8], strides = [1, 1]} : vector<8x32xf32> to vector<8x8xf32>
    %58 = arith.truncf %57 : vector<8x8xf32> to vector<8x8xbf16>
    %59 = vector.extract_strided_slice %14 {offsets = [0, 16], sizes = [8, 8], strides = [1, 1]} : vector<8x32xf32> to vector<8x8xf32>
    %60 = arith.truncf %59 : vector<8x8xf32> to vector<8x8xbf16>
    %cst_24 = arith.constant dense<0.000000e+00> : vector<8x8xf32>
    %61 = tpu.matmul %56, %58, %cst_24 {dimension_numbers = #tpu.dot_dimension_numbers<[1], [1], [0], [0], [0, 0, 1, 0], [], []>} : vector<8x8xbf16>, vector<8x8xbf16>, vector<8x8xf32> -> vector<8x8xf32>
    %cst_25 = arith.constant 0.353553385 : f32
    %62 = vector.broadcast %cst_25 : f32 to vector<8x8xf32>
    %63 = arith.mulf %61, %62 : vector<8x8xf32>
    %cst_26 = arith.constant dense<0xFF800000> : vector<8xf32>
    %64 = vector.multi_reduction <maximumf>, %63, %cst_26 [1] : vector<8x8xf32> to vector<8xf32>
    %65 = vector.shape_cast %64 : vector<8xf32> to vector<8x1xf32>
    %66 = vector.broadcast %65 : vector<8x1xf32> to vector<8x8xf32>
    %67 = arith.subf %63, %66 : vector<8x8xf32>
    %68 = math.exp %67 : vector<8x8xf32>
    %cst_27 = arith.constant dense<0.000000e+00> : vector<8xf32>
    %69 = vector.multi_reduction <add>, %68, %cst_27 [1] : vector<8x8xf32> to vector<8xf32>
    %70 = vector.shape_cast %69 : vector<8xf32> to vector<8x1xf32>
    %71 = vector.broadcast %70 : vector<8x1xf32> to vector<8x8xf32>
    %72 = arith.divf %68, %71 : vector<8x8xf32>
    %73 = arith.truncf %72 : vector<8x8xf32> to vector<8x8xbf16>
    %cst_28 = arith.constant dense<0.000000e+00> : vector<8x8xf32>
    %74 = tpu.matmul %73, %60, %cst_28 {dimension_numbers = #tpu.dot_dimension_numbers<[1], [0], [0], [1], [0, 0, 1, 1], [], []>} : vector<8x8xbf16>, vector<8x8xbf16>, vector<8x8xf32> -> vector<8x8xf32>
    %75 = vector.extract_strided_slice %12 {offsets = [0, 24], sizes = [8, 8], strides = [1, 1]} : vector<8x32xf32> to vector<8x8xf32>
    %76 = arith.truncf %75 : vector<8x8xf32> to vector<8x8xbf16>
    %77 = vector.extract_strided_slice %13 {offsets = [0, 24], sizes = [8, 8], strides = [1, 1]} : vector<8x32xf32> to vector<8x8xf32>
    %78 = arith.truncf %77 : vector<8x8xf32> to vector<8x8xbf16>
    %79 = vector.extract_strided_slice %14 {offsets = [0, 24], sizes = [8, 8], strides = [1, 1]} : vector<8x32xf32> to vector<8x8xf32>
    %80 = arith.truncf %79 : vector<8x8xf32> to vector<8x8xbf16>
    %cst_29 = arith.constant dense<0.000000e+00> : vector<8x8xf32>
    %81 = tpu.matmul %76, %78, %cst_29 {dimension_numbers = #tpu.dot_dimension_numbers<[1], [1], [0], [0], [0, 0, 1, 0], [], []>} : vector<8x8xbf16>, vector<8x8xbf16>, vector<8x8xf32> -> vector<8x8xf32>
    %cst_30 = arith.constant 0.353553385 : f32
    %82 = vector.broadcast %cst_30 : f32 to vector<8x8xf32>
    %83 = arith.mulf %81, %82 : vector<8x8xf32>
    %cst_31 = arith.constant dense<0xFF800000> : vector<8xf32>
    %84 = vector.multi_reduction <maximumf>, %83, %cst_31 [1] : vector<8x8xf32> to vector<8xf32>
    %85 = vector.shape_cast %84 : vector<8xf32> to vector<8x1xf32>
    %86 = vector.broadcast %85 : vector<8x1xf32> to vector<8x8xf32>
    %87 = arith.subf %83, %86 : vector<8x8xf32>
    %88 = math.exp %87 : vector<8x8xf32>
    %cst_32 = arith.constant dense<0.000000e+00> : vector<8xf32>
    %89 = vector.multi_reduction <add>, %88, %cst_32 [1] : vector<8x8xf32> to vector<8xf32>
    %90 = vector.shape_cast %89 : vector<8xf32> to vector<8x1xf32>
    %91 = vector.broadcast %90 : vector<8x1xf32> to vector<8x8xf32>
    %92 = arith.divf %88, %91 : vector<8x8xf32>
    %93 = arith.truncf %92 : vector<8x8xf32> to vector<8x8xbf16>
    %cst_33 = arith.constant dense<0.000000e+00> : vector<8x8xf32>
    %94 = tpu.matmul %93, %80, %cst_33 {dimension_numbers = #tpu.dot_dimension_numbers<[1], [0], [0], [1], [0, 0, 1, 1], [], []>} : vector<8x8xbf16>, vector<8x8xbf16>, vector<8x8xf32> -> vector<8x8xf32>
    %95 = tpu.concatenate %34, %54, %74, %94 in 1 : vector<8x8xf32>, vector<8x8xf32>, vector<8x8xf32>, vector<8x8xf32> -> vector<8x32xf32>
    %96 = arith.truncf %95 : vector<8x32xf32> to vector<8x32xbf16>
    %cst_34 = arith.constant dense<0.000000e+00> : vector<8x32xf32>
    %97 = tpu.matmul %96, %4, %cst_34 {dimension_numbers = #tpu.dot_dimension_numbers<[1], [0], [0], [1], [0, 0, 1, 1], [], []>} : vector<8x32xbf16>, vector<32x32xbf16>, vector<8x32xf32> -> vector<8x32xf32>
    %98 = vector.broadcast %5 : vector<1x32xf32> to vector<8x32xf32>
    %99 = arith.addf %97, %98 : vector<8x32xf32>
    %100 = arith.addf %1, %99 : vector<8x32xf32>
    %cst_35 = arith.constant dense<0.000000e+00> : vector<8xf32>
    %101 = vector.multi_reduction <add>, %100, %cst_35 [1] : vector<8x32xf32> to vector<8xf32>
    %102 = vector.shape_cast %101 : vector<8xf32> to vector<8x1xf32>
    %cst_36 = arith.constant 3.200000e+01 : f32
    %103 = vector.broadcast %cst_36 : f32 to vector<8x1xf32>
    %104 = arith.divf %102, %103 : vector<8x1xf32>
    %105 = vector.broadcast %104 : vector<8x1xf32> to vector<8x32xf32>
    %106 = arith.subf %100, %105 : vector<8x32xf32>
    %107 = arith.mulf %106, %106 : vector<8x32xf32>
    %cst_37 = arith.constant dense<0.000000e+00> : vector<8xf32>
    %108 = vector.multi_reduction <add>, %107, %cst_37 [1] : vector<8x32xf32> to vector<8xf32>
    %109 = vector.shape_cast %108 : vector<8xf32> to vector<8x1xf32>
    %cst_38 = arith.constant 3.200000e+01 : f32
    %110 = vector.broadcast %cst_38 : f32 to vector<8x1xf32>
    %111 = arith.divf %109, %110 : vector<8x1xf32>
    %cst_39 = arith.constant 9.99999974E-6 : f32
    %112 = vector.broadcast %cst_39 : f32 to vector<8x1xf32>
    %113 = arith.addf %111, %112 : vector<8x1xf32>
    %114 = math.rsqrt %113 : vector<8x1xf32>
    %115 = vector.broadcast %114 : vector<8x1xf32> to vector<8x32xf32>
    %116 = arith.mulf %106, %115 : vector<8x32xf32>
    %117 = vector.broadcast %6 : vector<1x32xf32> to vector<8x32xf32>
    %118 = arith.mulf %116, %117 : vector<8x32xf32>
    %119 = vector.broadcast %7 : vector<1x32xf32> to vector<8x32xf32>
    %120 = arith.addf %118, %119 : vector<8x32xf32>
    %c0_40 = arith.constant 0 : index
    %c0_41 = arith.constant 0 : index
    %121 = vector.load %arg8[%c0_40, %c0_41] : memref<32x32xbf16, #tpu.memory_space<vmem>>, vector<32x32xbf16>
    %c0_42 = arith.constant 0 : index
    %c0_43 = arith.constant 0 : index
    %122 = vector.load %arg9[%c0_42, %c0_43] : memref<1x32xf32, #tpu.memory_space<vmem>>, vector<1x32xf32>
    %c0_44 = arith.constant 0 : index
    %c0_45 = arith.constant 0 : index
    %123 = vector.load %arg10[%c0_44, %c0_45] : memref<32x32xbf16, #tpu.memory_space<vmem>>, vector<32x32xbf16>
    %c0_46 = arith.constant 0 : index
    %c0_47 = arith.constant 0 : index
    %124 = vector.load %arg11[%c0_46, %c0_47] : memref<1x32xf32, #tpu.memory_space<vmem>>, vector<1x32xf32>
    %c0_48 = arith.constant 0 : index
    %c0_49 = arith.constant 0 : index
    %125 = vector.load %arg12[%c0_48, %c0_49] : memref<1x32xf32, #tpu.memory_space<vmem>>, vector<1x32xf32>
    %c0_50 = arith.constant 0 : index
    %c0_51 = arith.constant 0 : index
    %126 = vector.load %arg13[%c0_50, %c0_51] : memref<1x32xf32, #tpu.memory_space<vmem>>, vector<1x32xf32>
    %127 = arith.truncf %120 : vector<8x32xf32> to vector<8x32xbf16>
    %cst_52 = arith.constant dense<0.000000e+00> : vector<8x32xf32>
    %128 = tpu.matmul %127, %121, %cst_52 {dimension_numbers = #tpu.dot_dimension_numbers<[1], [0], [0], [1], [0, 0, 1, 1], [], []>} : vector<8x32xbf16>, vector<32x32xbf16>, vector<8x32xf32> -> vector<8x32xf32>
    %129 = vector.broadcast %122 : vector<1x32xf32> to vector<8x32xf32>
    %130 = arith.addf %128, %129 : vector<8x32xf32>
    %cst_53 = arith.constant 0.000000e+00 : f32
    %131 = vector.broadcast %cst_53 : f32 to vector<8x32xf32>
    %132 = arith.maximumf %130, %131 : vector<8x32xf32>
    %133 = arith.truncf %132 : vector<8x32xf32> to vector<8x32xbf16>
    %cst_54 = arith.constant dense<0.000000e+00> : vector<8x32xf32>
    %134 = tpu.matmul %133, %123, %cst_54 {dimension_numbers = #tpu.dot_dimension_numbers<[1], [0], [0], [1], [0, 0, 1, 1], [], []>} : vector<8x32xbf16>, vector<32x32xbf16>, vector<8x32xf32> -> vector<8x32xf32>
    %135 = vector.broadcast %124 : vector<1x32xf32> to vector<8x32xf32>
    %136 = arith.addf %134, %135 : vector<8x32xf32>
    %137 = arith.addf %120, %136 : vector<8x32xf32>
    %cst_55 = arith.constant dense<0.000000e+00> : vector<8xf32>
    %138 = vector.multi_reduction <add>, %137, %cst_55 [1] : vector<8x32xf32> to vector<8xf32>
    %139 = vector.shape_cast %138 : vector<8xf32> to vector<8x1xf32>
    %cst_56 = arith.constant 3.200000e+01 : f32
    %140 = vector.broadcast %cst_56 : f32 to vector<8x1xf32>
    %141 = arith.divf %139, %140 : vector<8x1xf32>
    %142 = vector.broadcast %141 : vector<8x1xf32> to vector<8x32xf32>
    %143 = arith.subf %137, %142 : vector<8x32xf32>
    %144 = arith.mulf %143, %143 : vector<8x32xf32>
    %cst_57 = arith.constant dense<0.000000e+00> : vector<8xf32>
    %145 = vector.multi_reduction <add>, %144, %cst_57 [1] : vector<8x32xf32> to vector<8xf32>
    %146 = vector.shape_cast %145 : vector<8xf32> to vector<8x1xf32>
    %cst_58 = arith.constant 3.200000e+01 : f32
    %147 = vector.broadcast %cst_58 : f32 to vector<8x1xf32>
    %148 = arith.divf %146, %147 : vector<8x1xf32>
    %cst_59 = arith.constant 9.99999974E-6 : f32
    %149 = vector.broadcast %cst_59 : f32 to vector<8x1xf32>
    %150 = arith.addf %148, %149 : vector<8x1xf32>
    %151 = math.rsqrt %150 : vector<8x1xf32>
    %152 = vector.broadcast %151 : vector<8x1xf32> to vector<8x32xf32>
    %153 = arith.mulf %143, %152 : vector<8x32xf32>
    %154 = vector.broadcast %125 : vector<1x32xf32> to vector<8x32xf32>
    %155 = arith.mulf %153, %154 : vector<8x32xf32>
    %156 = vector.broadcast %126 : vector<1x32xf32> to vector<8x32xf32>
    %157 = arith.addf %155, %156 : vector<8x32xf32>
    %c0_60 = arith.constant 0 : index
    %c0_61 = arith.constant 0 : index
    %158 = vector.load %arg14[%c0_60, %c0_61] : memref<1x32xf32, #tpu.memory_space<vmem>>, vector<1x32xf32>
    %c0_62 = arith.constant 0 : index
    %c0_63 = arith.constant 0 : index
    %159 = vector.load %arg15[%c0_62, %c0_63] : memref<1x32xf32, #tpu.memory_space<vmem>>, vector<1x32xf32>
    %cst_64 = arith.constant dense<0.000000e+00> : vector<8xf32>
    %160 = vector.multi_reduction <add>, %157, %cst_64 [1] : vector<8x32xf32> to vector<8xf32>
    %161 = vector.shape_cast %160 : vector<8xf32> to vector<8x1xf32>
    %cst_65 = arith.constant 3.200000e+01 : f32
    %162 = vector.broadcast %cst_65 : f32 to vector<8x1xf32>
    %163 = arith.divf %161, %162 : vector<8x1xf32>
    %164 = vector.broadcast %163 : vector<8x1xf32> to vector<8x32xf32>
    %165 = arith.subf %157, %164 : vector<8x32xf32>
    %166 = arith.mulf %165, %165 : vector<8x32xf32>
    %cst_66 = arith.constant dense<0.000000e+00> : vector<8xf32>
    %167 = vector.multi_reduction <add>, %166, %cst_66 [1] : vector<8x32xf32> to vector<8xf32>
    %168 = vector.shape_cast %167 : vector<8xf32> to vector<8x1xf32>
    %cst_67 = arith.constant 3.200000e+01 : f32
    %169 = vector.broadcast %cst_67 : f32 to vector<8x1xf32>
    %170 = arith.divf %168, %169 : vector<8x1xf32>
    %cst_68 = arith.constant 9.99999974E-6 : f32
    %171 = vector.broadcast %cst_68 : f32 to vector<8x1xf32>
    %172 = arith.addf %170, %171 : vector<8x1xf32>
    %173 = math.rsqrt %172 : vector<8x1xf32>
    %174 = vector.broadcast %173 : vector<8x1xf32> to vector<8x32xf32>
    %175 = arith.mulf %165, %174 : vector<8x32xf32>
    %176 = vector.broadcast %158 : vector<1x32xf32> to vector<8x32xf32>
    %177 = arith.mulf %175, %176 : vector<8x32xf32>
    %178 = vector.broadcast %159 : vector<1x32xf32> to vector<8x32xf32>
    %179 = arith.addf %177, %178 : vector<8x32xf32>
    %c0_69 = arith.constant 0 : index
    %c0_70 = arith.constant 0 : index
    %c0_71 = arith.constant 0 : index
    %180 = vector.load %arg16[%c0_69, %c0_70, %c0_71] : memref<1x8x32xf32, #tpu.memory_space<vmem>>, vector<1x8x32xf32>
    %181 = vector.shape_cast %180 : vector<1x8x32xf32> to vector<8x32xf32>
    %182 = vector.shape_cast %179 : vector<8x32xf32> to vector<1x8x32xf32>
    tpu.vector_store %arg16[%c0_69, %c0_70, %c0_71], %182 {strides = array<i32>} : memref<1x8x32xf32, #tpu.memory_space<vmem>>, vector<1x8x32xf32>,
    return
  }
  func.func @transform_0(%arg0: i32) -> (i32, i32, i32) {
    %c0_i32 = arith.constant 0 : i32
    %c0_i32_0 = arith.constant 0 : i32
    %c0_i32_1 = arith.constant 0 : i32
    return %arg0, %c0_i32, %c0_i32_0 : i32, i32, i32
  }
  func.func @transform_1(%arg0: i32) -> (i32, i32) {
    %c0_i32 = arith.constant 0 : i32
    %c0_i32_0 = arith.constant 0 : i32
    %c0_i32_1 = arith.constant 0 : i32
    return %c0_i32, %c0_i32_0 : i32, i32
  }
  func.func @transform_2(%arg0: i32) -> (i32, i32) {
    %c0_i32 = arith.constant 0 : i32
    %c0_i32_0 = arith.constant 0 : i32
    %c0_i32_1 = arith.constant 0 : i32
    return %c0_i32, %c0_i32_0 : i32, i32
  }
  func.func @transform_3(%arg0: i32) -> (i32, i32) {
    %c0_i32 = arith.constant 0 : i32
    %c0_i32_0 = arith.constant 0 : i32
    %c0_i32_1 = arith.constant 0 : i32
    return %c0_i32, %c0_i32_0 : i32, i32
  }
  func.func @transform_4(%arg0: i32) -> (i32, i32) {
    %c0_i32 = arith.constant 0 : i32
    %c0_i32_0 = arith.constant 0 : i32
    %c0_i32_1 = arith.constant 0 : i32
    return %c0_i32, %c0_i32_0 : i32, i32
  }
  func.func @transform_5(%arg0: i32) -> (i32, i32) {
    %c0_i32 = arith.constant 0 : i32
    %c0_i32_0 = arith.constant 0 : i32
    %c0_i32_1 = arith.constant 0 : i32
    return %c0_i32, %c0_i32_0 : i32, i32
  }
  func.func @transform_6(%arg0: i32) -> (i32, i32) {
    %c0_i32 = arith.constant 0 : i32
    %c0_i32_0 = arith.constant 0 : i32
    %c0_i32_1 = arith.constant 0 : i32
    return %c0_i32, %c0_i32_0 : i32, i32
  }
  func.func @transform_7(%arg0: i32) -> (i32, i32) {
    %c0_i32 = arith.constant 0 : i32
    %c0_i32_0 = arith.constant 0 : i32
    %c0_i32_1 = arith.constant 0 : i32
    return %c0_i32, %c0_i32_0 : i32, i32
  }
  func.func @transform_8(%arg0: i32) -> (i32, i32) {
    %c0_i32 = arith.constant 0 : i32
    %c0_i32_0 = arith.constant 0 : i32
    %c0_i32_1 = arith.constant 0 : i32
    return %c0_i32, %c0_i32_0 : i32, i32
  }
  func.func @transform_9(%arg0: i32) -> (i32, i32) {
    %c0_i32 = arith.constant 0 : i32
    %c0_i32_0 = arith.constant 0 : i32
    %c0_i32_1 = arith.constant 0 : i32
    return %c0_i32, %c0_i32_0 : i32, i32
  }
  func.func @transform_10(%arg0: i32) -> (i32, i32) {
    %c0_i32 = arith.constant 0 : i32
    %c0_i32_0 = arith.constant 0 : i32
    %c0_i32_1 = arith.constant 0 : i32
    return %c0_i32, %c0_i32_0 : i32, i32
  }
  func.func @transform_11(%arg0: i32) -> (i32, i32) {
    %c0_i32 = arith.constant 0 : i32
    %c0_i32_0 = arith.constant 0 : i32
    %c0_i32_1 = arith.constant 0 : i32
    return %c0_i32, %c0_i32_0 : i32, i32
  }
  func.func @transform_12(%arg0: i32) -> (i32, i32) {
    %c0_i32 = arith.constant 0 : i32
    %c0_i32_0 = arith.constant 0 : i32
    %c0_i32_1 = arith.constant 0 : i32
    return %c0_i32, %c0_i32_0 : i32, i32
  }
  func.func @transform_13(%arg0: i32) -> (i32, i32) {
    %c0_i32 = arith.constant 0 : i32
    %c0_i32_0 = arith.constant 0 : i32
    %c0_i32_1 = arith.constant 0 : i32
    return %c0_i32, %c0_i32_0 : i32, i32
  }
  func.func @transform_14(%arg0: i32) -> (i32, i32) {
    %c0_i32 = arith.constant 0 : i32
    %c0_i32_0 = arith.constant 0 : i32
    %c0_i32_1 = arith.constant 0 : i32
    return %c0_i32, %c0_i32_0 : i32, i32
  }
  func.func @transform_15(%arg0: i32) -> (i32, i32, i32) {
    %c0_i32 = arith.constant 0 : i32
    %c0_i32_0 = arith.constant 0 : i32
    %c0_i32_1 = arith.constant 0 : i32
    return %arg0, %c0_i32, %c0_i32_0 : i32, i32, i32
  }
}

module attributes {stable_mosaic.version = 11 : i64} {
  func.func @_embed_kernel(%arg0: i32, %arg1: memref<1x8x4xf32, #tpu.memory_space<vmem>>, %arg2: memref<1x8x4xf32, #tpu.memory_space<vmem>>, %arg3: memref<16x32xbf16, #tpu.memory_space<vmem>>, %arg4: memref<8x32xf32, #tpu.memory_space<vmem>>, %arg5: memref<1x8x32xf32, #tpu.memory_space<vmem>>) attributes {dimension_semantics = [#tpu.dimension_semantics<parallel>], iteration_bounds = array<i64: 2>, scalar_prefetch = 0 : i64, scratch_operands = 0 : i64, tpu.core_type = #tpu.core_type<tc>, window_params = [{transform_indices = @transform_0, window_bounds = array<i64: 1, 8, 4>}, {transform_indices = @transform_1, window_bounds = array<i64: 1, 8, 4>}, {pipeline_mode = #tpu.pipeline_mode<synchronous>, transform_indices = @transform_2, window_bounds = array<i64: 16, 32>}, {pipeline_mode = #tpu.pipeline_mode<synchronous>, transform_indices = @transform_3, window_bounds = array<i64: 8, 32>}, {transform_indices = @transform_4, window_bounds = array<i64: 1, 8, 32>}]} {
    %c0 = arith.constant 0 : index
    %c0_0 = arith.constant 0 : index
    %c0_1 = arith.constant 0 : index
    %0 = vector.load %arg1[%c0, %c0_0, %c0_1] : memref<1x8x4xf32, #tpu.memory_space<vmem>>, vector<1x8x4xf32>
    %1 = vector.shape_cast %0 : vector<1x8x4xf32> to vector<8x4xf32>
    %c1_i32 = arith.constant 1 : i32
    %2 = tpu.dynamic_rotate %1 by %c1_i32 dim 0 : vector<8x4xf32>, i32 -> vector<8x4xf32>
    %c7_i32 = arith.constant 7 : i32
    %3 = tpu.dynamic_rotate %1 by %c7_i32 dim 0 : vector<8x4xf32>, i32 -> vector<8x4xf32>
    %c0_2 = arith.constant 0 : index
    %c0_3 = arith.constant 0 : index
    %c0_4 = arith.constant 0 : index
    %4 = vector.load %arg2[%c0_2, %c0_3, %c0_4] : memref<1x8x4xf32, #tpu.memory_space<vmem>>, vector<1x8x4xf32>
    %5 = vector.shape_cast %4 : vector<1x8x4xf32> to vector<8x4xf32>
    %6 = tpu.concatenate %2, %1, %3, %5 in 1 : vector<8x4xf32>, vector<8x4xf32>, vector<8x4xf32>, vector<8x4xf32> -> vector<8x16xf32>
    %7 = arith.truncf %6 : vector<8x16xf32> to vector<8x16xbf16>
    %c0_5 = arith.constant 0 : index
    %c0_6 = arith.constant 0 : index
    %8 = vector.load %arg3[%c0_5, %c0_6] : memref<16x32xbf16, #tpu.memory_space<vmem>>, vector<16x32xbf16>
    %cst = arith.constant dense<0.000000e+00> : vector<8x32xf32>
    %9 = tpu.matmul %7, %8, %cst {dimension_numbers = #tpu.dot_dimension_numbers<[1], [0], [0], [1], [0, 0, 1, 1], [], []>} : vector<8x16xbf16>, vector<16x32xbf16>, vector<8x32xf32> -> vector<8x32xf32>
    %c0_7 = arith.constant 0 : index
    %c0_8 = arith.constant 0 : index
    %10 = vector.load %arg4[%c0_7, %c0_8] : memref<8x32xf32, #tpu.memory_space<vmem>>, vector<8x32xf32>
    %11 = arith.addf %9, %10 : vector<8x32xf32>
    %c0_9 = arith.constant 0 : index
    %c0_10 = arith.constant 0 : index
    %c0_11 = arith.constant 0 : index
    %12 = vector.load %arg5[%c0_9, %c0_10, %c0_11] : memref<1x8x32xf32, #tpu.memory_space<vmem>>, vector<1x8x32xf32>
    %13 = vector.shape_cast %12 : vector<1x8x32xf32> to vector<8x32xf32>
    %14 = vector.shape_cast %11 : vector<8x32xf32> to vector<1x8x32xf32>
    tpu.vector_store %arg5[%c0_9, %c0_10, %c0_11], %14 {strides = array<i32>} : memref<1x8x32xf32, #tpu.memory_space<vmem>>, vector<1x8x32xf32>,
    return
  }
  func.func @transform_0(%arg0: i32) -> (i32, i32, i32) {
    %c0_i32 = arith.constant 0 : i32
    %c0_i32_0 = arith.constant 0 : i32
    %c0_i32_1 = arith.constant 0 : i32
    return %arg0, %c0_i32, %c0_i32_0 : i32, i32, i32
  }
  func.func @transform_1(%arg0: i32) -> (i32, i32, i32) {
    %c0_i32 = arith.constant 0 : i32
    %c0_i32_0 = arith.constant 0 : i32
    %c0_i32_1 = arith.constant 0 : i32
    return %arg0, %c0_i32, %c0_i32_0 : i32, i32, i32
  }
  func.func @transform_2(%arg0: i32) -> (i32, i32) {
    %c0_i32 = arith.constant 0 : i32
    %c0_i32_0 = arith.constant 0 : i32
    %c0_i32_1 = arith.constant 0 : i32
    return %c0_i32, %c0_i32_0 : i32, i32
  }
  func.func @transform_3(%arg0: i32) -> (i32, i32) {
    %c0_i32 = arith.constant 0 : i32
    %c0_i32_0 = arith.constant 0 : i32
    %c0_i32_1 = arith.constant 0 : i32
    return %c0_i32, %c0_i32_0 : i32, i32
  }
  func.func @transform_4(%arg0: i32) -> (i32, i32, i32) {
    %c0_i32 = arith.constant 0 : i32
    %c0_i32_0 = arith.constant 0 : i32
    %c0_i32_1 = arith.constant 0 : i32
    return %arg0, %c0_i32, %c0_i32_0 : i32, i32, i32
  }
}

module attributes {stable_mosaic.version = 11 : i64} {
  func.func @_dec_layer_proj_kernel(%arg0: i32, %arg1: memref<1x8x32xf32, #tpu.memory_space<vmem>>, %arg2: memref<1x8x32xf32, #tpu.memory_space<vmem>>, %arg3: memref<8x8xf32, #tpu.memory_space<vmem>>, %arg4: memref<32x96xbf16, #tpu.memory_space<vmem>>, %arg5: memref<1x96xf32, #tpu.memory_space<vmem>>, %arg6: memref<32x32xbf16, #tpu.memory_space<vmem>>, %arg7: memref<1x32xf32, #tpu.memory_space<vmem>>, %arg8: memref<1x32xf32, #tpu.memory_space<vmem>>, %arg9: memref<1x32xf32, #tpu.memory_space<vmem>>, %arg10: memref<32x32xbf16, #tpu.memory_space<vmem>>, %arg11: memref<1x32xf32, #tpu.memory_space<vmem>>, %arg12: memref<32x64xbf16, #tpu.memory_space<vmem>>, %arg13: memref<1x64xf32, #tpu.memory_space<vmem>>, %arg14: memref<32x32xbf16, #tpu.memory_space<vmem>>, %arg15: memref<1x32xf32, #tpu.memory_space<vmem>>, %arg16: memref<1x32xf32, #tpu.memory_space<vmem>>, %arg17: memref<1x32xf32, #tpu.memory_space<vmem>>, %arg18: memref<32x32xbf16, #tpu.memory_space<vmem>>, %arg19: memref<1x32xf32, #tpu.memory_space<vmem>>, %arg20: memref<32x32xbf16, #tpu.memory_space<vmem>>, %arg21: memref<1x32xf32, #tpu.memory_space<vmem>>, %arg22: memref<1x32xf32, #tpu.memory_space<vmem>>, %arg23: memref<1x32xf32, #tpu.memory_space<vmem>>, %arg24: memref<1x32xf32, #tpu.memory_space<vmem>>, %arg25: memref<1x32xf32, #tpu.memory_space<vmem>>, %arg26: memref<32x4xbf16, #tpu.memory_space<vmem>>, %arg27: memref<1x4xf32, #tpu.memory_space<vmem>>, %arg28: memref<1x8x4xf32, #tpu.memory_space<vmem>>) attributes {dimension_semantics = [#tpu.dimension_semantics<parallel>], iteration_bounds = array<i64: 2>, scalar_prefetch = 0 : i64, scratch_operands = 0 : i64, tpu.core_type = #tpu.core_type<tc>, window_params = [{transform_indices = @transform_0, window_bounds = array<i64: 1, 8, 32>}, {transform_indices = @transform_1, window_bounds = array<i64: 1, 8, 32>}, {pipeline_mode = #tpu.pipeline_mode<synchronous>, transform_indices = @transform_2, window_bounds = array<i64: 8, 8>}, {pipeline_mode = #tpu.pipeline_mode<synchronous>, transform_indices = @transform_3, window_bounds = array<i64: 32, 96>}, {pipeline_mode = #tpu.pipeline_mode<synchronous>, transform_indices = @transform_4, window_bounds = array<i64: 1, 96>}, {pipeline_mode = #tpu.pipeline_mode<synchronous>, transform_indices = @transform_5, window_bounds = array<i64: 32, 32>}, {pipeline_mode = #tpu.pipeline_mode<synchronous>, transform_indices = @transform_6, window_bounds = array<i64: 1, 32>}, {pipeline_mode = #tpu.pipeline_mode<synchronous>, transform_indices = @transform_7, window_bounds = array<i64: 1, 32>}, {pipeline_mode = #tpu.pipeline_mode<synchronous>, transform_indices = @transform_8, window_bounds = array<i64: 1, 32>}, {pipeline_mode = #tpu.pipeline_mode<synchronous>, transform_indices = @transform_9, window_bounds = array<i64: 32, 32>}, {pipeline_mode = #tpu.pipeline_mode<synchronous>, transform_indices = @transform_10, window_bounds = array<i64: 1, 32>}, {pipeline_mode = #tpu.pipeline_mode<synchronous>, transform_indices = @transform_11, window_bounds = array<i64: 32, 64>}, {pipeline_mode = #tpu.pipeline_mode<synchronous>, transform_indices = @transform_12, window_bounds = array<i64: 1, 64>}, {pipeline_mode = #tpu.pipeline_mode<synchronous>, transform_indices = @transform_13, window_bounds = array<i64: 32, 32>}, {pipeline_mode = #tpu.pipeline_mode<synchronous>, transform_indices = @transform_14, window_bounds = array<i64: 1, 32>}, {pipeline_mode = #tpu.pipeline_mode<synchronous>, transform_indices = @transform_15, window_bounds = array<i64: 1, 32>}, {pipeline_mode = #tpu.pipeline_mode<synchronous>, transform_indices = @transform_16, window_bounds = array<i64: 1, 32>}, {pipeline_mode = #tpu.pipeline_mode<synchronous>, transform_indices = @transform_17, window_bounds = array<i64: 32, 32>}, {pipeline_mode = #tpu.pipeline_mode<synchronous>, transform_indices = @transform_18, window_bounds = array<i64: 1, 32>}, {pipeline_mode = #tpu.pipeline_mode<synchronous>, transform_indices = @transform_19, window_bounds = array<i64: 32, 32>}, {pipeline_mode = #tpu.pipeline_mode<synchronous>, transform_indices = @transform_20, window_bounds = array<i64: 1, 32>}, {pipeline_mode = #tpu.pipeline_mode<synchronous>, transform_indices = @transform_21, window_bounds = array<i64: 1, 32>}, {pipeline_mode = #tpu.pipeline_mode<synchronous>, transform_indices = @transform_22, window_bounds = array<i64: 1, 32>}, {pipeline_mode = #tpu.pipeline_mode<synchronous>, transform_indices = @transform_23, window_bounds = array<i64: 1, 32>}, {pipeline_mode = #tpu.pipeline_mode<synchronous>, transform_indices = @transform_24, window_bounds = array<i64: 1, 32>}, {pipeline_mode = #tpu.pipeline_mode<synchronous>, transform_indices = @transform_25, window_bounds = array<i64: 32, 4>}, {pipeline_mode = #tpu.pipeline_mode<synchronous>, transform_indices = @transform_26, window_bounds = array<i64: 1, 4>}, {transform_indices = @transform_27, window_bounds = array<i64: 1, 8, 4>}]} {
    %c0 = arith.constant 0 : index
    %c0_0 = arith.constant 0 : index
    %c0_1 = arith.constant 0 : index
    %0 = vector.load %arg1[%c0, %c0_0, %c0_1] : memref<1x8x32xf32, #tpu.memory_space<vmem>>, vector<1x8x32xf32>
    %1 = vector.shape_cast %0 : vector<1x8x32xf32> to vector<8x32xf32>
    %c0_2 = arith.constant 0 : index
    %c0_3 = arith.constant 0 : index
    %c0_4 = arith.constant 0 : index
    %2 = vector.load %arg2[%c0_2, %c0_3, %c0_4] : memref<1x8x32xf32, #tpu.memory_space<vmem>>, vector<1x8x32xf32>
    %3 = vector.shape_cast %2 : vector<1x8x32xf32> to vector<8x32xf32>
    %c0_5 = arith.constant 0 : index
    %c0_6 = arith.constant 0 : index
    %4 = vector.load %arg3[%c0_5, %c0_6] : memref<8x8xf32, #tpu.memory_space<vmem>>, vector<8x8xf32>
    %c0_7 = arith.constant 0 : index
    %c0_8 = arith.constant 0 : index
    %5 = vector.load %arg4[%c0_7, %c0_8] : memref<32x96xbf16, #tpu.memory_space<vmem>>, vector<32x96xbf16>
    %c0_9 = arith.constant 0 : index
    %c0_10 = arith.constant 0 : index
    %6 = vector.load %arg5[%c0_9, %c0_10] : memref<1x96xf32, #tpu.memory_space<vmem>>, vector<1x96xf32>
    %c0_11 = arith.constant 0 : index
    %c0_12 = arith.constant 0 : index
    %7 = vector.load %arg6[%c0_11, %c0_12] : memref<32x32xbf16, #tpu.memory_space<vmem>>, vector<32x32xbf16>
    %c0_13 = arith.constant 0 : index
    %c0_14 = arith.constant 0 : index
    %8 = vector.load %arg7[%c0_13, %c0_14] : memref<1x32xf32, #tpu.memory_space<vmem>>, vector<1x32xf32>
    %c0_15 = arith.constant 0 : index
    %c0_16 = arith.constant 0 : index
    %9 = vector.load %arg8[%c0_15, %c0_16] : memref<1x32xf32, #tpu.memory_space<vmem>>, vector<1x32xf32>
    %c0_17 = arith.constant 0 : index
    %c0_18 = arith.constant 0 : index
    %10 = vector.load %arg9[%c0_17, %c0_18] : memref<1x32xf32, #tpu.memory_space<vmem>>, vector<1x32xf32>
    %11 = arith.truncf %1 : vector<8x32xf32> to vector<8x32xbf16>
    %cst = arith.constant dense<0.000000e+00> : vector<8x96xf32>
    %12 = tpu.matmul %11, %5, %cst {dimension_numbers = #tpu.dot_dimension_numbers<[1], [0], [0], [1], [0, 0, 1, 1], [], []>} : vector<8x32xbf16>, vector<32x96xbf16>, vector<8x96xf32> -> vector<8x96xf32>
    %13 = vector.broadcast %6 : vector<1x96xf32> to vector<8x96xf32>
    %14 = arith.addf %12, %13 : vector<8x96xf32>
    %15 = vector.extract_strided_slice %14 {offsets = [0, 0], sizes = [8, 32], strides = [1, 1]} : vector<8x96xf32> to vector<8x32xf32>
    %16 = vector.extract_strided_slice %14 {offsets = [0, 32], sizes = [8, 32], strides = [1, 1]} : vector<8x96xf32> to vector<8x32xf32>
    %17 = vector.extract_strided_slice %14 {offsets = [0, 64], sizes = [8, 32], strides = [1, 1]} : vector<8x96xf32> to vector<8x32xf32>
    %18 = vector.extract_strided_slice %15 {offsets = [0, 0], sizes = [8, 8], strides = [1, 1]} : vector<8x32xf32> to vector<8x8xf32>
    %19 = arith.truncf %18 : vector<8x8xf32> to vector<8x8xbf16>
    %20 = vector.extract_strided_slice %16 {offsets = [0, 0], sizes = [8, 8], strides = [1, 1]} : vector<8x32xf32> to vector<8x8xf32>
    %21 = arith.truncf %20 : vector<8x8xf32> to vector<8x8xbf16>
    %22 = vector.extract_strided_slice %17 {offsets = [0, 0], sizes = [8, 8], strides = [1, 1]} : vector<8x32xf32> to vector<8x8xf32>
    %23 = arith.truncf %22 : vector<8x8xf32> to vector<8x8xbf16>
    %cst_19 = arith.constant dense<0.000000e+00> : vector<8x8xf32>
    %24 = tpu.matmul %19, %21, %cst_19 {dimension_numbers = #tpu.dot_dimension_numbers<[1], [1], [0], [0], [0, 0, 1, 0], [], []>} : vector<8x8xbf16>, vector<8x8xbf16>, vector<8x8xf32> -> vector<8x8xf32>
    %cst_20 = arith.constant 0.353553385 : f32
    %25 = vector.broadcast %cst_20 : f32 to vector<8x8xf32>
    %26 = arith.mulf %24, %25 : vector<8x8xf32>
    %27 = arith.addf %26, %4 : vector<8x8xf32>
    %cst_21 = arith.constant dense<0xFF800000> : vector<8xf32>
    %28 = vector.multi_reduction <maximumf>, %27, %cst_21 [1] : vector<8x8xf32> to vector<8xf32>
    %29 = vector.shape_cast %28 : vector<8xf32> to vector<8x1xf32>
    %30 = vector.broadcast %29 : vector<8x1xf32> to vector<8x8xf32>
    %31 = arith.subf %27, %30 : vector<8x8xf32>
    %32 = math.exp %31 : vector<8x8xf32>
    %cst_22 = arith.constant dense<0.000000e+00> : vector<8xf32>
    %33 = vector.multi_reduction <add>, %32, %cst_22 [1] : vector<8x8xf32> to vector<8xf32>
    %34 = vector.shape_cast %33 : vector<8xf32> to vector<8x1xf32>
    %35 = vector.broadcast %34 : vector<8x1xf32> to vector<8x8xf32>
    %36 = arith.divf %32, %35 : vector<8x8xf32>
    %37 = arith.truncf %36 : vector<8x8xf32> to vector<8x8xbf16>
    %cst_23 = arith.constant dense<0.000000e+00> : vector<8x8xf32>
    %38 = tpu.matmul %37, %23, %cst_23 {dimension_numbers = #tpu.dot_dimension_numbers<[1], [0], [0], [1], [0, 0, 1, 1], [], []>} : vector<8x8xbf16>, vector<8x8xbf16>, vector<8x8xf32> -> vector<8x8xf32>
    %39 = vector.extract_strided_slice %15 {offsets = [0, 8], sizes = [8, 8], strides = [1, 1]} : vector<8x32xf32> to vector<8x8xf32>
    %40 = arith.truncf %39 : vector<8x8xf32> to vector<8x8xbf16>
    %41 = vector.extract_strided_slice %16 {offsets = [0, 8], sizes = [8, 8], strides = [1, 1]} : vector<8x32xf32> to vector<8x8xf32>
    %42 = arith.truncf %41 : vector<8x8xf32> to vector<8x8xbf16>
    %43 = vector.extract_strided_slice %17 {offsets = [0, 8], sizes = [8, 8], strides = [1, 1]} : vector<8x32xf32> to vector<8x8xf32>
    %44 = arith.truncf %43 : vector<8x8xf32> to vector<8x8xbf16>
    %cst_24 = arith.constant dense<0.000000e+00> : vector<8x8xf32>
    %45 = tpu.matmul %40, %42, %cst_24 {dimension_numbers = #tpu.dot_dimension_numbers<[1], [1], [0], [0], [0, 0, 1, 0], [], []>} : vector<8x8xbf16>, vector<8x8xbf16>, vector<8x8xf32> -> vector<8x8xf32>
    %cst_25 = arith.constant 0.353553385 : f32
    %46 = vector.broadcast %cst_25 : f32 to vector<8x8xf32>
    %47 = arith.mulf %45, %46 : vector<8x8xf32>
    %48 = arith.addf %47, %4 : vector<8x8xf32>
    %cst_26 = arith.constant dense<0xFF800000> : vector<8xf32>
    %49 = vector.multi_reduction <maximumf>, %48, %cst_26 [1] : vector<8x8xf32> to vector<8xf32>
    %50 = vector.shape_cast %49 : vector<8xf32> to vector<8x1xf32>
    %51 = vector.broadcast %50 : vector<8x1xf32> to vector<8x8xf32>
    %52 = arith.subf %48, %51 : vector<8x8xf32>
    %53 = math.exp %52 : vector<8x8xf32>
    %cst_27 = arith.constant dense<0.000000e+00> : vector<8xf32>
    %54 = vector.multi_reduction <add>, %53, %cst_27 [1] : vector<8x8xf32> to vector<8xf32>
    %55 = vector.shape_cast %54 : vector<8xf32> to vector<8x1xf32>
    %56 = vector.broadcast %55 : vector<8x1xf32> to vector<8x8xf32>
    %57 = arith.divf %53, %56 : vector<8x8xf32>
    %58 = arith.truncf %57 : vector<8x8xf32> to vector<8x8xbf16>
    %cst_28 = arith.constant dense<0.000000e+00> : vector<8x8xf32>
    %59 = tpu.matmul %58, %44, %cst_28 {dimension_numbers = #tpu.dot_dimension_numbers<[1], [0], [0], [1], [0, 0, 1, 1], [], []>} : vector<8x8xbf16>, vector<8x8xbf16>, vector<8x8xf32> -> vector<8x8xf32>
    %60 = vector.extract_strided_slice %15 {offsets = [0, 16], sizes = [8, 8], strides = [1, 1]} : vector<8x32xf32> to vector<8x8xf32>
    %61 = arith.truncf %60 : vector<8x8xf32> to vector<8x8xbf16>
    %62 = vector.extract_strided_slice %16 {offsets = [0, 16], sizes = [8, 8], strides = [1, 1]} : vector<8x32xf32> to vector<8x8xf32>
    %63 = arith.truncf %62 : vector<8x8xf32> to vector<8x8xbf16>
    %64 = vector.extract_strided_slice %17 {offsets = [0, 16], sizes = [8, 8], strides = [1, 1]} : vector<8x32xf32> to vector<8x8xf32>
    %65 = arith.truncf %64 : vector<8x8xf32> to vector<8x8xbf16>
    %cst_29 = arith.constant dense<0.000000e+00> : vector<8x8xf32>
    %66 = tpu.matmul %61, %63, %cst_29 {dimension_numbers = #tpu.dot_dimension_numbers<[1], [1], [0], [0], [0, 0, 1, 0], [], []>} : vector<8x8xbf16>, vector<8x8xbf16>, vector<8x8xf32> -> vector<8x8xf32>
    %cst_30 = arith.constant 0.353553385 : f32
    %67 = vector.broadcast %cst_30 : f32 to vector<8x8xf32>
    %68 = arith.mulf %66, %67 : vector<8x8xf32>
    %69 = arith.addf %68, %4 : vector<8x8xf32>
    %cst_31 = arith.constant dense<0xFF800000> : vector<8xf32>
    %70 = vector.multi_reduction <maximumf>, %69, %cst_31 [1] : vector<8x8xf32> to vector<8xf32>
    %71 = vector.shape_cast %70 : vector<8xf32> to vector<8x1xf32>
    %72 = vector.broadcast %71 : vector<8x1xf32> to vector<8x8xf32>
    %73 = arith.subf %69, %72 : vector<8x8xf32>
    %74 = math.exp %73 : vector<8x8xf32>
    %cst_32 = arith.constant dense<0.000000e+00> : vector<8xf32>
    %75 = vector.multi_reduction <add>, %74, %cst_32 [1] : vector<8x8xf32> to vector<8xf32>
    %76 = vector.shape_cast %75 : vector<8xf32> to vector<8x1xf32>
    %77 = vector.broadcast %76 : vector<8x1xf32> to vector<8x8xf32>
    %78 = arith.divf %74, %77 : vector<8x8xf32>
    %79 = arith.truncf %78 : vector<8x8xf32> to vector<8x8xbf16>
    %cst_33 = arith.constant dense<0.000000e+00> : vector<8x8xf32>
    %80 = tpu.matmul %79, %65, %cst_33 {dimension_numbers = #tpu.dot_dimension_numbers<[1], [0], [0], [1], [0, 0, 1, 1], [], []>} : vector<8x8xbf16>, vector<8x8xbf16>, vector<8x8xf32> -> vector<8x8xf32>
    %81 = vector.extract_strided_slice %15 {offsets = [0, 24], sizes = [8, 8], strides = [1, 1]} : vector<8x32xf32> to vector<8x8xf32>
    %82 = arith.truncf %81 : vector<8x8xf32> to vector<8x8xbf16>
    %83 = vector.extract_strided_slice %16 {offsets = [0, 24], sizes = [8, 8], strides = [1, 1]} : vector<8x32xf32> to vector<8x8xf32>
    %84 = arith.truncf %83 : vector<8x8xf32> to vector<8x8xbf16>
    %85 = vector.extract_strided_slice %17 {offsets = [0, 24], sizes = [8, 8], strides = [1, 1]} : vector<8x32xf32> to vector<8x8xf32>
    %86 = arith.truncf %85 : vector<8x8xf32> to vector<8x8xbf16>
    %cst_34 = arith.constant dense<0.000000e+00> : vector<8x8xf32>
    %87 = tpu.matmul %82, %84, %cst_34 {dimension_numbers = #tpu.dot_dimension_numbers<[1], [1], [0], [0], [0, 0, 1, 0], [], []>} : vector<8x8xbf16>, vector<8x8xbf16>, vector<8x8xf32> -> vector<8x8xf32>
    %cst_35 = arith.constant 0.353553385 : f32
    %88 = vector.broadcast %cst_35 : f32 to vector<8x8xf32>
    %89 = arith.mulf %87, %88 : vector<8x8xf32>
    %90 = arith.addf %89, %4 : vector<8x8xf32>
    %cst_36 = arith.constant dense<0xFF800000> : vector<8xf32>
    %91 = vector.multi_reduction <maximumf>, %90, %cst_36 [1] : vector<8x8xf32> to vector<8xf32>
    %92 = vector.shape_cast %91 : vector<8xf32> to vector<8x1xf32>
    %93 = vector.broadcast %92 : vector<8x1xf32> to vector<8x8xf32>
    %94 = arith.subf %90, %93 : vector<8x8xf32>
    %95 = math.exp %94 : vector<8x8xf32>
    %cst_37 = arith.constant dense<0.000000e+00> : vector<8xf32>
    %96 = vector.multi_reduction <add>, %95, %cst_37 [1] : vector<8x8xf32> to vector<8xf32>
    %97 = vector.shape_cast %96 : vector<8xf32> to vector<8x1xf32>
    %98 = vector.broadcast %97 : vector<8x1xf32> to vector<8x8xf32>
    %99 = arith.divf %95, %98 : vector<8x8xf32>
    %100 = arith.truncf %99 : vector<8x8xf32> to vector<8x8xbf16>
    %cst_38 = arith.constant dense<0.000000e+00> : vector<8x8xf32>
    %101 = tpu.matmul %100, %86, %cst_38 {dimension_numbers = #tpu.dot_dimension_numbers<[1], [0], [0], [1], [0, 0, 1, 1], [], []>} : vector<8x8xbf16>, vector<8x8xbf16>, vector<8x8xf32> -> vector<8x8xf32>
    %102 = tpu.concatenate %38, %59, %80, %101 in 1 : vector<8x8xf32>, vector<8x8xf32>, vector<8x8xf32>, vector<8x8xf32> -> vector<8x32xf32>
    %103 = arith.truncf %102 : vector<8x32xf32> to vector<8x32xbf16>
    %cst_39 = arith.constant dense<0.000000e+00> : vector<8x32xf32>
    %104 = tpu.matmul %103, %7, %cst_39 {dimension_numbers = #tpu.dot_dimension_numbers<[1], [0], [0], [1], [0, 0, 1, 1], [], []>} : vector<8x32xbf16>, vector<32x32xbf16>, vector<8x32xf32> -> vector<8x32xf32>
    %105 = vector.broadcast %8 : vector<1x32xf32> to vector<8x32xf32>
    %106 = arith.addf %104, %105 : vector<8x32xf32>
    %107 = arith.addf %1, %106 : vector<8x32xf32>
    %cst_40 = arith.constant dense<0.000000e+00> : vector<8xf32>
    %108 = vector.multi_reduction <add>, %107, %cst_40 [1] : vector<8x32xf32> to vector<8xf32>
    %109 = vector.shape_cast %108 : vector<8xf32> to vector<8x1xf32>
    %cst_41 = arith.constant 3.200000e+01 : f32
    %110 = vector.broadcast %cst_41 : f32 to vector<8x1xf32>
    %111 = arith.divf %109, %110 : vector<8x1xf32>
    %112 = vector.broadcast %111 : vector<8x1xf32> to vector<8x32xf32>
    %113 = arith.subf %107, %112 : vector<8x32xf32>
    %114 = arith.mulf %113, %113 : vector<8x32xf32>
    %cst_42 = arith.constant dense<0.000000e+00> : vector<8xf32>
    %115 = vector.multi_reduction <add>, %114, %cst_42 [1] : vector<8x32xf32> to vector<8xf32>
    %116 = vector.shape_cast %115 : vector<8xf32> to vector<8x1xf32>
    %cst_43 = arith.constant 3.200000e+01 : f32
    %117 = vector.broadcast %cst_43 : f32 to vector<8x1xf32>
    %118 = arith.divf %116, %117 : vector<8x1xf32>
    %cst_44 = arith.constant 9.99999974E-6 : f32
    %119 = vector.broadcast %cst_44 : f32 to vector<8x1xf32>
    %120 = arith.addf %118, %119 : vector<8x1xf32>
    %121 = math.rsqrt %120 : vector<8x1xf32>
    %122 = vector.broadcast %121 : vector<8x1xf32> to vector<8x32xf32>
    %123 = arith.mulf %113, %122 : vector<8x32xf32>
    %124 = vector.broadcast %9 : vector<1x32xf32> to vector<8x32xf32>
    %125 = arith.mulf %123, %124 : vector<8x32xf32>
    %126 = vector.broadcast %10 : vector<1x32xf32> to vector<8x32xf32>
    %127 = arith.addf %125, %126 : vector<8x32xf32>
    %c0_45 = arith.constant 0 : index
    %c0_46 = arith.constant 0 : index
    %128 = vector.load %arg10[%c0_45, %c0_46] : memref<32x32xbf16, #tpu.memory_space<vmem>>, vector<32x32xbf16>
    %c0_47 = arith.constant 0 : index
    %c0_48 = arith.constant 0 : index
    %129 = vector.load %arg11[%c0_47, %c0_48] : memref<1x32xf32, #tpu.memory_space<vmem>>, vector<1x32xf32>
    %c0_49 = arith.constant 0 : index
    %c0_50 = arith.constant 0 : index
    %130 = vector.load %arg12[%c0_49, %c0_50] : memref<32x64xbf16, #tpu.memory_space<vmem>>, vector<32x64xbf16>
    %c0_51 = arith.constant 0 : index
    %c0_52 = arith.constant 0 : index
    %131 = vector.load %arg13[%c0_51, %c0_52] : memref<1x64xf32, #tpu.memory_space<vmem>>, vector<1x64xf32>
    %c0_53 = arith.constant 0 : index
    %c0_54 = arith.constant 0 : index
    %132 = vector.load %arg14[%c0_53, %c0_54] : memref<32x32xbf16, #tpu.memory_space<vmem>>, vector<32x32xbf16>
    %c0_55 = arith.constant 0 : index
    %c0_56 = arith.constant 0 : index
    %133 = vector.load %arg15[%c0_55, %c0_56] : memref<1x32xf32, #tpu.memory_space<vmem>>, vector<1x32xf32>
    %c0_57 = arith.constant 0 : index
    %c0_58 = arith.constant 0 : index
    %134 = vector.load %arg16[%c0_57, %c0_58] : memref<1x32xf32, #tpu.memory_space<vmem>>, vector<1x32xf32>
    %c0_59 = arith.constant 0 : index
    %c0_60 = arith.constant 0 : index
    %135 = vector.load %arg17[%c0_59, %c0_60] : memref<1x32xf32, #tpu.memory_space<vmem>>, vector<1x32xf32>
    %136 = arith.truncf %127 : vector<8x32xf32> to vector<8x32xbf16>
    %cst_61 = arith.constant dense<0.000000e+00> : vector<8x32xf32>
    %137 = tpu.matmul %136, %128, %cst_61 {dimension_numbers = #tpu.dot_dimension_numbers<[1], [0], [0], [1], [0, 0, 1, 1], [], []>} : vector<8x32xbf16>, vector<32x32xbf16>, vector<8x32xf32> -> vector<8x32xf32>
    %138 = vector.broadcast %129 : vector<1x32xf32> to vector<8x32xf32>
    %139 = arith.addf %137, %138 : vector<8x32xf32>
    %140 = arith.truncf %3 : vector<8x32xf32> to vector<8x32xbf16>
    %cst_62 = arith.constant dense<0.000000e+00> : vector<8x64xf32>
    %141 = tpu.matmul %140, %130, %cst_62 {dimension_numbers = #tpu.dot_dimension_numbers<[1], [0], [0], [1], [0, 0, 1, 1], [], []>} : vector<8x32xbf16>, vector<32x64xbf16>, vector<8x64xf32> -> vector<8x64xf32>
    %142 = vector.broadcast %131 : vector<1x64xf32> to vector<8x64xf32>
    %143 = arith.addf %141, %142 : vector<8x64xf32>
    %144 = vector.extract_strided_slice %143 {offsets = [0, 0], sizes = [8, 32], strides = [1, 1]} : vector<8x64xf32> to vector<8x32xf32>
    %145 = vector.extract_strided_slice %143 {offsets = [0, 32], sizes = [8, 32], strides = [1, 1]} : vector<8x64xf32> to vector<8x32xf32>
    %146 = vector.extract_strided_slice %139 {offsets = [0, 0], sizes = [8, 8], strides = [1, 1]} : vector<8x32xf32> to vector<8x8xf32>
    %147 = arith.truncf %146 : vector<8x8xf32> to vector<8x8xbf16>
    %148 = vector.extract_strided_slice %144 {offsets = [0, 0], sizes = [8, 8], strides = [1, 1]} : vector<8x32xf32> to vector<8x8xf32>
    %149 = arith.truncf %148 : vector<8x8xf32> to vector<8x8xbf16>
    %150 = vector.extract_strided_slice %145 {offsets = [0, 0], sizes = [8, 8], strides = [1, 1]} : vector<8x32xf32> to vector<8x8xf32>
    %151 = arith.truncf %150 : vector<8x8xf32> to vector<8x8xbf16>
    %cst_63 = arith.constant dense<0.000000e+00> : vector<8x8xf32>
    %152 = tpu.matmul %147, %149, %cst_63 {dimension_numbers = #tpu.dot_dimension_numbers<[1], [1], [0], [0], [0, 0, 1, 0], [], []>} : vector<8x8xbf16>, vector<8x8xbf16>, vector<8x8xf32> -> vector<8x8xf32>
    %cst_64 = arith.constant 0.353553385 : f32
    %153 = vector.broadcast %cst_64 : f32 to vector<8x8xf32>
    %154 = arith.mulf %152, %153 : vector<8x8xf32>
    %cst_65 = arith.constant dense<0xFF800000> : vector<8xf32>
    %155 = vector.multi_reduction <maximumf>, %154, %cst_65 [1] : vector<8x8xf32> to vector<8xf32>
    %156 = vector.shape_cast %155 : vector<8xf32> to vector<8x1xf32>
    %157 = vector.broadcast %156 : vector<8x1xf32> to vector<8x8xf32>
    %158 = arith.subf %154, %157 : vector<8x8xf32>
    %159 = math.exp %158 : vector<8x8xf32>
    %cst_66 = arith.constant dense<0.000000e+00> : vector<8xf32>
    %160 = vector.multi_reduction <add>, %159, %cst_66 [1] : vector<8x8xf32> to vector<8xf32>
    %161 = vector.shape_cast %160 : vector<8xf32> to vector<8x1xf32>
    %162 = vector.broadcast %161 : vector<8x1xf32> to vector<8x8xf32>
    %163 = arith.divf %159, %162 : vector<8x8xf32>
    %164 = arith.truncf %163 : vector<8x8xf32> to vector<8x8xbf16>
    %cst_67 = arith.constant dense<0.000000e+00> : vector<8x8xf32>
    %165 = tpu.matmul %164, %151, %cst_67 {dimension_numbers = #tpu.dot_dimension_numbers<[1], [0], [0], [1], [0, 0, 1, 1], [], []>} : vector<8x8xbf16>, vector<8x8xbf16>, vector<8x8xf32> -> vector<8x8xf32>
    %166 = vector.extract_strided_slice %139 {offsets = [0, 8], sizes = [8, 8], strides = [1, 1]} : vector<8x32xf32> to vector<8x8xf32>
    %167 = arith.truncf %166 : vector<8x8xf32> to vector<8x8xbf16>
    %168 = vector.extract_strided_slice %144 {offsets = [0, 8], sizes = [8, 8], strides = [1, 1]} : vector<8x32xf32> to vector<8x8xf32>
    %169 = arith.truncf %168 : vector<8x8xf32> to vector<8x8xbf16>
    %170 = vector.extract_strided_slice %145 {offsets = [0, 8], sizes = [8, 8], strides = [1, 1]} : vector<8x32xf32> to vector<8x8xf32>
    %171 = arith.truncf %170 : vector<8x8xf32> to vector<8x8xbf16>
    %cst_68 = arith.constant dense<0.000000e+00> : vector<8x8xf32>
    %172 = tpu.matmul %167, %169, %cst_68 {dimension_numbers = #tpu.dot_dimension_numbers<[1], [1], [0], [0], [0, 0, 1, 0], [], []>} : vector<8x8xbf16>, vector<8x8xbf16>, vector<8x8xf32> -> vector<8x8xf32>
    %cst_69 = arith.constant 0.353553385 : f32
    %173 = vector.broadcast %cst_69 : f32 to vector<8x8xf32>
    %174 = arith.mulf %172, %173 : vector<8x8xf32>
    %cst_70 = arith.constant dense<0xFF800000> : vector<8xf32>
    %175 = vector.multi_reduction <maximumf>, %174, %cst_70 [1] : vector<8x8xf32> to vector<8xf32>
    %176 = vector.shape_cast %175 : vector<8xf32> to vector<8x1xf32>
    %177 = vector.broadcast %176 : vector<8x1xf32> to vector<8x8xf32>
    %178 = arith.subf %174, %177 : vector<8x8xf32>
    %179 = math.exp %178 : vector<8x8xf32>
    %cst_71 = arith.constant dense<0.000000e+00> : vector<8xf32>
    %180 = vector.multi_reduction <add>, %179, %cst_71 [1] : vector<8x8xf32> to vector<8xf32>
    %181 = vector.shape_cast %180 : vector<8xf32> to vector<8x1xf32>
    %182 = vector.broadcast %181 : vector<8x1xf32> to vector<8x8xf32>
    %183 = arith.divf %179, %182 : vector<8x8xf32>
    %184 = arith.truncf %183 : vector<8x8xf32> to vector<8x8xbf16>
    %cst_72 = arith.constant dense<0.000000e+00> : vector<8x8xf32>
    %185 = tpu.matmul %184, %171, %cst_72 {dimension_numbers = #tpu.dot_dimension_numbers<[1], [0], [0], [1], [0, 0, 1, 1], [], []>} : vector<8x8xbf16>, vector<8x8xbf16>, vector<8x8xf32> -> vector<8x8xf32>
    %186 = vector.extract_strided_slice %139 {offsets = [0, 16], sizes = [8, 8], strides = [1, 1]} : vector<8x32xf32> to vector<8x8xf32>
    %187 = arith.truncf %186 : vector<8x8xf32> to vector<8x8xbf16>
    %188 = vector.extract_strided_slice %144 {offsets = [0, 16], sizes = [8, 8], strides = [1, 1]} : vector<8x32xf32> to vector<8x8xf32>
    %189 = arith.truncf %188 : vector<8x8xf32> to vector<8x8xbf16>
    %190 = vector.extract_strided_slice %145 {offsets = [0, 16], sizes = [8, 8], strides = [1, 1]} : vector<8x32xf32> to vector<8x8xf32>
    %191 = arith.truncf %190 : vector<8x8xf32> to vector<8x8xbf16>
    %cst_73 = arith.constant dense<0.000000e+00> : vector<8x8xf32>
    %192 = tpu.matmul %187, %189, %cst_73 {dimension_numbers = #tpu.dot_dimension_numbers<[1], [1], [0], [0], [0, 0, 1, 0], [], []>} : vector<8x8xbf16>, vector<8x8xbf16>, vector<8x8xf32> -> vector<8x8xf32>
    %cst_74 = arith.constant 0.353553385 : f32
    %193 = vector.broadcast %cst_74 : f32 to vector<8x8xf32>
    %194 = arith.mulf %192, %193 : vector<8x8xf32>
    %cst_75 = arith.constant dense<0xFF800000> : vector<8xf32>
    %195 = vector.multi_reduction <maximumf>, %194, %cst_75 [1] : vector<8x8xf32> to vector<8xf32>
    %196 = vector.shape_cast %195 : vector<8xf32> to vector<8x1xf32>
    %197 = vector.broadcast %196 : vector<8x1xf32> to vector<8x8xf32>
    %198 = arith.subf %194, %197 : vector<8x8xf32>
    %199 = math.exp %198 : vector<8x8xf32>
    %cst_76 = arith.constant dense<0.000000e+00> : vector<8xf32>
    %200 = vector.multi_reduction <add>, %199, %cst_76 [1] : vector<8x8xf32> to vector<8xf32>
    %201 = vector.shape_cast %200 : vector<8xf32> to vector<8x1xf32>
    %202 = vector.broadcast %201 : vector<8x1xf32> to vector<8x8xf32>
    %203 = arith.divf %199, %202 : vector<8x8xf32>
    %204 = arith.truncf %203 : vector<8x8xf32> to vector<8x8xbf16>
    %cst_77 = arith.constant dense<0.000000e+00> : vector<8x8xf32>
    %205 = tpu.matmul %204, %191, %cst_77 {dimension_numbers = #tpu.dot_dimension_numbers<[1], [0], [0], [1], [0, 0, 1, 1], [], []>} : vector<8x8xbf16>, vector<8x8xbf16>, vector<8x8xf32> -> vector<8x8xf32>
    %206 = vector.extract_strided_slice %139 {offsets = [0, 24], sizes = [8, 8], strides = [1, 1]} : vector<8x32xf32> to vector<8x8xf32>
    %207 = arith.truncf %206 : vector<8x8xf32> to vector<8x8xbf16>
    %208 = vector.extract_strided_slice %144 {offsets = [0, 24], sizes = [8, 8], strides = [1, 1]} : vector<8x32xf32> to vector<8x8xf32>
    %209 = arith.truncf %208 : vector<8x8xf32> to vector<8x8xbf16>
    %210 = vector.extract_strided_slice %145 {offsets = [0, 24], sizes = [8, 8], strides = [1, 1]} : vector<8x32xf32> to vector<8x8xf32>
    %211 = arith.truncf %210 : vector<8x8xf32> to vector<8x8xbf16>
    %cst_78 = arith.constant dense<0.000000e+00> : vector<8x8xf32>
    %212 = tpu.matmul %207, %209, %cst_78 {dimension_numbers = #tpu.dot_dimension_numbers<[1], [1], [0], [0], [0, 0, 1, 0], [], []>} : vector<8x8xbf16>, vector<8x8xbf16>, vector<8x8xf32> -> vector<8x8xf32>
    %cst_79 = arith.constant 0.353553385 : f32
    %213 = vector.broadcast %cst_79 : f32 to vector<8x8xf32>
    %214 = arith.mulf %212, %213 : vector<8x8xf32>
    %cst_80 = arith.constant dense<0xFF800000> : vector<8xf32>
    %215 = vector.multi_reduction <maximumf>, %214, %cst_80 [1] : vector<8x8xf32> to vector<8xf32>
    %216 = vector.shape_cast %215 : vector<8xf32> to vector<8x1xf32>
    %217 = vector.broadcast %216 : vector<8x1xf32> to vector<8x8xf32>
    %218 = arith.subf %214, %217 : vector<8x8xf32>
    %219 = math.exp %218 : vector<8x8xf32>
    %cst_81 = arith.constant dense<0.000000e+00> : vector<8xf32>
    %220 = vector.multi_reduction <add>, %219, %cst_81 [1] : vector<8x8xf32> to vector<8xf32>
    %221 = vector.shape_cast %220 : vector<8xf32> to vector<8x1xf32>
    %222 = vector.broadcast %221 : vector<8x1xf32> to vector<8x8xf32>
    %223 = arith.divf %219, %222 : vector<8x8xf32>
    %224 = arith.truncf %223 : vector<8x8xf32> to vector<8x8xbf16>
    %cst_82 = arith.constant dense<0.000000e+00> : vector<8x8xf32>
    %225 = tpu.matmul %224, %211, %cst_82 {dimension_numbers = #tpu.dot_dimension_numbers<[1], [0], [0], [1], [0, 0, 1, 1], [], []>} : vector<8x8xbf16>, vector<8x8xbf16>, vector<8x8xf32> -> vector<8x8xf32>
    %226 = tpu.concatenate %165, %185, %205, %225 in 1 : vector<8x8xf32>, vector<8x8xf32>, vector<8x8xf32>, vector<8x8xf32> -> vector<8x32xf32>
    %227 = arith.truncf %226 : vector<8x32xf32> to vector<8x32xbf16>
    %cst_83 = arith.constant dense<0.000000e+00> : vector<8x32xf32>
    %228 = tpu.matmul %227, %132, %cst_83 {dimension_numbers = #tpu.dot_dimension_numbers<[1], [0], [0], [1], [0, 0, 1, 1], [], []>} : vector<8x32xbf16>, vector<32x32xbf16>, vector<8x32xf32> -> vector<8x32xf32>
    %229 = vector.broadcast %133 : vector<1x32xf32> to vector<8x32xf32>
    %230 = arith.addf %228, %229 : vector<8x32xf32>
    %231 = arith.addf %127, %230 : vector<8x32xf32>
    %cst_84 = arith.constant dense<0.000000e+00> : vector<8xf32>
    %232 = vector.multi_reduction <add>, %231, %cst_84 [1] : vector<8x32xf32> to vector<8xf32>
    %233 = vector.shape_cast %232 : vector<8xf32> to vector<8x1xf32>
    %cst_85 = arith.constant 3.200000e+01 : f32
    %234 = vector.broadcast %cst_85 : f32 to vector<8x1xf32>
    %235 = arith.divf %233, %234 : vector<8x1xf32>
    %236 = vector.broadcast %235 : vector<8x1xf32> to vector<8x32xf32>
    %237 = arith.subf %231, %236 : vector<8x32xf32>
    %238 = arith.mulf %237, %237 : vector<8x32xf32>
    %cst_86 = arith.constant dense<0.000000e+00> : vector<8xf32>
    %239 = vector.multi_reduction <add>, %238, %cst_86 [1] : vector<8x32xf32> to vector<8xf32>
    %240 = vector.shape_cast %239 : vector<8xf32> to vector<8x1xf32>
    %cst_87 = arith.constant 3.200000e+01 : f32
    %241 = vector.broadcast %cst_87 : f32 to vector<8x1xf32>
    %242 = arith.divf %240, %241 : vector<8x1xf32>
    %cst_88 = arith.constant 9.99999974E-6 : f32
    %243 = vector.broadcast %cst_88 : f32 to vector<8x1xf32>
    %244 = arith.addf %242, %243 : vector<8x1xf32>
    %245 = math.rsqrt %244 : vector<8x1xf32>
    %246 = vector.broadcast %245 : vector<8x1xf32> to vector<8x32xf32>
    %247 = arith.mulf %237, %246 : vector<8x32xf32>
    %248 = vector.broadcast %134 : vector<1x32xf32> to vector<8x32xf32>
    %249 = arith.mulf %247, %248 : vector<8x32xf32>
    %250 = vector.broadcast %135 : vector<1x32xf32> to vector<8x32xf32>
    %251 = arith.addf %249, %250 : vector<8x32xf32>
    %c0_89 = arith.constant 0 : index
    %c0_90 = arith.constant 0 : index
    %252 = vector.load %arg18[%c0_89, %c0_90] : memref<32x32xbf16, #tpu.memory_space<vmem>>, vector<32x32xbf16>
    %c0_91 = arith.constant 0 : index
    %c0_92 = arith.constant 0 : index
    %253 = vector.load %arg19[%c0_91, %c0_92] : memref<1x32xf32, #tpu.memory_space<vmem>>, vector<1x32xf32>
    %c0_93 = arith.constant 0 : index
    %c0_94 = arith.constant 0 : index
    %254 = vector.load %arg20[%c0_93, %c0_94] : memref<32x32xbf16, #tpu.memory_space<vmem>>, vector<32x32xbf16>
    %c0_95 = arith.constant 0 : index
    %c0_96 = arith.constant 0 : index
    %255 = vector.load %arg21[%c0_95, %c0_96] : memref<1x32xf32, #tpu.memory_space<vmem>>, vector<1x32xf32>
    %c0_97 = arith.constant 0 : index
    %c0_98 = arith.constant 0 : index
    %256 = vector.load %arg22[%c0_97, %c0_98] : memref<1x32xf32, #tpu.memory_space<vmem>>, vector<1x32xf32>
    %c0_99 = arith.constant 0 : index
    %c0_100 = arith.constant 0 : index
    %257 = vector.load %arg23[%c0_99, %c0_100] : memref<1x32xf32, #tpu.memory_space<vmem>>, vector<1x32xf32>
    %258 = arith.truncf %251 : vector<8x32xf32> to vector<8x32xbf16>
    %cst_101 = arith.constant dense<0.000000e+00> : vector<8x32xf32>
    %259 = tpu.matmul %258, %252, %cst_101 {dimension_numbers = #tpu.dot_dimension_numbers<[1], [0], [0], [1], [0, 0, 1, 1], [], []>} : vector<8x32xbf16>, vector<32x32xbf16>, vector<8x32xf32> -> vector<8x32xf32>
    %260 = vector.broadcast %253 : vector<1x32xf32> to vector<8x32xf32>
    %261 = arith.addf %259, %260 : vector<8x32xf32>
    %cst_102 = arith.constant 0.000000e+00 : f32
    %262 = vector.broadcast %cst_102 : f32 to vector<8x32xf32>
    %263 = arith.maximumf %261, %262 : vector<8x32xf32>
    %264 = arith.truncf %263 : vector<8x32xf32> to vector<8x32xbf16>
    %cst_103 = arith.constant dense<0.000000e+00> : vector<8x32xf32>
    %265 = tpu.matmul %264, %254, %cst_103 {dimension_numbers = #tpu.dot_dimension_numbers<[1], [0], [0], [1], [0, 0, 1, 1], [], []>} : vector<8x32xbf16>, vector<32x32xbf16>, vector<8x32xf32> -> vector<8x32xf32>
    %266 = vector.broadcast %255 : vector<1x32xf32> to vector<8x32xf32>
    %267 = arith.addf %265, %266 : vector<8x32xf32>
    %268 = arith.addf %251, %267 : vector<8x32xf32>
    %cst_104 = arith.constant dense<0.000000e+00> : vector<8xf32>
    %269 = vector.multi_reduction <add>, %268, %cst_104 [1] : vector<8x32xf32> to vector<8xf32>
    %270 = vector.shape_cast %269 : vector<8xf32> to vector<8x1xf32>
    %cst_105 = arith.constant 3.200000e+01 : f32
    %271 = vector.broadcast %cst_105 : f32 to vector<8x1xf32>
    %272 = arith.divf %270, %271 : vector<8x1xf32>
    %273 = vector.broadcast %272 : vector<8x1xf32> to vector<8x32xf32>
    %274 = arith.subf %268, %273 : vector<8x32xf32>
    %275 = arith.mulf %274, %274 : vector<8x32xf32>
    %cst_106 = arith.constant dense<0.000000e+00> : vector<8xf32>
    %276 = vector.multi_reduction <add>, %275, %cst_106 [1] : vector<8x32xf32> to vector<8xf32>
    %277 = vector.shape_cast %276 : vector<8xf32> to vector<8x1xf32>
    %cst_107 = arith.constant 3.200000e+01 : f32
    %278 = vector.broadcast %cst_107 : f32 to vector<8x1xf32>
    %279 = arith.divf %277, %278 : vector<8x1xf32>
    %cst_108 = arith.constant 9.99999974E-6 : f32
    %280 = vector.broadcast %cst_108 : f32 to vector<8x1xf32>
    %281 = arith.addf %279, %280 : vector<8x1xf32>
    %282 = math.rsqrt %281 : vector<8x1xf32>
    %283 = vector.broadcast %282 : vector<8x1xf32> to vector<8x32xf32>
    %284 = arith.mulf %274, %283 : vector<8x32xf32>
    %285 = vector.broadcast %256 : vector<1x32xf32> to vector<8x32xf32>
    %286 = arith.mulf %284, %285 : vector<8x32xf32>
    %287 = vector.broadcast %257 : vector<1x32xf32> to vector<8x32xf32>
    %288 = arith.addf %286, %287 : vector<8x32xf32>
    %c0_109 = arith.constant 0 : index
    %c0_110 = arith.constant 0 : index
    %289 = vector.load %arg24[%c0_109, %c0_110] : memref<1x32xf32, #tpu.memory_space<vmem>>, vector<1x32xf32>
    %c0_111 = arith.constant 0 : index
    %c0_112 = arith.constant 0 : index
    %290 = vector.load %arg25[%c0_111, %c0_112] : memref<1x32xf32, #tpu.memory_space<vmem>>, vector<1x32xf32>
    %cst_113 = arith.constant dense<0.000000e+00> : vector<8xf32>
    %291 = vector.multi_reduction <add>, %288, %cst_113 [1] : vector<8x32xf32> to vector<8xf32>
    %292 = vector.shape_cast %291 : vector<8xf32> to vector<8x1xf32>
    %cst_114 = arith.constant 3.200000e+01 : f32
    %293 = vector.broadcast %cst_114 : f32 to vector<8x1xf32>
    %294 = arith.divf %292, %293 : vector<8x1xf32>
    %295 = vector.broadcast %294 : vector<8x1xf32> to vector<8x32xf32>
    %296 = arith.subf %288, %295 : vector<8x32xf32>
    %297 = arith.mulf %296, %296 : vector<8x32xf32>
    %cst_115 = arith.constant dense<0.000000e+00> : vector<8xf32>
    %298 = vector.multi_reduction <add>, %297, %cst_115 [1] : vector<8x32xf32> to vector<8xf32>
    %299 = vector.shape_cast %298 : vector<8xf32> to vector<8x1xf32>
    %cst_116 = arith.constant 3.200000e+01 : f32
    %300 = vector.broadcast %cst_116 : f32 to vector<8x1xf32>
    %301 = arith.divf %299, %300 : vector<8x1xf32>
    %cst_117 = arith.constant 9.99999974E-6 : f32
    %302 = vector.broadcast %cst_117 : f32 to vector<8x1xf32>
    %303 = arith.addf %301, %302 : vector<8x1xf32>
    %304 = math.rsqrt %303 : vector<8x1xf32>
    %305 = vector.broadcast %304 : vector<8x1xf32> to vector<8x32xf32>
    %306 = arith.mulf %296, %305 : vector<8x32xf32>
    %307 = vector.broadcast %289 : vector<1x32xf32> to vector<8x32xf32>
    %308 = arith.mulf %306, %307 : vector<8x32xf32>
    %309 = vector.broadcast %290 : vector<1x32xf32> to vector<8x32xf32>
    %310 = arith.addf %308, %309 : vector<8x32xf32>
    %311 = arith.truncf %310 : vector<8x32xf32> to vector<8x32xbf16>
    %c0_118 = arith.constant 0 : index
    %c0_119 = arith.constant 0 : index
    %312 = vector.load %arg26[%c0_118, %c0_119] : memref<32x4xbf16, #tpu.memory_space<vmem>>, vector<32x4xbf16>
    %cst_120 = arith.constant dense<0.000000e+00> : vector<8x4xf32>
    %313 = tpu.matmul %311, %312, %cst_120 {dimension_numbers = #tpu.dot_dimension_numbers<[1], [0], [0], [1], [0, 0, 1, 1], [], []>} : vector<8x32xbf16>, vector<32x4xbf16>, vector<8x4xf32> -> vector<8x4xf32>
    %c0_121 = arith.constant 0 : index
    %c0_122 = arith.constant 0 : index
    %314 = vector.load %arg27[%c0_121, %c0_122] : memref<1x4xf32, #tpu.memory_space<vmem>>, vector<1x4xf32>
    %315 = vector.broadcast %314 : vector<1x4xf32> to vector<8x4xf32>
    %316 = arith.addf %313, %315 : vector<8x4xf32>
    %c0_123 = arith.constant 0 : index
    %c0_124 = arith.constant 0 : index
    %c0_125 = arith.constant 0 : index
    %317 = vector.load %arg28[%c0_123, %c0_124, %c0_125] : memref<1x8x4xf32, #tpu.memory_space<vmem>>, vector<1x8x4xf32>
    %318 = vector.shape_cast %317 : vector<1x8x4xf32> to vector<8x4xf32>
    %319 = vector.shape_cast %316 : vector<8x4xf32> to vector<1x8x4xf32>
    tpu.vector_store %arg28[%c0_123, %c0_124, %c0_125], %319 {strides = array<i32>} : memref<1x8x4xf32, #tpu.memory_space<vmem>>, vector<1x8x4xf32>,
    return
  }
  func.func @transform_0(%arg0: i32) -> (i32, i32, i32) {
    %c0_i32 = arith.constant 0 : i32
    %c0_i32_0 = arith.constant 0 : i32
    %c0_i32_1 = arith.constant 0 : i32
    return %arg0, %c0_i32, %c0_i32_0 : i32, i32, i32
  }
  func.func @transform_1(%arg0: i32) -> (i32, i32, i32) {
    %c0_i32 = arith.constant 0 : i32
    %c0_i32_0 = arith.constant 0 : i32
    %c0_i32_1 = arith.constant 0 : i32
    return %arg0, %c0_i32, %c0_i32_0 : i32, i32, i32
  }
  func.func @transform_2(%arg0: i32) -> (i32, i32) {
    %c0_i32 = arith.constant 0 : i32
    %c0_i32_0 = arith.constant 0 : i32
    %c0_i32_1 = arith.constant 0 : i32
    return %c0_i32, %c0_i32_0 : i32, i32
  }
  func.func @transform_3(%arg0: i32) -> (i32, i32) {
    %c0_i32 = arith.constant 0 : i32
    %c0_i32_0 = arith.constant 0 : i32
    %c0_i32_1 = arith.constant 0 : i32
    return %c0_i32, %c0_i32_0 : i32, i32
  }
  func.func @transform_4(%arg0: i32) -> (i32, i32) {
    %c0_i32 = arith.constant 0 : i32
    %c0_i32_0 = arith.constant 0 : i32
    %c0_i32_1 = arith.constant 0 : i32
    return %c0_i32, %c0_i32_0 : i32, i32
  }
  func.func @transform_5(%arg0: i32) -> (i32, i32) {
    %c0_i32 = arith.constant 0 : i32
    %c0_i32_0 = arith.constant 0 : i32
    %c0_i32_1 = arith.constant 0 : i32
    return %c0_i32, %c0_i32_0 : i32, i32
  }
  func.func @transform_6(%arg0: i32) -> (i32, i32) {
    %c0_i32 = arith.constant 0 : i32
    %c0_i32_0 = arith.constant 0 : i32
    %c0_i32_1 = arith.constant 0 : i32
    return %c0_i32, %c0_i32_0 : i32, i32
  }
  func.func @transform_7(%arg0: i32) -> (i32, i32) {
    %c0_i32 = arith.constant 0 : i32
    %c0_i32_0 = arith.constant 0 : i32
    %c0_i32_1 = arith.constant 0 : i32
    return %c0_i32, %c0_i32_0 : i32, i32
  }
  func.func @transform_8(%arg0: i32) -> (i32, i32) {
    %c0_i32 = arith.constant 0 : i32
    %c0_i32_0 = arith.constant 0 : i32
    %c0_i32_1 = arith.constant 0 : i32
    return %c0_i32, %c0_i32_0 : i32, i32
  }
  func.func @transform_9(%arg0: i32) -> (i32, i32) {
    %c0_i32 = arith.constant 0 : i32
    %c0_i32_0 = arith.constant 0 : i32
    %c0_i32_1 = arith.constant 0 : i32
    return %c0_i32, %c0_i32_0 : i32, i32
  }
  func.func @transform_10(%arg0: i32) -> (i32, i32) {
    %c0_i32 = arith.constant 0 : i32
    %c0_i32_0 = arith.constant 0 : i32
    %c0_i32_1 = arith.constant 0 : i32
    return %c0_i32, %c0_i32_0 : i32, i32
  }
  func.func @transform_11(%arg0: i32) -> (i32, i32) {
    %c0_i32 = arith.constant 0 : i32
    %c0_i32_0 = arith.constant 0 : i32
    %c0_i32_1 = arith.constant 0 : i32
    return %c0_i32, %c0_i32_0 : i32, i32
  }
  func.func @transform_12(%arg0: i32) -> (i32, i32) {
    %c0_i32 = arith.constant 0 : i32
    %c0_i32_0 = arith.constant 0 : i32
    %c0_i32_1 = arith.constant 0 : i32
    return %c0_i32, %c0_i32_0 : i32, i32
  }
  func.func @transform_13(%arg0: i32) -> (i32, i32) {
    %c0_i32 = arith.constant 0 : i32
    %c0_i32_0 = arith.constant 0 : i32
    %c0_i32_1 = arith.constant 0 : i32
    return %c0_i32, %c0_i32_0 : i32, i32
  }
  func.func @transform_14(%arg0: i32) -> (i32, i32) {
    %c0_i32 = arith.constant 0 : i32
    %c0_i32_0 = arith.constant 0 : i32
    %c0_i32_1 = arith.constant 0 : i32
    return %c0_i32, %c0_i32_0 : i32, i32
  }
  func.func @transform_15(%arg0: i32) -> (i32, i32) {
    %c0_i32 = arith.constant 0 : i32
    %c0_i32_0 = arith.constant 0 : i32
    %c0_i32_1 = arith.constant 0 : i32
    return %c0_i32, %c0_i32_0 : i32, i32
  }
  func.func @transform_16(%arg0: i32) -> (i32, i32) {
    %c0_i32 = arith.constant 0 : i32
    %c0_i32_0 = arith.constant 0 : i32
    %c0_i32_1 = arith.constant 0 : i32
    return %c0_i32, %c0_i32_0 : i32, i32
  }
  func.func @transform_17(%arg0: i32) -> (i32, i32) {
    %c0_i32 = arith.constant 0 : i32
    %c0_i32_0 = arith.constant 0 : i32
    %c0_i32_1 = arith.constant 0 : i32
    return %c0_i32, %c0_i32_0 : i32, i32
  }
  func.func @transform_18(%arg0: i32) -> (i32, i32) {
    %c0_i32 = arith.constant 0 : i32
    %c0_i32_0 = arith.constant 0 : i32
    %c0_i32_1 = arith.constant 0 : i32
    return %c0_i32, %c0_i32_0 : i32, i32
  }
  func.func @transform_19(%arg0: i32) -> (i32, i32) {
    %c0_i32 = arith.constant 0 : i32
    %c0_i32_0 = arith.constant 0 : i32
    %c0_i32_1 = arith.constant 0 : i32
    return %c0_i32, %c0_i32_0 : i32, i32
  }
  func.func @transform_20(%arg0: i32) -> (i32, i32) {
    %c0_i32 = arith.constant 0 : i32
    %c0_i32_0 = arith.constant 0 : i32
    %c0_i32_1 = arith.constant 0 : i32
    return %c0_i32, %c0_i32_0 : i32, i32
  }
  func.func @transform_21(%arg0: i32) -> (i32, i32) {
    %c0_i32 = arith.constant 0 : i32
    %c0_i32_0 = arith.constant 0 : i32
    %c0_i32_1 = arith.constant 0 : i32
    return %c0_i32, %c0_i32_0 : i32, i32
  }
  func.func @transform_22(%arg0: i32) -> (i32, i32) {
    %c0_i32 = arith.constant 0 : i32
    %c0_i32_0 = arith.constant 0 : i32
    %c0_i32_1 = arith.constant 0 : i32
    return %c0_i32, %c0_i32_0 : i32, i32
  }
  func.func @transform_23(%arg0: i32) -> (i32, i32) {
    %c0_i32 = arith.constant 0 : i32
    %c0_i32_0 = arith.constant 0 : i32
    %c0_i32_1 = arith.constant 0 : i32
    return %c0_i32, %c0_i32_0 : i32, i32
  }
  func.func @transform_24(%arg0: i32) -> (i32, i32) {
    %c0_i32 = arith.constant 0 : i32
    %c0_i32_0 = arith.constant 0 : i32
    %c0_i32_1 = arith.constant 0 : i32
    return %c0_i32, %c0_i32_0 : i32, i32
  }
  func.func @transform_25(%arg0: i32) -> (i32, i32) {
    %c0_i32 = arith.constant 0 : i32
    %c0_i32_0 = arith.constant 0 : i32
    %c0_i32_1 = arith.constant 0 : i32
    return %c0_i32, %c0_i32_0 : i32, i32
  }
  func.func @transform_26(%arg0: i32) -> (i32, i32) {
    %c0_i32 = arith.constant 0 : i32
    %c0_i32_0 = arith.constant 0 : i32
    %c0_i32_1 = arith.constant 0 : i32
    return %c0_i32, %c0_i32_0 : i32, i32
  }
  func.func @transform_27(%arg0: i32) -> (i32, i32, i32) {
    %c0_i32 = arith.constant 0 : i32
    %c0_i32_0 = arith.constant 0 : i32
    %c0_i32_1 = arith.constant 0 : i32
    return %arg0, %c0_i32, %c0_i32_0 : i32, i32, i32
  }
}

</mosaic_0001>

<llo_original>
// kernel: _lambda_.5
$region0: #{_lambda_.5}
  #allocation0 [shape = 'u32[]', space=smem, size = 0x4, offset = 0x4, fixed_abs, tag = 'smem constant byte address 0x4 - core index']
  #allocation1 [shape = 'u32[72,128]{1,0:T(1,128)}', space=vmem, size = 0x9000, scoped, tag = 'internal scratch']
  %s0 = inlined_call_operand.vmem [shape: f32[2,16,4], index: 0, kind: input, shape index: {}]
  %s1 = inlined_call_operand.vmem [shape: f32[2,16,4], index: 1, kind: input, shape index: {}]
  %s2 = inlined_call_operand.vmem [shape: bf16[16,32], index: 2, kind: input, shape index: {}]
  %s3 = inlined_call_operand.vmem [shape: f32[16,32], index: 3, kind: input, shape index: {}]
  %s4 = inlined_call_operand.vmem [shape: f32[2,16,32], index: 4, kind: output, shape index: {}]
  %s5 = sld [smem:[#allocation0]]
  $region49: #{_lambda_.5} parent=0
    _
  %s7 = ssub.s32 1, %s5
  %s8 = scalar_select 0, %s7, %s5
  loop: start=0, step=1, limit=4
  $region2: #{_lambda_.5} parent=0 // loop_pre_header
    _
  $region3: #{_lambda_.5} parent=0 // loop_header
    %s10 = sphi 0, %s14
    %p11 = scmp.ge.s32.totalorder %s10, 4
    %s20 = sphi 0, %s22
    %s23 = sphi 0, %s20
    %s24 = sphi 0, %s23
    %s40 = sphi 0, %s24
    %s46 = sphi 0, %s48
    %s49 = sphi 0, %s46
    %s50 = sphi 0, %s49
    %s66 = sphi 0, %s50
    %s70 = sphi 0, %s70
    %s72 = sphi 0, %s70
    %s73 = sphi 0, %s72
    %s87 = sphi 0, %s73
    %s91 = sphi 0, %s91
    %s93 = sphi 0, %s91
    %s94 = sphi 0, %s93
    %s108 = sphi 0, %s94
    %s114 = sphi 0, %s116
    %s117 = sphi 0, %s114
    %s118 = sphi 0, %s117
    %s134 = sphi 0, %s118
  $region4: #{_lambda_.5} parent=0 // loop_header_branch
    %13 = sbr.rel (%p11) target = $region8
  $region5: #{_lambda_.5} parent=0 // loop_body
    %s15 = ssub.s32 %s10, 1
    %s16 = ssub.s32 %s10, 2
    %s17 = sadd.s32 %s10, 1
    %s18 = ssub.s32 %s10, %s17
    %p19 = scmp.eq.s32.totalorder %s18, 0
    %s21 = sadd.s32 %s20, 1
    %s22 = scalar_select %p19, %s20, %s21
    %p25 = pneg %p19
    %p26 = scmp.eq.s32.totalorder %s10, 1
    %p27 = por %p25, %p26
    %p28 = scmp.ne.s32.totalorder %s20, %s23
    %p29 = scmp.eq.s32.totalorder %s10, 0
    %p30 = por %p28, %p29
    %p31 = scmp.ne.s32.totalorder %s20, %s23
    %p32 = scmp.eq.s32.totalorder %s15, 1
    %p33 = por %p31, %p32
    %p34 = scmp.ne.s32.totalorder %s23, %s24
    %p35 = scmp.eq.s32.totalorder %s15, 0
    %p36 = por %p34, %p35
    %p37 = scmp.ne.s32.totalorder %s23, %s24
    %p38 = scmp.eq.s32.totalorder %s16, 1
    %p39 = por %p37, %p38
    %p41 = scmp.ne.s32.totalorder %s24, %s40
    %p42 = scmp.eq.s32.totalorder %s16, 0
    %p43 = por %p41, %p42
    %s44 = ssub.s32 %s10, %s17
    %p45 = scmp.eq.s32.totalorder %s44, 0
    %s47 = sadd.s32 %s46, 1
    %s48 = scalar_select %p45, %s46, %s47
    %p51 = pneg %p45
    %p52 = scmp.eq.s32.totalorder %s10, 1
    %p53 = por %p51, %p52
    %p54 = scmp.ne.s32.totalorder %s46, %s49
    %p55 = scmp.eq.s32.totalorder %s10, 0
    %p56 = por %p54, %p55
    %p57 = scmp.ne.s32.totalorder %s46, %s49
    %p58 = scmp.eq.s32.totalorder %s15, 1
    %p59 = por %p57, %p58
    %p60 = scmp.ne.s32.totalorder %s49, %s50
    %p61 = scmp.eq.s32.totalorder %s15, 0
    %p62 = por %p60, %p61
    %p63 = scmp.ne.s32.totalorder %s49, %s50
    %p64 = scmp.eq.s32.totalorder %s16, 1
    %p65 = por %p63, %p64
    %p67 = scmp.ne.s32.totalorder %s50, %s66
    %p68 = scmp.eq.s32.totalorder %s16, 0
    %p69 = por %p67, %p68
    %s71 = sadd.s32 %s70, 1
    %p74 = scmp.eq.s32.totalorder %s10, 1
    %p75 = scmp.ne.s32.totalorder %s70, %s72
    %p76 = scmp.eq.s32.totalorder %s10, 0
    %p77 = por %p75, %p76
    %p78 = scmp.ne.s32.totalorder %s70, %s72
    %p79 = scmp.eq.s32.totalorder %s15, 1
    %p80 = por %p78, %p79
    %p81 = scmp.ne.s32.totalorder %s72, %s73
    %p82 = scmp.eq.s32.totalorder %s15, 0
    %p83 = por %p81, %p82
    %p84 = scmp.ne.s32.totalorder %s72, %s73
    %p85 = scmp.eq.s32.totalorder %s16, 1
    %p86 = por %p84, %p85
    %p88 = scmp.ne.s32.totalorder %s73, %s87
    %p89 = scmp.eq.s32.totalorder %s16, 0
    %p90 = por %p88, %p89
    %s92 = sadd.s32 %s91, 1
    %p95 = scmp.eq.s32.totalorder %s10, 1
    %p96 = scmp.ne.s32.totalorder %s91, %s93
    %p97 = scmp.eq.s32.totalorder %s10, 0
    %p98 = por %p96, %p97
    %p99 = scmp.ne.s32.totalorder %s91, %s93
    %p100 = scmp.eq.s32.totalorder %s15, 1
    %p101 = por %p99, %p100
    %p102 = scmp.ne.s32.totalorder %s93, %s94
    %p103 = scmp.eq.s32.totalorder %s15, 0
    %p104 = por %p102, %p103
    %p105 = scmp.ne.s32.totalorder %s93, %s94
    %p106 = scmp.eq.s32.totalorder %s16, 1
    %p107 = por %p105, %p106
    %p109 = scmp.ne.s32.totalorder %s94, %s108
    %p110 = scmp.eq.s32.totalorder %s16, 0
    %p111 = por %p109, %p110
    %s112 = ssub.s32 %s10, %s17
    %p113 = scmp.eq.s32.totalorder %s112, 0
    %s115 = sadd.s32 %s114, 1
    %s116 = scalar_select %p113, %s114, %s115
    %p119 = pneg %p113
    %p120 = scmp.eq.s32.totalorder %s10, 1
    %p121 = por %p119, %p120
    %p122 = scmp.ne.s32.totalorder %s114, %s117
    %p123 = scmp.eq.s32.totalorder %s10, 0
    %p124 = por %p122, %p123
    %p125 = scmp.ne.s32.totalorder %s114, %s117
    %p126 = scmp.eq.s32.totalorder %s15, 1
    %p127 = por %p125, %p126
    %p128 = scmp.ne.s32.totalorder %s117, %s118
    %p129 = scmp.eq.s32.totalorder %s15, 0
    %p130 = por %p128, %p129
    %p131 = scmp.ne.s32.totalorder %s117, %s118
    %p132 = scmp.eq.s32.totalorder %s16, 1
    %p133 = por %p131, %p132
    %p135 = scmp.ne.s32.totalorder %s118, %s134
    %p136 = scmp.eq.s32.totalorder %s16, 0
    %p137 = por %p135, %p136
    %p138 = scmp.le.s32.totalorder 1, %s10
    %p139 = scmp.lt.s32.totalorder %s10, 3
    %p140 = pnand %p138, %p139
    %p141 = pneg %p140
    // Predicated region
    $region9: #{_lambda_.5} parent=5 // pred_check
      _
    $region10: #{_lambda_.5} parent=5 // pred_check_branch
      %143 = sbr.rel (%p140) target = $region12
    $region11: #{_lambda_.5} parent=5 // pred_region
      %s144 = ssub.s32 %s10, 1
      // Predicated region
      $region13: #{_lambda_.5} parent=11 // pred_check
        %p145 = pneg %p83
      $region14: #{_lambda_.5} parent=11 // pred_check_branch
        %147 = sbr.rel (%p145) target = $region16
      $region15: #{_lambda_.5} parent=11 // pred_region
        _
      $region16: #{_lambda_.5} parent=11 // pred_fallthru
        _
      // Predicated region
      $region17: #{_lambda_.5} parent=11 // pred_check
        %p148 = pneg %p104
      $region18: #{_lambda_.5} parent=11 // pred_check_branch
        %150 = sbr.rel (%p148) target = $region20
      $region19: #{_lambda_.5} parent=11 // pred_region
        _
      $region20: #{_lambda_.5} parent=11 // pred_fallthru
        _
    $region12: #{_lambda_.5} parent=5 // pred_fallthru
      _
    %p151 = scmp.lt.s32.totalorder %s10, 2
    // Predicated region
    $region21: #{_lambda_.5} parent=5 // pred_check
      %p152 = pneg %p151
    $region22: #{_lambda_.5} parent=5 // pred_check_branch
      %154 = sbr.rel (%p152) target = $region24
    $region23: #{_lambda_.5} parent=5 // pred_region
      // Predicated region
      $region25: #{_lambda_.5} parent=23 // pred_check
        %p155 = pneg %p30
      $region26: #{_lambda_.5} parent=23 // pred_check_branch
        %157 = sbr.rel (%p155) target = $region28
      $region27: #{_lambda_.5} parent=23 // pred_region
        %p158 = scmp.lt.s32.totalorder %s10, 1
        %s159 = scalar_select %p158, %s10, 1
        %s160 = smul.addr %s159, 2
        %s161 = smul.addr %s160, 8
        %s162 = scalar_lea.vmem %s0, %s161
      $region28: #{_lambda_.5} parent=23 // pred_fallthru
        _
      // Predicated region
      $region29: #{_lambda_.5} parent=23 // pred_check
        %p163 = pneg %p56
      $region30: #{_lambda_.5} parent=23 // pred_check_branch
        %165 = sbr.rel (%p163) target = $region32
      $region31: #{_lambda_.5} parent=23 // pred_region
        %p166 = scmp.lt.s32.totalorder %s10, 1
        %s167 = scalar_select %p166, %s10, 1
        %s168 = smul.addr %s167, 2
        %s169 = smul.addr %s168, 8
        %s170 = scalar_lea.vmem %s1, %s169
      $region32: #{_lambda_.5} parent=23 // pred_fallthru
        _
    $region24: #{_lambda_.5} parent=5 // pred_fallthru
      _
    %p171 = scmp.le.s32.totalorder 1, %s10
    %p172 = scmp.lt.s32.totalorder %s10, 3
    %p173 = pnand %p171, %p172
    %p174 = pneg %p173
    // Predicated region
    $region33: #{_lambda_.5} parent=5 // pred_check
      _
    $region34: #{_lambda_.5} parent=5 // pred_check_branch
      %176 = sbr.rel (%p173) target = $region36
    $region35: #{_lambda_.5} parent=5 // pred_region
      %s177 = ssub.s32 %s10, 1
      %p178 = scmp.lt.s32.totalorder %s15, 1
      %s179 = scalar_select %p178, %s15, 1
      %s180 = smul.addr %s179, 2
      %s181 = smul.addr %s180, 8
      %s182 = scalar_lea.vmem %s0, %s181
      %p183 = pneg %p36
      %p184 = pneg %p33
      %p185 = scmp.lt.s32.totalorder %s15, 1
      %s186 = scalar_select %p185, %s15, 1
      %s187 = smul.addr %s186, 2
      %s188 = smul.addr %s187, 8
      %s189 = scalar_lea.vmem %s1, %s188
      %p190 = pneg %p62
      %p191 = pneg %p59
      %p192 = pneg %p83
      %p193 = pneg %p80
      %p194 = pneg %p104
      %p195 = pneg %p101
      %p196 = pneg %p130
      %p197 = pneg %p127
      %p198 = scmp.lt.s32.totalorder %s15, 1
      %s199 = scalar_select %p198, %s15, 1
      %s200 = smul.addr %s199, 2
      %s201 = smul.addr %s200, 8
      %s202 = scalar_lea.vmem %s4, %s201
      %p203 = scmp.lt.s32.totalorder %s15, 1
      %s204 = scalar_select %p203, %s15, 1
      %s205 = smul.addr %s204, 2
      %s206 = smul.addr %s205, 8
      %s207 = scalar_lea.vmem %s0, %s206
      %p208 = scmp.lt.s32.totalorder %s15, 1
      %s209 = scalar_select %p208, %s15, 1
      %s210 = smul.addr %s209, 2
      %s211 = smul.addr %s210, 8
      %s212 = scalar_lea.vmem %s1, %s211
      %p213 = scmp.lt.s32.totalorder %s15, 1
      %s214 = scalar_select %p213, %s15, 1
      %s215 = smul.addr %s214, 2
      %s216 = smul.addr %s215, 8
      %s217 = scalar_lea.vmem %s4, %s216
      %v219 = vld [vmem:[%s207] sm:$0xff]
      %v220 = vld [vmem:[%s207 + $0x8] sm:$0xff]
      %v221 = vrot.slane %v219, 7
      %v222 = vrot.slane %v220, 7
      %v223 = vlaneseq
      %v224 = vshrl.u32 %v223, 7
      %vm225 = vcmp.lt.s32.totalorder %v224, 1
      %v226 = vsel %vm225, %v221, %v222
      %v227 = vsel %vm225, %v222, %v221
      %v228 = vrot.slane %v219, 1
      %v229 = vrot.slane %v220, 1
      %vm230 = vcmp.lt.s32.totalorder %v224, 7
      %v231 = vsel %vm230, %v228, %v229
      %v232 = vsel %vm230, %v229, %v228
      %v233 = vld [vmem:[%s212] sm:$0xff]
      %v234 = vld [vmem:[%s212 + $0x8] sm:$0xff]
      %237 = vrot.lane.b32.xlu0 %v219, 4
      %v238 = vpop.permute.xlu0 %237
      %239 = vrot.lane.b32.xlu0 %v220, 4
      %v240 = vpop.permute.xlu0 %239
      %245 = vrot.lane.b32.xlu0 %v231, 8
      %v246 = vpop.permute.xlu0 %245
      %247 = vrot.lane.b32.xlu0 %v232, 8
      %v248 = vpop.permute.xlu0 %247
      %253 = vrot.lane.b32.xlu0 %v233, 12
      %v254 = vpop.permute.xlu0 %253
      %255 = vrot.lane.b32.xlu0 %v234, 12
      %v256 = vpop.permute.xlu0 %255
      %vm259 = vcmask 31744
      %v260 = vsel %vm259, %v227, %v238
      %v261 = vsel %vm259, %v226, %v240
      %vm262 = vcmask 64512
      %v263 = vsel %vm262, %v260, %v246
      %v264 = vsel %vm262, %v261, %v248
      %vm265 = vcmask 97280
      %v266 = vsel %vm265, %v263, %v254
      %v267 = vsel %vm265, %v264, %v256
      %v268 = vpack.c.bf16 %v267, %v266
      %v269 = vld [vmem:[%s2] sm:$0xf]
      %v270 = vld [vmem:[%s2 + $0x4] sm:$0xf]
      %v271 = vld [vmem:[%s3] sm:$0xff]
      %v272 = vld [vmem:[%s3 + $0x8] sm:$0xff]
      %v275 = vunpack.c.l.b16 %v269
      %v276 = vunpack.c.l.b16 %v270
      %v277 = vpack.c.b16 %v276, %v275
      %vm279 = vcmask 130048
      %v281 = vsel %vm279, %v268, 0
      %283 = vmatpush.bf16.msra.mxu0 0
      %284 = vmatpush.bf16.msra.mxu0 0
      %285 = vmatpush.bf16.msra.mxu0 0
      %286 = vmatpush.bf16.msra.mxu0 0
      %287 = vmatpush.bf16.msra.mxu0 0
      %288 = vmatpush.bf16.msra.mxu0 0
      %289 = vmatpush.bf16.msra.mxu0 0
      %290 = vmatpush.bf16.msra.mxu0 %v277
      %291 = vmatmul.bf16.gmra.mxu0 %v281
      %v292 = vpop.f32.mrf.mxu0
      %v293 = vadd.f32 %v271, %v292
      %v294 = vpop.f32.mrf.mxu0
      %v295 = vadd.f32 %v272, %v294
      %296 = vdwg.mxu0
      %vm297 = vcmask 261120
      %298 = vst.msk [vmem:[%s217] sm:$0xff] %vm297, %v293
      %299 = vst.msk [vmem:[%s217 + $0x8] sm:$0xff] %vm297, %v295
      %p300 = scmp.lt.s32.totalorder %s15, 1
      %s301 = scalar_select %p300, %s15, 1
      %s302 = smul.addr %s301, 2
      %s303 = smul.addr %s302, 8
      %s304 = scalar_lea.vmem %s4, %s303
      // Predicated region
      $region37: #{_lambda_.5} parent=35 // pred_check
        %p305 = pneg %p127
      $region38: #{_lambda_.5} parent=35 // pred_check_branch
        %307 = sbr.rel (%p305) target = $region40
      $region39: #{_lambda_.5} parent=35 // pred_region
        _
      $region40: #{_lambda_.5} parent=35 // pred_fallthru
        _
    $region36: #{_lambda_.5} parent=5 // pred_fallthru
      _
    %p308 = scmp.le.s32.totalorder 2, %s10
    // Predicated region
    $region41: #{_lambda_.5} parent=5 // pred_check
      %p309 = pneg %p308
    $region42: #{_lambda_.5} parent=5 // pred_check_branch
      %311 = sbr.rel (%p309) target = $region44
    $region43: #{_lambda_.5} parent=5 // pred_region
      %s312 = ssub.s32 %s10, 2
      // Predicated region
      $region45: #{_lambda_.5} parent=43 // pred_check
        %p313 = pneg %p133
      $region46: #{_lambda_.5} parent=43 // pred_check_branch
        %315 = sbr.rel (%p313) target = $region48
      $region47: #{_lambda_.5} parent=43 // pred_region
        %p316 = scmp.lt.s32.totalorder %s16, 1
        %s317 = scalar_select %p316, %s16, 1
        %s318 = smul.addr %s317, 2
        %s319 = smul.addr %s318, 8
        %s320 = scalar_lea.vmem %s4, %s319
      $region48: #{_lambda_.5} parent=43 // pred_fallthru
        _
    $region44: #{_lambda_.5} parent=5 // pred_fallthru
      _
  $region6: #{_lambda_.5} parent=0 // loop_footer
    %s14 = sadd.s32 1, %s10
  $region7: #{_lambda_.5} parent=0 // loop_footer_branch
    %9 = sbr.rel target = $region3
  $region8: #{_lambda_.5} parent=0 // loop_exit
    _

// kernel: _lambda_.6
$region0: #{_lambda_.6}
  #allocation0 [shape = 'u32[]', space=smem, size = 0x4, offset = 0x4, fixed_abs, tag = 'smem constant byte address 0x4 - core index']
  #allocation1 [shape = 'u32[72,128]{1,0:T(1,128)}', space=vmem, size = 0x9000, scoped, tag = 'internal scratch']
  #allocation2 [shape = 'f32[16,32]{1,0:T(8,128)}', space=vmem, size = 0x2000, scoped, tag = 'scratch operand']
  %s0 = inlined_call_operand.vmem [shape: f32[2,16,32], index: 0, kind: input, shape index: {}]
  %s1 = inlined_call_operand.vmem [shape: bf16[32,96], index: 1, kind: input, shape index: {}]
  %s2 = inlined_call_operand.vmem [shape: f32[1,96], index: 2, kind: input, shape index: {}]
  %s3 = inlined_call_operand.vmem [shape: bf16[32,32], index: 3, kind: input, shape index: {}]
  %s4 = inlined_call_operand.vmem [shape: f32[1,32], index: 4, kind: input, shape index: {}, may-alias: {4,6,8,10,12,15}]
  %s5 = inlined_call_operand.vmem [shape: f32[1,32], index: 5, kind: input, shape index: {}, may-alias: {5,11}]
  %s6 = inlined_call_operand.vmem [shape: f32[1,32], index: 6, kind: input, shape index: {}, may-alias: {4,6,8,10,12,15}]
  %s7 = inlined_call_operand.vmem [shape: bf16[32,32], index: 7, kind: input, shape index: {}]
  %s8 = inlined_call_operand.vmem [shape: f32[1,32], index: 8, kind: input, shape index: {}, may-alias: {4,6,8,10,12,15}]
  %s9 = inlined_call_operand.vmem [shape: bf16[32,32], index: 9, kind: input, shape index: {}]
  %s10 = inlined_call_operand.vmem [shape: f32[1,32], index: 10, kind: input, shape index: {}, may-alias: {4,6,8,10,12,15}]
  %s11 = inlined_call_operand.vmem [shape: f32[1,32], index: 11, kind: input, shape index: {}, may-alias: {5,11}]
  %s12 = inlined_call_operand.vmem [shape: f32[1,32], index: 12, kind: input, shape index: {}, may-alias: {4,6,8,10,12,15}]
  %s13 = inlined_call_operand.vmem [shape: bf16[96,32], index: 13, kind: input, shape index: {}]
  %s14 = inlined_call_operand.vmem [shape: f32[1,32], index: 14, kind: input, shape index: {}]
  %s15 = inlined_call_operand.vmem [shape: f32[1,32], index: 15, kind: input, shape index: {}, may-alias: {4,6,8,10,12,15}]
  %s16 = inlined_call_operand.vmem [shape: f32[2,8,32], index: 16, kind: output, shape index: {}]
  %s17 = sld [smem:[#allocation0]]
  $region97: #{_lambda_.6} parent=0
    _
  %s19 = ssub.s32 1, %s17
  %s20 = scalar_select 0, %s19, %s17
  loop: start=0, step=1, limit=4
  $region2: #{_lambda_.6} parent=0 // loop_pre_header
    _
  $region3: #{_lambda_.6} parent=0 // loop_header
    %s22 = sphi 0, %s26
    %p23 = scmp.ge.s32.totalorder %s22, 4
    %s32 = sphi 0, %s34
    %s35 = sphi 0, %s32
    %s36 = sphi 0, %s35
    %s52 = sphi 0, %s36
    %s56 = sphi 0, %s56
    %s58 = sphi 0, %s56
    %s59 = sphi 0, %s58
    %s73 = sphi 0, %s59
    %s77 = sphi 0, %s77
    %s79 = sphi 0, %s77
    %s80 = sphi 0, %s79
    %s94 = sphi 0, %s80
    %s98 = sphi 0, %s98
    %s100 = sphi 0, %s98
    %s101 = sphi 0, %s100
    %s115 = sphi 0, %s101
    %s119 = sphi 0, %s119
    %s121 = sphi 0, %s119
    %s122 = sphi 0, %s121
    %s136 = sphi 0, %s122
    %s140 = sphi 0, %s140
    %s142 = sphi 0, %s140
    %s143 = sphi 0, %s142
    %s157 = sphi 0, %s143
    %s161 = sphi 0, %s161
    %s163 = sphi 0, %s161
    %s164 = sphi 0, %s163
    %s178 = sphi 0, %s164
    %s182 = sphi 0, %s182
    %s184 = sphi 0, %s182
    %s185 = sphi 0, %s184
    %s199 = sphi 0, %s185
    %s203 = sphi 0, %s203
    %s205 = sphi 0, %s203
    %s206 = sphi 0, %s205
    %s220 = sphi 0, %s206
    %s224 = sphi 0, %s224
    %s226 = sphi 0, %s224
    %s227 = sphi 0, %s226
    %s241 = sphi 0, %s227
    %s245 = sphi 0, %s245
    %s247 = sphi 0, %s245
    %s248 = sphi 0, %s247
    %s262 = sphi 0, %s248
    %s266 = sphi 0, %s266
    %s268 = sphi 0, %s266
    %s269 = sphi 0, %s268
    %s283 = sphi 0, %s269
    %s287 = sphi 0, %s287
    %s289 = sphi 0, %s287
    %s290 = sphi 0, %s289
    %s304 = sphi 0, %s290
    %s308 = sphi 0, %s308
    %s310 = sphi 0, %s308
    %s311 = sphi 0, %s310
    %s325 = sphi 0, %s311
    %s329 = sphi 0, %s329
    %s331 = sphi 0, %s329
    %s332 = sphi 0, %s331
    %s346 = sphi 0, %s332
    %s350 = sphi 0, %s350
    %s352 = sphi 0, %s350
    %s353 = sphi 0, %s352
    %s367 = sphi 0, %s353
    %s373 = sphi 0, %s375
    %s376 = sphi 0, %s373
    %s377 = sphi 0, %s376
    %s393 = sphi 0, %s377
  $region4: #{_lambda_.6} parent=0 // loop_header_branch
    %25 = sbr.rel (%p23) target = $region8
  $region5: #{_lambda_.6} parent=0 // loop_body
    %s27 = ssub.s32 %s22, 1
    %s28 = ssub.s32 %s22, 2
    %s29 = sadd.s32 %s22, 1
    %s30 = ssub.s32 %s22, %s29
    %p31 = scmp.eq.s32.totalorder %s30, 0
    %s33 = sadd.s32 %s32, 1
    %s34 = scalar_select %p31, %s32, %s33
    %p37 = pneg %p31
    %p38 = scmp.eq.s32.totalorder %s22, 1
    %p39 = por %p37, %p38
    %p40 = scmp.ne.s32.totalorder %s32, %s35
    %p41 = scmp.eq.s32.totalorder %s22, 0
    %p42 = por %p40, %p41
    %p43 = scmp.ne.s32.totalorder %s32, %s35
    %p44 = scmp.eq.s32.totalorder %s27, 1
    %p45 = por %p43, %p44
    %p46 = scmp.ne.s32.totalorder %s35, %s36
    %p47 = scmp.eq.s32.totalorder %s27, 0
    %p48 = por %p46, %p47
    %p49 = scmp.ne.s32.totalorder %s35, %s36
    %p50 = scmp.eq.s32.totalorder %s28, 1
    %p51 = por %p49, %p50
    %p53 = scmp.ne.s32.totalorder %s36, %s52
    %p54 = scmp.eq.s32.totalorder %s28, 0
    %p55 = por %p53, %p54
    %s57 = sadd.s32 %s56, 1
    %p60 = scmp.eq.s32.totalorder %s22, 1
    %p61 = scmp.ne.s32.totalorder %s56, %s58
    %p62 = scmp.eq.s32.totalorder %s22, 0
    %p63 = por %p61, %p62
    %p64 = scmp.ne.s32.totalorder %s56, %s58
    %p65 = scmp.eq.s32.totalorder %s27, 1
    %p66 = por %p64, %p65
    %p67 = scmp.ne.s32.totalorder %s58, %s59
    %p68 = scmp.eq.s32.totalorder %s27, 0
    %p69 = por %p67, %p68
    %p70 = scmp.ne.s32.totalorder %s58, %s59
    %p71 = scmp.eq.s32.totalorder %s28, 1
    %p72 = por %p70, %p71
    %p74 = scmp.ne.s32.totalorder %s59, %s73
    %p75 = scmp.eq.s32.totalorder %s28, 0
    %p76 = por %p74, %p75
    %s78 = sadd.s32 %s77, 1
    %p81 = scmp.eq.s32.totalorder %s22, 1
    %p82 = scmp.ne.s32.totalorder %s77, %s79
    %p83 = scmp.eq.s32.totalorder %s22, 0
    %p84 = por %p82, %p83
    %p85 = scmp.ne.s32.totalorder %s77, %s79
    %p86 = scmp.eq.s32.totalorder %s27, 1
    %p87 = por %p85, %p86
    %p88 = scmp.ne.s32.totalorder %s79, %s80
    %p89 = scmp.eq.s32.totalorder %s27, 0
    %p90 = por %p88, %p89
    %p91 = scmp.ne.s32.totalorder %s79, %s80
    %p92 = scmp.eq.s32.totalorder %s28, 1
    %p93 = por %p91, %p92
    %p95 = scmp.ne.s32.totalorder %s80, %s94
    %p96 = scmp.eq.s32.totalorder %s28, 0
    %p97 = por %p95, %p96
    %s99 = sadd.s32 %s98, 1
    %p102 = scmp.eq.s32.totalorder %s22, 1
    %p103 = scmp.ne.s32.totalorder %s98, %s100
    %p104 = scmp.eq.s32.totalorder %s22, 0
    %p105 = por %p103, %p104
    %p106 = scmp.ne.s32.totalorder %s98, %s100
    %p107 = scmp.eq.s32.totalorder %s27, 1
    %p108 = por %p106, %p107
    %p109 = scmp.ne.s32.totalorder %s100, %s101
    %p110 = scmp.eq.s32.totalorder %s27, 0
    %p111 = por %p109, %p110
    %p112 = scmp.ne.s32.totalorder %s100, %s101
    %p113 = scmp.eq.s32.totalorder %s28, 1
    %p114 = por %p112, %p113
    %p116 = scmp.ne.s32.totalorder %s101, %s115
    %p117 = scmp.eq.s32.totalorder %s28, 0
    %p118 = por %p116, %p117
    %s120 = sadd.s32 %s119, 1
    %p123 = scmp.eq.s32.totalorder %s22, 1
    %p124 = scmp.ne.s32.totalorder %s119, %s121
    %p125 = scmp.eq.s32.totalorder %s22, 0
    %p126 = por %p124, %p125
    %p127 = scmp.ne.s32.totalorder %s119, %s121
    %p128 = scmp.eq.s32.totalorder %s27, 1
    %p129 = por %p127, %p128
    %p130 = scmp.ne.s32.totalorder %s121, %s122
    %p131 = scmp.eq.s32.totalorder %s27, 0
    %p132 = por %p130, %p131
    %p133 = scmp.ne.s32.totalorder %s121, %s122
    %p134 = scmp.eq.s32.totalorder %s28, 1
    %p135 = por %p133, %p134
    %p137 = scmp.ne.s32.totalorder %s122, %s136
    %p138 = scmp.eq.s32.totalorder %s28, 0
    %p139 = por %p137, %p138
    %s141 = sadd.s32 %s140, 1
    %p144 = scmp.eq.s32.totalorder %s22, 1
    %p145 = scmp.ne.s32.totalorder %s140, %s142
    %p146 = scmp.eq.s32.totalorder %s22, 0
    %p147 = por %p145, %p146
    %p148 = scmp.ne.s32.totalorder %s140, %s142
    %p149 = scmp.eq.s32.totalorder %s27, 1
    %p150 = por %p148, %p149
    %p151 = scmp.ne.s32.totalorder %s142, %s143
    %p152 = scmp.eq.s32.totalorder %s27, 0
    %p153 = por %p151, %p152
    %p154 = scmp.ne.s32.totalorder %s142, %s143
    %p155 = scmp.eq.s32.totalorder %s28, 1
    %p156 = por %p154, %p155
    %p158 = scmp.ne.s32.totalorder %s143, %s157
    %p159 = scmp.eq.s32.totalorder %s28, 0
    %p160 = por %p158, %p159
    %s162 = sadd.s32 %s161, 1
    %p165 = scmp.eq.s32.totalorder %s22, 1
    %p166 = scmp.ne.s32.totalorder %s161, %s163
    %p167 = scmp.eq.s32.totalorder %s22, 0
    %p168 = por %p166, %p167
    %p169 = scmp.ne.s32.totalorder %s161, %s163
    %p170 = scmp.eq.s32.totalorder %s27, 1
    %p171 = por %p169, %p170
    %p172 = scmp.ne.s32.totalorder %s163, %s164
    %p173 = scmp.eq.s32.totalorder %s27, 0
    %p174 = por %p172, %p173
    %p175 = scmp.ne.s32.totalorder %s163, %s164
    %p176 = scmp.eq.s32.totalorder %s28, 1
    %p177 = por %p175, %p176
    %p179 = scmp.ne.s32.totalorder %s164, %s178
    %p180 = scmp.eq.s32.totalorder %s28, 0
    %p181 = por %p179, %p180
    %s183 = sadd.s32 %s182, 1
    %p186 = scmp.eq.s32.totalorder %s22, 1
    %p187 = scmp.ne.s32.totalorder %s182, %s184
    %p188 = scmp.eq.s32.totalorder %s22, 0
    %p189 = por %p187, %p188
    %p190 = scmp.ne.s32.totalorder %s182, %s184
    %p191 = scmp.eq.s32.totalorder %s27, 1
    %p192 = por %p190, %p191
    %p193 = scmp.ne.s32.totalorder %s184, %s185
    %p194 = scmp.eq.s32.totalorder %s27, 0
    %p195 = por %p193, %p194
    %p196 = scmp.ne.s32.totalorder %s184, %s185
    %p197 = scmp.eq.s32.totalorder %s28, 1
    %p198 = por %p196, %p197
    %p200 = scmp.ne.s32.totalorder %s185, %s199
    %p201 = scmp.eq.s32.totalorder %s28, 0
    %p202 = por %p200, %p201
    %s204 = sadd.s32 %s203, 1
    %p207 = scmp.eq.s32.totalorder %s22, 1
    %p208 = scmp.ne.s32.totalorder %s203, %s205
    %p209 = scmp.eq.s32.totalorder %s22, 0
    %p210 = por %p208, %p209
    %p211 = scmp.ne.s32.totalorder %s203, %s205
    %p212 = scmp.eq.s32.totalorder %s27, 1
    %p213 = por %p211, %p212
    %p214 = scmp.ne.s32.totalorder %s205, %s206
    %p215 = scmp.eq.s32.totalorder %s27, 0
    %p216 = por %p214, %p215
    %p217 = scmp.ne.s32.totalorder %s205, %s206
    %p218 = scmp.eq.s32.totalorder %s28, 1
    %p219 = por %p217, %p218
    %p221 = scmp.ne.s32.totalorder %s206, %s220
    %p222 = scmp.eq.s32.totalorder %s28, 0
    %p223 = por %p221, %p222
    %s225 = sadd.s32 %s224, 1
    %p228 = scmp.eq.s32.totalorder %s22, 1
    %p229 = scmp.ne.s32.totalorder %s224, %s226
    %p230 = scmp.eq.s32.totalorder %s22, 0
    %p231 = por %p229, %p230
    %p232 = scmp.ne.s32.totalorder %s224, %s226
    %p233 = scmp.eq.s32.totalorder %s27, 1
    %p234 = por %p232, %p233
    %p235 = scmp.ne.s32.totalorder %s226, %s227
    %p236 = scmp.eq.s32.totalorder %s27, 0
    %p237 = por %p235, %p236
    %p238 = scmp.ne.s32.totalorder %s226, %s227
    %p239 = scmp.eq.s32.totalorder %s28, 1
    %p240 = por %p238, %p239
    %p242 = scmp.ne.s32.totalorder %s227, %s241
    %p243 = scmp.eq.s32.totalorder %s28, 0
    %p244 = por %p242, %p243
    %s246 = sadd.s32 %s245, 1
    %p249 = scmp.eq.s32.totalorder %s22, 1
    %p250 = scmp.ne.s32.totalorder %s245, %s247
    %p251 = scmp.eq.s32.totalorder %s22, 0
    %p252 = por %p250, %p251
    %p253 = scmp.ne.s32.totalorder %s245, %s247
    %p254 = scmp.eq.s32.totalorder %s27, 1
    %p255 = por %p253, %p254
    %p256 = scmp.ne.s32.totalorder %s247, %s248
    %p257 = scmp.eq.s32.totalorder %s27, 0
    %p258 = por %p256, %p257
    %p259 = scmp.ne.s32.totalorder %s247, %s248
    %p260 = scmp.eq.s32.totalorder %s28, 1
    %p261 = por %p259, %p260
    %p263 = scmp.ne.s32.totalorder %s248, %s262
    %p264 = scmp.eq.s32.totalorder %s28, 0
    %p265 = por %p263, %p264
    %s267 = sadd.s32 %s266, 1
    %p270 = scmp.eq.s32.totalorder %s22, 1
    %p271 = scmp.ne.s32.totalorder %s266, %s268
    %p272 = scmp.eq.s32.totalorder %s22, 0
    %p273 = por %p271, %p272
    %p274 = scmp.ne.s32.totalorder %s266, %s268
    %p275 = scmp.eq.s32.totalorder %s27, 1
    %p276 = por %p274, %p275
    %p277 = scmp.ne.s32.totalorder %s268, %s269
    %p278 = scmp.eq.s32.totalorder %s27, 0
    %p279 = por %p277, %p278
    %p280 = scmp.ne.s32.totalorder %s268, %s269
    %p281 = scmp.eq.s32.totalorder %s28, 1
    %p282 = por %p280, %p281
    %p284 = scmp.ne.s32.totalorder %s269, %s283
    %p285 = scmp.eq.s32.totalorder %s28, 0
    %p286 = por %p284, %p285
    %s288 = sadd.s32 %s287, 1
    %p291 = scmp.eq.s32.totalorder %s22, 1
    %p292 = scmp.ne.s32.totalorder %s287, %s289
    %p293 = scmp.eq.s32.totalorder %s22, 0
    %p294 = por %p292, %p293
    %p295 = scmp.ne.s32.totalorder %s287, %s289
    %p296 = scmp.eq.s32.totalorder %s27, 1
    %p297 = por %p295, %p296
    %p298 = scmp.ne.s32.totalorder %s289, %s290
    %p299 = scmp.eq.s32.totalorder %s27, 0
    %p300 = por %p298, %p299
    %p301 = scmp.ne.s32.totalorder %s289, %s290
    %p302 = scmp.eq.s32.totalorder %s28, 1
    %p303 = por %p301, %p302
    %p305 = scmp.ne.s32.totalorder %s290, %s304
    %p306 = scmp.eq.s32.totalorder %s28, 0
    %p307 = por %p305, %p306
    %s309 = sadd.s32 %s308, 1
    %p312 = scmp.eq.s32.totalorder %s22, 1
    %p313 = scmp.ne.s32.totalorder %s308, %s310
    %p314 = scmp.eq.s32.totalorder %s22, 0
    %p315 = por %p313, %p314
    %p316 = scmp.ne.s32.totalorder %s308, %s310
    %p317 = scmp.eq.s32.totalorder %s27, 1
    %p318 = por %p316, %p317
    %p319 = scmp.ne.s32.totalorder %s310, %s311
    %p320 = scmp.eq.s32.totalorder %s27, 0
    %p321 = por %p319, %p320
    %p322 = scmp.ne.s32.totalorder %s310, %s311
    %p323 = scmp.eq.s32.totalorder %s28, 1
    %p324 = por %p322, %p323
    %p326 = scmp.ne.s32.totalorder %s311, %s325
    %p327 = scmp.eq.s32.totalorder %s28, 0
    %p328 = por %p326, %p327
    %s330 = sadd.s32 %s329, 1
    %p333 = scmp.eq.s32.totalorder %s22, 1
    %p334 = scmp.ne.s32.totalorder %s329, %s331
    %p335 = scmp.eq.s32.totalorder %s22, 0
    %p336 = por %p334, %p335
    %p337 = scmp.ne.s32.totalorder %s329, %s331
    %p338 = scmp.eq.s32.totalorder %s27, 1
    %p339 = por %p337, %p338
    %p340 = scmp.ne.s32.totalorder %s331, %s332
    %p341 = scmp.eq.s32.totalorder %s27, 0
    %p342 = por %p340, %p341
    %p343 = scmp.ne.s32.totalorder %s331, %s332
    %p344 = scmp.eq.s32.totalorder %s28, 1
    %p345 = por %p343, %p344
    %p347 = scmp.ne.s32.totalorder %s332, %s346
    %p348 = scmp.eq.s32.totalorder %s28, 0
    %p349 = por %p347, %p348
    %s351 = sadd.s32 %s350, 1
    %p354 = scmp.eq.s32.totalorder %s22, 1
    %p355 = scmp.ne.s32.totalorder %s350, %s352
    %p356 = scmp.eq.s32.totalorder %s22, 0
    %p357 = por %p355, %p356
    %p358 = scmp.ne.s32.totalorder %s350, %s352
    %p359 = scmp.eq.s32.totalorder %s27, 1
    %p360 = por %p358, %p359
    %p361 = scmp.ne.s32.totalorder %s352, %s353
    %p362 = scmp.eq.s32.totalorder %s27, 0
    %p363 = por %p361, %p362
    %p364 = scmp.ne.s32.totalorder %s352, %s353
    %p365 = scmp.eq.s32.totalorder %s28, 1
    %p366 = por %p364, %p365
    %p368 = scmp.ne.s32.totalorder %s353, %s367
    %p369 = scmp.eq.s32.totalorder %s28, 0
    %p370 = por %p368, %p369
    %s371 = ssub.s32 %s22, %s29
    %p372 = scmp.eq.s32.totalorder %s371, 0
    %s374 = sadd.s32 %s373, 1
    %s375 = scalar_select %p372, %s373, %s374
    %p378 = pneg %p372
    %p379 = scmp.eq.s32.totalorder %s22, 1
    %p380 = por %p378, %p379
    %p381 = scmp.ne.s32.totalorder %s373, %s376
    %p382 = scmp.eq.s32.totalorder %s22, 0
    %p383 = por %p381, %p382
    %p384 = scmp.ne.s32.totalorder %s373, %s376
    %p385 = scmp.eq.s32.totalorder %s27, 1
    %p386 = por %p384, %p385
    %p387 = scmp.ne.s32.totalorder %s376, %s377
    %p388 = scmp.eq.s32.totalorder %s27, 0
    %p389 = por %p387, %p388
    %p390 = scmp.ne.s32.totalorder %s376, %s377
    %p391 = scmp.eq.s32.totalorder %s28, 1
    %p392 = por %p390, %p391
    %p394 = scmp.ne.s32.totalorder %s377, %s393
    %p395 = scmp.eq.s32.totalorder %s28, 0
    %p396 = por %p394, %p395
    %p397 = scmp.le.s32.totalorder 1, %s22
    %p398 = scmp.lt.s32.totalorder %s22, 3
    %p399 = pnand %p397, %p398
    %p400 = pneg %p399
    // Predicated region
    $region9: #{_lambda_.6} parent=5 // pred_check
      _
    $region10: #{_lambda_.6} parent=5 // pred_check_branch
      %402 = sbr.rel (%p399) target = $region12
    $region11: #{_lambda_.6} parent=5 // pred_region
      %s403 = ssub.s32 %s22, 1
      // Predicated region
      $region13: #{_lambda_.6} parent=11 // pred_check
        %p404 = pneg %p69
      $region14: #{_lambda_.6} parent=11 // pred_check_branch
        %406 = sbr.rel (%p404) target = $region16
      $region15: #{_lambda_.6} parent=11 // pred_region
        _
      $region16: #{_lambda_.6} parent=11 // pred_fallthru
        _
      // Predicated region
      $region17: #{_lambda_.6} parent=11 // pred_check
        %p407 = pneg %p90
      $region18: #{_lambda_.6} parent=11 // pred_check_branch
        %409 = sbr.rel (%p407) target = $region20
      $region19: #{_lambda_.6} parent=11 // pred_region
        _
      $region20: #{_lambda_.6} parent=11 // pred_fallthru
        _
      // Predicated region
      $region21: #{_lambda_.6} parent=11 // pred_check
        %p410 = pneg %p111
      $region22: #{_lambda_.6} parent=11 // pred_check_branch
        %412 = sbr.rel (%p410) target = $region24
      $region23: #{_lambda_.6} parent=11 // pred_region
        _
      $region24: #{_lambda_.6} parent=11 // pred_fallthru
        _
      // Predicated region
      $region25: #{_lambda_.6} parent=11 // pred_check
        %p413 = pneg %p132
      $region26: #{_lambda_.6} parent=11 // pred_check_branch
        %415 = sbr.rel (%p413) target = $region28
      $region27: #{_lambda_.6} parent=11 // pred_region
        _
      $region28: #{_lambda_.6} parent=11 // pred_fallthru
        _
      // Predicated region
      $region29: #{_lambda_.6} parent=11 // pred_check
        %p416 = pneg %p153
      $region30: #{_lambda_.6} parent=11 // pred_check_branch
        %418 = sbr.rel (%p416) target = $region32
      $region31: #{_lambda_.6} parent=11 // pred_region
        _
      $region32: #{_lambda_.6} parent=11 // pred_fallthru
        _
      // Predicated region
      $region33: #{_lambda_.6} parent=11 // pred_check
        %p419 = pneg %p174
      $region34: #{_lambda_.6} parent=11 // pred_check_branch
        %421 = sbr.rel (%p419) target = $region36
      $region35: #{_lambda_.6} parent=11 // pred_region
        _
      $region36: #{_lambda_.6} parent=11 // pred_fallthru
        _
      // Predicated region
      $region37: #{_lambda_.6} parent=11 // pred_check
        %p422 = pneg %p195
      $region38: #{_lambda_.6} parent=11 // pred_check_branch
        %424 = sbr.rel (%p422) target = $region40
      $region39: #{_lambda_.6} parent=11 // pred_region
        _
      $region40: #{_lambda_.6} parent=11 // pred_fallthru
        _
      // Predicated region
      $region41: #{_lambda_.6} parent=11 // pred_check
        %p425 = pneg %p216
      $region42: #{_lambda_.6} parent=11 // pred_check_branch
        %427 = sbr.rel (%p425) target = $region44
      $region43: #{_lambda_.6} parent=11 // pred_region
        _
      $region44: #{_lambda_.6} parent=11 // pred_fallthru
        _
      // Predicated region
      $region45: #{_lambda_.6} parent=11 // pred_check
        %p428 = pneg %p237
      $region46: #{_lambda_.6} parent=11 // pred_check_branch
        %430 = sbr.rel (%p428) target = $region48
      $region47: #{_lambda_.6} parent=11 // pred_region
        _
      $region48: #{_lambda_.6} parent=11 // pred_fallthru
        _
      // Predicated region
      $region49: #{_lambda_.6} parent=11 // pred_check
        %p431 = pneg %p258
      $region50: #{_lambda_.6} parent=11 // pred_check_branch
        %433 = sbr.rel (%p431) target = $region52
      $region51: #{_lambda_.6} parent=11 // pred_region
        _
      $region52: #{_lambda_.6} parent=11 // pred_fallthru
        _
      // Predicated region
      $region53: #{_lambda_.6} parent=11 // pred_check
        %p434 = pneg %p279
      $region54: #{_lambda_.6} parent=11 // pred_check_branch
        %436 = sbr.rel (%p434) target = $region56
      $region55: #{_lambda_.6} parent=11 // pred_region
        _
      $region56: #{_lambda_.6} parent=11 // pred_fallthru
        _
      // Predicated region
      $region57: #{_lambda_.6} parent=11 // pred_check
        %p437 = pneg %p300
      $region58: #{_lambda_.6} parent=11 // pred_check_branch
        %439 = sbr.rel (%p437) target = $region60
      $region59: #{_lambda_.6} parent=11 // pred_region
        _
      $region60: #{_lambda_.6} parent=11 // pred_fallthru
        _
      // Predicated region
      $region61: #{_lambda_.6} parent=11 // pred_check
        %p440 = pneg %p321
      $region62: #{_lambda_.6} parent=11 // pred_check_branch
        %442 = sbr.rel (%p440) target = $region64
      $region63: #{_lambda_.6} parent=11 // pred_region
        _
      $region64: #{_lambda_.6} parent=11 // pred_fallthru
        _
      // Predicated region
      $region65: #{_lambda_.6} parent=11 // pred_check
        %p443 = pneg %p342
      $region66: #{_lambda_.6} parent=11 // pred_check_branch
        %445 = sbr.rel (%p443) target = $region68
      $region67: #{_lambda_.6} parent=11 // pred_region
        _
      $region68: #{_lambda_.6} parent=11 // pred_fallthru
        _
      // Predicated region
      $region69: #{_lambda_.6} parent=11 // pred_check
        %p446 = pneg %p363
      $region70: #{_lambda_.6} parent=11 // pred_check_branch
        %448 = sbr.rel (%p446) target = $region72
      $region71: #{_lambda_.6} parent=11 // pred_region
        _
      $region72: #{_lambda_.6} parent=11 // pred_fallthru
        _
    $region12: #{_lambda_.6} parent=5 // pred_fallthru
      _
    %p449 = scmp.lt.s32.totalorder %s22, 2
    // Predicated region
    $region73: #{_lambda_.6} parent=5 // pred_check
      %p450 = pneg %p449
    $region74: #{_lambda_.6} parent=5 // pred_check_branch
      %452 = sbr.rel (%p450) target = $region76
    $region75: #{_lambda_.6} parent=5 // pred_region
      // Predicated region
      $region77: #{_lambda_.6} parent=75 // pred_check
        %p453 = pneg %p42
      $region78: #{_lambda_.6} parent=75 // pred_check_branch
        %455 = sbr.rel (%p453) target = $region80
      $region79: #{_lambda_.6} parent=75 // pred_region
        %p456 = scmp.lt.s32.totalorder %s22, 1
        %s457 = scalar_select %p456, %s22, 1
        %s458 = smul.addr %s457, 2
        %s459 = smul.addr %s458, 8
        %s460 = scalar_lea.vmem %s0, %s459
      $region80: #{_lambda_.6} parent=75 // pred_fallthru
        _
    $region76: #{_lambda_.6} parent=5 // pred_fallthru
      _
    %p461 = scmp.le.s32.totalorder 1, %s22
    %p462 = scmp.lt.s32.totalorder %s22, 3
    %p463 = pnand %p461, %p462
    %p464 = pneg %p463
    // Predicated region
    $region81: #{_lambda_.6} parent=5 // pred_check
      _
    $region82: #{_lambda_.6} parent=5 // pred_check_branch
      %466 = sbr.rel (%p463) target = $region84
    $region83: #{_lambda_.6} parent=5 // pred_region
      %s467 = ssub.s32 %s22, 1
      %p468 = scmp.lt.s32.totalorder %s27, 1
      %s469 = scalar_select %p468, %s27, 1
      %s470 = smul.addr %s469, 2
      %s471 = smul.addr %s470, 8
      %s472 = scalar_lea.vmem %s0, %s471
      %p473 = pneg %p48
      %p474 = pneg %p45
      %p475 = pneg %p69
      %p476 = pneg %p66
      %p477 = pneg %p90
      %p478 = pneg %p87
      %p479 = pneg %p111
      %p480 = pneg %p108
      %p481 = pneg %p132
      %p482 = pneg %p129
      %p483 = pneg %p153
      %p484 = pneg %p150
      %p485 = pneg %p174
      %p486 = pneg %p171
      %p487 = pneg %p195
      %p488 = pneg %p192
      %p489 = pneg %p216
      %p490 = pneg %p213
      %p491 = pneg %p237
      %p492 = pneg %p234
      %p493 = pneg %p258
      %p494 = pneg %p255
      %p495 = pneg %p279
      %p496 = pneg %p276
      %p497 = pneg %p300
      %p498 = pneg %p297
      %p499 = pneg %p321
      %p500 = pneg %p318
      %p501 = pneg %p342
      %p502 = pneg %p339
      %p503 = pneg %p363
      %p504 = pneg %p360
      %p505 = pneg %p389
      %p506 = pneg %p386
      %p507 = scmp.lt.s32.totalorder %s27, 1
      %s508 = scalar_select %p507, %s27, 1
      %s509 = smul.addr %s508, 8
      %s510 = scalar_lea.vmem %s16, %s509
      %p511 = scmp.lt.s32.totalorder %s27, 1
      %s512 = scalar_select %p511, %s27, 1
      %s513 = smul.addr %s512, 2
      %s514 = smul.addr %s513, 8
      %s515 = scalar_lea.vmem %s0, %s514
      %p516 = scmp.lt.s32.totalorder %s27, 1
      %s517 = scalar_select %p516, %s27, 1
      %s518 = smul.addr %s517, 8
      %s519 = scalar_lea.vmem %s16, %s518
      %v521 = vld [vmem:[%s515] sm:$0xff]
      %v522 = vld [vmem:[%s515 + $0x8] sm:$0xff]
      %v523 = vld [vmem:[%s1] sm:$0xf]
      %v524 = vld [vmem:[%s1 + $0x4] sm:$0xf]
      %v525 = vld [vmem:[%s1 + $0x8] sm:$0xf]
      %v526 = vld [vmem:[%s1 + $0xc] sm:$0xf]
      %v527 = vld [vmem:[%s2] sm:$0x1]
      %v528 = vld [vmem:[%s3] sm:$0xf]
      %v529 = vld [vmem:[%s3 + $0x4] sm:$0xf]
      %v530 = vld [vmem:[%s3 + $0x8] sm:$0xf]
      %v531 = vld [vmem:[%s3 + $0xc] sm:$0xf]
      %v532 = vld [vmem:[%s4] sm:$0x1]
      %v533 = vld [vmem:[%s5] sm:$0x1]
      %v534 = vld [vmem:[%s6] sm:$0x1]
      %v535 = vpack.c.bf16 %v522, %v521
      %v537 = vperm.slane %v527, 0
      %v543 = vunpack.c.l.b16 %v523
      %v544 = vunpack.c.l.b16 %v524
      %v545 = vunpack.c.l.b16 %v525
      %v546 = vunpack.c.l.b16 %v526
      %v547 = vpack.c.b16 %v544, %v543
      %v548 = vpack.c.b16 %v546, %v545
      %vm551 = vcmask 261120
      %v553 = vsel %vm551, %v535, 0
      %555 = vmatpush.bf16.msra.mxu0 0
      %556 = vmatpush.bf16.msra.mxu0 0
      %557 = vmatpush.bf16.msra.mxu0 0
      %558 = vmatpush.bf16.msra.mxu0 0
      %559 = vmatpush.bf16.msra.mxu0 0
      %560 = vmatpush.bf16.msra.mxu0 0
      %561 = vmatpush.bf16.msra.mxu0 %v548
      %562 = vmatpush.bf16.msra.mxu0 %v547
      %563 = vmatmul.bf16.gmra.mxu0 %v553
      %v564 = vpop.f32.mrf.mxu0
      %v565 = vadd.f32 %v537, %v564
      %v566 = vpop.f32.mrf.mxu0
      %v567 = vadd.f32 %v537, %v566
      %568 = vdwg.mxu0
      %v569 = vpack.c.bf16 %v567, %v565
      %571 = vrot.lane.b32.xlu0 %v569, 96
      %v572 = vpop.permute.xlu0 %571
      %vm573 = vcmask 64512
      %v575 = vsel %vm573, %v569, 0
      %v578 = vsel %vm573, %v572, 0
      %580 = vmatpush.bf16.xpose.msra.mxu0 0
      %581 = vmatpush.bf16.xpose.msra.mxu0 0
      %582 = vmatpush.bf16.xpose.msra.mxu0 0
      %583 = vmatpush.bf16.xpose.msra.mxu0 0
      %584 = vmatpush.bf16.xpose.msra.mxu0 0
      %585 = vmatpush.bf16.xpose.msra.mxu0 0
      %586 = vmatpush.bf16.xpose.msra.mxu0 0
      %587 = vmatpush.bf16.xpose.msra.mxu0 %v578
      %588 = vmatmul.bf16.gmra.mxu0 %v575
      %v589 = vpop.f32.mrf.mxu0
      %v590 = vadd.f32 0.0, %v589
      %v591 = vpop.f32.mrf.mxu0
      %v592 = vadd.f32 0.0, %v591
      %593 = vdwg.mxu0
      %v594 = vmul.f32 %v590, 0.35355338
      %v595 = vmul.f32 %v592, 0.35355338
      %vm596 = vcmask 130048
      %v597 = vsel %vm596, %v594, -inf
      %598 = vmax.xlane.f32.xlu0 %v597
      %v599 = vpop.xlane.xlu0 %598
      %v600 = vsel %vm596, %v595, -inf
      %601 = vmax.xlane.f32.xlu0 %v600
      %v602 = vpop.xlane.xlu0 %601
      %v603 = vsub.f32 %v594, %v599
      %v604 = vsub.f32 %v595, %v602
      %v605 = vmul.f32 %v603, 1.442695
      %v606 = vpow.pop %v605
      %v607 = vmul.f32 %v604, 1.442695
      %v608 = vpow.pop %v607
      %v609 = vsel %vm596, %v606, 0.0
      %610 = vadd.xlane.f32.xlu0 %v609
      %v611 = vpop.xlane.xlu0 %610
      %v612 = vsel %vm596, %v608, 0.0
      %613 = vadd.xlane.f32.xlu0 %v612
      %v614 = vpop.xlane.xlu0 %613
      %v615 = vrcp.pop %v611
      %v616 = vmul.f32 %v611, %v615
      %v617 = vsub.f32 1.0, %v616
      %v618 = vmul.f32 %v615, %v617
      %v619 = vadd.f32 %v615, %v618
      %vm620 = vweird.f32 %v611
      %vm621 = vweird.f32 %v615
      %vm622 = vmor %vm620, %vm621
      %v623 = vsel %vm622, %v615, %v619
      %v624 = vand.u32 2147483647, %v611
      %vm625 = vcmp.eq.f32.partialorder %v624, 8.507059e+37
      %v626 = vand.u32 %v611, 2147483648
      %v627 = vor.u32 1.1754944e-38, %v626
      %v628 = vsel %vm625, %v627, %v623
      %v629 = vmul.f32 %v606, %v628
      %v630 = vrcp.pop %v614
      %v631 = vmul.f32 %v614, %v630
      %v632 = vsub.f32 1.0, %v631
      %v633 = vmul.f32 %v630, %v632
      %v634 = vadd.f32 %v630, %v633
      %vm635 = vweird.f32 %v614
      %vm636 = vweird.f32 %v630
      %vm637 = vmor %vm635, %vm636
      %v638 = vsel %vm637, %v630, %v634
      %v639 = vand.u32 2147483647, %v614
      %vm640 = vcmp.eq.f32.partialorder %v639, 8.507059e+37
      %v641 = vand.u32 %v614, 2147483648
      %v642 = vor.u32 1.1754944e-38, %v641
      %v643 = vsel %vm640, %v642, %v638
      %v644 = vmul.f32 %v608, %v643
      %v645 = vpack.c.bf16 %v644, %v629
      %646 = vrot.lane.b32.xlu0 %v569, 64
      %v647 = vpop.permute.xlu0 %646
      %v650 = vsel %vm596, %v645, 0
      %652 = vmatpush.bf16.msra.mxu0 0
      %653 = vmatpush.bf16.msra.mxu0 0
      %654 = vmatpush.bf16.msra.mxu0 0
      %655 = vmatpush.bf16.msra.mxu0 0
      %656 = vmatpush.bf16.msra.mxu0 0
      %657 = vmatpush.bf16.msra.mxu0 0
      %658 = vmatpush.bf16.msra.mxu0 0
      %659 = vmatpush.bf16.msra.mxu0 %v647
      %660 = vmatmul.bf16.gmra.mxu0 %v650
      %v661 = vpop.f32.mrf.mxu0
      %v662 = vadd.f32 0.0, %v661
      %v663 = vpop.f32.mrf.mxu0
      %v664 = vadd.f32 0.0, %v663
      %665 = vdwg.mxu0
      %666 = vrot.lane.b32.xlu0 %v569, 120
      %v667 = vpop.permute.xlu0 %666
      %668 = vrot.lane.b32.xlu0 %v569, 88
      %v669 = vpop.permute.xlu0 %668
      %v671 = vsel %vm573, %v667, 0
      %v674 = vsel %vm573, %v669, 0
      %676 = vmatpush.bf16.xpose.msra.mxu0 0
      %677 = vmatpush.bf16.xpose.msra.mxu0 0
      %678 = vmatpush.bf16.xpose.msra.mxu0 0
      %679 = vmatpush.bf16.xpose.msra.mxu0 0
      %680 = vmatpush.bf16.xpose.msra.mxu0 0
      %681 = vmatpush.bf16.xpose.msra.mxu0 0
      %682 = vmatpush.bf16.xpose.msra.mxu0 0
      %683 = vmatpush.bf16.xpose.msra.mxu0 %v674
      %684 = vmatmul.bf16.gmra.mxu0 %v671
      %v685 = vpop.f32.mrf.mxu0
      %v686 = vadd.f32 0.0, %v685
      %v687 = vpop.f32.mrf.mxu0
      %v688 = vadd.f32 0.0, %v687
      %689 = vdwg.mxu0
      %v690 = vmul.f32 %v686, 0.35355338
      %v691 = vmul.f32 %v688, 0.35355338
      %v692 = vsel %vm596, %v690, -inf
      %693 = vmax.xlane.f32.xlu0 %v692
      %v694 = vpop.xlane.xlu0 %693
      %v695 = vsel %vm596, %v691, -inf
      %696 = vmax.xlane.f32.xlu0 %v695
      %v697 = vpop.xlane.xlu0 %696
      %v698 = vsub.f32 %v690, %v694
      %v699 = vsub.f32 %v691, %v697
      %v700 = vmul.f32 %v698, 1.442695
      %v701 = vpow.pop %v700
      %v702 = vmul.f32 %v699, 1.442695
      %v703 = vpow.pop %v702
      %v704 = vsel %vm596, %v701, 0.0
      %705 = vadd.xlane.f32.xlu0 %v704
      %v706 = vpop.xlane.xlu0 %705
      %v707 = vsel %vm596, %v703, 0.0
      %708 = vadd.xlane.f32.xlu0 %v707
      %v709 = vpop.xlane.xlu0 %708
      %v710 = vrcp.pop %v706
      %v711 = vmul.f32 %v706, %v710
      %v712 = vsub.f32 1.0, %v711
      %v713 = vmul.f32 %v710, %v712
      %v714 = vadd.f32 %v710, %v713
      %vm715 = vweird.f32 %v706
      %vm716 = vweird.f32 %v710
      %vm717 = vmor %vm715, %vm716
      %v718 = vsel %vm717, %v710, %v714
      %v719 = vand.u32 2147483647, %v706
      %vm720 = vcmp.eq.f32.partialorder %v719, 8.507059e+37
      %v721 = vand.u32 %v706, 2147483648
      %v722 = vor.u32 1.1754944e-38, %v721
      %v723 = vsel %vm720, %v722, %v718
      %v724 = vmul.f32 %v701, %v723
      %v725 = vrcp.pop %v709
      %v726 = vmul.f32 %v709, %v725
      %v727 = vsub.f32 1.0, %v726
      %v728 = vmul.f32 %v725, %v727
      %v729 = vadd.f32 %v725, %v728
      %vm730 = vweird.f32 %v709
      %vm731 = vweird.f32 %v725
      %vm732 = vmor %vm730, %vm731
      %v733 = vsel %vm732, %v725, %v729
      %v734 = vand.u32 2147483647, %v709
      %vm735 = vcmp.eq.f32.partialorder %v734, 8.507059e+37
      %v736 = vand.u32 %v709, 2147483648
      %v737 = vor.u32 1.1754944e-38, %v736
      %v738 = vsel %vm735, %v737, %v733
      %v739 = vmul.f32 %v703, %v738
      %v740 = vpack.c.bf16 %v739, %v724
      %741 = vrot.lane.b32.xlu0 %v569, 56
      %v742 = vpop.permute.xlu0 %741
      %v745 = vsel %vm596, %v740, 0
      %747 = vmatpush.bf16.msra.mxu0 0
      %748 = vmatpush.bf16.msra.mxu0 0
      %749 = vmatpush.bf16.msra.mxu0 0
      %750 = vmatpush.bf16.msra.mxu0 0
      %751 = vmatpush.bf16.msra.mxu0 0
      %752 = vmatpush.bf16.msra.mxu0 0
      %753 = vmatpush.bf16.msra.mxu0 0
      %754 = vmatpush.bf16.msra.mxu0 %v742
      %755 = vmatmul.bf16.gmra.mxu0 %v745
      %v756 = vpop.f32.mrf.mxu0
      %v757 = vadd.f32 0.0, %v756
      %v758 = vpop.f32.mrf.mxu0
      %v759 = vadd.f32 0.0, %v758
      %760 = vdwg.mxu0
      %761 = vrot.lane.b32.xlu0 %v569, 112
      %v762 = vpop.permute.xlu0 %761
      %763 = vrot.lane.b32.xlu0 %v569, 80
      %v764 = vpop.permute.xlu0 %763
      %v766 = vsel %vm573, %v762, 0
      %v769 = vsel %vm573, %v764, 0
      %771 = vmatpush.bf16.xpose.msra.mxu0 0
      %772 = vmatpush.bf16.xpose.msra.mxu0 0
      %773 = vmatpush.bf16.xpose.msra.mxu0 0
      %774 = vmatpush.bf16.xpose.msra.mxu0 0
      %775 = vmatpush.bf16.xpose.msra.mxu0 0
      %776 = vmatpush.bf16.xpose.msra.mxu0 0
      %777 = vmatpush.bf16.xpose.msra.mxu0 0
      %778 = vmatpush.bf16.xpose.msra.mxu0 %v769
      %779 = vmatmul.bf16.gmra.mxu0 %v766
      %v780 = vpop.f32.mrf.mxu0
      %v781 = vadd.f32 0.0, %v780
      %v782 = vpop.f32.mrf.mxu0
      %v783 = vadd.f32 0.0, %v782
      %784 = vdwg.mxu0
      %v785 = vmul.f32 %v781, 0.35355338
      %v786 = vmul.f32 %v783, 0.35355338
      %v787 = vsel %vm596, %v785, -inf
      %788 = vmax.xlane.f32.xlu0 %v787
      %v789 = vpop.xlane.xlu0 %788
      %v790 = vsel %vm596, %v786, -inf
      %791 = vmax.xlane.f32.xlu0 %v790
      %v792 = vpop.xlane.xlu0 %791
      %v793 = vsub.f32 %v785, %v789
      %v794 = vsub.f32 %v786, %v792
      %v795 = vmul.f32 %v793, 1.442695
      %v796 = vpow.pop %v795
      %v797 = vmul.f32 %v794, 1.442695
      %v798 = vpow.pop %v797
      %v799 = vsel %vm596, %v796, 0.0
      %800 = vadd.xlane.f32.xlu0 %v799
      %v801 = vpop.xlane.xlu0 %800
      %v802 = vsel %vm596, %v798, 0.0
      %803 = vadd.xlane.f32.xlu0 %v802
      %v804 = vpop.xlane.xlu0 %803
      %v805 = vrcp.pop %v801
      %v806 = vmul.f32 %v801, %v805
      %v807 = vsub.f32 1.0, %v806
      %v808 = vmul.f32 %v805, %v807
      %v809 = vadd.f32 %v805, %v808
      %vm810 = vweird.f32 %v801
      %vm811 = vweird.f32 %v805
      %vm812 = vmor %vm810, %vm811
      %v813 = vsel %vm812, %v805, %v809
      %v814 = vand.u32 2147483647, %v801
      %vm815 = vcmp.eq.f32.partialorder %v814, 8.507059e+37
      %v816 = vand.u32 %v801, 2147483648
      %v817 = vor.u32 1.1754944e-38, %v816
      %v818 = vsel %vm815, %v817, %v813
      %v819 = vmul.f32 %v796, %v818
      %v820 = vrcp.pop %v804
      %v821 = vmul.f32 %v804, %v820
      %v822 = vsub.f32 1.0, %v821
      %v823 = vmul.f32 %v820, %v822
      %v824 = vadd.f32 %v820, %v823
      %vm825 = vweird.f32 %v804
      %vm826 = vweird.f32 %v820
      %vm827 = vmor %vm825, %vm826
      %v828 = vsel %vm827, %v820, %v824
      %v829 = vand.u32 2147483647, %v804
      %vm830 = vcmp.eq.f32.partialorder %v829, 8.507059e+37
      %v831 = vand.u32 %v804, 2147483648
      %v832 = vor.u32 1.1754944e-38, %v831
      %v833 = vsel %vm830, %v832, %v828
      %v834 = vmul.f32 %v798, %v833
      %v835 = vpack.c.bf16 %v834, %v819
      %836 = vrot.lane.b32.xlu0 %v569, 48
      %v837 = vpop.permute.xlu0 %836
      %v840 = vsel %vm596, %v835, 0
      %842 = vmatpush.bf16.msra.mxu0 0
      %843 = vmatpush.bf16.msra.mxu0 0
      %844 = vmatpush.bf16.msra.mxu0 0
      %845 = vmatpush.bf16.msra.mxu0 0
      %846 = vmatpush.bf16.msra.mxu0 0
      %847 = vmatpush.bf16.msra.mxu0 0
      %848 = vmatpush.bf16.msra.mxu0 0
      %849 = vmatpush.bf16.msra.mxu0 %v837
      %850 = vmatmul.bf16.gmra.mxu0 %v840
      %v851 = vpop.f32.mrf.mxu0
      %v852 = vadd.f32 0.0, %v851
      %v853 = vpop.f32.mrf.mxu0
      %v854 = vadd.f32 0.0, %v853
      %855 = vdwg.mxu0
      %856 = vrot.lane.b32.xlu0 %v569, 104
      %v857 = vpop.permute.xlu0 %856
      %858 = vrot.lane.b32.xlu0 %v569, 72
      %v859 = vpop.permute.xlu0 %858
      %v861 = vsel %vm573, %v857, 0
      %v864 = vsel %vm573, %v859, 0
      %866 = vmatpush.bf16.xpose.msra.mxu0 0
      %867 = vmatpush.bf16.xpose.msra.mxu0 0
      %868 = vmatpush.bf16.xpose.msra.mxu0 0
      %869 = vmatpush.bf16.xpose.msra.mxu0 0
      %870 = vmatpush.bf16.xpose.msra.mxu0 0
      %871 = vmatpush.bf16.xpose.msra.mxu0 0
      %872 = vmatpush.bf16.xpose.msra.mxu0 0
      %873 = vmatpush.bf16.xpose.msra.mxu0 %v864
      %874 = vmatmul.bf16.gmra.mxu0 %v861
      %v875 = vpop.f32.mrf.mxu0
      %v876 = vadd.f32 0.0, %v875
      %v877 = vpop.f32.mrf.mxu0
      %v878 = vadd.f32 0.0, %v877
      %879 = vdwg.mxu0
      %v880 = vmul.f32 %v876, 0.35355338
      %v881 = vmul.f32 %v878, 0.35355338
      %v882 = vsel %vm596, %v880, -inf
      %883 = vmax.xlane.f32.xlu0 %v882
      %v884 = vpop.xlane.xlu0 %883
      %v885 = vsel %vm596, %v881, -inf
      %886 = vmax.xlane.f32.xlu0 %v885
      %v887 = vpop.xlane.xlu0 %886
      %v888 = vsub.f32 %v880, %v884
      %v889 = vsub.f32 %v881, %v887
      %v890 = vmul.f32 %v888, 1.442695
      %v891 = vpow.pop %v890
      %v892 = vmul.f32 %v889, 1.442695
      %v893 = vpow.pop %v892
      %v894 = vsel %vm596, %v891, 0.0
      %895 = vadd.xlane.f32.xlu0 %v894
      %v896 = vpop.xlane.xlu0 %895
      %v897 = vsel %vm596, %v893, 0.0
      %898 = vadd.xlane.f32.xlu0 %v897
      %v899 = vpop.xlane.xlu0 %898
      %v900 = vrcp.pop %v896
      %v901 = vmul.f32 %v896, %v900
      %v902 = vsub.f32 1.0, %v901
      %v903 = vmul.f32 %v900, %v902
      %v904 = vadd.f32 %v900, %v903
      %vm905 = vweird.f32 %v896
      %vm906 = vweird.f32 %v900
      %vm907 = vmor %vm905, %vm906
      %v908 = vsel %vm907, %v900, %v904
      %v909 = vand.u32 2147483647, %v896
      %vm910 = vcmp.eq.f32.partialorder %v909, 8.507059e+37
      %v911 = vand.u32 %v896, 2147483648
      %v912 = vor.u32 1.1754944e-38, %v911
      %v913 = vsel %vm910, %v912, %v908
      %v914 = vmul.f32 %v891, %v913
      %v915 = vrcp.pop %v899
      %v916 = vmul.f32 %v899, %v915
      %v917 = vsub.f32 1.0, %v916
      %v918 = vmul.f32 %v915, %v917
      %v919 = vadd.f32 %v915, %v918
      %vm920 = vweird.f32 %v899
      %vm921 = vweird.f32 %v915
      %vm922 = vmor %vm920, %vm921
      %v923 = vsel %vm922, %v915, %v919
      %v924 = vand.u32 2147483647, %v899
      %vm925 = vcmp.eq.f32.partialorder %v924, 8.507059e+37
      %v926 = vand.u32 %v899, 2147483648
      %v927 = vor.u32 1.1754944e-38, %v926
      %v928 = vsel %vm925, %v927, %v923
      %v929 = vmul.f32 %v893, %v928
      %v930 = vpack.c.bf16 %v929, %v914
      %931 = vrot.lane.b32.xlu0 %v569, 40
      %v932 = vpop.permute.xlu0 %931
      %v935 = vsel %vm596, %v930, 0
      %937 = vmatpush.bf16.msra.mxu0 0
      %938 = vmatpush.bf16.msra.mxu0 0
      %939 = vmatpush.bf16.msra.mxu0 0
      %940 = vmatpush.bf16.msra.mxu0 0
      %941 = vmatpush.bf16.msra.mxu0 0
      %942 = vmatpush.bf16.msra.mxu0 0
      %943 = vmatpush.bf16.msra.mxu0 0
      %944 = vmatpush.bf16.msra.mxu0 %v932
      %945 = vmatmul.bf16.gmra.mxu0 %v935
      %v946 = vpop.f32.mrf.mxu0
      %v947 = vadd.f32 0.0, %v946
      %v948 = vpop.f32.mrf.mxu0
      %v949 = vadd.f32 0.0, %v948
      %950 = vdwg.mxu0
      %953 = vrot.lane.b32.xlu0 %v757, 8
      %v954 = vpop.permute.xlu0 %953
      %955 = vrot.lane.b32.xlu0 %v759, 8
      %v956 = vpop.permute.xlu0 %955
      %961 = vrot.lane.b32.xlu0 %v852, 16
      %v962 = vpop.permute.xlu0 %961
      %963 = vrot.lane.b32.xlu0 %v854, 16
      %v964 = vpop.permute.xlu0 %963
      %969 = vrot.lane.b32.xlu0 %v947, 24
      %v970 = vpop.permute.xlu0 %969
      %971 = vrot.lane.b32.xlu0 %v949, 24
      %v972 = vpop.permute.xlu0 %971
      %v975 = vsel %vm573, %v662, %v954
      %v976 = vsel %vm573, %v664, %v956
      %v977 = vsel %vm596, %v975, %v962
      %v978 = vsel %vm596, %v976, %v964
      %vm979 = vcmask 195584
      %v980 = vsel %vm979, %v977, %v970
      %v981 = vsel %vm979, %v978, %v972
      %v982 = vpack.c.bf16 %v981, %v980
      %v984 = vperm.slane %v532, 0
      %v990 = vunpack.c.l.b16 %v528
      %v991 = vunpack.c.l.b16 %v529
      %v992 = vunpack.c.l.b16 %v530
      %v993 = vunpack.c.l.b16 %v531
      %v994 = vpack.c.b16 %v991, %v990
      %v995 = vpack.c.b16 %v993, %v992
      %v999 = vsel %vm551, %v982, 0
      %1001 = vmatpush.bf16.msra.mxu0 0
      %1002 = vmatpush.bf16.msra.mxu0 0
      %1003 = vmatpush.bf16.msra.mxu0 0
      %1004 = vmatpush.bf16.msra.mxu0 0
      %1005 = vmatpush.bf16.msra.mxu0 0
      %1006 = vmatpush.bf16.msra.mxu0 0
      %1007 = vmatpush.bf16.msra.mxu0 %v995
      %1008 = vmatpush.bf16.msra.mxu0 %v994
      %1009 = vmatmul.bf16.gmra.mxu0 %v999
      %v1010 = vpop.f32.mrf.mxu0
      %v1011 = vadd.f32 %v984, %v1010
      %v1012 = vpop.f32.mrf.mxu0
      %v1013 = vadd.f32 %v984, %v1012
      %1014 = vdwg.mxu0
      %v1015 = vadd.f32 %v521, %v1011
      %v1016 = vadd.f32 %v522, %v1013
      %v1017 = vsel %vm551, %v1015, 0.0
      %1018 = vadd.xlane.f32.xlu0 %v1017
      %v1019 = vpop.xlane.xlu0 %1018
      %v1020 = vsel %vm551, %v1016, 0.0
      %1021 = vadd.xlane.f32.xlu0 %v1020
      %v1022 = vpop.xlane.xlu0 %1021
      %v1023 = vrcp.pop 32.0
      %v1024 = vmul.f32 32.0, %v1023
      %v1025 = vsub.f32 1.0, %v1024
      %v1026 = vmul.f32 %v1023, %v1025
      %v1027 = vadd.f32 %v1023, %v1026
      %vm1028 = vweird.f32 %v1023
      %v1029 = vsel %vm1028, %v1023, %v1027
      %v1030 = vmul.f32 %v1019, %v1029
      %v1031 = vmul.f32 %v1022, %v1029
      %v1032 = vsub.f32 %v1015, %v1030
      %v1033 = vsub.f32 %v1016, %v1031
      %v1034 = vmul.f32 %v1032, %v1032
      %v1035 = vmul.f32 %v1033, %v1033
      %v1036 = vsel %vm551, %v1034, 0.0
      %1037 = vadd.xlane.f32.xlu0 %v1036
      %v1038 = vpop.xlane.xlu0 %1037
      %v1039 = vsel %vm551, %v1035, 0.0
      %1040 = vadd.xlane.f32.xlu0 %v1039
      %v1041 = vpop.xlane.xlu0 %1040
      %v1042 = vmul.f32 %v1038, %v1029
      %v1043 = vmul.f32 %v1041, %v1029
      %v1044 = vadd.f32 %v1042, 1e-05
      %v1045 = vadd.f32 %v1043, 1e-05
      %v1046 = vrsqrt.pop %v1044
      %v1047 = vmul.f32 %v1046, %v1044
      %v1048 = vmul.f32 %v1047, %v1046
      %v1049 = vmul.f32 0.5, %v1048
      %v1050 = vsub.f32 1.5, %v1049
      %v1051 = vmul.f32 %v1046, %v1050
      %vm1052 = vweird.f32 %v1044
      %vm1053 = vweird.f32 %v1046
      %vm1054 = vmor %vm1052, %vm1053
      %v1055 = vsel %vm1054, %v1046, %v1051
      %v1056 = vrsqrt.pop %v1045
      %v1057 = vmul.f32 %v1056, %v1045
      %v1058 = vmul.f32 %v1057, %v1056
      %v1059 = vmul.f32 0.5, %v1058
      %v1060 = vsub.f32 1.5, %v1059
      %v1061 = vmul.f32 %v1056, %v1060
      %vm1062 = vweird.f32 %v1045
      %vm1063 = vweird.f32 %v1056
      %vm1064 = vmor %vm1062, %vm1063
      %v1065 = vsel %vm1064, %v1056, %v1061
      %v1066 = vmul.f32 %v1032, %v1055
      %v1067 = vmul.f32 %v1033, %v1065
      %v1069 = vperm.slane %v533, 0
      %v1071 = vmul.f32 %v1066, %v1069
      %v1072 = vmul.f32 %v1067, %v1069
      %v1074 = vperm.slane %v534, 0
      %v1076 = vadd.f32 %v1071, %v1074
      %v1077 = vadd.f32 %v1072, %v1074
      %v1078 = vld [vmem:[%s7] sm:$0xf]
      %v1079 = vld [vmem:[%s7 + $0x4] sm:$0xf]
      %v1080 = vld [vmem:[%s7 + $0x8] sm:$0xf]
      %v1081 = vld [vmem:[%s7 + $0xc] sm:$0xf]
      %v1082 = vld [vmem:[%s8] sm:$0x1]
      %v1083 = vld [vmem:[%s9] sm:$0xf]
      %v1084 = vld [vmem:[%s9 + $0x4] sm:$0xf]
      %v1085 = vld [vmem:[%s9 + $0x8] sm:$0xf]
      %v1086 = vld [vmem:[%s9 + $0xc] sm:$0xf]
      %v1087 = vld [vmem:[%s10] sm:$0x1]
      %v1088 = vld [vmem:[%s11] sm:$0x1]
      %v1089 = vld [vmem:[%s12] sm:$0x1]
      %v1090 = vpack.c.bf16 %v1077, %v1076
      %v1092 = vperm.slane %v1082, 0
      %v1098 = vunpack.c.l.b16 %v1078
      %v1099 = vunpack.c.l.b16 %v1079
      %v1100 = vunpack.c.l.b16 %v1080
      %v1101 = vunpack.c.l.b16 %v1081
      %v1102 = vpack.c.b16 %v1099, %v1098
      %v1103 = vpack.c.b16 %v1101, %v1100
      %v1107 = vsel %vm551, %v1090, 0
      %1109 = vmatpush.bf16.msra.mxu0 0
      %1110 = vmatpush.bf16.msra.mxu0 0
      %1111 = vmatpush.bf16.msra.mxu0 0
      %1112 = vmatpush.bf16.msra.mxu0 0
      %1113 = vmatpush.bf16.msra.mxu0 0
      %1114 = vmatpush.bf16.msra.mxu0 0
      %1115 = vmatpush.bf16.msra.mxu0 %v1103
      %1116 = vmatpush.bf16.msra.mxu0 %v1102
      %1117 = vmatmul.bf16.gmra.mxu0 %v1107
      %v1118 = vpop.f32.mrf.mxu0
      %v1119 = vadd.f32 %v1092, %v1118
      %v1120 = vpop.f32.mrf.mxu0
      %v1121 = vadd.f32 %v1092, %v1120
      %1122 = vdwg.mxu0
      %v1123 = vmax.f32 %v1119, 0.0
      %v1124 = vmax.f32 %v1121, 0.0
      %v1125 = vpack.c.bf16 %v1124, %v1123
      %v1127 = vperm.slane %v1087, 0
      %v1133 = vunpack.c.l.b16 %v1083
      %v1134 = vunpack.c.l.b16 %v1084
      %v1135 = vunpack.c.l.b16 %v1085
      %v1136 = vunpack.c.l.b16 %v1086
      %v1137 = vpack.c.b16 %v1134, %v1133
      %v1138 = vpack.c.b16 %v1136, %v1135
      %v1142 = vsel %vm551, %v1125, 0
      %1144 = vmatpush.bf16.msra.mxu0 0
      %1145 = vmatpush.bf16.msra.mxu0 0
      %1146 = vmatpush.bf16.msra.mxu0 0
      %1147 = vmatpush.bf16.msra.mxu0 0
      %1148 = vmatpush.bf16.msra.mxu0 0
      %1149 = vmatpush.bf16.msra.mxu0 0
      %1150 = vmatpush.bf16.msra.mxu0 %v1138
      %1151 = vmatpush.bf16.msra.mxu0 %v1137
      %1152 = vmatmul.bf16.gmra.mxu0 %v1142
      %v1153 = vpop.f32.mrf.mxu0
      %v1154 = vadd.f32 %v1127, %v1153
      %v1155 = vpop.f32.mrf.mxu0
      %v1156 = vadd.f32 %v1127, %v1155
      %1157 = vdwg.mxu0
      %v1158 = vadd.f32 %v1076, %v1154
      %v1159 = vadd.f32 %v1077, %v1156
      %v1160 = vsel %vm551, %v1158, 0.0
      %1161 = vadd.xlane.f32.xlu0 %v1160
      %v1162 = vpop.xlane.xlu0 %1161
      %v1163 = vsel %vm551, %v1159, 0.0
      %1164 = vadd.xlane.f32.xlu0 %v1163
      %v1165 = vpop.xlane.xlu0 %1164
      %v1166 = vmul.f32 %v1162, %v1029
      %v1167 = vmul.f32 %v1165, %v1029
      %v1168 = vsub.f32 %v1158, %v1166
      %v1169 = vsub.f32 %v1159, %v1167
      %v1170 = vmul.f32 %v1168, %v1168
      %v1171 = vmul.f32 %v1169, %v1169
      %v1172 = vsel %vm551, %v1170, 0.0
      %1173 = vadd.xlane.f32.xlu0 %v1172
      %v1174 = vpop.xlane.xlu0 %1173
      %v1175 = vsel %vm551, %v1171, 0.0
      %1176 = vadd.xlane.f32.xlu0 %v1175
      %v1177 = vpop.xlane.xlu0 %1176
      %v1178 = vmul.f32 %v1174, %v1029
      %v1179 = vmul.f32 %v1177, %v1029
      %v1180 = vadd.f32 %v1178, 1e-05
      %v1181 = vadd.f32 %v1179, 1e-05
      %v1182 = vrsqrt.pop %v1180
      %v1183 = vmul.f32 %v1182, %v1180
      %v1184 = vmul.f32 %v1183, %v1182
      %v1185 = vmul.f32 0.5, %v1184
      %v1186 = vsub.f32 1.5, %v1185
      %v1187 = vmul.f32 %v1182, %v1186
      %vm1188 = vweird.f32 %v1180
      %vm1189 = vweird.f32 %v1182
      %vm1190 = vmor %vm1188, %vm1189
      %v1191 = vsel %vm1190, %v1182, %v1187
      %v1192 = vrsqrt.pop %v1181
      %v1193 = vmul.f32 %v1192, %v1181
      %v1194 = vmul.f32 %v1193, %v1192
      %v1195 = vmul.f32 0.5, %v1194
      %v1196 = vsub.f32 1.5, %v1195
      %v1197 = vmul.f32 %v1192, %v1196
      %vm1198 = vweird.f32 %v1181
      %vm1199 = vweird.f32 %v1192
      %vm1200 = vmor %vm1198, %vm1199
      %v1201 = vsel %vm1200, %v1192, %v1197
      %v1202 = vmul.f32 %v1168, %v1191
      %v1203 = vmul.f32 %v1169, %v1201
      %v1205 = vperm.slane %v1088, 0
      %v1207 = vmul.f32 %v1202, %v1205
      %v1208 = vmul.f32 %v1203, %v1205
      %v1210 = vperm.slane %v1089, 0
      %v1212 = vadd.f32 %v1207, %v1210
      %v1213 = vadd.f32 %v1208, %v1210
      %v1214 = vld [vmem:[%s13] sm:$0xf]
      %v1215 = vld [vmem:[%s13 + $0x4] sm:$0xf]
      %v1216 = vld [vmem:[%s13 + $0x8] sm:$0xf]
      %v1217 = vld [vmem:[%s13 + $0xc] sm:$0xf]
      %v1218 = vld [vmem:[%s13 + $0x10] sm:$0xf]
      %v1219 = vld [vmem:[%s13 + $0x14] sm:$0xf]
      %v1220 = vld [vmem:[%s13 + $0x18] sm:$0xf]
      %v1221 = vld [vmem:[%s13 + $0x1c] sm:$0xf]
      %v1222 = vld [vmem:[%s13 + $0x20] sm:$0xf]
      %v1223 = vld [vmem:[%s13 + $0x24] sm:$0xf]
      %v1224 = vld [vmem:[%s13 + $0x28] sm:$0xf]
      %v1225 = vld [vmem:[%s13 + $0x2c] sm:$0xf]
      %v1226 = vrot.slane %v1212, 7
      %v1227 = vrot.slane %v1213, 7
      %v1228 = vlaneseq
      %v1229 = vshrl.u32 %v1228, 7
      %vm1230 = vcmp.lt.s32.totalorder %v1229, 1
      %v1231 = vsel %vm1230, %v1226, %v1227
      %v1232 = vsel %vm1230, %v1227, %v1226
      %v1233 = vrot.slane %v1212, 1
      %v1234 = vrot.slane %v1213, 1
      %vm1235 = vcmp.lt.s32.totalorder %v1229, 7
      %v1236 = vsel %vm1235, %v1233, %v1234
      %v1237 = vsel %vm1235, %v1234, %v1233
      %1240 = vrot.lane.b32.xlu0 %v1212, 32
      %v1241 = vpop.permute.xlu0 %1240
      %1242 = vrot.lane.b32.xlu0 %v1213, 32
      %v1243 = vpop.permute.xlu0 %1242
      %1248 = vrot.lane.b32.xlu0 %v1236, 64
      %v1249 = vpop.permute.xlu0 %1248
      %1250 = vrot.lane.b32.xlu0 %v1237, 64
      %v1251 = vpop.permute.xlu0 %1250
      %v1254 = vsel %vm551, %v1232, %v1241
      %v1255 = vsel %vm551, %v1231, %v1243
      %vm1256 = vcmask 523264
      %v1257 = vsel %vm1256, %v1254, %v1249
      %v1258 = vsel %vm1256, %v1255, %v1251
      %v1259 = vpack.c.bf16 %v1258, %v1257
      %v1272 = vunpack.c.l.b16 %v1214
      %v1273 = vunpack.c.l.b16 %v1215
      %v1274 = vunpack.c.l.b16 %v1216
      %v1275 = vunpack.c.l.b16 %v1217
      %v1276 = vunpack.c.l.b16 %v1218
      %v1277 = vunpack.c.l.b16 %v1219
      %v1278 = vunpack.c.l.b16 %v1220
      %v1279 = vunpack.c.l.b16 %v1221
      %v1280 = vunpack.c.l.b16 %v1222
      %v1281 = vunpack.c.l.b16 %v1223
      %v1282 = vunpack.c.l.b16 %v1224
      %v1283 = vunpack.c.l.b16 %v1225
      %v1284 = vpack.c.b16 %v1273, %v1272
      %v1285 = vpack.c.b16 %v1275, %v1274
      %v1286 = vpack.c.b16 %v1277, %v1276
      %v1287 = vpack.c.b16 %v1279, %v1278
      %v1288 = vpack.c.b16 %v1281, %v1280
      %v1289 = vpack.c.b16 %v1283, %v1282
      %vm1296 = vcmask 785408
      %v1298 = vsel %vm1296, %v1259, 0
      %1300 = vmatpush.bf16.msra.mxu0 0
      %1301 = vmatpush.bf16.msra.mxu0 0
      %1302 = vmatpush.bf16.msra.mxu0 %v1289
      %1303 = vmatpush.bf16.msra.mxu0 %v1288
      %1304 = vmatpush.bf16.msra.mxu0 %v1287
      %1305 = vmatpush.bf16.msra.mxu0 %v1286
      %1306 = vmatpush.bf16.msra.mxu0 %v1285
      %1307 = vmatpush.bf16.msra.mxu0 %v1284
      %1308 = vmatmul.bf16.gmra.mxu0 %v1298
      %v1309 = vpop.f32.mrf.mxu0
      %v1310 = vadd.f32 0.0, %v1309
      %v1311 = vpop.f32.mrf.mxu0
      %v1312 = vadd.f32 0.0, %v1311
      %1313 = vdwg.mxu0
      %v1314 = vld [vmem:[%s14] sm:$0x1]
      %v1316 = vperm.slane %v1314, 0
      %v1318 = vmul.f32 %v1310, %v1316
      %v1319 = vmul.f32 %v1312, %v1316
      %v1320 = vld [vmem:[%s15] sm:$0x1]
      %v1322 = vperm.slane %v1320, 0
      %v1324 = vadd.f32 %v1318, %v1322
      %v1325 = vadd.f32 %v1319, %v1322
      %vm1326 = vcmp.gt.f32.partialorder %v1324, 0.0
      %vm1327 = vcmp.gt.f32.partialorder %v1325, 0.0
      %v1328 = vmin.f32 %v1324, 0.0
      %v1329 = vmin.f32 %v1325, 0.0
      %v1330 = vmul.f32 %v1328, 1.442695
      %v1331 = vpow.pop %v1330
      %v1332 = vmul.f32 %v1329, 1.442695
      %v1333 = vpow.pop %v1332
      %v1334 = vsub.f32 %v1331, 1.0
      %v1335 = vsub.f32 %v1333, 1.0
      %v1336 = vsel %vm1326, %v1324, %v1334
      %v1337 = vsel %vm1327, %v1325, %v1335
      %1338 = vst.msk [vmem:[#allocation2] sm:$0xff] %vm551, %v1336
      %1339 = vst.msk [vmem:[#allocation2 + $0x8] sm:$0xff] %vm551, %v1337
      %v1340 = vld [vmem:[#allocation2] ss:$2 sm:$0xff]
      %s1341 = scalar_lea.vmem [#allocation2], 1
      %v1342 = vld [vmem:[%s1341] ss:$2 sm:$0xff]
      %v1343 = vrot.slane %v1342, 7
      %vm1344 = vcmp.eq.s32.totalorder %v1229, 0
      %v1345 = vsel %vm1344, -1e+30, %v1343
      %v1346 = vmax.f32 %v1340, %v1342
      %v1347 = vmax.f32 %v1346, %v1345
      %1348 = vst.msk [vmem:[%s519] sm:$0xff] %vm551, %v1347
      %p1349 = scmp.lt.s32.totalorder %s27, 1
      %s1350 = scalar_select %p1349, %s27, 1
      %s1351 = smul.addr %s1350, 8
      %s1352 = scalar_lea.vmem %s16, %s1351
      // Predicated region
      $region85: #{_lambda_.6} parent=83 // pred_check
        %p1353 = pneg %p386
      $region86: #{_lambda_.6} parent=83 // pred_check_branch
        %1355 = sbr.rel (%p1353) target = $region88
      $region87: #{_lambda_.6} parent=83 // pred_region
        _
      $region88: #{_lambda_.6} parent=83 // pred_fallthru
        _
    $region84: #{_lambda_.6} parent=5 // pred_fallthru
      _
    %p1356 = scmp.le.s32.totalorder 2, %s22
    // Predicated region
    $region89: #{_lambda_.6} parent=5 // pred_check
      %p1357 = pneg %p1356
    $region90: #{_lambda_.6} parent=5 // pred_check_branch
      %1359 = sbr.rel (%p1357) target = $region92
    $region91: #{_lambda_.6} parent=5 // pred_region
      %s1360 = ssub.s32 %s22, 2
      // Predicated region
      $region93: #{_lambda_.6} parent=91 // pred_check
        %p1361 = pneg %p392
      $region94: #{_lambda_.6} parent=91 // pred_check_branch
        %1363 = sbr.rel (%p1361) target = $region96
      $region95: #{_lambda_.6} parent=91 // pred_region
        %p1364 = scmp.lt.s32.totalorder %s28, 1
        %s1365 = scalar_select %p1364, %s28, 1
        %s1366 = smul.addr %s1365, 8
        %s1367 = scalar_lea.vmem %s16, %s1366
      $region96: #{_lambda_.6} parent=91 // pred_fallthru
        _
    $region92: #{_lambda_.6} parent=5 // pred_fallthru
      _
  $region6: #{_lambda_.6} parent=0 // loop_footer
    %s26 = sadd.s32 1, %s22
  $region7: #{_lambda_.6} parent=0 // loop_footer_branch
    %21 = sbr.rel target = $region3
  $region8: #{_lambda_.6} parent=0 // loop_exit
    _

// kernel: _lambda_.7
$region0: #{_lambda_.7}
  #allocation0 [shape = 'u32[]', space=smem, size = 0x4, offset = 0x4, fixed_abs, tag = 'smem constant byte address 0x4 - core index']
  #allocation1 [shape = 'u32[72,128]{1,0:T(1,128)}', space=vmem, size = 0x9000, scoped, tag = 'internal scratch']
  %s0 = inlined_call_operand.vmem [shape: f32[2,8,32], index: 0, kind: input, shape index: {}]
  %s1 = inlined_call_operand.vmem [shape: bf16[32,96], index: 1, kind: input, shape index: {}]
  %s2 = inlined_call_operand.vmem [shape: f32[1,96], index: 2, kind: input, shape index: {}]
  %s3 = inlined_call_operand.vmem [shape: bf16[32,32], index: 3, kind: input, shape index: {}]
  %s4 = inlined_call_operand.vmem [shape: f32[1,32], index: 4, kind: input, shape index: {}, may-alias: {4,6,8,10,12,14}]
  %s5 = inlined_call_operand.vmem [shape: f32[1,32], index: 5, kind: input, shape index: {}, may-alias: {5,11,13}]
  %s6 = inlined_call_operand.vmem [shape: f32[1,32], index: 6, kind: input, shape index: {}, may-alias: {4,6,8,10,12,14}]
  %s7 = inlined_call_operand.vmem [shape: bf16[32,32], index: 7, kind: input, shape index: {}]
  %s8 = inlined_call_operand.vmem [shape: f32[1,32], index: 8, kind: input, shape index: {}, may-alias: {4,6,8,10,12,14}]
  %s9 = inlined_call_operand.vmem [shape: bf16[32,32], index: 9, kind: input, shape index: {}]
  %s10 = inlined_call_operand.vmem [shape: f32[1,32], index: 10, kind: input, shape index: {}, may-alias: {4,6,8,10,12,14}]
  %s11 = inlined_call_operand.vmem [shape: f32[1,32], index: 11, kind: input, shape index: {}, may-alias: {5,11,13}]
  %s12 = inlined_call_operand.vmem [shape: f32[1,32], index: 12, kind: input, shape index: {}, may-alias: {4,6,8,10,12,14}]
  %s13 = inlined_call_operand.vmem [shape: f32[1,32], index: 13, kind: input, shape index: {}, may-alias: {5,11,13}]
  %s14 = inlined_call_operand.vmem [shape: f32[1,32], index: 14, kind: input, shape index: {}, may-alias: {4,6,8,10,12,14}]
  %s15 = inlined_call_operand.vmem [shape: f32[2,8,32], index: 15, kind: output, shape index: {}]
  %s16 = sld [smem:[#allocation0]]
  $region93: #{_lambda_.7} parent=0
    _
  %s18 = ssub.s32 1, %s16
  %s19 = scalar_select 0, %s18, %s16
  loop: start=0, step=1, limit=4
  $region2: #{_lambda_.7} parent=0 // loop_pre_header
    _
  $region3: #{_lambda_.7} parent=0 // loop_header
    %s21 = sphi 0, %s25
    %p22 = scmp.ge.s32.totalorder %s21, 4
    %s31 = sphi 0, %s33
    %s34 = sphi 0, %s31
    %s35 = sphi 0, %s34
    %s51 = sphi 0, %s35
    %s55 = sphi 0, %s55
    %s57 = sphi 0, %s55
    %s58 = sphi 0, %s57
    %s72 = sphi 0, %s58
    %s76 = sphi 0, %s76
    %s78 = sphi 0, %s76
    %s79 = sphi 0, %s78
    %s93 = sphi 0, %s79
    %s97 = sphi 0, %s97
    %s99 = sphi 0, %s97
    %s100 = sphi 0, %s99
    %s114 = sphi 0, %s100
    %s118 = sphi 0, %s118
    %s120 = sphi 0, %s118
    %s121 = sphi 0, %s120
    %s135 = sphi 0, %s121
    %s139 = sphi 0, %s139
    %s141 = sphi 0, %s139
    %s142 = sphi 0, %s141
    %s156 = sphi 0, %s142
    %s160 = sphi 0, %s160
    %s162 = sphi 0, %s160
    %s163 = sphi 0, %s162
    %s177 = sphi 0, %s163
    %s181 = sphi 0, %s181
    %s183 = sphi 0, %s181
    %s184 = sphi 0, %s183
    %s198 = sphi 0, %s184
    %s202 = sphi 0, %s202
    %s204 = sphi 0, %s202
    %s205 = sphi 0, %s204
    %s219 = sphi 0, %s205
    %s223 = sphi 0, %s223
    %s225 = sphi 0, %s223
    %s226 = sphi 0, %s225
    %s240 = sphi 0, %s226
    %s244 = sphi 0, %s244
    %s246 = sphi 0, %s244
    %s247 = sphi 0, %s246
    %s261 = sphi 0, %s247
    %s265 = sphi 0, %s265
    %s267 = sphi 0, %s265
    %s268 = sphi 0, %s267
    %s282 = sphi 0, %s268
    %s286 = sphi 0, %s286
    %s288 = sphi 0, %s286
    %s289 = sphi 0, %s288
    %s303 = sphi 0, %s289
    %s307 = sphi 0, %s307
    %s309 = sphi 0, %s307
    %s310 = sphi 0, %s309
    %s324 = sphi 0, %s310
    %s328 = sphi 0, %s328
    %s330 = sphi 0, %s328
    %s331 = sphi 0, %s330
    %s345 = sphi 0, %s331
    %s351 = sphi 0, %s353
    %s354 = sphi 0, %s351
    %s355 = sphi 0, %s354
    %s371 = sphi 0, %s355
  $region4: #{_lambda_.7} parent=0 // loop_header_branch
    %24 = sbr.rel (%p22) target = $region8
  $region5: #{_lambda_.7} parent=0 // loop_body
    %s26 = ssub.s32 %s21, 1
    %s27 = ssub.s32 %s21, 2
    %s28 = sadd.s32 %s21, 1
    %s29 = ssub.s32 %s21, %s28
    %p30 = scmp.eq.s32.totalorder %s29, 0
    %s32 = sadd.s32 %s31, 1
    %s33 = scalar_select %p30, %s31, %s32
    %p36 = pneg %p30
    %p37 = scmp.eq.s32.totalorder %s21, 1
    %p38 = por %p36, %p37
    %p39 = scmp.ne.s32.totalorder %s31, %s34
    %p40 = scmp.eq.s32.totalorder %s21, 0
    %p41 = por %p39, %p40
    %p42 = scmp.ne.s32.totalorder %s31, %s34
    %p43 = scmp.eq.s32.totalorder %s26, 1
    %p44 = por %p42, %p43
    %p45 = scmp.ne.s32.totalorder %s34, %s35
    %p46 = scmp.eq.s32.totalorder %s26, 0
    %p47 = por %p45, %p46
    %p48 = scmp.ne.s32.totalorder %s34, %s35
    %p49 = scmp.eq.s32.totalorder %s27, 1
    %p50 = por %p48, %p49
    %p52 = scmp.ne.s32.totalorder %s35, %s51
    %p53 = scmp.eq.s32.totalorder %s27, 0
    %p54 = por %p52, %p53
    %s56 = sadd.s32 %s55, 1
    %p59 = scmp.eq.s32.totalorder %s21, 1
    %p60 = scmp.ne.s32.totalorder %s55, %s57
    %p61 = scmp.eq.s32.totalorder %s21, 0
    %p62 = por %p60, %p61
    %p63 = scmp.ne.s32.totalorder %s55, %s57
    %p64 = scmp.eq.s32.totalorder %s26, 1
    %p65 = por %p63, %p64
    %p66 = scmp.ne.s32.totalorder %s57, %s58
    %p67 = scmp.eq.s32.totalorder %s26, 0
    %p68 = por %p66, %p67
    %p69 = scmp.ne.s32.totalorder %s57, %s58
    %p70 = scmp.eq.s32.totalorder %s27, 1
    %p71 = por %p69, %p70
    %p73 = scmp.ne.s32.totalorder %s58, %s72
    %p74 = scmp.eq.s32.totalorder %s27, 0
    %p75 = por %p73, %p74
    %s77 = sadd.s32 %s76, 1
    %p80 = scmp.eq.s32.totalorder %s21, 1
    %p81 = scmp.ne.s32.totalorder %s76, %s78
    %p82 = scmp.eq.s32.totalorder %s21, 0
    %p83 = por %p81, %p82
    %p84 = scmp.ne.s32.totalorder %s76, %s78
    %p85 = scmp.eq.s32.totalorder %s26, 1
    %p86 = por %p84, %p85
    %p87 = scmp.ne.s32.totalorder %s78, %s79
    %p88 = scmp.eq.s32.totalorder %s26, 0
    %p89 = por %p87, %p88
    %p90 = scmp.ne.s32.totalorder %s78, %s79
    %p91 = scmp.eq.s32.totalorder %s27, 1
    %p92 = por %p90, %p91
    %p94 = scmp.ne.s32.totalorder %s79, %s93
    %p95 = scmp.eq.s32.totalorder %s27, 0
    %p96 = por %p94, %p95
    %s98 = sadd.s32 %s97, 1
    %p101 = scmp.eq.s32.totalorder %s21, 1
    %p102 = scmp.ne.s32.totalorder %s97, %s99
    %p103 = scmp.eq.s32.totalorder %s21, 0
    %p104 = por %p102, %p103
    %p105 = scmp.ne.s32.totalorder %s97, %s99
    %p106 = scmp.eq.s32.totalorder %s26, 1
    %p107 = por %p105, %p106
    %p108 = scmp.ne.s32.totalorder %s99, %s100
    %p109 = scmp.eq.s32.totalorder %s26, 0
    %p110 = por %p108, %p109
    %p111 = scmp.ne.s32.totalorder %s99, %s100
    %p112 = scmp.eq.s32.totalorder %s27, 1
    %p113 = por %p111, %p112
    %p115 = scmp.ne.s32.totalorder %s100, %s114
    %p116 = scmp.eq.s32.totalorder %s27, 0
    %p117 = por %p115, %p116
    %s119 = sadd.s32 %s118, 1
    %p122 = scmp.eq.s32.totalorder %s21, 1
    %p123 = scmp.ne.s32.totalorder %s118, %s120
    %p124 = scmp.eq.s32.totalorder %s21, 0
    %p125 = por %p123, %p124
    %p126 = scmp.ne.s32.totalorder %s118, %s120
    %p127 = scmp.eq.s32.totalorder %s26, 1
    %p128 = por %p126, %p127
    %p129 = scmp.ne.s32.totalorder %s120, %s121
    %p130 = scmp.eq.s32.totalorder %s26, 0
    %p131 = por %p129, %p130
    %p132 = scmp.ne.s32.totalorder %s120, %s121
    %p133 = scmp.eq.s32.totalorder %s27, 1
    %p134 = por %p132, %p133
    %p136 = scmp.ne.s32.totalorder %s121, %s135
    %p137 = scmp.eq.s32.totalorder %s27, 0
    %p138 = por %p136, %p137
    %s140 = sadd.s32 %s139, 1
    %p143 = scmp.eq.s32.totalorder %s21, 1
    %p144 = scmp.ne.s32.totalorder %s139, %s141
    %p145 = scmp.eq.s32.totalorder %s21, 0
    %p146 = por %p144, %p145
    %p147 = scmp.ne.s32.totalorder %s139, %s141
    %p148 = scmp.eq.s32.totalorder %s26, 1
    %p149 = por %p147, %p148
    %p150 = scmp.ne.s32.totalorder %s141, %s142
    %p151 = scmp.eq.s32.totalorder %s26, 0
    %p152 = por %p150, %p151
    %p153 = scmp.ne.s32.totalorder %s141, %s142
    %p154 = scmp.eq.s32.totalorder %s27, 1
    %p155 = por %p153, %p154
    %p157 = scmp.ne.s32.totalorder %s142, %s156
    %p158 = scmp.eq.s32.totalorder %s27, 0
    %p159 = por %p157, %p158
    %s161 = sadd.s32 %s160, 1
    %p164 = scmp.eq.s32.totalorder %s21, 1
    %p165 = scmp.ne.s32.totalorder %s160, %s162
    %p166 = scmp.eq.s32.totalorder %s21, 0
    %p167 = por %p165, %p166
    %p168 = scmp.ne.s32.totalorder %s160, %s162
    %p169 = scmp.eq.s32.totalorder %s26, 1
    %p170 = por %p168, %p169
    %p171 = scmp.ne.s32.totalorder %s162, %s163
    %p172 = scmp.eq.s32.totalorder %s26, 0
    %p173 = por %p171, %p172
    %p174 = scmp.ne.s32.totalorder %s162, %s163
    %p175 = scmp.eq.s32.totalorder %s27, 1
    %p176 = por %p174, %p175
    %p178 = scmp.ne.s32.totalorder %s163, %s177
    %p179 = scmp.eq.s32.totalorder %s27, 0
    %p180 = por %p178, %p179
    %s182 = sadd.s32 %s181, 1
    %p185 = scmp.eq.s32.totalorder %s21, 1
    %p186 = scmp.ne.s32.totalorder %s181, %s183
    %p187 = scmp.eq.s32.totalorder %s21, 0
    %p188 = por %p186, %p187
    %p189 = scmp.ne.s32.totalorder %s181, %s183
    %p190 = scmp.eq.s32.totalorder %s26, 1
    %p191 = por %p189, %p190
    %p192 = scmp.ne.s32.totalorder %s183, %s184
    %p193 = scmp.eq.s32.totalorder %s26, 0
    %p194 = por %p192, %p193
    %p195 = scmp.ne.s32.totalorder %s183, %s184
    %p196 = scmp.eq.s32.totalorder %s27, 1
    %p197 = por %p195, %p196
    %p199 = scmp.ne.s32.totalorder %s184, %s198
    %p200 = scmp.eq.s32.totalorder %s27, 0
    %p201 = por %p199, %p200
    %s203 = sadd.s32 %s202, 1
    %p206 = scmp.eq.s32.totalorder %s21, 1
    %p207 = scmp.ne.s32.totalorder %s202, %s204
    %p208 = scmp.eq.s32.totalorder %s21, 0
    %p209 = por %p207, %p208
    %p210 = scmp.ne.s32.totalorder %s202, %s204
    %p211 = scmp.eq.s32.totalorder %s26, 1
    %p212 = por %p210, %p211
    %p213 = scmp.ne.s32.totalorder %s204, %s205
    %p214 = scmp.eq.s32.totalorder %s26, 0
    %p215 = por %p213, %p214
    %p216 = scmp.ne.s32.totalorder %s204, %s205
    %p217 = scmp.eq.s32.totalorder %s27, 1
    %p218 = por %p216, %p217
    %p220 = scmp.ne.s32.totalorder %s205, %s219
    %p221 = scmp.eq.s32.totalorder %s27, 0
    %p222 = por %p220, %p221
    %s224 = sadd.s32 %s223, 1
    %p227 = scmp.eq.s32.totalorder %s21, 1
    %p228 = scmp.ne.s32.totalorder %s223, %s225
    %p229 = scmp.eq.s32.totalorder %s21, 0
    %p230 = por %p228, %p229
    %p231 = scmp.ne.s32.totalorder %s223, %s225
    %p232 = scmp.eq.s32.totalorder %s26, 1
    %p233 = por %p231, %p232
    %p234 = scmp.ne.s32.totalorder %s225, %s226
    %p235 = scmp.eq.s32.totalorder %s26, 0
    %p236 = por %p234, %p235
    %p237 = scmp.ne.s32.totalorder %s225, %s226
    %p238 = scmp.eq.s32.totalorder %s27, 1
    %p239 = por %p237, %p238
    %p241 = scmp.ne.s32.totalorder %s226, %s240
    %p242 = scmp.eq.s32.totalorder %s27, 0
    %p243 = por %p241, %p242
    %s245 = sadd.s32 %s244, 1
    %p248 = scmp.eq.s32.totalorder %s21, 1
    %p249 = scmp.ne.s32.totalorder %s244, %s246
    %p250 = scmp.eq.s32.totalorder %s21, 0
    %p251 = por %p249, %p250
    %p252 = scmp.ne.s32.totalorder %s244, %s246
    %p253 = scmp.eq.s32.totalorder %s26, 1
    %p254 = por %p252, %p253
    %p255 = scmp.ne.s32.totalorder %s246, %s247
    %p256 = scmp.eq.s32.totalorder %s26, 0
    %p257 = por %p255, %p256
    %p258 = scmp.ne.s32.totalorder %s246, %s247
    %p259 = scmp.eq.s32.totalorder %s27, 1
    %p260 = por %p258, %p259
    %p262 = scmp.ne.s32.totalorder %s247, %s261
    %p263 = scmp.eq.s32.totalorder %s27, 0
    %p264 = por %p262, %p263
    %s266 = sadd.s32 %s265, 1
    %p269 = scmp.eq.s32.totalorder %s21, 1
    %p270 = scmp.ne.s32.totalorder %s265, %s267
    %p271 = scmp.eq.s32.totalorder %s21, 0
    %p272 = por %p270, %p271
    %p273 = scmp.ne.s32.totalorder %s265, %s267
    %p274 = scmp.eq.s32.totalorder %s26, 1
    %p275 = por %p273, %p274
    %p276 = scmp.ne.s32.totalorder %s267, %s268
    %p277 = scmp.eq.s32.totalorder %s26, 0
    %p278 = por %p276, %p277
    %p279 = scmp.ne.s32.totalorder %s267, %s268
    %p280 = scmp.eq.s32.totalorder %s27, 1
    %p281 = por %p279, %p280
    %p283 = scmp.ne.s32.totalorder %s268, %s282
    %p284 = scmp.eq.s32.totalorder %s27, 0
    %p285 = por %p283, %p284
    %s287 = sadd.s32 %s286, 1
    %p290 = scmp.eq.s32.totalorder %s21, 1
    %p291 = scmp.ne.s32.totalorder %s286, %s288
    %p292 = scmp.eq.s32.totalorder %s21, 0
    %p293 = por %p291, %p292
    %p294 = scmp.ne.s32.totalorder %s286, %s288
    %p295 = scmp.eq.s32.totalorder %s26, 1
    %p296 = por %p294, %p295
    %p297 = scmp.ne.s32.totalorder %s288, %s289
    %p298 = scmp.eq.s32.totalorder %s26, 0
    %p299 = por %p297, %p298
    %p300 = scmp.ne.s32.totalorder %s288, %s289
    %p301 = scmp.eq.s32.totalorder %s27, 1
    %p302 = por %p300, %p301
    %p304 = scmp.ne.s32.totalorder %s289, %s303
    %p305 = scmp.eq.s32.totalorder %s27, 0
    %p306 = por %p304, %p305
    %s308 = sadd.s32 %s307, 1
    %p311 = scmp.eq.s32.totalorder %s21, 1
    %p312 = scmp.ne.s32.totalorder %s307, %s309
    %p313 = scmp.eq.s32.totalorder %s21, 0
    %p314 = por %p312, %p313
    %p315 = scmp.ne.s32.totalorder %s307, %s309
    %p316 = scmp.eq.s32.totalorder %s26, 1
    %p317 = por %p315, %p316
    %p318 = scmp.ne.s32.totalorder %s309, %s310
    %p319 = scmp.eq.s32.totalorder %s26, 0
    %p320 = por %p318, %p319
    %p321 = scmp.ne.s32.totalorder %s309, %s310
    %p322 = scmp.eq.s32.totalorder %s27, 1
    %p323 = por %p321, %p322
    %p325 = scmp.ne.s32.totalorder %s310, %s324
    %p326 = scmp.eq.s32.totalorder %s27, 0
    %p327 = por %p325, %p326
    %s329 = sadd.s32 %s328, 1
    %p332 = scmp.eq.s32.totalorder %s21, 1
    %p333 = scmp.ne.s32.totalorder %s328, %s330
    %p334 = scmp.eq.s32.totalorder %s21, 0
    %p335 = por %p333, %p334
    %p336 = scmp.ne.s32.totalorder %s328, %s330
    %p337 = scmp.eq.s32.totalorder %s26, 1
    %p338 = por %p336, %p337
    %p339 = scmp.ne.s32.totalorder %s330, %s331
    %p340 = scmp.eq.s32.totalorder %s26, 0
    %p341 = por %p339, %p340
    %p342 = scmp.ne.s32.totalorder %s330, %s331
    %p343 = scmp.eq.s32.totalorder %s27, 1
    %p344 = por %p342, %p343
    %p346 = scmp.ne.s32.totalorder %s331, %s345
    %p347 = scmp.eq.s32.totalorder %s27, 0
    %p348 = por %p346, %p347
    %s349 = ssub.s32 %s21, %s28
    %p350 = scmp.eq.s32.totalorder %s349, 0
    %s352 = sadd.s32 %s351, 1
    %s353 = scalar_select %p350, %s351, %s352
    %p356 = pneg %p350
    %p357 = scmp.eq.s32.totalorder %s21, 1
    %p358 = por %p356, %p357
    %p359 = scmp.ne.s32.totalorder %s351, %s354
    %p360 = scmp.eq.s32.totalorder %s21, 0
    %p361 = por %p359, %p360
    %p362 = scmp.ne.s32.totalorder %s351, %s354
    %p363 = scmp.eq.s32.totalorder %s26, 1
    %p364 = por %p362, %p363
    %p365 = scmp.ne.s32.totalorder %s354, %s355
    %p366 = scmp.eq.s32.totalorder %s26, 0
    %p367 = por %p365, %p366
    %p368 = scmp.ne.s32.totalorder %s354, %s355
    %p369 = scmp.eq.s32.totalorder %s27, 1
    %p370 = por %p368, %p369
    %p372 = scmp.ne.s32.totalorder %s355, %s371
    %p373 = scmp.eq.s32.totalorder %s27, 0
    %p374 = por %p372, %p373
    %p375 = scmp.le.s32.totalorder 1, %s21
    %p376 = scmp.lt.s32.totalorder %s21, 3
    %p377 = pnand %p375, %p376
    %p378 = pneg %p377
    // Predicated region
    $region9: #{_lambda_.7} parent=5 // pred_check
      _
    $region10: #{_lambda_.7} parent=5 // pred_check_branch
      %380 = sbr.rel (%p377) target = $region12
    $region11: #{_lambda_.7} parent=5 // pred_region
      %s381 = ssub.s32 %s21, 1
      // Predicated region
      $region13: #{_lambda_.7} parent=11 // pred_check
        %p382 = pneg %p68
      $region14: #{_lambda_.7} parent=11 // pred_check_branch
        %384 = sbr.rel (%p382) target = $region16
      $region15: #{_lambda_.7} parent=11 // pred_region
        _
      $region16: #{_lambda_.7} parent=11 // pred_fallthru
        _
      // Predicated region
      $region17: #{_lambda_.7} parent=11 // pred_check
        %p385 = pneg %p89
      $region18: #{_lambda_.7} parent=11 // pred_check_branch
        %387 = sbr.rel (%p385) target = $region20
      $region19: #{_lambda_.7} parent=11 // pred_region
        _
      $region20: #{_lambda_.7} parent=11 // pred_fallthru
        _
      // Predicated region
      $region21: #{_lambda_.7} parent=11 // pred_check
        %p388 = pneg %p110
      $region22: #{_lambda_.7} parent=11 // pred_check_branch
        %390 = sbr.rel (%p388) target = $region24
      $region23: #{_lambda_.7} parent=11 // pred_region
        _
      $region24: #{_lambda_.7} parent=11 // pred_fallthru
        _
      // Predicated region
      $region25: #{_lambda_.7} parent=11 // pred_check
        %p391 = pneg %p131
      $region26: #{_lambda_.7} parent=11 // pred_check_branch
        %393 = sbr.rel (%p391) target = $region28
      $region27: #{_lambda_.7} parent=11 // pred_region
        _
      $region28: #{_lambda_.7} parent=11 // pred_fallthru
        _
      // Predicated region
      $region29: #{_lambda_.7} parent=11 // pred_check
        %p394 = pneg %p152
      $region30: #{_lambda_.7} parent=11 // pred_check_branch
        %396 = sbr.rel (%p394) target = $region32
      $region31: #{_lambda_.7} parent=11 // pred_region
        _
      $region32: #{_lambda_.7} parent=11 // pred_fallthru
        _
      // Predicated region
      $region33: #{_lambda_.7} parent=11 // pred_check
        %p397 = pneg %p173
      $region34: #{_lambda_.7} parent=11 // pred_check_branch
        %399 = sbr.rel (%p397) target = $region36
      $region35: #{_lambda_.7} parent=11 // pred_region
        _
      $region36: #{_lambda_.7} parent=11 // pred_fallthru
        _
      // Predicated region
      $region37: #{_lambda_.7} parent=11 // pred_check
        %p400 = pneg %p194
      $region38: #{_lambda_.7} parent=11 // pred_check_branch
        %402 = sbr.rel (%p400) target = $region40
      $region39: #{_lambda_.7} parent=11 // pred_region
        _
      $region40: #{_lambda_.7} parent=11 // pred_fallthru
        _
      // Predicated region
      $region41: #{_lambda_.7} parent=11 // pred_check
        %p403 = pneg %p215
      $region42: #{_lambda_.7} parent=11 // pred_check_branch
        %405 = sbr.rel (%p403) target = $region44
      $region43: #{_lambda_.7} parent=11 // pred_region
        _
      $region44: #{_lambda_.7} parent=11 // pred_fallthru
        _
      // Predicated region
      $region45: #{_lambda_.7} parent=11 // pred_check
        %p406 = pneg %p236
      $region46: #{_lambda_.7} parent=11 // pred_check_branch
        %408 = sbr.rel (%p406) target = $region48
      $region47: #{_lambda_.7} parent=11 // pred_region
        _
      $region48: #{_lambda_.7} parent=11 // pred_fallthru
        _
      // Predicated region
      $region49: #{_lambda_.7} parent=11 // pred_check
        %p409 = pneg %p257
      $region50: #{_lambda_.7} parent=11 // pred_check_branch
        %411 = sbr.rel (%p409) target = $region52
      $region51: #{_lambda_.7} parent=11 // pred_region
        _
      $region52: #{_lambda_.7} parent=11 // pred_fallthru
        _
      // Predicated region
      $region53: #{_lambda_.7} parent=11 // pred_check
        %p412 = pneg %p278
      $region54: #{_lambda_.7} parent=11 // pred_check_branch
        %414 = sbr.rel (%p412) target = $region56
      $region55: #{_lambda_.7} parent=11 // pred_region
        _
      $region56: #{_lambda_.7} parent=11 // pred_fallthru
        _
      // Predicated region
      $region57: #{_lambda_.7} parent=11 // pred_check
        %p415 = pneg %p299
      $region58: #{_lambda_.7} parent=11 // pred_check_branch
        %417 = sbr.rel (%p415) target = $region60
      $region59: #{_lambda_.7} parent=11 // pred_region
        _
      $region60: #{_lambda_.7} parent=11 // pred_fallthru
        _
      // Predicated region
      $region61: #{_lambda_.7} parent=11 // pred_check
        %p418 = pneg %p320
      $region62: #{_lambda_.7} parent=11 // pred_check_branch
        %420 = sbr.rel (%p418) target = $region64
      $region63: #{_lambda_.7} parent=11 // pred_region
        _
      $region64: #{_lambda_.7} parent=11 // pred_fallthru
        _
      // Predicated region
      $region65: #{_lambda_.7} parent=11 // pred_check
        %p421 = pneg %p341
      $region66: #{_lambda_.7} parent=11 // pred_check_branch
        %423 = sbr.rel (%p421) target = $region68
      $region67: #{_lambda_.7} parent=11 // pred_region
        _
      $region68: #{_lambda_.7} parent=11 // pred_fallthru
        _
    $region12: #{_lambda_.7} parent=5 // pred_fallthru
      _
    %p424 = scmp.lt.s32.totalorder %s21, 2
    // Predicated region
    $region69: #{_lambda_.7} parent=5 // pred_check
      %p425 = pneg %p424
    $region70: #{_lambda_.7} parent=5 // pred_check_branch
      %427 = sbr.rel (%p425) target = $region72
    $region71: #{_lambda_.7} parent=5 // pred_region
      // Predicated region
      $region73: #{_lambda_.7} parent=71 // pred_check
        %p428 = pneg %p41
      $region74: #{_lambda_.7} parent=71 // pred_check_branch
        %430 = sbr.rel (%p428) target = $region76
      $region75: #{_lambda_.7} parent=71 // pred_region
        %p431 = scmp.lt.s32.totalorder %s21, 1
        %s432 = scalar_select %p431, %s21, 1
        %s433 = smul.addr %s432, 8
        %s434 = scalar_lea.vmem %s0, %s433
      $region76: #{_lambda_.7} parent=71 // pred_fallthru
        _
    $region72: #{_lambda_.7} parent=5 // pred_fallthru
      _
    %p435 = scmp.le.s32.totalorder 1, %s21
    %p436 = scmp.lt.s32.totalorder %s21, 3
    %p437 = pnand %p435, %p436
    %p438 = pneg %p437
    // Predicated region
    $region77: #{_lambda_.7} parent=5 // pred_check
      _
    $region78: #{_lambda_.7} parent=5 // pred_check_branch
      %440 = sbr.rel (%p437) target = $region80
    $region79: #{_lambda_.7} parent=5 // pred_region
      %s441 = ssub.s32 %s21, 1
      %p442 = scmp.lt.s32.totalorder %s26, 1
      %s443 = scalar_select %p442, %s26, 1
      %s444 = smul.addr %s443, 8
      %s445 = scalar_lea.vmem %s0, %s444
      %p446 = pneg %p47
      %p447 = pneg %p44
      %p448 = pneg %p68
      %p449 = pneg %p65
      %p450 = pneg %p89
      %p451 = pneg %p86
      %p452 = pneg %p110
      %p453 = pneg %p107
      %p454 = pneg %p131
      %p455 = pneg %p128
      %p456 = pneg %p152
      %p457 = pneg %p149
      %p458 = pneg %p173
      %p459 = pneg %p170
      %p460 = pneg %p194
      %p461 = pneg %p191
      %p462 = pneg %p215
      %p463 = pneg %p212
      %p464 = pneg %p236
      %p465 = pneg %p233
      %p466 = pneg %p257
      %p467 = pneg %p254
      %p468 = pneg %p278
      %p469 = pneg %p275
      %p470 = pneg %p299
      %p471 = pneg %p296
      %p472 = pneg %p320
      %p473 = pneg %p317
      %p474 = pneg %p341
      %p475 = pneg %p338
      %p476 = pneg %p367
      %p477 = pneg %p364
      %p478 = scmp.lt.s32.totalorder %s26, 1
      %s479 = scalar_select %p478, %s26, 1
      %s480 = smul.addr %s479, 8
      %s481 = scalar_lea.vmem %s15, %s480
      %p482 = scmp.lt.s32.totalorder %s26, 1
      %s483 = scalar_select %p482, %s26, 1
      %s484 = smul.addr %s483, 8
      %s485 = scalar_lea.vmem %s0, %s484
      %p486 = scmp.lt.s32.totalorder %s26, 1
      %s487 = scalar_select %p486, %s26, 1
      %s488 = smul.addr %s487, 8
      %s489 = scalar_lea.vmem %s15, %s488
      %v491 = vld [vmem:[%s485] sm:$0xff]
      %v492 = vld [vmem:[%s1] sm:$0xf]
      %v493 = vld [vmem:[%s1 + $0x4] sm:$0xf]
      %v494 = vld [vmem:[%s1 + $0x8] sm:$0xf]
      %v495 = vld [vmem:[%s1 + $0xc] sm:$0xf]
      %v496 = vld [vmem:[%s2] sm:$0x1]
      %v497 = vld [vmem:[%s3] sm:$0xf]
      %v498 = vld [vmem:[%s3 + $0x4] sm:$0xf]
      %v499 = vld [vmem:[%s3 + $0x8] sm:$0xf]
      %v500 = vld [vmem:[%s3 + $0xc] sm:$0xf]
      %v501 = vld [vmem:[%s4] sm:$0x1]
      %v502 = vld [vmem:[%s5] sm:$0x1]
      %v503 = vld [vmem:[%s6] sm:$0x1]
      %v504 = vpack.c.bf16 %v491, %v491
      %v506 = vperm.slane %v496, 0
      %v512 = vunpack.c.l.b16 %v492
      %v513 = vunpack.c.l.b16 %v493
      %v514 = vunpack.c.l.b16 %v494
      %v515 = vunpack.c.l.b16 %v495
      %v516 = vpack.c.b16 %v513, %v512
      %v517 = vpack.c.b16 %v515, %v514
      %vm520 = vcmask 261120
      %v522 = vsel %vm520, %v504, 0
      %524 = vmatpush.bf16.msra.mxu0 0
      %525 = vmatpush.bf16.msra.mxu0 0
      %526 = vmatpush.bf16.msra.mxu0 0
      %527 = vmatpush.bf16.msra.mxu0 0
      %528 = vmatpush.bf16.msra.mxu0 0
      %529 = vmatpush.bf16.msra.mxu0 0
      %530 = vmatpush.bf16.msra.mxu0 %v517
      %531 = vmatpush.bf16.msra.mxu0 %v516
      %532 = vmatmul.bf16.gmra.mxu0 %v522
      %v533 = vpop.f32.mrf.mxu0
      %v534 = vadd.f32 %v506, %v533
      %v535 = vpop.f32.mrf.mxu0
      %536 = vdwg.mxu0
      %v537 = vpack.c.bf16 %v534, %v534
      %539 = vrot.lane.b32.xlu0 %v537, 96
      %v540 = vpop.permute.xlu0 %539
      %vm541 = vcmask 64512
      %v543 = vsel %vm541, %v537, 0
      %v546 = vsel %vm541, %v540, 0
      %548 = vmatpush.bf16.xpose.msra.mxu0 0
      %549 = vmatpush.bf16.xpose.msra.mxu0 0
      %550 = vmatpush.bf16.xpose.msra.mxu0 0
      %551 = vmatpush.bf16.xpose.msra.mxu0 0
      %552 = vmatpush.bf16.xpose.msra.mxu0 0
      %553 = vmatpush.bf16.xpose.msra.mxu0 0
      %554 = vmatpush.bf16.xpose.msra.mxu0 0
      %555 = vmatpush.bf16.xpose.msra.mxu0 %v546
      %556 = vmatmul.bf16.gmra.mxu0 %v543
      %v557 = vpop.f32.mrf.mxu0
      %v558 = vadd.f32 0.0, %v557
      %v559 = vpop.f32.mrf.mxu0
      %560 = vdwg.mxu0
      %v561 = vmul.f32 %v558, 0.35355338
      %v562 = vsel %vm541, %v561, -inf
      %563 = vmax.xlane.f32.xlu0 %v562
      %v564 = vpop.xlane.xlu0 %563
      %v565 = vsub.f32 %v561, %v564
      %v566 = vmul.f32 %v565, 1.442695
      %v567 = vpow.pop %v566
      %v568 = vsel %vm541, %v567, 0.0
      %569 = vadd.xlane.f32.xlu0 %v568
      %v570 = vpop.xlane.xlu0 %569
      %v571 = vrcp.pop %v570
      %v572 = vmul.f32 %v570, %v571
      %v573 = vsub.f32 1.0, %v572
      %v574 = vmul.f32 %v571, %v573
      %v575 = vadd.f32 %v571, %v574
      %vm576 = vweird.f32 %v570
      %vm577 = vweird.f32 %v571
      %vm578 = vmor %vm576, %vm577
      %v579 = vsel %vm578, %v571, %v575
      %v580 = vand.u32 2147483647, %v570
      %vm581 = vcmp.eq.f32.partialorder %v580, 8.507059e+37
      %v582 = vand.u32 %v570, 2147483648
      %v583 = vor.u32 1.1754944e-38, %v582
      %v584 = vsel %vm581, %v583, %v579
      %v585 = vmul.f32 %v567, %v584
      %v586 = vpack.c.bf16 %v585, %v585
      %587 = vrot.lane.b32.xlu0 %v537, 64
      %v588 = vpop.permute.xlu0 %587
      %v590 = vsel %vm541, %v586, 0
      %vm592 = vcmask 1043456
      %v594 = vsel %vm592, %v588, 0
      %596 = vmatpush.bf16.msra.mxu0 0
      %597 = vmatpush.bf16.msra.mxu0 0
      %598 = vmatpush.bf16.msra.mxu0 0
      %599 = vmatpush.bf16.msra.mxu0 0
      %600 = vmatpush.bf16.msra.mxu0 0
      %601 = vmatpush.bf16.msra.mxu0 0
      %602 = vmatpush.bf16.msra.mxu0 0
      %603 = vmatpush.bf16.msra.mxu0 %v594
      %604 = vmatmul.bf16.gmra.mxu0 %v590
      %v605 = vpop.f32.mrf.mxu0
      %v606 = vadd.f32 0.0, %v605
      %v607 = vpop.f32.mrf.mxu0
      %608 = vdwg.mxu0
      %609 = vrot.lane.b32.xlu0 %v537, 120
      %v610 = vpop.permute.xlu0 %609
      %611 = vrot.lane.b32.xlu0 %v537, 88
      %v612 = vpop.permute.xlu0 %611
      %v614 = vsel %vm541, %v610, 0
      %v617 = vsel %vm541, %v612, 0
      %619 = vmatpush.bf16.xpose.msra.mxu0 0
      %620 = vmatpush.bf16.xpose.msra.mxu0 0
      %621 = vmatpush.bf16.xpose.msra.mxu0 0
      %622 = vmatpush.bf16.xpose.msra.mxu0 0
      %623 = vmatpush.bf16.xpose.msra.mxu0 0
      %624 = vmatpush.bf16.xpose.msra.mxu0 0
      %625 = vmatpush.bf16.xpose.msra.mxu0 0
      %626 = vmatpush.bf16.xpose.msra.mxu0 %v617
      %627 = vmatmul.bf16.gmra.mxu0 %v614
      %v628 = vpop.f32.mrf.mxu0
      %v629 = vadd.f32 0.0, %v628
      %v630 = vpop.f32.mrf.mxu0
      %631 = vdwg.mxu0
      %v632 = vmul.f32 %v629, 0.35355338
      %v633 = vsel %vm541, %v632, -inf
      %634 = vmax.xlane.f32.xlu0 %v633
      %v635 = vpop.xlane.xlu0 %634
      %v636 = vsub.f32 %v632, %v635
      %v637 = vmul.f32 %v636, 1.442695
      %v638 = vpow.pop %v637
      %v639 = vsel %vm541, %v638, 0.0
      %640 = vadd.xlane.f32.xlu0 %v639
      %v641 = vpop.xlane.xlu0 %640
      %v642 = vrcp.pop %v641
      %v643 = vmul.f32 %v641, %v642
      %v644 = vsub.f32 1.0, %v643
      %v645 = vmul.f32 %v642, %v644
      %v646 = vadd.f32 %v642, %v645
      %vm647 = vweird.f32 %v641
      %vm648 = vweird.f32 %v642
      %vm649 = vmor %vm647, %vm648
      %v650 = vsel %vm649, %v642, %v646
      %v651 = vand.u32 2147483647, %v641
      %vm652 = vcmp.eq.f32.partialorder %v651, 8.507059e+37
      %v653 = vand.u32 %v641, 2147483648
      %v654 = vor.u32 1.1754944e-38, %v653
      %v655 = vsel %vm652, %v654, %v650
      %v656 = vmul.f32 %v638, %v655
      %v657 = vpack.c.bf16 %v656, %v656
      %658 = vrot.lane.b32.xlu0 %v537, 56
      %v659 = vpop.permute.xlu0 %658
      %v661 = vsel %vm541, %v657, 0
      %v664 = vsel %vm592, %v659, 0
      %666 = vmatpush.bf16.msra.mxu0 0
      %667 = vmatpush.bf16.msra.mxu0 0
      %668 = vmatpush.bf16.msra.mxu0 0
      %669 = vmatpush.bf16.msra.mxu0 0
      %670 = vmatpush.bf16.msra.mxu0 0
      %671 = vmatpush.bf16.msra.mxu0 0
      %672 = vmatpush.bf16.msra.mxu0 0
      %673 = vmatpush.bf16.msra.mxu0 %v664
      %674 = vmatmul.bf16.gmra.mxu0 %v661
      %v675 = vpop.f32.mrf.mxu0
      %v676 = vadd.f32 0.0, %v675
      %v677 = vpop.f32.mrf.mxu0
      %678 = vdwg.mxu0
      %679 = vrot.lane.b32.xlu0 %v537, 112
      %v680 = vpop.permute.xlu0 %679
      %681 = vrot.lane.b32.xlu0 %v537, 80
      %v682 = vpop.permute.xlu0 %681
      %v684 = vsel %vm541, %v680, 0
      %v687 = vsel %vm541, %v682, 0
      %689 = vmatpush.bf16.xpose.msra.mxu0 0
      %690 = vmatpush.bf16.xpose.msra.mxu0 0
      %691 = vmatpush.bf16.xpose.msra.mxu0 0
      %692 = vmatpush.bf16.xpose.msra.mxu0 0
      %693 = vmatpush.bf16.xpose.msra.mxu0 0
      %694 = vmatpush.bf16.xpose.msra.mxu0 0
      %695 = vmatpush.bf16.xpose.msra.mxu0 0
      %696 = vmatpush.bf16.xpose.msra.mxu0 %v687
      %697 = vmatmul.bf16.gmra.mxu0 %v684
      %v698 = vpop.f32.mrf.mxu0
      %v699 = vadd.f32 0.0, %v698
      %v700 = vpop.f32.mrf.mxu0
      %701 = vdwg.mxu0
      %v702 = vmul.f32 %v699, 0.35355338
      %v703 = vsel %vm541, %v702, -inf
      %704 = vmax.xlane.f32.xlu0 %v703
      %v705 = vpop.xlane.xlu0 %704
      %v706 = vsub.f32 %v702, %v705
      %v707 = vmul.f32 %v706, 1.442695
      %v708 = vpow.pop %v707
      %v709 = vsel %vm541, %v708, 0.0
      %710 = vadd.xlane.f32.xlu0 %v709
      %v711 = vpop.xlane.xlu0 %710
      %v712 = vrcp.pop %v711
      %v713 = vmul.f32 %v711, %v712
      %v714 = vsub.f32 1.0, %v713
      %v715 = vmul.f32 %v712, %v714
      %v716 = vadd.f32 %v712, %v715
      %vm717 = vweird.f32 %v711
      %vm718 = vweird.f32 %v712
      %vm719 = vmor %vm717, %vm718
      %v720 = vsel %vm719, %v712, %v716
      %v721 = vand.u32 2147483647, %v711
      %vm722 = vcmp.eq.f32.partialorder %v721, 8.507059e+37
      %v723 = vand.u32 %v711, 2147483648
      %v724 = vor.u32 1.1754944e-38, %v723
      %v725 = vsel %vm722, %v724, %v720
      %v726 = vmul.f32 %v708, %v725
      %v727 = vpack.c.bf16 %v726, %v726
      %728 = vrot.lane.b32.xlu0 %v537, 48
      %v729 = vpop.permute.xlu0 %728
      %v731 = vsel %vm541, %v727, 0
      %v734 = vsel %vm592, %v729, 0
      %736 = vmatpush.bf16.msra.mxu0 0
      %737 = vmatpush.bf16.msra.mxu0 0
      %738 = vmatpush.bf16.msra.mxu0 0
      %739 = vmatpush.bf16.msra.mxu0 0
      %740 = vmatpush.bf16.msra.mxu0 0
      %741 = vmatpush.bf16.msra.mxu0 0
      %742 = vmatpush.bf16.msra.mxu0 0
      %743 = vmatpush.bf16.msra.mxu0 %v734
      %744 = vmatmul.bf16.gmra.mxu0 %v731
      %v745 = vpop.f32.mrf.mxu0
      %v746 = vadd.f32 0.0, %v745
      %v747 = vpop.f32.mrf.mxu0
      %748 = vdwg.mxu0
      %749 = vrot.lane.b32.xlu0 %v537, 104
      %v750 = vpop.permute.xlu0 %749
      %751 = vrot.lane.b32.xlu0 %v537, 72
      %v752 = vpop.permute.xlu0 %751
      %v754 = vsel %vm541, %v750, 0
      %v757 = vsel %vm541, %v752, 0
      %759 = vmatpush.bf16.xpose.msra.mxu0 0
      %760 = vmatpush.bf16.xpose.msra.mxu0 0
      %761 = vmatpush.bf16.xpose.msra.mxu0 0
      %762 = vmatpush.bf16.xpose.msra.mxu0 0
      %763 = vmatpush.bf16.xpose.msra.mxu0 0
      %764 = vmatpush.bf16.xpose.msra.mxu0 0
      %765 = vmatpush.bf16.xpose.msra.mxu0 0
      %766 = vmatpush.bf16.xpose.msra.mxu0 %v757
      %767 = vmatmul.bf16.gmra.mxu0 %v754
      %v768 = vpop.f32.mrf.mxu0
      %v769 = vadd.f32 0.0, %v768
      %v770 = vpop.f32.mrf.mxu0
      %771 = vdwg.mxu0
      %v772 = vmul.f32 %v769, 0.35355338
      %v773 = vsel %vm541, %v772, -inf
      %774 = vmax.xlane.f32.xlu0 %v773
      %v775 = vpop.xlane.xlu0 %774
      %v776 = vsub.f32 %v772, %v775
      %v777 = vmul.f32 %v776, 1.442695
      %v778 = vpow.pop %v777
      %v779 = vsel %vm541, %v778, 0.0
      %780 = vadd.xlane.f32.xlu0 %v779
      %v781 = vpop.xlane.xlu0 %780
      %v782 = vrcp.pop %v781
      %v783 = vmul.f32 %v781, %v782
      %v784 = vsub.f32 1.0, %v783
      %v785 = vmul.f32 %v782, %v784
      %v786 = vadd.f32 %v782, %v785
      %vm787 = vweird.f32 %v781
      %vm788 = vweird.f32 %v782
      %vm789 = vmor %vm787, %vm788
      %v790 = vsel %vm789, %v782, %v786
      %v791 = vand.u32 2147483647, %v781
      %vm792 = vcmp.eq.f32.partialorder %v791, 8.507059e+37
      %v793 = vand.u32 %v781, 2147483648
      %v794 = vor.u32 1.1754944e-38, %v793
      %v795 = vsel %vm792, %v794, %v790
      %v796 = vmul.f32 %v778, %v795
      %v797 = vpack.c.bf16 %v796, %v796
      %798 = vrot.lane.b32.xlu0 %v537, 40
      %v799 = vpop.permute.xlu0 %798
      %v801 = vsel %vm541, %v797, 0
      %v804 = vsel %vm592, %v799, 0
      %806 = vmatpush.bf16.msra.mxu0 0
      %807 = vmatpush.bf16.msra.mxu0 0
      %808 = vmatpush.bf16.msra.mxu0 0
      %809 = vmatpush.bf16.msra.mxu0 0
      %810 = vmatpush.bf16.msra.mxu0 0
      %811 = vmatpush.bf16.msra.mxu0 0
      %812 = vmatpush.bf16.msra.mxu0 0
      %813 = vmatpush.bf16.msra.mxu0 %v804
      %814 = vmatmul.bf16.gmra.mxu0 %v801
      %v815 = vpop.f32.mrf.mxu0
      %v816 = vadd.f32 0.0, %v815
      %v817 = vpop.f32.mrf.mxu0
      %818 = vdwg.mxu0
      %820 = vrot.lane.b32.xlu0 %v676, 8
      %v821 = vpop.permute.xlu0 %820
      %824 = vrot.lane.b32.xlu0 %v746, 16
      %v825 = vpop.permute.xlu0 %824
      %828 = vrot.lane.b32.xlu0 %v816, 24
      %v829 = vpop.permute.xlu0 %828
      %v831 = vsel %vm541, %v606, %v821
      %vm832 = vcmask 130048
      %v833 = vsel %vm832, %v831, %v825
      %vm834 = vcmask 195584
      %v835 = vsel %vm834, %v833, %v829
      %v836 = vpack.c.bf16 %v835, %v835
      %v838 = vperm.slane %v501, 0
      %v844 = vunpack.c.l.b16 %v497
      %v845 = vunpack.c.l.b16 %v498
      %v846 = vunpack.c.l.b16 %v499
      %v847 = vunpack.c.l.b16 %v500
      %v848 = vpack.c.b16 %v845, %v844
      %v849 = vpack.c.b16 %v847, %v846
      %v853 = vsel %vm520, %v836, 0
      %855 = vmatpush.bf16.msra.mxu0 0
      %856 = vmatpush.bf16.msra.mxu0 0
      %857 = vmatpush.bf16.msra.mxu0 0
      %858 = vmatpush.bf16.msra.mxu0 0
      %859 = vmatpush.bf16.msra.mxu0 0
      %860 = vmatpush.bf16.msra.mxu0 0
      %861 = vmatpush.bf16.msra.mxu0 %v849
      %862 = vmatpush.bf16.msra.mxu0 %v848
      %863 = vmatmul.bf16.gmra.mxu0 %v853
      %v864 = vpop.f32.mrf.mxu0
      %v865 = vadd.f32 %v838, %v864
      %v866 = vpop.f32.mrf.mxu0
      %867 = vdwg.mxu0
      %v868 = vadd.f32 %v491, %v865
      %v869 = vsel %vm520, %v868, 0.0
      %870 = vadd.xlane.f32.xlu0 %v869
      %v871 = vpop.xlane.xlu0 %870
      %v872 = vrcp.pop 32.0
      %v873 = vmul.f32 32.0, %v872
      %v874 = vsub.f32 1.0, %v873
      %v875 = vmul.f32 %v872, %v874
      %v876 = vadd.f32 %v872, %v875
      %vm877 = vweird.f32 %v872
      %v878 = vsel %vm877, %v872, %v876
      %v879 = vmul.f32 %v871, %v878
      %v880 = vsub.f32 %v868, %v879
      %v881 = vmul.f32 %v880, %v880
      %v882 = vsel %vm520, %v881, 0.0
      %883 = vadd.xlane.f32.xlu0 %v882
      %v884 = vpop.xlane.xlu0 %883
      %v885 = vmul.f32 %v884, %v878
      %v886 = vadd.f32 %v885, 1e-05
      %v887 = vrsqrt.pop %v886
      %v888 = vmul.f32 %v887, %v886
      %v889 = vmul.f32 %v888, %v887
      %v890 = vmul.f32 0.5, %v889
      %v891 = vsub.f32 1.5, %v890
      %v892 = vmul.f32 %v887, %v891
      %vm893 = vweird.f32 %v886
      %vm894 = vweird.f32 %v887
      %vm895 = vmor %vm893, %vm894
      %v896 = vsel %vm895, %v887, %v892
      %v897 = vmul.f32 %v880, %v896
      %v899 = vperm.slane %v502, 0
      %v901 = vmul.f32 %v897, %v899
      %v903 = vperm.slane %v503, 0
      %v905 = vadd.f32 %v901, %v903
      %v906 = vld [vmem:[%s7] sm:$0xf]
      %v907 = vld [vmem:[%s7 + $0x4] sm:$0xf]
      %v908 = vld [vmem:[%s7 + $0x8] sm:$0xf]
      %v909 = vld [vmem:[%s7 + $0xc] sm:$0xf]
      %v910 = vld [vmem:[%s8] sm:$0x1]
      %v911 = vld [vmem:[%s9] sm:$0xf]
      %v912 = vld [vmem:[%s9 + $0x4] sm:$0xf]
      %v913 = vld [vmem:[%s9 + $0x8] sm:$0xf]
      %v914 = vld [vmem:[%s9 + $0xc] sm:$0xf]
      %v915 = vld [vmem:[%s10] sm:$0x1]
      %v916 = vld [vmem:[%s11] sm:$0x1]
      %v917 = vld [vmem:[%s12] sm:$0x1]
      %v918 = vpack.c.bf16 %v905, %v905
      %v920 = vperm.slane %v910, 0
      %v926 = vunpack.c.l.b16 %v906
      %v927 = vunpack.c.l.b16 %v907
      %v928 = vunpack.c.l.b16 %v908
      %v929 = vunpack.c.l.b16 %v909
      %v930 = vpack.c.b16 %v927, %v926
      %v931 = vpack.c.b16 %v929, %v928
      %v935 = vsel %vm520, %v918, 0
      %937 = vmatpush.bf16.msra.mxu0 0
      %938 = vmatpush.bf16.msra.mxu0 0
      %939 = vmatpush.bf16.msra.mxu0 0
      %940 = vmatpush.bf16.msra.mxu0 0
      %941 = vmatpush.bf16.msra.mxu0 0
      %942 = vmatpush.bf16.msra.mxu0 0
      %943 = vmatpush.bf16.msra.mxu0 %v931
      %944 = vmatpush.bf16.msra.mxu0 %v930
      %945 = vmatmul.bf16.gmra.mxu0 %v935
      %v946 = vpop.f32.mrf.mxu0
      %v947 = vadd.f32 %v920, %v946
      %v948 = vpop.f32.mrf.mxu0
      %949 = vdwg.mxu0
      %v950 = vmax.f32 %v947, 0.0
      %v951 = vpack.c.bf16 %v950, %v950
      %v953 = vperm.slane %v915, 0
      %v959 = vunpack.c.l.b16 %v911
      %v960 = vunpack.c.l.b16 %v912
      %v961 = vunpack.c.l.b16 %v913
      %v962 = vunpack.c.l.b16 %v914
      %v963 = vpack.c.b16 %v960, %v959
      %v964 = vpack.c.b16 %v962, %v961
      %v968 = vsel %vm520, %v951, 0
      %970 = vmatpush.bf16.msra.mxu0 0
      %971 = vmatpush.bf16.msra.mxu0 0
      %972 = vmatpush.bf16.msra.mxu0 0
      %973 = vmatpush.bf16.msra.mxu0 0
      %974 = vmatpush.bf16.msra.mxu0 0
      %975 = vmatpush.bf16.msra.mxu0 0
      %976 = vmatpush.bf16.msra.mxu0 %v964
      %977 = vmatpush.bf16.msra.mxu0 %v963
      %978 = vmatmul.bf16.gmra.mxu0 %v968
      %v979 = vpop.f32.mrf.mxu0
      %v980 = vadd.f32 %v953, %v979
      %v981 = vpop.f32.mrf.mxu0
      %982 = vdwg.mxu0
      %v983 = vadd.f32 %v905, %v980
      %v984 = vsel %vm520, %v983, 0.0
      %985 = vadd.xlane.f32.xlu0 %v984
      %v986 = vpop.xlane.xlu0 %985
      %v987 = vmul.f32 %v986, %v878
      %v988 = vsub.f32 %v983, %v987
      %v989 = vmul.f32 %v988, %v988
      %v990 = vsel %vm520, %v989, 0.0
      %991 = vadd.xlane.f32.xlu0 %v990
      %v992 = vpop.xlane.xlu0 %991
      %v993 = vmul.f32 %v992, %v878
      %v994 = vadd.f32 %v993, 1e-05
      %v995 = vrsqrt.pop %v994
      %v996 = vmul.f32 %v995, %v994
      %v997 = vmul.f32 %v996, %v995
      %v998 = vmul.f32 0.5, %v997
      %v999 = vsub.f32 1.5, %v998
      %v1000 = vmul.f32 %v995, %v999
      %vm1001 = vweird.f32 %v994
      %vm1002 = vweird.f32 %v995
      %vm1003 = vmor %vm1001, %vm1002
      %v1004 = vsel %vm1003, %v995, %v1000
      %v1005 = vmul.f32 %v988, %v1004
      %v1007 = vperm.slane %v916, 0
      %v1009 = vmul.f32 %v1005, %v1007
      %v1011 = vperm.slane %v917, 0
      %v1013 = vadd.f32 %v1009, %v1011
      %v1014 = vld [vmem:[%s13] sm:$0x1]
      %v1015 = vld [vmem:[%s14] sm:$0x1]
      %v1016 = vsel %vm520, %v1013, 0.0
      %1017 = vadd.xlane.f32.xlu0 %v1016
      %v1018 = vpop.xlane.xlu0 %1017
      %v1019 = vmul.f32 %v1018, %v878
      %v1020 = vsub.f32 %v1013, %v1019
      %v1021 = vmul.f32 %v1020, %v1020
      %v1022 = vsel %vm520, %v1021, 0.0
      %1023 = vadd.xlane.f32.xlu0 %v1022
      %v1024 = vpop.xlane.xlu0 %1023
      %v1025 = vmul.f32 %v1024, %v878
      %v1026 = vadd.f32 %v1025, 1e-05
      %v1027 = vrsqrt.pop %v1026
      %v1028 = vmul.f32 %v1027, %v1026
      %v1029 = vmul.f32 %v1028, %v1027
      %v1030 = vmul.f32 0.5, %v1029
      %v1031 = vsub.f32 1.5, %v1030
      %v1032 = vmul.f32 %v1027, %v1031
      %vm1033 = vweird.f32 %v1026
      %vm1034 = vweird.f32 %v1027
      %vm1035 = vmor %vm1033, %vm1034
      %v1036 = vsel %vm1035, %v1027, %v1032
      %v1037 = vmul.f32 %v1020, %v1036
      %v1039 = vperm.slane %v1014, 0
      %v1041 = vmul.f32 %v1037, %v1039
      %v1043 = vperm.slane %v1015, 0
      %v1045 = vadd.f32 %v1041, %v1043
      %1046 = vst.msk [vmem:[%s489] sm:$0xff] %vm520, %v1045
      %p1047 = scmp.lt.s32.totalorder %s26, 1
      %s1048 = scalar_select %p1047, %s26, 1
      %s1049 = smul.addr %s1048, 8
      %s1050 = scalar_lea.vmem %s15, %s1049
      // Predicated region
      $region81: #{_lambda_.7} parent=79 // pred_check
        %p1051 = pneg %p364
      $region82: #{_lambda_.7} parent=79 // pred_check_branch
        %1053 = sbr.rel (%p1051) target = $region84
      $region83: #{_lambda_.7} parent=79 // pred_region
        _
      $region84: #{_lambda_.7} parent=79 // pred_fallthru
        _
    $region80: #{_lambda_.7} parent=5 // pred_fallthru
      _
    %p1054 = scmp.le.s32.totalorder 2, %s21
    // Predicated region
    $region85: #{_lambda_.7} parent=5 // pred_check
      %p1055 = pneg %p1054
    $region86: #{_lambda_.7} parent=5 // pred_check_branch
      %1057 = sbr.rel (%p1055) target = $region88
    $region87: #{_lambda_.7} parent=5 // pred_region
      %s1058 = ssub.s32 %s21, 2
      // Predicated region
      $region89: #{_lambda_.7} parent=87 // pred_check
        %p1059 = pneg %p370
      $region90: #{_lambda_.7} parent=87 // pred_check_branch
        %1061 = sbr.rel (%p1059) target = $region92
      $region91: #{_lambda_.7} parent=87 // pred_region
        %p1062 = scmp.lt.s32.totalorder %s27, 1
        %s1063 = scalar_select %p1062, %s27, 1
        %s1064 = smul.addr %s1063, 8
        %s1065 = scalar_lea.vmem %s15, %s1064
      $region92: #{_lambda_.7} parent=87 // pred_fallthru
        _
    $region88: #{_lambda_.7} parent=5 // pred_fallthru
      _
  $region6: #{_lambda_.7} parent=0 // loop_footer
    %s25 = sadd.s32 1, %s21
  $region7: #{_lambda_.7} parent=0 // loop_footer_branch
    %20 = sbr.rel target = $region3
  $region8: #{_lambda_.7} parent=0 // loop_exit
    _

// kernel: _lambda_.8
$region0: #{_lambda_.8}
  #allocation0 [shape = 'u32[]', space=smem, size = 0x4, offset = 0x4, fixed_abs, tag = 'smem constant byte address 0x4 - core index']
  #allocation1 [shape = 'u32[72,128]{1,0:T(1,128)}', space=vmem, size = 0x9000, scoped, tag = 'internal scratch']
  %s0 = inlined_call_operand.vmem [shape: f32[2,8,4], index: 0, kind: input, shape index: {}]
  %s1 = inlined_call_operand.vmem [shape: f32[2,8,4], index: 1, kind: input, shape index: {}]
  %s2 = inlined_call_operand.vmem [shape: bf16[16,32], index: 2, kind: input, shape index: {}]
  %s3 = inlined_call_operand.vmem [shape: f32[8,32], index: 3, kind: input, shape index: {}]
  %s4 = inlined_call_operand.vmem [shape: f32[2,8,32], index: 4, kind: output, shape index: {}]
  %s5 = sld [smem:[#allocation0]]
  $region49: #{_lambda_.8} parent=0
    _
  %s7 = ssub.s32 1, %s5
  %s8 = scalar_select 0, %s7, %s5
  loop: start=0, step=1, limit=4
  $region2: #{_lambda_.8} parent=0 // loop_pre_header
    _
  $region3: #{_lambda_.8} parent=0 // loop_header
    %s10 = sphi 0, %s14
    %p11 = scmp.ge.s32.totalorder %s10, 4
    %s20 = sphi 0, %s22
    %s23 = sphi 0, %s20
    %s24 = sphi 0, %s23
    %s40 = sphi 0, %s24
    %s46 = sphi 0, %s48
    %s49 = sphi 0, %s46
    %s50 = sphi 0, %s49
    %s66 = sphi 0, %s50
    %s70 = sphi 0, %s70
    %s72 = sphi 0, %s70
    %s73 = sphi 0, %s72
    %s87 = sphi 0, %s73
    %s91 = sphi 0, %s91
    %s93 = sphi 0, %s91
    %s94 = sphi 0, %s93
    %s108 = sphi 0, %s94
    %s114 = sphi 0, %s116
    %s117 = sphi 0, %s114
    %s118 = sphi 0, %s117
    %s134 = sphi 0, %s118
  $region4: #{_lambda_.8} parent=0 // loop_header_branch
    %13 = sbr.rel (%p11) target = $region8
  $region5: #{_lambda_.8} parent=0 // loop_body
    %s15 = ssub.s32 %s10, 1
    %s16 = ssub.s32 %s10, 2
    %s17 = sadd.s32 %s10, 1
    %s18 = ssub.s32 %s10, %s17
    %p19 = scmp.eq.s32.totalorder %s18, 0
    %s21 = sadd.s32 %s20, 1
    %s22 = scalar_select %p19, %s20, %s21
    %p25 = pneg %p19
    %p26 = scmp.eq.s32.totalorder %s10, 1
    %p27 = por %p25, %p26
    %p28 = scmp.ne.s32.totalorder %s20, %s23
    %p29 = scmp.eq.s32.totalorder %s10, 0
    %p30 = por %p28, %p29
    %p31 = scmp.ne.s32.totalorder %s20, %s23
    %p32 = scmp.eq.s32.totalorder %s15, 1
    %p33 = por %p31, %p32
    %p34 = scmp.ne.s32.totalorder %s23, %s24
    %p35 = scmp.eq.s32.totalorder %s15, 0
    %p36 = por %p34, %p35
    %p37 = scmp.ne.s32.totalorder %s23, %s24
    %p38 = scmp.eq.s32.totalorder %s16, 1
    %p39 = por %p37, %p38
    %p41 = scmp.ne.s32.totalorder %s24, %s40
    %p42 = scmp.eq.s32.totalorder %s16, 0
    %p43 = por %p41, %p42
    %s44 = ssub.s32 %s10, %s17
    %p45 = scmp.eq.s32.totalorder %s44, 0
    %s47 = sadd.s32 %s46, 1
    %s48 = scalar_select %p45, %s46, %s47
    %p51 = pneg %p45
    %p52 = scmp.eq.s32.totalorder %s10, 1
    %p53 = por %p51, %p52
    %p54 = scmp.ne.s32.totalorder %s46, %s49
    %p55 = scmp.eq.s32.totalorder %s10, 0
    %p56 = por %p54, %p55
    %p57 = scmp.ne.s32.totalorder %s46, %s49
    %p58 = scmp.eq.s32.totalorder %s15, 1
    %p59 = por %p57, %p58
    %p60 = scmp.ne.s32.totalorder %s49, %s50
    %p61 = scmp.eq.s32.totalorder %s15, 0
    %p62 = por %p60, %p61
    %p63 = scmp.ne.s32.totalorder %s49, %s50
    %p64 = scmp.eq.s32.totalorder %s16, 1
    %p65 = por %p63, %p64
    %p67 = scmp.ne.s32.totalorder %s50, %s66
    %p68 = scmp.eq.s32.totalorder %s16, 0
    %p69 = por %p67, %p68
    %s71 = sadd.s32 %s70, 1
    %p74 = scmp.eq.s32.totalorder %s10, 1
    %p75 = scmp.ne.s32.totalorder %s70, %s72
    %p76 = scmp.eq.s32.totalorder %s10, 0
    %p77 = por %p75, %p76
    %p78 = scmp.ne.s32.totalorder %s70, %s72
    %p79 = scmp.eq.s32.totalorder %s15, 1
    %p80 = por %p78, %p79
    %p81 = scmp.ne.s32.totalorder %s72, %s73
    %p82 = scmp.eq.s32.totalorder %s15, 0
    %p83 = por %p81, %p82
    %p84 = scmp.ne.s32.totalorder %s72, %s73
    %p85 = scmp.eq.s32.totalorder %s16, 1
    %p86 = por %p84, %p85
    %p88 = scmp.ne.s32.totalorder %s73, %s87
    %p89 = scmp.eq.s32.totalorder %s16, 0
    %p90 = por %p88, %p89
    %s92 = sadd.s32 %s91, 1
    %p95 = scmp.eq.s32.totalorder %s10, 1
    %p96 = scmp.ne.s32.totalorder %s91, %s93
    %p97 = scmp.eq.s32.totalorder %s10, 0
    %p98 = por %p96, %p97
    %p99 = scmp.ne.s32.totalorder %s91, %s93
    %p100 = scmp.eq.s32.totalorder %s15, 1
    %p101 = por %p99, %p100
    %p102 = scmp.ne.s32.totalorder %s93, %s94
    %p103 = scmp.eq.s32.totalorder %s15, 0
    %p104 = por %p102, %p103
    %p105 = scmp.ne.s32.totalorder %s93, %s94
    %p106 = scmp.eq.s32.totalorder %s16, 1
    %p107 = por %p105, %p106
    %p109 = scmp.ne.s32.totalorder %s94, %s108
    %p110 = scmp.eq.s32.totalorder %s16, 0
    %p111 = por %p109, %p110
    %s112 = ssub.s32 %s10, %s17
    %p113 = scmp.eq.s32.totalorder %s112, 0
    %s115 = sadd.s32 %s114, 1
    %s116 = scalar_select %p113, %s114, %s115
    %p119 = pneg %p113
    %p120 = scmp.eq.s32.totalorder %s10, 1
    %p121 = por %p119, %p120
    %p122 = scmp.ne.s32.totalorder %s114, %s117
    %p123 = scmp.eq.s32.totalorder %s10, 0
    %p124 = por %p122, %p123
    %p125 = scmp.ne.s32.totalorder %s114, %s117
    %p126 = scmp.eq.s32.totalorder %s15, 1
    %p127 = por %p125, %p126
    %p128 = scmp.ne.s32.totalorder %s117, %s118
    %p129 = scmp.eq.s32.totalorder %s15, 0
    %p130 = por %p128, %p129
    %p131 = scmp.ne.s32.totalorder %s117, %s118
    %p132 = scmp.eq.s32.totalorder %s16, 1
    %p133 = por %p131, %p132
    %p135 = scmp.ne.s32.totalorder %s118, %s134
    %p136 = scmp.eq.s32.totalorder %s16, 0
    %p137 = por %p135, %p136
    %p138 = scmp.le.s32.totalorder 1, %s10
    %p139 = scmp.lt.s32.totalorder %s10, 3
    %p140 = pnand %p138, %p139
    %p141 = pneg %p140
    // Predicated region
    $region9: #{_lambda_.8} parent=5 // pred_check
      _
    $region10: #{_lambda_.8} parent=5 // pred_check_branch
      %143 = sbr.rel (%p140) target = $region12
    $region11: #{_lambda_.8} parent=5 // pred_region
      %s144 = ssub.s32 %s10, 1
      // Predicated region
      $region13: #{_lambda_.8} parent=11 // pred_check
        %p145 = pneg %p83
      $region14: #{_lambda_.8} parent=11 // pred_check_branch
        %147 = sbr.rel (%p145) target = $region16
      $region15: #{_lambda_.8} parent=11 // pred_region
        _
      $region16: #{_lambda_.8} parent=11 // pred_fallthru
        _
      // Predicated region
      $region17: #{_lambda_.8} parent=11 // pred_check
        %p148 = pneg %p104
      $region18: #{_lambda_.8} parent=11 // pred_check_branch
        %150 = sbr.rel (%p148) target = $region20
      $region19: #{_lambda_.8} parent=11 // pred_region
        _
      $region20: #{_lambda_.8} parent=11 // pred_fallthru
        _
    $region12: #{_lambda_.8} parent=5 // pred_fallthru
      _
    %p151 = scmp.lt.s32.totalorder %s10, 2
    // Predicated region
    $region21: #{_lambda_.8} parent=5 // pred_check
      %p152 = pneg %p151
    $region22: #{_lambda_.8} parent=5 // pred_check_branch
      %154 = sbr.rel (%p152) target = $region24
    $region23: #{_lambda_.8} parent=5 // pred_region
      // Predicated region
      $region25: #{_lambda_.8} parent=23 // pred_check
        %p155 = pneg %p30
      $region26: #{_lambda_.8} parent=23 // pred_check_branch
        %157 = sbr.rel (%p155) target = $region28
      $region27: #{_lambda_.8} parent=23 // pred_region
        %p158 = scmp.lt.s32.totalorder %s10, 1
        %s159 = scalar_select %p158, %s10, 1
        %s160 = smul.addr %s159, 8
        %s161 = scalar_lea.vmem %s0, %s160
      $region28: #{_lambda_.8} parent=23 // pred_fallthru
        _
      // Predicated region
      $region29: #{_lambda_.8} parent=23 // pred_check
        %p162 = pneg %p56
      $region30: #{_lambda_.8} parent=23 // pred_check_branch
        %164 = sbr.rel (%p162) target = $region32
      $region31: #{_lambda_.8} parent=23 // pred_region
        %p165 = scmp.lt.s32.totalorder %s10, 1
        %s166 = scalar_select %p165, %s10, 1
        %s167 = smul.addr %s166, 8
        %s168 = scalar_lea.vmem %s1, %s167
      $region32: #{_lambda_.8} parent=23 // pred_fallthru
        _
    $region24: #{_lambda_.8} parent=5 // pred_fallthru
      _
    %p169 = scmp.le.s32.totalorder 1, %s10
    %p170 = scmp.lt.s32.totalorder %s10, 3
    %p171 = pnand %p169, %p170
    %p172 = pneg %p171
    // Predicated region
    $region33: #{_lambda_.8} parent=5 // pred_check
      _
    $region34: #{_lambda_.8} parent=5 // pred_check_branch
      %174 = sbr.rel (%p171) target = $region36
    $region35: #{_lambda_.8} parent=5 // pred_region
      %s175 = ssub.s32 %s10, 1
      %p176 = scmp.lt.s32.totalorder %s15, 1
      %s177 = scalar_select %p176, %s15, 1
      %s178 = smul.addr %s177, 8
      %s179 = scalar_lea.vmem %s0, %s178
      %p180 = pneg %p36
      %p181 = pneg %p33
      %p182 = scmp.lt.s32.totalorder %s15, 1
      %s183 = scalar_select %p182, %s15, 1
      %s184 = smul.addr %s183, 8
      %s185 = scalar_lea.vmem %s1, %s184
      %p186 = pneg %p62
      %p187 = pneg %p59
      %p188 = pneg %p83
      %p189 = pneg %p80
      %p190 = pneg %p104
      %p191 = pneg %p101
      %p192 = pneg %p130
      %p193 = pneg %p127
      %p194 = scmp.lt.s32.totalorder %s15, 1
      %s195 = scalar_select %p194, %s15, 1
      %s196 = smul.addr %s195, 8
      %s197 = scalar_lea.vmem %s4, %s196
      %p198 = scmp.lt.s32.totalorder %s15, 1
      %s199 = scalar_select %p198, %s15, 1
      %s200 = smul.addr %s199, 8
      %s201 = scalar_lea.vmem %s0, %s200
      %p202 = scmp.lt.s32.totalorder %s15, 1
      %s203 = scalar_select %p202, %s15, 1
      %s204 = smul.addr %s203, 8
      %s205 = scalar_lea.vmem %s1, %s204
      %p206 = scmp.lt.s32.totalorder %s15, 1
      %s207 = scalar_select %p206, %s15, 1
      %s208 = smul.addr %s207, 8
      %s209 = scalar_lea.vmem %s4, %s208
      %v211 = vld [vmem:[%s201] sm:$0xff]
      %v212 = vrot.slane %v211, 7
      %v213 = vrot.slane %v211, 1
      %v214 = vld [vmem:[%s205] sm:$0xff]
      %216 = vrot.lane.b32.xlu0 %v211, 4
      %v217 = vpop.permute.xlu0 %216
      %220 = vrot.lane.b32.xlu0 %v213, 8
      %v221 = vpop.permute.xlu0 %220
      %224 = vrot.lane.b32.xlu0 %v214, 12
      %v225 = vpop.permute.xlu0 %224
      %vm227 = vcmask 31744
      %v228 = vsel %vm227, %v212, %v217
      %vm229 = vcmask 64512
      %v230 = vsel %vm229, %v228, %v221
      %vm231 = vcmask 97280
      %v232 = vsel %vm231, %v230, %v225
      %v233 = vpack.c.bf16 %v232, %v232
      %v234 = vld [vmem:[%s2] sm:$0xf]
      %v235 = vld [vmem:[%s2 + $0x4] sm:$0xf]
      %v236 = vld [vmem:[%s3] sm:$0xff]
      %v239 = vunpack.c.l.b16 %v234
      %v240 = vunpack.c.l.b16 %v235
      %v241 = vpack.c.b16 %v240, %v239
      %vm243 = vcmask 130048
      %v245 = vsel %vm243, %v233, 0
      %247 = vmatpush.bf16.msra.mxu0 0
      %248 = vmatpush.bf16.msra.mxu0 0
      %249 = vmatpush.bf16.msra.mxu0 0
      %250 = vmatpush.bf16.msra.mxu0 0
      %251 = vmatpush.bf16.msra.mxu0 0
      %252 = vmatpush.bf16.msra.mxu0 0
      %253 = vmatpush.bf16.msra.mxu0 0
      %254 = vmatpush.bf16.msra.mxu0 %v241
      %255 = vmatmul.bf16.gmra.mxu0 %v245
      %v256 = vpop.f32.mrf.mxu0
      %v257 = vadd.f32 %v236, %v256
      %v258 = vpop.f32.mrf.mxu0
      %259 = vdwg.mxu0
      %vm260 = vcmask 261120
      %261 = vst.msk [vmem:[%s209] sm:$0xff] %vm260, %v257
      %p262 = scmp.lt.s32.totalorder %s15, 1
      %s263 = scalar_select %p262, %s15, 1
      %s264 = smul.addr %s263, 8
      %s265 = scalar_lea.vmem %s4, %s264
      // Predicated region
      $region37: #{_lambda_.8} parent=35 // pred_check
        %p266 = pneg %p127
      $region38: #{_lambda_.8} parent=35 // pred_check_branch
        %268 = sbr.rel (%p266) target = $region40
      $region39: #{_lambda_.8} parent=35 // pred_region
        _
      $region40: #{_lambda_.8} parent=35 // pred_fallthru
        _
    $region36: #{_lambda_.8} parent=5 // pred_fallthru
      _
    %p269 = scmp.le.s32.totalorder 2, %s10
    // Predicated region
    $region41: #{_lambda_.8} parent=5 // pred_check
      %p270 = pneg %p269
    $region42: #{_lambda_.8} parent=5 // pred_check_branch
      %272 = sbr.rel (%p270) target = $region44
    $region43: #{_lambda_.8} parent=5 // pred_region
      %s273 = ssub.s32 %s10, 2
      // Predicated region
      $region45: #{_lambda_.8} parent=43 // pred_check
        %p274 = pneg %p133
      $region46: #{_lambda_.8} parent=43 // pred_check_branch
        %276 = sbr.rel (%p274) target = $region48
      $region47: #{_lambda_.8} parent=43 // pred_region
        %p277 = scmp.lt.s32.totalorder %s16, 1
        %s278 = scalar_select %p277, %s16, 1
        %s279 = smul.addr %s278, 8
        %s280 = scalar_lea.vmem %s4, %s279
      $region48: #{_lambda_.8} parent=43 // pred_fallthru
        _
    $region44: #{_lambda_.8} parent=5 // pred_fallthru
      _
  $region6: #{_lambda_.8} parent=0 // loop_footer
    %s14 = sadd.s32 1, %s10
  $region7: #{_lambda_.8} parent=0 // loop_footer_branch
    %9 = sbr.rel target = $region3
  $region8: #{_lambda_.8} parent=0 // loop_exit
    _

// kernel: _lambda_.9
$region0: #{_lambda_.9}
  #allocation0 [shape = 'u32[]', space=smem, size = 0x4, offset = 0x4, fixed_abs, tag = 'smem constant byte address 0x4 - core index']
  #allocation1 [shape = 'u32[72,128]{1,0:T(1,128)}', space=vmem, size = 0x9000, scoped, tag = 'internal scratch']
  %s0 = inlined_call_operand.vmem [shape: f32[2,8,32], index: 0, kind: input, shape index: {}]
  %s1 = inlined_call_operand.vmem [shape: f32[2,8,32], index: 1, kind: input, shape index: {}]
  %s2 = inlined_call_operand.vmem [shape: f32[8,8], index: 2, kind: input, shape index: {}]
  %s3 = inlined_call_operand.vmem [shape: bf16[32,96], index: 3, kind: input, shape index: {}]
  %s4 = inlined_call_operand.vmem [shape: f32[1,96], index: 4, kind: input, shape index: {}]
  %s5 = inlined_call_operand.vmem [shape: bf16[32,32], index: 5, kind: input, shape index: {}]
  %s6 = inlined_call_operand.vmem [shape: f32[1,32], index: 6, kind: input, shape index: {}, may-alias: {6,8,10,14,16,18,20,22,24}]
  %s7 = inlined_call_operand.vmem [shape: f32[1,32], index: 7, kind: input, shape index: {}, may-alias: {7,15,21,23}]
  %s8 = inlined_call_operand.vmem [shape: f32[1,32], index: 8, kind: input, shape index: {}, may-alias: {6,8,10,14,16,18,20,22,24}]
  %s9 = inlined_call_operand.vmem [shape: bf16[32,32], index: 9, kind: input, shape index: {}]
  %s10 = inlined_call_operand.vmem [shape: f32[1,32], index: 10, kind: input, shape index: {}, may-alias: {6,8,10,14,16,18,20,22,24}]
  %s11 = inlined_call_operand.vmem [shape: bf16[32,64], index: 11, kind: input, shape index: {}]
  %s12 = inlined_call_operand.vmem [shape: f32[1,64], index: 12, kind: input, shape index: {}]
  %s13 = inlined_call_operand.vmem [shape: bf16[32,32], index: 13, kind: input, shape index: {}]
  %s14 = inlined_call_operand.vmem [shape: f32[1,32], index: 14, kind: input, shape index: {}, may-alias: {6,8,10,14,16,18,20,22,24}]
  %s15 = inlined_call_operand.vmem [shape: f32[1,32], index: 15, kind: input, shape index: {}, may-alias: {7,15,21,23}]
  %s16 = inlined_call_operand.vmem [shape: f32[1,32], index: 16, kind: input, shape index: {}, may-alias: {6,8,10,14,16,18,20,22,24}]
  %s17 = inlined_call_operand.vmem [shape: bf16[32,32], index: 17, kind: input, shape index: {}]
  %s18 = inlined_call_operand.vmem [shape: f32[1,32], index: 18, kind: input, shape index: {}, may-alias: {6,8,10,14,16,18,20,22,24}]
  %s19 = inlined_call_operand.vmem [shape: bf16[32,32], index: 19, kind: input, shape index: {}]
  %s20 = inlined_call_operand.vmem [shape: f32[1,32], index: 20, kind: input, shape index: {}, may-alias: {6,8,10,14,16,18,20,22,24}]
  %s21 = inlined_call_operand.vmem [shape: f32[1,32], index: 21, kind: input, shape index: {}, may-alias: {7,15,21,23}]
  %s22 = inlined_call_operand.vmem [shape: f32[1,32], index: 22, kind: input, shape index: {}, may-alias: {6,8,10,14,16,18,20,22,24}]
  %s23 = inlined_call_operand.vmem [shape: f32[1,32], index: 23, kind: input, shape index: {}, may-alias: {7,15,21,23}]
  %s24 = inlined_call_operand.vmem [shape: f32[1,32], index: 24, kind: input, shape index: {}, may-alias: {6,8,10,14,16,18,20,22,24}]
  %s25 = inlined_call_operand.vmem [shape: bf16[32,4], index: 25, kind: input, shape index: {}]
  %s26 = inlined_call_operand.vmem [shape: f32[1,4], index: 26, kind: input, shape index: {}]
  %s27 = inlined_call_operand.vmem [shape: f32[2,8,4], index: 27, kind: output, shape index: {}]
  %s28 = sld [smem:[#allocation0]]
  $region141: #{_lambda_.9} parent=0
    _
  %s30 = ssub.s32 1, %s28
  %s31 = scalar_select 0, %s30, %s28
  loop: start=0, step=1, limit=4
  $region2: #{_lambda_.9} parent=0 // loop_pre_header
    _
  $region3: #{_lambda_.9} parent=0 // loop_header
    %s33 = sphi 0, %s37
    %p34 = scmp.ge.s32.totalorder %s33, 4
    %s43 = sphi 0, %s45
    %s46 = sphi 0, %s43
    %s47 = sphi 0, %s46
    %s63 = sphi 0, %s47
    %s69 = sphi 0, %s71
    %s72 = sphi 0, %s69
    %s73 = sphi 0, %s72
    %s89 = sphi 0, %s73
    %s93 = sphi 0, %s93
    %s95 = sphi 0, %s93
    %s96 = sphi 0, %s95
    %s110 = sphi 0, %s96
    %s114 = sphi 0, %s114
    %s116 = sphi 0, %s114
    %s117 = sphi 0, %s116
    %s131 = sphi 0, %s117
    %s135 = sphi 0, %s135
    %s137 = sphi 0, %s135
    %s138 = sphi 0, %s137
    %s152 = sphi 0, %s138
    %s156 = sphi 0, %s156
    %s158 = sphi 0, %s156
    %s159 = sphi 0, %s158
    %s173 = sphi 0, %s159
    %s177 = sphi 0, %s177
    %s179 = sphi 0, %s177
    %s180 = sphi 0, %s179
    %s194 = sphi 0, %s180
    %s198 = sphi 0, %s198
    %s200 = sphi 0, %s198
    %s201 = sphi 0, %s200
    %s215 = sphi 0, %s201
    %s219 = sphi 0, %s219
    %s221 = sphi 0, %s219
    %s222 = sphi 0, %s221
    %s236 = sphi 0, %s222
    %s240 = sphi 0, %s240
    %s242 = sphi 0, %s240
    %s243 = sphi 0, %s242
    %s257 = sphi 0, %s243
    %s261 = sphi 0, %s261
    %s263 = sphi 0, %s261
    %s264 = sphi 0, %s263
    %s278 = sphi 0, %s264
    %s282 = sphi 0, %s282
    %s284 = sphi 0, %s282
    %s285 = sphi 0, %s284
    %s299 = sphi 0, %s285
    %s303 = sphi 0, %s303
    %s305 = sphi 0, %s303
    %s306 = sphi 0, %s305
    %s320 = sphi 0, %s306
    %s324 = sphi 0, %s324
    %s326 = sphi 0, %s324
    %s327 = sphi 0, %s326
    %s341 = sphi 0, %s327
    %s345 = sphi 0, %s345
    %s347 = sphi 0, %s345
    %s348 = sphi 0, %s347
    %s362 = sphi 0, %s348
    %s366 = sphi 0, %s366
    %s368 = sphi 0, %s366
    %s369 = sphi 0, %s368
    %s383 = sphi 0, %s369
    %s387 = sphi 0, %s387
    %s389 = sphi 0, %s387
    %s390 = sphi 0, %s389
    %s404 = sphi 0, %s390
    %s408 = sphi 0, %s408
    %s410 = sphi 0, %s408
    %s411 = sphi 0, %s410
    %s425 = sphi 0, %s411
    %s429 = sphi 0, %s429
    %s431 = sphi 0, %s429
    %s432 = sphi 0, %s431
    %s446 = sphi 0, %s432
    %s450 = sphi 0, %s450
    %s452 = sphi 0, %s450
    %s453 = sphi 0, %s452
    %s467 = sphi 0, %s453
    %s471 = sphi 0, %s471
    %s473 = sphi 0, %s471
    %s474 = sphi 0, %s473
    %s488 = sphi 0, %s474
    %s492 = sphi 0, %s492
    %s494 = sphi 0, %s492
    %s495 = sphi 0, %s494
    %s509 = sphi 0, %s495
    %s513 = sphi 0, %s513
    %s515 = sphi 0, %s513
    %s516 = sphi 0, %s515
    %s530 = sphi 0, %s516
    %s534 = sphi 0, %s534
    %s536 = sphi 0, %s534
    %s537 = sphi 0, %s536
    %s551 = sphi 0, %s537
    %s555 = sphi 0, %s555
    %s557 = sphi 0, %s555
    %s558 = sphi 0, %s557
    %s572 = sphi 0, %s558
    %s576 = sphi 0, %s576
    %s578 = sphi 0, %s576
    %s579 = sphi 0, %s578
    %s593 = sphi 0, %s579
    %s597 = sphi 0, %s597
    %s599 = sphi 0, %s597
    %s600 = sphi 0, %s599
    %s614 = sphi 0, %s600
    %s620 = sphi 0, %s622
    %s623 = sphi 0, %s620
    %s624 = sphi 0, %s623
    %s640 = sphi 0, %s624
  $region4: #{_lambda_.9} parent=0 // loop_header_branch
    %36 = sbr.rel (%p34) target = $region8
  $region5: #{_lambda_.9} parent=0 // loop_body
    %s38 = ssub.s32 %s33, 1
    %s39 = ssub.s32 %s33, 2
    %s40 = sadd.s32 %s33, 1
    %s41 = ssub.s32 %s33, %s40
    %p42 = scmp.eq.s32.totalorder %s41, 0
    %s44 = sadd.s32 %s43, 1
    %s45 = scalar_select %p42, %s43, %s44
    %p48 = pneg %p42
    %p49 = scmp.eq.s32.totalorder %s33, 1
    %p50 = por %p48, %p49
    %p51 = scmp.ne.s32.totalorder %s43, %s46
    %p52 = scmp.eq.s32.totalorder %s33, 0
    %p53 = por %p51, %p52
    %p54 = scmp.ne.s32.totalorder %s43, %s46
    %p55 = scmp.eq.s32.totalorder %s38, 1
    %p56 = por %p54, %p55
    %p57 = scmp.ne.s32.totalorder %s46, %s47
    %p58 = scmp.eq.s32.totalorder %s38, 0
    %p59 = por %p57, %p58
    %p60 = scmp.ne.s32.totalorder %s46, %s47
    %p61 = scmp.eq.s32.totalorder %s39, 1
    %p62 = por %p60, %p61
    %p64 = scmp.ne.s32.totalorder %s47, %s63
    %p65 = scmp.eq.s32.totalorder %s39, 0
    %p66 = por %p64, %p65
    %s67 = ssub.s32 %s33, %s40
    %p68 = scmp.eq.s32.totalorder %s67, 0
    %s70 = sadd.s32 %s69, 1
    %s71 = scalar_select %p68, %s69, %s70
    %p74 = pneg %p68
    %p75 = scmp.eq.s32.totalorder %s33, 1
    %p76 = por %p74, %p75
    %p77 = scmp.ne.s32.totalorder %s69, %s72
    %p78 = scmp.eq.s32.totalorder %s33, 0
    %p79 = por %p77, %p78
    %p80 = scmp.ne.s32.totalorder %s69, %s72
    %p81 = scmp.eq.s32.totalorder %s38, 1
    %p82 = por %p80, %p81
    %p83 = scmp.ne.s32.totalorder %s72, %s73
    %p84 = scmp.eq.s32.totalorder %s38, 0
    %p85 = por %p83, %p84
    %p86 = scmp.ne.s32.totalorder %s72, %s73
    %p87 = scmp.eq.s32.totalorder %s39, 1
    %p88 = por %p86, %p87
    %p90 = scmp.ne.s32.totalorder %s73, %s89
    %p91 = scmp.eq.s32.totalorder %s39, 0
    %p92 = por %p90, %p91
    %s94 = sadd.s32 %s93, 1
    %p97 = scmp.eq.s32.totalorder %s33, 1
    %p98 = scmp.ne.s32.totalorder %s93, %s95
    %p99 = scmp.eq.s32.totalorder %s33, 0
    %p100 = por %p98, %p99
    %p101 = scmp.ne.s32.totalorder %s93, %s95
    %p102 = scmp.eq.s32.totalorder %s38, 1
    %p103 = por %p101, %p102
    %p104 = scmp.ne.s32.totalorder %s95, %s96
    %p105 = scmp.eq.s32.totalorder %s38, 0
    %p106 = por %p104, %p105
    %p107 = scmp.ne.s32.totalorder %s95, %s96
    %p108 = scmp.eq.s32.totalorder %s39, 1
    %p109 = por %p107, %p108
    %p111 = scmp.ne.s32.totalorder %s96, %s110
    %p112 = scmp.eq.s32.totalorder %s39, 0
    %p113 = por %p111, %p112
    %s115 = sadd.s32 %s114, 1
    %p118 = scmp.eq.s32.totalorder %s33, 1
    %p119 = scmp.ne.s32.totalorder %s114, %s116
    %p120 = scmp.eq.s32.totalorder %s33, 0
    %p121 = por %p119, %p120
    %p122 = scmp.ne.s32.totalorder %s114, %s116
    %p123 = scmp.eq.s32.totalorder %s38, 1
    %p124 = por %p122, %p123
    %p125 = scmp.ne.s32.totalorder %s116, %s117
    %p126 = scmp.eq.s32.totalorder %s38, 0
    %p127 = por %p125, %p126
    %p128 = scmp.ne.s32.totalorder %s116, %s117
    %p129 = scmp.eq.s32.totalorder %s39, 1
    %p130 = por %p128, %p129
    %p132 = scmp.ne.s32.totalorder %s117, %s131
    %p133 = scmp.eq.s32.totalorder %s39, 0
    %p134 = por %p132, %p133
    %s136 = sadd.s32 %s135, 1
    %p139 = scmp.eq.s32.totalorder %s33, 1
    %p140 = scmp.ne.s32.totalorder %s135, %s137
    %p141 = scmp.eq.s32.totalorder %s33, 0
    %p142 = por %p140, %p141
    %p143 = scmp.ne.s32.totalorder %s135, %s137
    %p144 = scmp.eq.s32.totalorder %s38, 1
    %p145 = por %p143, %p144
    %p146 = scmp.ne.s32.totalorder %s137, %s138
    %p147 = scmp.eq.s32.totalorder %s38, 0
    %p148 = por %p146, %p147
    %p149 = scmp.ne.s32.totalorder %s137, %s138
    %p150 = scmp.eq.s32.totalorder %s39, 1
    %p151 = por %p149, %p150
    %p153 = scmp.ne.s32.totalorder %s138, %s152
    %p154 = scmp.eq.s32.totalorder %s39, 0
    %p155 = por %p153, %p154
    %s157 = sadd.s32 %s156, 1
    %p160 = scmp.eq.s32.totalorder %s33, 1
    %p161 = scmp.ne.s32.totalorder %s156, %s158
    %p162 = scmp.eq.s32.totalorder %s33, 0
    %p163 = por %p161, %p162
    %p164 = scmp.ne.s32.totalorder %s156, %s158
    %p165 = scmp.eq.s32.totalorder %s38, 1
    %p166 = por %p164, %p165
    %p167 = scmp.ne.s32.totalorder %s158, %s159
    %p168 = scmp.eq.s32.totalorder %s38, 0
    %p169 = por %p167, %p168
    %p170 = scmp.ne.s32.totalorder %s158, %s159
    %p171 = scmp.eq.s32.totalorder %s39, 1
    %p172 = por %p170, %p171
    %p174 = scmp.ne.s32.totalorder %s159, %s173
    %p175 = scmp.eq.s32.totalorder %s39, 0
    %p176 = por %p174, %p175
    %s178 = sadd.s32 %s177, 1
    %p181 = scmp.eq.s32.totalorder %s33, 1
    %p182 = scmp.ne.s32.totalorder %s177, %s179
    %p183 = scmp.eq.s32.totalorder %s33, 0
    %p184 = por %p182, %p183
    %p185 = scmp.ne.s32.totalorder %s177, %s179
    %p186 = scmp.eq.s32.totalorder %s38, 1
    %p187 = por %p185, %p186
    %p188 = scmp.ne.s32.totalorder %s179, %s180
    %p189 = scmp.eq.s32.totalorder %s38, 0
    %p190 = por %p188, %p189
    %p191 = scmp.ne.s32.totalorder %s179, %s180
    %p192 = scmp.eq.s32.totalorder %s39, 1
    %p193 = por %p191, %p192
    %p195 = scmp.ne.s32.totalorder %s180, %s194
    %p196 = scmp.eq.s32.totalorder %s39, 0
    %p197 = por %p195, %p196
    %s199 = sadd.s32 %s198, 1
    %p202 = scmp.eq.s32.totalorder %s33, 1
    %p203 = scmp.ne.s32.totalorder %s198, %s200
    %p204 = scmp.eq.s32.totalorder %s33, 0
    %p205 = por %p203, %p204
    %p206 = scmp.ne.s32.totalorder %s198, %s200
    %p207 = scmp.eq.s32.totalorder %s38, 1
    %p208 = por %p206, %p207
    %p209 = scmp.ne.s32.totalorder %s200, %s201
    %p210 = scmp.eq.s32.totalorder %s38, 0
    %p211 = por %p209, %p210
    %p212 = scmp.ne.s32.totalorder %s200, %s201
    %p213 = scmp.eq.s32.totalorder %s39, 1
    %p214 = por %p212, %p213
    %p216 = scmp.ne.s32.totalorder %s201, %s215
    %p217 = scmp.eq.s32.totalorder %s39, 0
    %p218 = por %p216, %p217
    %s220 = sadd.s32 %s219, 1
    %p223 = scmp.eq.s32.totalorder %s33, 1
    %p224 = scmp.ne.s32.totalorder %s219, %s221
    %p225 = scmp.eq.s32.totalorder %s33, 0
    %p226 = por %p224, %p225
    %p227 = scmp.ne.s32.totalorder %s219, %s221
    %p228 = scmp.eq.s32.totalorder %s38, 1
    %p229 = por %p227, %p228
    %p230 = scmp.ne.s32.totalorder %s221, %s222
    %p231 = scmp.eq.s32.totalorder %s38, 0
    %p232 = por %p230, %p231
    %p233 = scmp.ne.s32.totalorder %s221, %s222
    %p234 = scmp.eq.s32.totalorder %s39, 1
    %p235 = por %p233, %p234
    %p237 = scmp.ne.s32.totalorder %s222, %s236
    %p238 = scmp.eq.s32.totalorder %s39, 0
    %p239 = por %p237, %p238
    %s241 = sadd.s32 %s240, 1
    %p244 = scmp.eq.s32.totalorder %s33, 1
    %p245 = scmp.ne.s32.totalorder %s240, %s242
    %p246 = scmp.eq.s32.totalorder %s33, 0
    %p247 = por %p245, %p246
    %p248 = scmp.ne.s32.totalorder %s240, %s242
    %p249 = scmp.eq.s32.totalorder %s38, 1
    %p250 = por %p248, %p249
    %p251 = scmp.ne.s32.totalorder %s242, %s243
    %p252 = scmp.eq.s32.totalorder %s38, 0
    %p253 = por %p251, %p252
    %p254 = scmp.ne.s32.totalorder %s242, %s243
    %p255 = scmp.eq.s32.totalorder %s39, 1
    %p256 = por %p254, %p255
    %p258 = scmp.ne.s32.totalorder %s243, %s257
    %p259 = scmp.eq.s32.totalorder %s39, 0
    %p260 = por %p258, %p259
    %s262 = sadd.s32 %s261, 1
    %p265 = scmp.eq.s32.totalorder %s33, 1
    %p266 = scmp.ne.s32.totalorder %s261, %s263
    %p267 = scmp.eq.s32.totalorder %s33, 0
    %p268 = por %p266, %p267
    %p269 = scmp.ne.s32.totalorder %s261, %s263
    %p270 = scmp.eq.s32.totalorder %s38, 1
    %p271 = por %p269, %p270
    %p272 = scmp.ne.s32.totalorder %s263, %s264
    %p273 = scmp.eq.s32.totalorder %s38, 0
    %p274 = por %p272, %p273
    %p275 = scmp.ne.s32.totalorder %s263, %s264
    %p276 = scmp.eq.s32.totalorder %s39, 1
    %p277 = por %p275, %p276
    %p279 = scmp.ne.s32.totalorder %s264, %s278
    %p280 = scmp.eq.s32.totalorder %s39, 0
    %p281 = por %p279, %p280
    %s283 = sadd.s32 %s282, 1
    %p286 = scmp.eq.s32.totalorder %s33, 1
    %p287 = scmp.ne.s32.totalorder %s282, %s284
    %p288 = scmp.eq.s32.totalorder %s33, 0
    %p289 = por %p287, %p288
    %p290 = scmp.ne.s32.totalorder %s282, %s284
    %p291 = scmp.eq.s32.totalorder %s38, 1
    %p292 = por %p290, %p291
    %p293 = scmp.ne.s32.totalorder %s284, %s285
    %p294 = scmp.eq.s32.totalorder %s38, 0
    %p295 = por %p293, %p294
    %p296 = scmp.ne.s32.totalorder %s284, %s285
    %p297 = scmp.eq.s32.totalorder %s39, 1
    %p298 = por %p296, %p297
    %p300 = scmp.ne.s32.totalorder %s285, %s299
    %p301 = scmp.eq.s32.totalorder %s39, 0
    %p302 = por %p300, %p301
    %s304 = sadd.s32 %s303, 1
    %p307 = scmp.eq.s32.totalorder %s33, 1
    %p308 = scmp.ne.s32.totalorder %s303, %s305
    %p309 = scmp.eq.s32.totalorder %s33, 0
    %p310 = por %p308, %p309
    %p311 = scmp.ne.s32.totalorder %s303, %s305
    %p312 = scmp.eq.s32.totalorder %s38, 1
    %p313 = por %p311, %p312
    %p314 = scmp.ne.s32.totalorder %s305, %s306
    %p315 = scmp.eq.s32.totalorder %s38, 0
    %p316 = por %p314, %p315
    %p317 = scmp.ne.s32.totalorder %s305, %s306
    %p318 = scmp.eq.s32.totalorder %s39, 1
    %p319 = por %p317, %p318
    %p321 = scmp.ne.s32.totalorder %s306, %s320
    %p322 = scmp.eq.s32.totalorder %s39, 0
    %p323 = por %p321, %p322
    %s325 = sadd.s32 %s324, 1
    %p328 = scmp.eq.s32.totalorder %s33, 1
    %p329 = scmp.ne.s32.totalorder %s324, %s326
    %p330 = scmp.eq.s32.totalorder %s33, 0
    %p331 = por %p329, %p330
    %p332 = scmp.ne.s32.totalorder %s324, %s326
    %p333 = scmp.eq.s32.totalorder %s38, 1
    %p334 = por %p332, %p333
    %p335 = scmp.ne.s32.totalorder %s326, %s327
    %p336 = scmp.eq.s32.totalorder %s38, 0
    %p337 = por %p335, %p336
    %p338 = scmp.ne.s32.totalorder %s326, %s327
    %p339 = scmp.eq.s32.totalorder %s39, 1
    %p340 = por %p338, %p339
    %p342 = scmp.ne.s32.totalorder %s327, %s341
    %p343 = scmp.eq.s32.totalorder %s39, 0
    %p344 = por %p342, %p343
    %s346 = sadd.s32 %s345, 1
    %p349 = scmp.eq.s32.totalorder %s33, 1
    %p350 = scmp.ne.s32.totalorder %s345, %s347
    %p351 = scmp.eq.s32.totalorder %s33, 0
    %p352 = por %p350, %p351
    %p353 = scmp.ne.s32.totalorder %s345, %s347
    %p354 = scmp.eq.s32.totalorder %s38, 1
    %p355 = por %p353, %p354
    %p356 = scmp.ne.s32.totalorder %s347, %s348
    %p357 = scmp.eq.s32.totalorder %s38, 0
    %p358 = por %p356, %p357
    %p359 = scmp.ne.s32.totalorder %s347, %s348
    %p360 = scmp.eq.s32.totalorder %s39, 1
    %p361 = por %p359, %p360
    %p363 = scmp.ne.s32.totalorder %s348, %s362
    %p364 = scmp.eq.s32.totalorder %s39, 0
    %p365 = por %p363, %p364
    %s367 = sadd.s32 %s366, 1
    %p370 = scmp.eq.s32.totalorder %s33, 1
    %p371 = scmp.ne.s32.totalorder %s366, %s368
    %p372 = scmp.eq.s32.totalorder %s33, 0
    %p373 = por %p371, %p372
    %p374 = scmp.ne.s32.totalorder %s366, %s368
    %p375 = scmp.eq.s32.totalorder %s38, 1
    %p376 = por %p374, %p375
    %p377 = scmp.ne.s32.totalorder %s368, %s369
    %p378 = scmp.eq.s32.totalorder %s38, 0
    %p379 = por %p377, %p378
    %p380 = scmp.ne.s32.totalorder %s368, %s369
    %p381 = scmp.eq.s32.totalorder %s39, 1
    %p382 = por %p380, %p381
    %p384 = scmp.ne.s32.totalorder %s369, %s383
    %p385 = scmp.eq.s32.totalorder %s39, 0
    %p386 = por %p384, %p385
    %s388 = sadd.s32 %s387, 1
    %p391 = scmp.eq.s32.totalorder %s33, 1
    %p392 = scmp.ne.s32.totalorder %s387, %s389
    %p393 = scmp.eq.s32.totalorder %s33, 0
    %p394 = por %p392, %p393
    %p395 = scmp.ne.s32.totalorder %s387, %s389
    %p396 = scmp.eq.s32.totalorder %s38, 1
    %p397 = por %p395, %p396
    %p398 = scmp.ne.s32.totalorder %s389, %s390
    %p399 = scmp.eq.s32.totalorder %s38, 0
    %p400 = por %p398, %p399
    %p401 = scmp.ne.s32.totalorder %s389, %s390
    %p402 = scmp.eq.s32.totalorder %s39, 1
    %p403 = por %p401, %p402
    %p405 = scmp.ne.s32.totalorder %s390, %s404
    %p406 = scmp.eq.s32.totalorder %s39, 0
    %p407 = por %p405, %p406
    %s409 = sadd.s32 %s408, 1
    %p412 = scmp.eq.s32.totalorder %s33, 1
    %p413 = scmp.ne.s32.totalorder %s408, %s410
    %p414 = scmp.eq.s32.totalorder %s33, 0
    %p415 = por %p413, %p414
    %p416 = scmp.ne.s32.totalorder %s408, %s410
    %p417 = scmp.eq.s32.totalorder %s38, 1
    %p418 = por %p416, %p417
    %p419 = scmp.ne.s32.totalorder %s410, %s411
    %p420 = scmp.eq.s32.totalorder %s38, 0
    %p421 = por %p419, %p420
    %p422 = scmp.ne.s32.totalorder %s410, %s411
    %p423 = scmp.eq.s32.totalorder %s39, 1
    %p424 = por %p422, %p423
    %p426 = scmp.ne.s32.totalorder %s411, %s425
    %p427 = scmp.eq.s32.totalorder %s39, 0
    %p428 = por %p426, %p427
    %s430 = sadd.s32 %s429, 1
    %p433 = scmp.eq.s32.totalorder %s33, 1
    %p434 = scmp.ne.s32.totalorder %s429, %s431
    %p435 = scmp.eq.s32.totalorder %s33, 0
    %p436 = por %p434, %p435
    %p437 = scmp.ne.s32.totalorder %s429, %s431
    %p438 = scmp.eq.s32.totalorder %s38, 1
    %p439 = por %p437, %p438
    %p440 = scmp.ne.s32.totalorder %s431, %s432
    %p441 = scmp.eq.s32.totalorder %s38, 0
    %p442 = por %p440, %p441
    %p443 = scmp.ne.s32.totalorder %s431, %s432
    %p444 = scmp.eq.s32.totalorder %s39, 1
    %p445 = por %p443, %p444
    %p447 = scmp.ne.s32.totalorder %s432, %s446
    %p448 = scmp.eq.s32.totalorder %s39, 0
    %p449 = por %p447, %p448
    %s451 = sadd.s32 %s450, 1
    %p454 = scmp.eq.s32.totalorder %s33, 1
    %p455 = scmp.ne.s32.totalorder %s450, %s452
    %p456 = scmp.eq.s32.totalorder %s33, 0
    %p457 = por %p455, %p456
    %p458 = scmp.ne.s32.totalorder %s450, %s452
    %p459 = scmp.eq.s32.totalorder %s38, 1
    %p460 = por %p458, %p459
    %p461 = scmp.ne.s32.totalorder %s452, %s453
    %p462 = scmp.eq.s32.totalorder %s38, 0
    %p463 = por %p461, %p462
    %p464 = scmp.ne.s32.totalorder %s452, %s453
    %p465 = scmp.eq.s32.totalorder %s39, 1
    %p466 = por %p464, %p465
    %p468 = scmp.ne.s32.totalorder %s453, %s467
    %p469 = scmp.eq.s32.totalorder %s39, 0
    %p470 = por %p468, %p469
    %s472 = sadd.s32 %s471, 1
    %p475 = scmp.eq.s32.totalorder %s33, 1
    %p476 = scmp.ne.s32.totalorder %s471, %s473
    %p477 = scmp.eq.s32.totalorder %s33, 0
    %p478 = por %p476, %p477
    %p479 = scmp.ne.s32.totalorder %s471, %s473
    %p480 = scmp.eq.s32.totalorder %s38, 1
    %p481 = por %p479, %p480
    %p482 = scmp.ne.s32.totalorder %s473, %s474
    %p483 = scmp.eq.s32.totalorder %s38, 0
    %p484 = por %p482, %p483
    %p485 = scmp.ne.s32.totalorder %s473, %s474
    %p486 = scmp.eq.s32.totalorder %s39, 1
    %p487 = por %p485, %p486
    %p489 = scmp.ne.s32.totalorder %s474, %s488
    %p490 = scmp.eq.s32.totalorder %s39, 0
    %p491 = por %p489, %p490
    %s493 = sadd.s32 %s492, 1
    %p496 = scmp.eq.s32.totalorder %s33, 1
    %p497 = scmp.ne.s32.totalorder %s492, %s494
    %p498 = scmp.eq.s32.totalorder %s33, 0
    %p499 = por %p497, %p498
    %p500 = scmp.ne.s32.totalorder %s492, %s494
    %p501 = scmp.eq.s32.totalorder %s38, 1
    %p502 = por %p500, %p501
    %p503 = scmp.ne.s32.totalorder %s494, %s495
    %p504 = scmp.eq.s32.totalorder %s38, 0
    %p505 = por %p503, %p504
    %p506 = scmp.ne.s32.totalorder %s494, %s495
    %p507 = scmp.eq.s32.totalorder %s39, 1
    %p508 = por %p506, %p507
    %p510 = scmp.ne.s32.totalorder %s495, %s509
    %p511 = scmp.eq.s32.totalorder %s39, 0
    %p512 = por %p510, %p511
    %s514 = sadd.s32 %s513, 1
    %p517 = scmp.eq.s32.totalorder %s33, 1
    %p518 = scmp.ne.s32.totalorder %s513, %s515
    %p519 = scmp.eq.s32.totalorder %s33, 0
    %p520 = por %p518, %p519
    %p521 = scmp.ne.s32.totalorder %s513, %s515
    %p522 = scmp.eq.s32.totalorder %s38, 1
    %p523 = por %p521, %p522
    %p524 = scmp.ne.s32.totalorder %s515, %s516
    %p525 = scmp.eq.s32.totalorder %s38, 0
    %p526 = por %p524, %p525
    %p527 = scmp.ne.s32.totalorder %s515, %s516
    %p528 = scmp.eq.s32.totalorder %s39, 1
    %p529 = por %p527, %p528
    %p531 = scmp.ne.s32.totalorder %s516, %s530
    %p532 = scmp.eq.s32.totalorder %s39, 0
    %p533 = por %p531, %p532
    %s535 = sadd.s32 %s534, 1
    %p538 = scmp.eq.s32.totalorder %s33, 1
    %p539 = scmp.ne.s32.totalorder %s534, %s536
    %p540 = scmp.eq.s32.totalorder %s33, 0
    %p541 = por %p539, %p540
    %p542 = scmp.ne.s32.totalorder %s534, %s536
    %p543 = scmp.eq.s32.totalorder %s38, 1
    %p544 = por %p542, %p543
    %p545 = scmp.ne.s32.totalorder %s536, %s537
    %p546 = scmp.eq.s32.totalorder %s38, 0
    %p547 = por %p545, %p546
    %p548 = scmp.ne.s32.totalorder %s536, %s537
    %p549 = scmp.eq.s32.totalorder %s39, 1
    %p550 = por %p548, %p549
    %p552 = scmp.ne.s32.totalorder %s537, %s551
    %p553 = scmp.eq.s32.totalorder %s39, 0
    %p554 = por %p552, %p553
    %s556 = sadd.s32 %s555, 1
    %p559 = scmp.eq.s32.totalorder %s33, 1
    %p560 = scmp.ne.s32.totalorder %s555, %s557
    %p561 = scmp.eq.s32.totalorder %s33, 0
    %p562 = por %p560, %p561
    %p563 = scmp.ne.s32.totalorder %s555, %s557
    %p564 = scmp.eq.s32.totalorder %s38, 1
    %p565 = por %p563, %p564
    %p566 = scmp.ne.s32.totalorder %s557, %s558
    %p567 = scmp.eq.s32.totalorder %s38, 0
    %p568 = por %p566, %p567
    %p569 = scmp.ne.s32.totalorder %s557, %s558
    %p570 = scmp.eq.s32.totalorder %s39, 1
    %p571 = por %p569, %p570
    %p573 = scmp.ne.s32.totalorder %s558, %s572
    %p574 = scmp.eq.s32.totalorder %s39, 0
    %p575 = por %p573, %p574
    %s577 = sadd.s32 %s576, 1
    %p580 = scmp.eq.s32.totalorder %s33, 1
    %p581 = scmp.ne.s32.totalorder %s576, %s578
    %p582 = scmp.eq.s32.totalorder %s33, 0
    %p583 = por %p581, %p582
    %p584 = scmp.ne.s32.totalorder %s576, %s578
    %p585 = scmp.eq.s32.totalorder %s38, 1
    %p586 = por %p584, %p585
    %p587 = scmp.ne.s32.totalorder %s578, %s579
    %p588 = scmp.eq.s32.totalorder %s38, 0
    %p589 = por %p587, %p588
    %p590 = scmp.ne.s32.totalorder %s578, %s579
    %p591 = scmp.eq.s32.totalorder %s39, 1
    %p592 = por %p590, %p591
    %p594 = scmp.ne.s32.totalorder %s579, %s593
    %p595 = scmp.eq.s32.totalorder %s39, 0
    %p596 = por %p594, %p595
    %s598 = sadd.s32 %s597, 1
    %p601 = scmp.eq.s32.totalorder %s33, 1
    %p602 = scmp.ne.s32.totalorder %s597, %s599
    %p603 = scmp.eq.s32.totalorder %s33, 0
    %p604 = por %p602, %p603
    %p605 = scmp.ne.s32.totalorder %s597, %s599
    %p606 = scmp.eq.s32.totalorder %s38, 1
    %p607 = por %p605, %p606
    %p608 = scmp.ne.s32.totalorder %s599, %s600
    %p609 = scmp.eq.s32.totalorder %s38, 0
    %p610 = por %p608, %p609
    %p611 = scmp.ne.s32.totalorder %s599, %s600
    %p612 = scmp.eq.s32.totalorder %s39, 1
    %p613 = por %p611, %p612
    %p615 = scmp.ne.s32.totalorder %s600, %s614
    %p616 = scmp.eq.s32.totalorder %s39, 0
    %p617 = por %p615, %p616
    %s618 = ssub.s32 %s33, %s40
    %p619 = scmp.eq.s32.totalorder %s618, 0
    %s621 = sadd.s32 %s620, 1
    %s622 = scalar_select %p619, %s620, %s621
    %p625 = pneg %p619
    %p626 = scmp.eq.s32.totalorder %s33, 1
    %p627 = por %p625, %p626
    %p628 = scmp.ne.s32.totalorder %s620, %s623
    %p629 = scmp.eq.s32.totalorder %s33, 0
    %p630 = por %p628, %p629
    %p631 = scmp.ne.s32.totalorder %s620, %s623
    %p632 = scmp.eq.s32.totalorder %s38, 1
    %p633 = por %p631, %p632
    %p634 = scmp.ne.s32.totalorder %s623, %s624
    %p635 = scmp.eq.s32.totalorder %s38, 0
    %p636 = por %p634, %p635
    %p637 = scmp.ne.s32.totalorder %s623, %s624
    %p638 = scmp.eq.s32.totalorder %s39, 1
    %p639 = por %p637, %p638
    %p641 = scmp.ne.s32.totalorder %s624, %s640
    %p642 = scmp.eq.s32.totalorder %s39, 0
    %p643 = por %p641, %p642
    %p644 = scmp.le.s32.totalorder 1, %s33
    %p645 = scmp.lt.s32.totalorder %s33, 3
    %p646 = pnand %p644, %p645
    %p647 = pneg %p646
    // Predicated region
    $region9: #{_lambda_.9} parent=5 // pred_check
      _
    $region10: #{_lambda_.9} parent=5 // pred_check_branch
      %649 = sbr.rel (%p646) target = $region12
    $region11: #{_lambda_.9} parent=5 // pred_region
      %s650 = ssub.s32 %s33, 1
      // Predicated region
      $region13: #{_lambda_.9} parent=11 // pred_check
        %p651 = pneg %p106
      $region14: #{_lambda_.9} parent=11 // pred_check_branch
        %653 = sbr.rel (%p651) target = $region16
      $region15: #{_lambda_.9} parent=11 // pred_region
        _
      $region16: #{_lambda_.9} parent=11 // pred_fallthru
        _
      // Predicated region
      $region17: #{_lambda_.9} parent=11 // pred_check
        %p654 = pneg %p127
      $region18: #{_lambda_.9} parent=11 // pred_check_branch
        %656 = sbr.rel (%p654) target = $region20
      $region19: #{_lambda_.9} parent=11 // pred_region
        _
      $region20: #{_lambda_.9} parent=11 // pred_fallthru
        _
      // Predicated region
      $region21: #{_lambda_.9} parent=11 // pred_check
        %p657 = pneg %p148
      $region22: #{_lambda_.9} parent=11 // pred_check_branch
        %659 = sbr.rel (%p657) target = $region24
      $region23: #{_lambda_.9} parent=11 // pred_region
        _
      $region24: #{_lambda_.9} parent=11 // pred_fallthru
        _
      // Predicated region
      $region25: #{_lambda_.9} parent=11 // pred_check
        %p660 = pneg %p169
      $region26: #{_lambda_.9} parent=11 // pred_check_branch
        %662 = sbr.rel (%p660) target = $region28
      $region27: #{_lambda_.9} parent=11 // pred_region
        _
      $region28: #{_lambda_.9} parent=11 // pred_fallthru
        _
      // Predicated region
      $region29: #{_lambda_.9} parent=11 // pred_check
        %p663 = pneg %p190
      $region30: #{_lambda_.9} parent=11 // pred_check_branch
        %665 = sbr.rel (%p663) target = $region32
      $region31: #{_lambda_.9} parent=11 // pred_region
        _
      $region32: #{_lambda_.9} parent=11 // pred_fallthru
        _
      // Predicated region
      $region33: #{_lambda_.9} parent=11 // pred_check
        %p666 = pneg %p211
      $region34: #{_lambda_.9} parent=11 // pred_check_branch
        %668 = sbr.rel (%p666) target = $region36
      $region35: #{_lambda_.9} parent=11 // pred_region
        _
      $region36: #{_lambda_.9} parent=11 // pred_fallthru
        _
      // Predicated region
      $region37: #{_lambda_.9} parent=11 // pred_check
        %p669 = pneg %p232
      $region38: #{_lambda_.9} parent=11 // pred_check_branch
        %671 = sbr.rel (%p669) target = $region40
      $region39: #{_lambda_.9} parent=11 // pred_region
        _
      $region40: #{_lambda_.9} parent=11 // pred_fallthru
        _
      // Predicated region
      $region41: #{_lambda_.9} parent=11 // pred_check
        %p672 = pneg %p253
      $region42: #{_lambda_.9} parent=11 // pred_check_branch
        %674 = sbr.rel (%p672) target = $region44
      $region43: #{_lambda_.9} parent=11 // pred_region
        _
      $region44: #{_lambda_.9} parent=11 // pred_fallthru
        _
      // Predicated region
      $region45: #{_lambda_.9} parent=11 // pred_check
        %p675 = pneg %p274
      $region46: #{_lambda_.9} parent=11 // pred_check_branch
        %677 = sbr.rel (%p675) target = $region48
      $region47: #{_lambda_.9} parent=11 // pred_region
        _
      $region48: #{_lambda_.9} parent=11 // pred_fallthru
        _
      // Predicated region
      $region49: #{_lambda_.9} parent=11 // pred_check
        %p678 = pneg %p295
      $region50: #{_lambda_.9} parent=11 // pred_check_branch
        %680 = sbr.rel (%p678) target = $region52
      $region51: #{_lambda_.9} parent=11 // pred_region
        _
      $region52: #{_lambda_.9} parent=11 // pred_fallthru
        _
      // Predicated region
      $region53: #{_lambda_.9} parent=11 // pred_check
        %p681 = pneg %p316
      $region54: #{_lambda_.9} parent=11 // pred_check_branch
        %683 = sbr.rel (%p681) target = $region56
      $region55: #{_lambda_.9} parent=11 // pred_region
        _
      $region56: #{_lambda_.9} parent=11 // pred_fallthru
        _
      // Predicated region
      $region57: #{_lambda_.9} parent=11 // pred_check
        %p684 = pneg %p337
      $region58: #{_lambda_.9} parent=11 // pred_check_branch
        %686 = sbr.rel (%p684) target = $region60
      $region59: #{_lambda_.9} parent=11 // pred_region
        _
      $region60: #{_lambda_.9} parent=11 // pred_fallthru
        _
      // Predicated region
      $region61: #{_lambda_.9} parent=11 // pred_check
        %p687 = pneg %p358
      $region62: #{_lambda_.9} parent=11 // pred_check_branch
        %689 = sbr.rel (%p687) target = $region64
      $region63: #{_lambda_.9} parent=11 // pred_region
        _
      $region64: #{_lambda_.9} parent=11 // pred_fallthru
        _
      // Predicated region
      $region65: #{_lambda_.9} parent=11 // pred_check
        %p690 = pneg %p379
      $region66: #{_lambda_.9} parent=11 // pred_check_branch
        %692 = sbr.rel (%p690) target = $region68
      $region67: #{_lambda_.9} parent=11 // pred_region
        _
      $region68: #{_lambda_.9} parent=11 // pred_fallthru
        _
      // Predicated region
      $region69: #{_lambda_.9} parent=11 // pred_check
        %p693 = pneg %p400
      $region70: #{_lambda_.9} parent=11 // pred_check_branch
        %695 = sbr.rel (%p693) target = $region72
      $region71: #{_lambda_.9} parent=11 // pred_region
        _
      $region72: #{_lambda_.9} parent=11 // pred_fallthru
        _
      // Predicated region
      $region73: #{_lambda_.9} parent=11 // pred_check
        %p696 = pneg %p421
      $region74: #{_lambda_.9} parent=11 // pred_check_branch
        %698 = sbr.rel (%p696) target = $region76
      $region75: #{_lambda_.9} parent=11 // pred_region
        _
      $region76: #{_lambda_.9} parent=11 // pred_fallthru
        _
      // Predicated region
      $region77: #{_lambda_.9} parent=11 // pred_check
        %p699 = pneg %p442
      $region78: #{_lambda_.9} parent=11 // pred_check_branch
        %701 = sbr.rel (%p699) target = $region80
      $region79: #{_lambda_.9} parent=11 // pred_region
        _
      $region80: #{_lambda_.9} parent=11 // pred_fallthru
        _
      // Predicated region
      $region81: #{_lambda_.9} parent=11 // pred_check
        %p702 = pneg %p463
      $region82: #{_lambda_.9} parent=11 // pred_check_branch
        %704 = sbr.rel (%p702) target = $region84
      $region83: #{_lambda_.9} parent=11 // pred_region
        _
      $region84: #{_lambda_.9} parent=11 // pred_fallthru
        _
      // Predicated region
      $region85: #{_lambda_.9} parent=11 // pred_check
        %p705 = pneg %p484
      $region86: #{_lambda_.9} parent=11 // pred_check_branch
        %707 = sbr.rel (%p705) target = $region88
      $region87: #{_lambda_.9} parent=11 // pred_region
        _
      $region88: #{_lambda_.9} parent=11 // pred_fallthru
        _
      // Predicated region
      $region89: #{_lambda_.9} parent=11 // pred_check
        %p708 = pneg %p505
      $region90: #{_lambda_.9} parent=11 // pred_check_branch
        %710 = sbr.rel (%p708) target = $region92
      $region91: #{_lambda_.9} parent=11 // pred_region
        _
      $region92: #{_lambda_.9} parent=11 // pred_fallthru
        _
      // Predicated region
      $region93: #{_lambda_.9} parent=11 // pred_check
        %p711 = pneg %p526
      $region94: #{_lambda_.9} parent=11 // pred_check_branch
        %713 = sbr.rel (%p711) target = $region96
      $region95: #{_lambda_.9} parent=11 // pred_region
        _
      $region96: #{_lambda_.9} parent=11 // pred_fallthru
        _
      // Predicated region
      $region97: #{_lambda_.9} parent=11 // pred_check
        %p714 = pneg %p547
      $region98: #{_lambda_.9} parent=11 // pred_check_branch
        %716 = sbr.rel (%p714) target = $region100
      $region99: #{_lambda_.9} parent=11 // pred_region
        _
      $region100: #{_lambda_.9} parent=11 // pred_fallthru
        _
      // Predicated region
      $region101: #{_lambda_.9} parent=11 // pred_check
        %p717 = pneg %p568
      $region102: #{_lambda_.9} parent=11 // pred_check_branch
        %719 = sbr.rel (%p717) target = $region104
      $region103: #{_lambda_.9} parent=11 // pred_region
        _
      $region104: #{_lambda_.9} parent=11 // pred_fallthru
        _
      // Predicated region
      $region105: #{_lambda_.9} parent=11 // pred_check
        %p720 = pneg %p589
      $region106: #{_lambda_.9} parent=11 // pred_check_branch
        %722 = sbr.rel (%p720) target = $region108
      $region107: #{_lambda_.9} parent=11 // pred_region
        _
      $region108: #{_lambda_.9} parent=11 // pred_fallthru
        _
      // Predicated region
      $region109: #{_lambda_.9} parent=11 // pred_check
        %p723 = pneg %p610
      $region110: #{_lambda_.9} parent=11 // pred_check_branch
        %725 = sbr.rel (%p723) target = $region112
      $region111: #{_lambda_.9} parent=11 // pred_region
        _
      $region112: #{_lambda_.9} parent=11 // pred_fallthru
        _
    $region12: #{_lambda_.9} parent=5 // pred_fallthru
      _
    %p726 = scmp.lt.s32.totalorder %s33, 2
    // Predicated region
    $region113: #{_lambda_.9} parent=5 // pred_check
      %p727 = pneg %p726
    $region114: #{_lambda_.9} parent=5 // pred_check_branch
      %729 = sbr.rel (%p727) target = $region116
    $region115: #{_lambda_.9} parent=5 // pred_region
      // Predicated region
      $region117: #{_lambda_.9} parent=115 // pred_check
        %p730 = pneg %p53
      $region118: #{_lambda_.9} parent=115 // pred_check_branch
        %732 = sbr.rel (%p730) target = $region120
      $region119: #{_lambda_.9} parent=115 // pred_region
        %p733 = scmp.lt.s32.totalorder %s33, 1
        %s734 = scalar_select %p733, %s33, 1
        %s735 = smul.addr %s734, 8
        %s736 = scalar_lea.vmem %s0, %s735
      $region120: #{_lambda_.9} parent=115 // pred_fallthru
        _
      // Predicated region
      $region121: #{_lambda_.9} parent=115 // pred_check
        %p737 = pneg %p79
      $region122: #{_lambda_.9} parent=115 // pred_check_branch
        %739 = sbr.rel (%p737) target = $region124
      $region123: #{_lambda_.9} parent=115 // pred_region
        %p740 = scmp.lt.s32.totalorder %s33, 1
        %s741 = scalar_select %p740, %s33, 1
        %s742 = smul.addr %s741, 8
        %s743 = scalar_lea.vmem %s1, %s742
      $region124: #{_lambda_.9} parent=115 // pred_fallthru
        _
    $region116: #{_lambda_.9} parent=5 // pred_fallthru
      _
    %p744 = scmp.le.s32.totalorder 1, %s33
    %p745 = scmp.lt.s32.totalorder %s33, 3
    %p746 = pnand %p744, %p745
    %p747 = pneg %p746
    // Predicated region
    $region125: #{_lambda_.9} parent=5 // pred_check
      _
    $region126: #{_lambda_.9} parent=5 // pred_check_branch
      %749 = sbr.rel (%p746) target = $region128
    $region127: #{_lambda_.9} parent=5 // pred_region
      %s750 = ssub.s32 %s33, 1
      %p751 = scmp.lt.s32.totalorder %s38, 1
      %s752 = scalar_select %p751, %s38, 1
      %s753 = smul.addr %s752, 8
      %s754 = scalar_lea.vmem %s0, %s753
      %p755 = pneg %p59
      %p756 = pneg %p56
      %p757 = scmp.lt.s32.totalorder %s38, 1
      %s758 = scalar_select %p757, %s38, 1
      %s759 = smul.addr %s758, 8
      %s760 = scalar_lea.vmem %s1, %s759
      %p761 = pneg %p85
      %p762 = pneg %p82
      %p763 = pneg %p106
      %p764 = pneg %p103
      %p765 = pneg %p127
      %p766 = pneg %p124
      %p767 = pneg %p148
      %p768 = pneg %p145
      %p769 = pneg %p169
      %p770 = pneg %p166
      %p771 = pneg %p190
      %p772 = pneg %p187
      %p773 = pneg %p211
      %p774 = pneg %p208
      %p775 = pneg %p232
      %p776 = pneg %p229
      %p777 = pneg %p253
      %p778 = pneg %p250
      %p779 = pneg %p274
      %p780 = pneg %p271
      %p781 = pneg %p295
      %p782 = pneg %p292
      %p783 = pneg %p316
      %p784 = pneg %p313
      %p785 = pneg %p337
      %p786 = pneg %p334
      %p787 = pneg %p358
      %p788 = pneg %p355
      %p789 = pneg %p379
      %p790 = pneg %p376
      %p791 = pneg %p400
      %p792 = pneg %p397
      %p793 = pneg %p421
      %p794 = pneg %p418
      %p795 = pneg %p442
      %p796 = pneg %p439
      %p797 = pneg %p463
      %p798 = pneg %p460
      %p799 = pneg %p484
      %p800 = pneg %p481
      %p801 = pneg %p505
      %p802 = pneg %p502
      %p803 = pneg %p526
      %p804 = pneg %p523
      %p805 = pneg %p547
      %p806 = pneg %p544
      %p807 = pneg %p568
      %p808 = pneg %p565
      %p809 = pneg %p589
      %p810 = pneg %p586
      %p811 = pneg %p610
      %p812 = pneg %p607
      %p813 = pneg %p636
      %p814 = pneg %p633
      %p815 = scmp.lt.s32.totalorder %s38, 1
      %s816 = scalar_select %p815, %s38, 1
      %s817 = smul.addr %s816, 8
      %s818 = scalar_lea.vmem %s27, %s817
      %p819 = scmp.lt.s32.totalorder %s38, 1
      %s820 = scalar_select %p819, %s38, 1
      %s821 = smul.addr %s820, 8
      %s822 = scalar_lea.vmem %s0, %s821
      %p823 = scmp.lt.s32.totalorder %s38, 1
      %s824 = scalar_select %p823, %s38, 1
      %s825 = smul.addr %s824, 8
      %s826 = scalar_lea.vmem %s1, %s825
      %p827 = scmp.lt.s32.totalorder %s38, 1
      %s828 = scalar_select %p827, %s38, 1
      %s829 = smul.addr %s828, 8
      %s830 = scalar_lea.vmem %s27, %s829
      %v832 = vld [vmem:[%s822] sm:$0xff]
      %v833 = vld [vmem:[%s826] sm:$0xff]
      %v834 = vld [vmem:[%s2] sm:$0xff]
      %v835 = vld [vmem:[%s3] sm:$0xf]
      %v836 = vld [vmem:[%s3 + $0x4] sm:$0xf]
      %v837 = vld [vmem:[%s3 + $0x8] sm:$0xf]
      %v838 = vld [vmem:[%s3 + $0xc] sm:$0xf]
      %v839 = vld [vmem:[%s4] sm:$0x1]
      %v840 = vld [vmem:[%s5] sm:$0xf]
      %v841 = vld [vmem:[%s5 + $0x4] sm:$0xf]
      %v842 = vld [vmem:[%s5 + $0x8] sm:$0xf]
      %v843 = vld [vmem:[%s5 + $0xc] sm:$0xf]
      %v844 = vld [vmem:[%s6] sm:$0x1]
      %v845 = vld [vmem:[%s7] sm:$0x1]
      %v846 = vld [vmem:[%s8] sm:$0x1]
      %v847 = vpack.c.bf16 %v832, %v832
      %v849 = vperm.slane %v839, 0
      %v855 = vunpack.c.l.b16 %v835
      %v856 = vunpack.c.l.b16 %v836
      %v857 = vunpack.c.l.b16 %v837
      %v858 = vunpack.c.l.b16 %v838
      %v859 = vpack.c.b16 %v856, %v855
      %v860 = vpack.c.b16 %v858, %v857
      %vm863 = vcmask 261120
      %v865 = vsel %vm863, %v847, 0
      %867 = vmatpush.bf16.msra.mxu0 0
      %868 = vmatpush.bf16.msra.mxu0 0
      %869 = vmatpush.bf16.msra.mxu0 0
      %870 = vmatpush.bf16.msra.mxu0 0
      %871 = vmatpush.bf16.msra.mxu0 0
      %872 = vmatpush.bf16.msra.mxu0 0
      %873 = vmatpush.bf16.msra.mxu0 %v860
      %874 = vmatpush.bf16.msra.mxu0 %v859
      %875 = vmatmul.bf16.gmra.mxu0 %v865
      %v876 = vpop.f32.mrf.mxu0
      %v877 = vadd.f32 %v849, %v876
      %v878 = vpop.f32.mrf.mxu0
      %879 = vdwg.mxu0
      %v880 = vpack.c.bf16 %v877, %v877
      %882 = vrot.lane.b32.xlu0 %v880, 96
      %v883 = vpop.permute.xlu0 %882
      %vm884 = vcmask 64512
      %v886 = vsel %vm884, %v880, 0
      %v889 = vsel %vm884, %v883, 0
      %891 = vmatpush.bf16.xpose.msra.mxu0 0
      %892 = vmatpush.bf16.xpose.msra.mxu0 0
      %893 = vmatpush.bf16.xpose.msra.mxu0 0
      %894 = vmatpush.bf16.xpose.msra.mxu0 0
      %895 = vmatpush.bf16.xpose.msra.mxu0 0
      %896 = vmatpush.bf16.xpose.msra.mxu0 0
      %897 = vmatpush.bf16.xpose.msra.mxu0 0
      %898 = vmatpush.bf16.xpose.msra.mxu0 %v889
      %899 = vmatmul.bf16.gmra.mxu0 %v886
      %v900 = vpop.f32.mrf.mxu0
      %v901 = vadd.f32 0.0, %v900
      %v902 = vpop.f32.mrf.mxu0
      %903 = vdwg.mxu0
      %v904 = vmul.f32 %v901, 0.35355338
      %v905 = vadd.f32 %v904, %v834
      %v906 = vsel %vm884, %v905, -inf
      %907 = vmax.xlane.f32.xlu0 %v906
      %v908 = vpop.xlane.xlu0 %907
      %v909 = vsub.f32 %v905, %v908
      %v910 = vmul.f32 %v909, 1.442695
      %v911 = vpow.pop %v910
      %v912 = vsel %vm884, %v911, 0.0
      %913 = vadd.xlane.f32.xlu0 %v912
      %v914 = vpop.xlane.xlu0 %913
      %v915 = vrcp.pop %v914
      %v916 = vmul.f32 %v914, %v915
      %v917 = vsub.f32 1.0, %v916
      %v918 = vmul.f32 %v915, %v917
      %v919 = vadd.f32 %v915, %v918
      %vm920 = vweird.f32 %v914
      %vm921 = vweird.f32 %v915
      %vm922 = vmor %vm920, %vm921
      %v923 = vsel %vm922, %v915, %v919
      %v924 = vand.u32 2147483647, %v914
      %vm925 = vcmp.eq.f32.partialorder %v924, 8.507059e+37
      %v926 = vand.u32 %v914, 2147483648
      %v927 = vor.u32 1.1754944e-38, %v926
      %v928 = vsel %vm925, %v927, %v923
      %v929 = vmul.f32 %v911, %v928
      %v930 = vpack.c.bf16 %v929, %v929
      %931 = vrot.lane.b32.xlu0 %v880, 64
      %v932 = vpop.permute.xlu0 %931
      %v934 = vsel %vm884, %v930, 0
      %vm936 = vcmask 1043456
      %v938 = vsel %vm936, %v932, 0
      %940 = vmatpush.bf16.msra.mxu0 0
      %941 = vmatpush.bf16.msra.mxu0 0
      %942 = vmatpush.bf16.msra.mxu0 0
      %943 = vmatpush.bf16.msra.mxu0 0
      %944 = vmatpush.bf16.msra.mxu0 0
      %945 = vmatpush.bf16.msra.mxu0 0
      %946 = vmatpush.bf16.msra.mxu0 0
      %947 = vmatpush.bf16.msra.mxu0 %v938
      %948 = vmatmul.bf16.gmra.mxu0 %v934
      %v949 = vpop.f32.mrf.mxu0
      %v950 = vadd.f32 0.0, %v949
      %v951 = vpop.f32.mrf.mxu0
      %952 = vdwg.mxu0
      %953 = vrot.lane.b32.xlu0 %v880, 120
      %v954 = vpop.permute.xlu0 %953
      %955 = vrot.lane.b32.xlu0 %v880, 88
      %v956 = vpop.permute.xlu0 %955
      %v958 = vsel %vm884, %v954, 0
      %v961 = vsel %vm884, %v956, 0
      %963 = vmatpush.bf16.xpose.msra.mxu0 0
      %964 = vmatpush.bf16.xpose.msra.mxu0 0
      %965 = vmatpush.bf16.xpose.msra.mxu0 0
      %966 = vmatpush.bf16.xpose.msra.mxu0 0
      %967 = vmatpush.bf16.xpose.msra.mxu0 0
      %968 = vmatpush.bf16.xpose.msra.mxu0 0
      %969 = vmatpush.bf16.xpose.msra.mxu0 0
      %970 = vmatpush.bf16.xpose.msra.mxu0 %v961
      %971 = vmatmul.bf16.gmra.mxu0 %v958
      %v972 = vpop.f32.mrf.mxu0
      %v973 = vadd.f32 0.0, %v972
      %v974 = vpop.f32.mrf.mxu0
      %975 = vdwg.mxu0
      %v976 = vmul.f32 %v973, 0.35355338
      %v977 = vadd.f32 %v976, %v834
      %v978 = vsel %vm884, %v977, -inf
      %979 = vmax.xlane.f32.xlu0 %v978
      %v980 = vpop.xlane.xlu0 %979
      %v981 = vsub.f32 %v977, %v980
      %v982 = vmul.f32 %v981, 1.442695
      %v983 = vpow.pop %v982
      %v984 = vsel %vm884, %v983, 0.0
      %985 = vadd.xlane.f32.xlu0 %v984
      %v986 = vpop.xlane.xlu0 %985
      %v987 = vrcp.pop %v986
      %v988 = vmul.f32 %v986, %v987
      %v989 = vsub.f32 1.0, %v988
      %v990 = vmul.f32 %v987, %v989
      %v991 = vadd.f32 %v987, %v990
      %vm992 = vweird.f32 %v986
      %vm993 = vweird.f32 %v987
      %vm994 = vmor %vm992, %vm993
      %v995 = vsel %vm994, %v987, %v991
      %v996 = vand.u32 2147483647, %v986
      %vm997 = vcmp.eq.f32.partialorder %v996, 8.507059e+37
      %v998 = vand.u32 %v986, 2147483648
      %v999 = vor.u32 1.1754944e-38, %v998
      %v1000 = vsel %vm997, %v999, %v995
      %v1001 = vmul.f32 %v983, %v1000
      %v1002 = vpack.c.bf16 %v1001, %v1001
      %1003 = vrot.lane.b32.xlu0 %v880, 56
      %v1004 = vpop.permute.xlu0 %1003
      %v1006 = vsel %vm884, %v1002, 0
      %v1009 = vsel %vm936, %v1004, 0
      %1011 = vmatpush.bf16.msra.mxu0 0
      %1012 = vmatpush.bf16.msra.mxu0 0
      %1013 = vmatpush.bf16.msra.mxu0 0
      %1014 = vmatpush.bf16.msra.mxu0 0
      %1015 = vmatpush.bf16.msra.mxu0 0
      %1016 = vmatpush.bf16.msra.mxu0 0
      %1017 = vmatpush.bf16.msra.mxu0 0
      %1018 = vmatpush.bf16.msra.mxu0 %v1009
      %1019 = vmatmul.bf16.gmra.mxu0 %v1006
      %v1020 = vpop.f32.mrf.mxu0
      %v1021 = vadd.f32 0.0, %v1020
      %v1022 = vpop.f32.mrf.mxu0
      %1023 = vdwg.mxu0
      %1024 = vrot.lane.b32.xlu0 %v880, 112
      %v1025 = vpop.permute.xlu0 %1024
      %1026 = vrot.lane.b32.xlu0 %v880, 80
      %v1027 = vpop.permute.xlu0 %1026
      %v1029 = vsel %vm884, %v1025, 0
      %v1032 = vsel %vm884, %v1027, 0
      %1034 = vmatpush.bf16.xpose.msra.mxu0 0
      %1035 = vmatpush.bf16.xpose.msra.mxu0 0
      %1036 = vmatpush.bf16.xpose.msra.mxu0 0
      %1037 = vmatpush.bf16.xpose.msra.mxu0 0
      %1038 = vmatpush.bf16.xpose.msra.mxu0 0
      %1039 = vmatpush.bf16.xpose.msra.mxu0 0
      %1040 = vmatpush.bf16.xpose.msra.mxu0 0
      %1041 = vmatpush.bf16.xpose.msra.mxu0 %v1032
      %1042 = vmatmul.bf16.gmra.mxu0 %v1029
      %v1043 = vpop.f32.mrf.mxu0
      %v1044 = vadd.f32 0.0, %v1043
      %v1045 = vpop.f32.mrf.mxu0
      %1046 = vdwg.mxu0
      %v1047 = vmul.f32 %v1044, 0.35355338
      %v1048 = vadd.f32 %v1047, %v834
      %v1049 = vsel %vm884, %v1048, -inf
      %1050 = vmax.xlane.f32.xlu0 %v1049
      %v1051 = vpop.xlane.xlu0 %1050
      %v1052 = vsub.f32 %v1048, %v1051
      %v1053 = vmul.f32 %v1052, 1.442695
      %v1054 = vpow.pop %v1053
      %v1055 = vsel %vm884, %v1054, 0.0
      %1056 = vadd.xlane.f32.xlu0 %v1055
      %v1057 = vpop.xlane.xlu0 %1056
      %v1058 = vrcp.pop %v1057
      %v1059 = vmul.f32 %v1057, %v1058
      %v1060 = vsub.f32 1.0, %v1059
      %v1061 = vmul.f32 %v1058, %v1060
      %v1062 = vadd.f32 %v1058, %v1061
      %vm1063 = vweird.f32 %v1057
      %vm1064 = vweird.f32 %v1058
      %vm1065 = vmor %vm1063, %vm1064
      %v1066 = vsel %vm1065, %v1058, %v1062
      %v1067 = vand.u32 2147483647, %v1057
      %vm1068 = vcmp.eq.f32.partialorder %v1067, 8.507059e+37
      %v1069 = vand.u32 %v1057, 2147483648
      %v1070 = vor.u32 1.1754944e-38, %v1069
      %v1071 = vsel %vm1068, %v1070, %v1066
      %v1072 = vmul.f32 %v1054, %v1071
      %v1073 = vpack.c.bf16 %v1072, %v1072
      %1074 = vrot.lane.b32.xlu0 %v880, 48
      %v1075 = vpop.permute.xlu0 %1074
      %v1077 = vsel %vm884, %v1073, 0
      %v1080 = vsel %vm936, %v1075, 0
      %1082 = vmatpush.bf16.msra.mxu0 0
      %1083 = vmatpush.bf16.msra.mxu0 0
      %1084 = vmatpush.bf16.msra.mxu0 0
      %1085 = vmatpush.bf16.msra.mxu0 0
      %1086 = vmatpush.bf16.msra.mxu0 0
      %1087 = vmatpush.bf16.msra.mxu0 0
      %1088 = vmatpush.bf16.msra.mxu0 0
      %1089 = vmatpush.bf16.msra.mxu0 %v1080
      %1090 = vmatmul.bf16.gmra.mxu0 %v1077
      %v1091 = vpop.f32.mrf.mxu0
      %v1092 = vadd.f32 0.0, %v1091
      %v1093 = vpop.f32.mrf.mxu0
      %1094 = vdwg.mxu0
      %1095 = vrot.lane.b32.xlu0 %v880, 104
      %v1096 = vpop.permute.xlu0 %1095
      %1097 = vrot.lane.b32.xlu0 %v880, 72
      %v1098 = vpop.permute.xlu0 %1097
      %v1100 = vsel %vm884, %v1096, 0
      %v1103 = vsel %vm884, %v1098, 0
      %1105 = vmatpush.bf16.xpose.msra.mxu0 0
      %1106 = vmatpush.bf16.xpose.msra.mxu0 0
      %1107 = vmatpush.bf16.xpose.msra.mxu0 0
      %1108 = vmatpush.bf16.xpose.msra.mxu0 0
      %1109 = vmatpush.bf16.xpose.msra.mxu0 0
      %1110 = vmatpush.bf16.xpose.msra.mxu0 0
      %1111 = vmatpush.bf16.xpose.msra.mxu0 0
      %1112 = vmatpush.bf16.xpose.msra.mxu0 %v1103
      %1113 = vmatmul.bf16.gmra.mxu0 %v1100
      %v1114 = vpop.f32.mrf.mxu0
      %v1115 = vadd.f32 0.0, %v1114
      %v1116 = vpop.f32.mrf.mxu0
      %1117 = vdwg.mxu0
      %v1118 = vmul.f32 %v1115, 0.35355338
      %v1119 = vadd.f32 %v1118, %v834
      %v1120 = vsel %vm884, %v1119, -inf
      %1121 = vmax.xlane.f32.xlu0 %v1120
      %v1122 = vpop.xlane.xlu0 %1121
      %v1123 = vsub.f32 %v1119, %v1122
      %v1124 = vmul.f32 %v1123, 1.442695
      %v1125 = vpow.pop %v1124
      %v1126 = vsel %vm884, %v1125, 0.0
      %1127 = vadd.xlane.f32.xlu0 %v1126
      %v1128 = vpop.xlane.xlu0 %1127
      %v1129 = vrcp.pop %v1128
      %v1130 = vmul.f32 %v1128, %v1129
      %v1131 = vsub.f32 1.0, %v1130
      %v1132 = vmul.f32 %v1129, %v1131
      %v1133 = vadd.f32 %v1129, %v1132
      %vm1134 = vweird.f32 %v1128
      %vm1135 = vweird.f32 %v1129
      %vm1136 = vmor %vm1134, %vm1135
      %v1137 = vsel %vm1136, %v1129, %v1133
      %v1138 = vand.u32 2147483647, %v1128
      %vm1139 = vcmp.eq.f32.partialorder %v1138, 8.507059e+37
      %v1140 = vand.u32 %v1128, 2147483648
      %v1141 = vor.u32 1.1754944e-38, %v1140
      %v1142 = vsel %vm1139, %v1141, %v1137
      %v1143 = vmul.f32 %v1125, %v1142
      %v1144 = vpack.c.bf16 %v1143, %v1143
      %1145 = vrot.lane.b32.xlu0 %v880, 40
      %v1146 = vpop.permute.xlu0 %1145
      %v1148 = vsel %vm884, %v1144, 0
      %v1151 = vsel %vm936, %v1146, 0
      %1153 = vmatpush.bf16.msra.mxu0 0
      %1154 = vmatpush.bf16.msra.mxu0 0
      %1155 = vmatpush.bf16.msra.mxu0 0
      %1156 = vmatpush.bf16.msra.mxu0 0
      %1157 = vmatpush.bf16.msra.mxu0 0
      %1158 = vmatpush.bf16.msra.mxu0 0
      %1159 = vmatpush.bf16.msra.mxu0 0
      %1160 = vmatpush.bf16.msra.mxu0 %v1151
      %1161 = vmatmul.bf16.gmra.mxu0 %v1148
      %v1162 = vpop.f32.mrf.mxu0
      %v1163 = vadd.f32 0.0, %v1162
      %v1164 = vpop.f32.mrf.mxu0
      %1165 = vdwg.mxu0
      %1167 = vrot.lane.b32.xlu0 %v1021, 8
      %v1168 = vpop.permute.xlu0 %1167
      %1171 = vrot.lane.b32.xlu0 %v1092, 16
      %v1172 = vpop.permute.xlu0 %1171
      %1175 = vrot.lane.b32.xlu0 %v1163, 24
      %v1176 = vpop.permute.xlu0 %1175
      %v1178 = vsel %vm884, %v950, %v1168
      %vm1179 = vcmask 130048
      %v1180 = vsel %vm1179, %v1178, %v1172
      %vm1181 = vcmask 195584
      %v1182 = vsel %vm1181, %v1180, %v1176
      %v1183 = vpack.c.bf16 %v1182, %v1182
      %v1185 = vperm.slane %v844, 0
      %v1191 = vunpack.c.l.b16 %v840
      %v1192 = vunpack.c.l.b16 %v841
      %v1193 = vunpack.c.l.b16 %v842
      %v1194 = vunpack.c.l.b16 %v843
      %v1195 = vpack.c.b16 %v1192, %v1191
      %v1196 = vpack.c.b16 %v1194, %v1193
      %v1200 = vsel %vm863, %v1183, 0
      %1202 = vmatpush.bf16.msra.mxu0 0
      %1203 = vmatpush.bf16.msra.mxu0 0
      %1204 = vmatpush.bf16.msra.mxu0 0
      %1205 = vmatpush.bf16.msra.mxu0 0
      %1206 = vmatpush.bf16.msra.mxu0 0
      %1207 = vmatpush.bf16.msra.mxu0 0
      %1208 = vmatpush.bf16.msra.mxu0 %v1196
      %1209 = vmatpush.bf16.msra.mxu0 %v1195
      %1210 = vmatmul.bf16.gmra.mxu0 %v1200
      %v1211 = vpop.f32.mrf.mxu0
      %v1212 = vadd.f32 %v1185, %v1211
      %v1213 = vpop.f32.mrf.mxu0
      %1214 = vdwg.mxu0
      %v1215 = vadd.f32 %v832, %v1212
      %v1216 = vsel %vm863, %v1215, 0.0
      %1217 = vadd.xlane.f32.xlu0 %v1216
      %v1218 = vpop.xlane.xlu0 %1217
      %v1219 = vrcp.pop 32.0
      %v1220 = vmul.f32 32.0, %v1219
      %v1221 = vsub.f32 1.0, %v1220
      %v1222 = vmul.f32 %v1219, %v1221
      %v1223 = vadd.f32 %v1219, %v1222
      %vm1224 = vweird.f32 %v1219
      %v1225 = vsel %vm1224, %v1219, %v1223
      %v1226 = vmul.f32 %v1218, %v1225
      %v1227 = vsub.f32 %v1215, %v1226
      %v1228 = vmul.f32 %v1227, %v1227
      %v1229 = vsel %vm863, %v1228, 0.0
      %1230 = vadd.xlane.f32.xlu0 %v1229
      %v1231 = vpop.xlane.xlu0 %1230
      %v1232 = vmul.f32 %v1231, %v1225
      %v1233 = vadd.f32 %v1232, 1e-05
      %v1234 = vrsqrt.pop %v1233
      %v1235 = vmul.f32 %v1234, %v1233
      %v1236 = vmul.f32 %v1235, %v1234
      %v1237 = vmul.f32 0.5, %v1236
      %v1238 = vsub.f32 1.5, %v1237
      %v1239 = vmul.f32 %v1234, %v1238
      %vm1240 = vweird.f32 %v1233
      %vm1241 = vweird.f32 %v1234
      %vm1242 = vmor %vm1240, %vm1241
      %v1243 = vsel %vm1242, %v1234, %v1239
      %v1244 = vmul.f32 %v1227, %v1243
      %v1246 = vperm.slane %v845, 0
      %v1248 = vmul.f32 %v1244, %v1246
      %v1250 = vperm.slane %v846, 0
      %v1252 = vadd.f32 %v1248, %v1250
      %v1253 = vld [vmem:[%s9] sm:$0xf]
      %v1254 = vld [vmem:[%s9 + $0x4] sm:$0xf]
      %v1255 = vld [vmem:[%s9 + $0x8] sm:$0xf]
      %v1256 = vld [vmem:[%s9 + $0xc] sm:$0xf]
      %v1257 = vld [vmem:[%s10] sm:$0x1]
      %v1258 = vld [vmem:[%s11] sm:$0xf]
      %v1259 = vld [vmem:[%s11 + $0x4] sm:$0xf]
      %v1260 = vld [vmem:[%s11 + $0x8] sm:$0xf]
      %v1261 = vld [vmem:[%s11 + $0xc] sm:$0xf]
      %v1262 = vld [vmem:[%s12] sm:$0x1]
      %v1263 = vld [vmem:[%s13] sm:$0xf]
      %v1264 = vld [vmem:[%s13 + $0x4] sm:$0xf]
      %v1265 = vld [vmem:[%s13 + $0x8] sm:$0xf]
      %v1266 = vld [vmem:[%s13 + $0xc] sm:$0xf]
      %v1267 = vld [vmem:[%s14] sm:$0x1]
      %v1268 = vld [vmem:[%s15] sm:$0x1]
      %v1269 = vld [vmem:[%s16] sm:$0x1]
      %v1270 = vpack.c.bf16 %v1252, %v1252
      %v1272 = vperm.slane %v1257, 0
      %v1278 = vunpack.c.l.b16 %v1253
      %v1279 = vunpack.c.l.b16 %v1254
      %v1280 = vunpack.c.l.b16 %v1255
      %v1281 = vunpack.c.l.b16 %v1256
      %v1282 = vpack.c.b16 %v1279, %v1278
      %v1283 = vpack.c.b16 %v1281, %v1280
      %v1287 = vsel %vm863, %v1270, 0
      %1289 = vmatpush.bf16.msra.mxu0 0
      %1290 = vmatpush.bf16.msra.mxu0 0
      %1291 = vmatpush.bf16.msra.mxu0 0
      %1292 = vmatpush.bf16.msra.mxu0 0
      %1293 = vmatpush.bf16.msra.mxu0 0
      %1294 = vmatpush.bf16.msra.mxu0 0
      %1295 = vmatpush.bf16.msra.mxu0 %v1283
      %1296 = vmatpush.bf16.msra.mxu0 %v1282
      %1297 = vmatmul.bf16.gmra.mxu0 %v1287
      %v1298 = vpop.f32.mrf.mxu0
      %v1299 = vadd.f32 %v1272, %v1298
      %v1300 = vpop.f32.mrf.mxu0
      %1301 = vdwg.mxu0
      %v1302 = vpack.c.bf16 %v833, %v833
      %v1304 = vperm.slane %v1262, 0
      %v1310 = vunpack.c.l.b16 %v1258
      %v1311 = vunpack.c.l.b16 %v1259
      %v1312 = vunpack.c.l.b16 %v1260
      %v1313 = vunpack.c.l.b16 %v1261
      %v1314 = vpack.c.b16 %v1311, %v1310
      %v1315 = vpack.c.b16 %v1313, %v1312
      %v1319 = vsel %vm863, %v1302, 0
      %1321 = vmatpush.bf16.msra.mxu0 0
      %1322 = vmatpush.bf16.msra.mxu0 0
      %1323 = vmatpush.bf16.msra.mxu0 0
      %1324 = vmatpush.bf16.msra.mxu0 0
      %1325 = vmatpush.bf16.msra.mxu0 0
      %1326 = vmatpush.bf16.msra.mxu0 0
      %1327 = vmatpush.bf16.msra.mxu0 %v1315
      %1328 = vmatpush.bf16.msra.mxu0 %v1314
      %1329 = vmatmul.bf16.gmra.mxu0 %v1319
      %v1330 = vpop.f32.mrf.mxu0
      %v1331 = vadd.f32 %v1304, %v1330
      %v1332 = vpop.f32.mrf.mxu0
      %1333 = vdwg.mxu0
      %v1334 = vpack.c.bf16 %v1299, %v1299
      %v1335 = vpack.c.bf16 %v1331, %v1331
      %v1337 = vsel %vm884, %v1334, 0
      %v1340 = vsel %vm884, %v1335, 0
      %1342 = vmatpush.bf16.xpose.msra.mxu0 0
      %1343 = vmatpush.bf16.xpose.msra.mxu0 0
      %1344 = vmatpush.bf16.xpose.msra.mxu0 0
      %1345 = vmatpush.bf16.xpose.msra.mxu0 0
      %1346 = vmatpush.bf16.xpose.msra.mxu0 0
      %1347 = vmatpush.bf16.xpose.msra.mxu0 0
      %1348 = vmatpush.bf16.xpose.msra.mxu0 0
      %1349 = vmatpush.bf16.xpose.msra.mxu0 %v1340
      %1350 = vmatmul.bf16.gmra.mxu0 %v1337
      %v1351 = vpop.f32.mrf.mxu0
      %v1352 = vadd.f32 0.0, %v1351
      %v1353 = vpop.f32.mrf.mxu0
      %1354 = vdwg.mxu0
      %v1355 = vmul.f32 %v1352, 0.35355338
      %v1356 = vsel %vm884, %v1355, -inf
      %1357 = vmax.xlane.f32.xlu0 %v1356
      %v1358 = vpop.xlane.xlu0 %1357
      %v1359 = vsub.f32 %v1355, %v1358
      %v1360 = vmul.f32 %v1359, 1.442695
      %v1361 = vpow.pop %v1360
      %v1362 = vsel %vm884, %v1361, 0.0
      %1363 = vadd.xlane.f32.xlu0 %v1362
      %v1364 = vpop.xlane.xlu0 %1363
      %v1365 = vrcp.pop %v1364
      %v1366 = vmul.f32 %v1364, %v1365
      %v1367 = vsub.f32 1.0, %v1366
      %v1368 = vmul.f32 %v1365, %v1367
      %v1369 = vadd.f32 %v1365, %v1368
      %vm1370 = vweird.f32 %v1364
      %vm1371 = vweird.f32 %v1365
      %vm1372 = vmor %vm1370, %vm1371
      %v1373 = vsel %vm1372, %v1365, %v1369
      %v1374 = vand.u32 2147483647, %v1364
      %vm1375 = vcmp.eq.f32.partialorder %v1374, 8.507059e+37
      %v1376 = vand.u32 %v1364, 2147483648
      %v1377 = vor.u32 1.1754944e-38, %v1376
      %v1378 = vsel %vm1375, %v1377, %v1373
      %v1379 = vmul.f32 %v1361, %v1378
      %v1380 = vpack.c.bf16 %v1379, %v1379
      %1382 = vrot.lane.b32.xlu0 %v1335, 96
      %v1383 = vpop.permute.xlu0 %1382
      %v1385 = vsel %vm884, %v1380, 0
      %v1388 = vsel %vm936, %v1383, 0
      %1390 = vmatpush.bf16.msra.mxu0 0
      %1391 = vmatpush.bf16.msra.mxu0 0
      %1392 = vmatpush.bf16.msra.mxu0 0
      %1393 = vmatpush.bf16.msra.mxu0 0
      %1394 = vmatpush.bf16.msra.mxu0 0
      %1395 = vmatpush.bf16.msra.mxu0 0
      %1396 = vmatpush.bf16.msra.mxu0 0
      %1397 = vmatpush.bf16.msra.mxu0 %v1388
      %1398 = vmatmul.bf16.gmra.mxu0 %v1385
      %v1399 = vpop.f32.mrf.mxu0
      %v1400 = vadd.f32 0.0, %v1399
      %v1401 = vpop.f32.mrf.mxu0
      %1402 = vdwg.mxu0
      %1404 = vrot.lane.b32.xlu0 %v1334, 120
      %v1405 = vpop.permute.xlu0 %1404
      %1406 = vrot.lane.b32.xlu0 %v1335, 120
      %v1407 = vpop.permute.xlu0 %1406
      %v1409 = vsel %vm884, %v1405, 0
      %v1412 = vsel %vm884, %v1407, 0
      %1414 = vmatpush.bf16.xpose.msra.mxu0 0
      %1415 = vmatpush.bf16.xpose.msra.mxu0 0
      %1416 = vmatpush.bf16.xpose.msra.mxu0 0
      %1417 = vmatpush.bf16.xpose.msra.mxu0 0
      %1418 = vmatpush.bf16.xpose.msra.mxu0 0
      %1419 = vmatpush.bf16.xpose.msra.mxu0 0
      %1420 = vmatpush.bf16.xpose.msra.mxu0 0
      %1421 = vmatpush.bf16.xpose.msra.mxu0 %v1412
      %1422 = vmatmul.bf16.gmra.mxu0 %v1409
      %v1423 = vpop.f32.mrf.mxu0
      %v1424 = vadd.f32 0.0, %v1423
      %v1425 = vpop.f32.mrf.mxu0
      %1426 = vdwg.mxu0
      %v1427 = vmul.f32 %v1424, 0.35355338
      %v1428 = vsel %vm884, %v1427, -inf
      %1429 = vmax.xlane.f32.xlu0 %v1428
      %v1430 = vpop.xlane.xlu0 %1429
      %v1431 = vsub.f32 %v1427, %v1430
      %v1432 = vmul.f32 %v1431, 1.442695
      %v1433 = vpow.pop %v1432
      %v1434 = vsel %vm884, %v1433, 0.0
      %1435 = vadd.xlane.f32.xlu0 %v1434
      %v1436 = vpop.xlane.xlu0 %1435
      %v1437 = vrcp.pop %v1436
      %v1438 = vmul.f32 %v1436, %v1437
      %v1439 = vsub.f32 1.0, %v1438
      %v1440 = vmul.f32 %v1437, %v1439
      %v1441 = vadd.f32 %v1437, %v1440
      %vm1442 = vweird.f32 %v1436
      %vm1443 = vweird.f32 %v1437
      %vm1444 = vmor %vm1442, %vm1443
      %v1445 = vsel %vm1444, %v1437, %v1441
      %v1446 = vand.u32 2147483647, %v1436
      %vm1447 = vcmp.eq.f32.partialorder %v1446, 8.507059e+37
      %v1448 = vand.u32 %v1436, 2147483648
      %v1449 = vor.u32 1.1754944e-38, %v1448
      %v1450 = vsel %vm1447, %v1449, %v1445
      %v1451 = vmul.f32 %v1433, %v1450
      %v1452 = vpack.c.bf16 %v1451, %v1451
      %1453 = vrot.lane.b32.xlu0 %v1335, 88
      %v1454 = vpop.permute.xlu0 %1453
      %v1456 = vsel %vm884, %v1452, 0
      %v1459 = vsel %vm936, %v1454, 0
      %1461 = vmatpush.bf16.msra.mxu0 0
      %1462 = vmatpush.bf16.msra.mxu0 0
      %1463 = vmatpush.bf16.msra.mxu0 0
      %1464 = vmatpush.bf16.msra.mxu0 0
      %1465 = vmatpush.bf16.msra.mxu0 0
      %1466 = vmatpush.bf16.msra.mxu0 0
      %1467 = vmatpush.bf16.msra.mxu0 0
      %1468 = vmatpush.bf16.msra.mxu0 %v1459
      %1469 = vmatmul.bf16.gmra.mxu0 %v1456
      %v1470 = vpop.f32.mrf.mxu0
      %v1471 = vadd.f32 0.0, %v1470
      %v1472 = vpop.f32.mrf.mxu0
      %1473 = vdwg.mxu0
      %1474 = vrot.lane.b32.xlu0 %v1334, 112
      %v1475 = vpop.permute.xlu0 %1474
      %1476 = vrot.lane.b32.xlu0 %v1335, 112
      %v1477 = vpop.permute.xlu0 %1476
      %v1479 = vsel %vm884, %v1475, 0
      %v1482 = vsel %vm884, %v1477, 0
      %1484 = vmatpush.bf16.xpose.msra.mxu0 0
      %1485 = vmatpush.bf16.xpose.msra.mxu0 0
      %1486 = vmatpush.bf16.xpose.msra.mxu0 0
      %1487 = vmatpush.bf16.xpose.msra.mxu0 0
      %1488 = vmatpush.bf16.xpose.msra.mxu0 0
      %1489 = vmatpush.bf16.xpose.msra.mxu0 0
      %1490 = vmatpush.bf16.xpose.msra.mxu0 0
      %1491 = vmatpush.bf16.xpose.msra.mxu0 %v1482
      %1492 = vmatmul.bf16.gmra.mxu0 %v1479
      %v1493 = vpop.f32.mrf.mxu0
      %v1494 = vadd.f32 0.0, %v1493
      %v1495 = vpop.f32.mrf.mxu0
      %1496 = vdwg.mxu0
      %v1497 = vmul.f32 %v1494, 0.35355338
      %v1498 = vsel %vm884, %v1497, -inf
      %1499 = vmax.xlane.f32.xlu0 %v1498
      %v1500 = vpop.xlane.xlu0 %1499
      %v1501 = vsub.f32 %v1497, %v1500
      %v1502 = vmul.f32 %v1501, 1.442695
      %v1503 = vpow.pop %v1502
      %v1504 = vsel %vm884, %v1503, 0.0
      %1505 = vadd.xlane.f32.xlu0 %v1504
      %v1506 = vpop.xlane.xlu0 %1505
      %v1507 = vrcp.pop %v1506
      %v1508 = vmul.f32 %v1506, %v1507
      %v1509 = vsub.f32 1.0, %v1508
      %v1510 = vmul.f32 %v1507, %v1509
      %v1511 = vadd.f32 %v1507, %v1510
      %vm1512 = vweird.f32 %v1506
      %vm1513 = vweird.f32 %v1507
      %vm1514 = vmor %vm1512, %vm1513
      %v1515 = vsel %vm1514, %v1507, %v1511
      %v1516 = vand.u32 2147483647, %v1506
      %vm1517 = vcmp.eq.f32.partialorder %v1516, 8.507059e+37
      %v1518 = vand.u32 %v1506, 2147483648
      %v1519 = vor.u32 1.1754944e-38, %v1518
      %v1520 = vsel %vm1517, %v1519, %v1515
      %v1521 = vmul.f32 %v1503, %v1520
      %v1522 = vpack.c.bf16 %v1521, %v1521
      %1523 = vrot.lane.b32.xlu0 %v1335, 80
      %v1524 = vpop.permute.xlu0 %1523
      %v1526 = vsel %vm884, %v1522, 0
      %v1529 = vsel %vm936, %v1524, 0
      %1531 = vmatpush.bf16.msra.mxu0 0
      %1532 = vmatpush.bf16.msra.mxu0 0
      %1533 = vmatpush.bf16.msra.mxu0 0
      %1534 = vmatpush.bf16.msra.mxu0 0
      %1535 = vmatpush.bf16.msra.mxu0 0
      %1536 = vmatpush.bf16.msra.mxu0 0
      %1537 = vmatpush.bf16.msra.mxu0 0
      %1538 = vmatpush.bf16.msra.mxu0 %v1529
      %1539 = vmatmul.bf16.gmra.mxu0 %v1526
      %v1540 = vpop.f32.mrf.mxu0
      %v1541 = vadd.f32 0.0, %v1540
      %v1542 = vpop.f32.mrf.mxu0
      %1543 = vdwg.mxu0
      %1544 = vrot.lane.b32.xlu0 %v1334, 104
      %v1545 = vpop.permute.xlu0 %1544
      %1546 = vrot.lane.b32.xlu0 %v1335, 104
      %v1547 = vpop.permute.xlu0 %1546
      %v1549 = vsel %vm884, %v1545, 0
      %v1552 = vsel %vm884, %v1547, 0
      %1554 = vmatpush.bf16.xpose.msra.mxu0 0
      %1555 = vmatpush.bf16.xpose.msra.mxu0 0
      %1556 = vmatpush.bf16.xpose.msra.mxu0 0
      %1557 = vmatpush.bf16.xpose.msra.mxu0 0
      %1558 = vmatpush.bf16.xpose.msra.mxu0 0
      %1559 = vmatpush.bf16.xpose.msra.mxu0 0
      %1560 = vmatpush.bf16.xpose.msra.mxu0 0
      %1561 = vmatpush.bf16.xpose.msra.mxu0 %v1552
      %1562 = vmatmul.bf16.gmra.mxu0 %v1549
      %v1563 = vpop.f32.mrf.mxu0
      %v1564 = vadd.f32 0.0, %v1563
      %v1565 = vpop.f32.mrf.mxu0
      %1566 = vdwg.mxu0
      %v1567 = vmul.f32 %v1564, 0.35355338
      %v1568 = vsel %vm884, %v1567, -inf
      %1569 = vmax.xlane.f32.xlu0 %v1568
      %v1570 = vpop.xlane.xlu0 %1569
      %v1571 = vsub.f32 %v1567, %v1570
      %v1572 = vmul.f32 %v1571, 1.442695
      %v1573 = vpow.pop %v1572
      %v1574 = vsel %vm884, %v1573, 0.0
      %1575 = vadd.xlane.f32.xlu0 %v1574
      %v1576 = vpop.xlane.xlu0 %1575
      %v1577 = vrcp.pop %v1576
      %v1578 = vmul.f32 %v1576, %v1577
      %v1579 = vsub.f32 1.0, %v1578
      %v1580 = vmul.f32 %v1577, %v1579
      %v1581 = vadd.f32 %v1577, %v1580
      %vm1582 = vweird.f32 %v1576
      %vm1583 = vweird.f32 %v1577
      %vm1584 = vmor %vm1582, %vm1583
      %v1585 = vsel %vm1584, %v1577, %v1581
      %v1586 = vand.u32 2147483647, %v1576
      %vm1587 = vcmp.eq.f32.partialorder %v1586, 8.507059e+37
      %v1588 = vand.u32 %v1576, 2147483648
      %v1589 = vor.u32 1.1754944e-38, %v1588
      %v1590 = vsel %vm1587, %v1589, %v1585
      %v1591 = vmul.f32 %v1573, %v1590
      %v1592 = vpack.c.bf16 %v1591, %v1591
      %1593 = vrot.lane.b32.xlu0 %v1335, 72
      %v1594 = vpop.permute.xlu0 %1593
      %v1596 = vsel %vm884, %v1592, 0
      %v1599 = vsel %vm936, %v1594, 0
      %1601 = vmatpush.bf16.msra.mxu0 0
      %1602 = vmatpush.bf16.msra.mxu0 0
      %1603 = vmatpush.bf16.msra.mxu0 0
      %1604 = vmatpush.bf16.msra.mxu0 0
      %1605 = vmatpush.bf16.msra.mxu0 0
      %1606 = vmatpush.bf16.msra.mxu0 0
      %1607 = vmatpush.bf16.msra.mxu0 0
      %1608 = vmatpush.bf16.msra.mxu0 %v1599
      %1609 = vmatmul.bf16.gmra.mxu0 %v1596
      %v1610 = vpop.f32.mrf.mxu0
      %v1611 = vadd.f32 0.0, %v1610
      %v1612 = vpop.f32.mrf.mxu0
      %1613 = vdwg.mxu0
      %1615 = vrot.lane.b32.xlu0 %v1471, 8
      %v1616 = vpop.permute.xlu0 %1615
      %1619 = vrot.lane.b32.xlu0 %v1541, 16
      %v1620 = vpop.permute.xlu0 %1619
      %1623 = vrot.lane.b32.xlu0 %v1611, 24
      %v1624 = vpop.permute.xlu0 %1623
      %v1626 = vsel %vm884, %v1400, %v1616
      %v1627 = vsel %vm1179, %v1626, %v1620
      %v1628 = vsel %vm1181, %v1627, %v1624
      %v1629 = vpack.c.bf16 %v1628, %v1628
      %v1631 = vperm.slane %v1267, 0
      %v1637 = vunpack.c.l.b16 %v1263
      %v1638 = vunpack.c.l.b16 %v1264
      %v1639 = vunpack.c.l.b16 %v1265
      %v1640 = vunpack.c.l.b16 %v1266
      %v1641 = vpack.c.b16 %v1638, %v1637
      %v1642 = vpack.c.b16 %v1640, %v1639
      %v1646 = vsel %vm863, %v1629, 0
      %1648 = vmatpush.bf16.msra.mxu0 0
      %1649 = vmatpush.bf16.msra.mxu0 0
      %1650 = vmatpush.bf16.msra.mxu0 0
      %1651 = vmatpush.bf16.msra.mxu0 0
      %1652 = vmatpush.bf16.msra.mxu0 0
      %1653 = vmatpush.bf16.msra.mxu0 0
      %1654 = vmatpush.bf16.msra.mxu0 %v1642
      %1655 = vmatpush.bf16.msra.mxu0 %v1641
      %1656 = vmatmul.bf16.gmra.mxu0 %v1646
      %v1657 = vpop.f32.mrf.mxu0
      %v1658 = vadd.f32 %v1631, %v1657
      %v1659 = vpop.f32.mrf.mxu0
      %1660 = vdwg.mxu0
      %v1661 = vadd.f32 %v1252, %v1658
      %v1662 = vsel %vm863, %v1661, 0.0
      %1663 = vadd.xlane.f32.xlu0 %v1662
      %v1664 = vpop.xlane.xlu0 %1663
      %v1665 = vmul.f32 %v1664, %v1225
      %v1666 = vsub.f32 %v1661, %v1665
      %v1667 = vmul.f32 %v1666, %v1666
      %v1668 = vsel %vm863, %v1667, 0.0
      %1669 = vadd.xlane.f32.xlu0 %v1668
      %v1670 = vpop.xlane.xlu0 %1669
      %v1671 = vmul.f32 %v1670, %v1225
      %v1672 = vadd.f32 %v1671, 1e-05
      %v1673 = vrsqrt.pop %v1672
      %v1674 = vmul.f32 %v1673, %v1672
      %v1675 = vmul.f32 %v1674, %v1673
      %v1676 = vmul.f32 0.5, %v1675
      %v1677 = vsub.f32 1.5, %v1676
      %v1678 = vmul.f32 %v1673, %v1677
      %vm1679 = vweird.f32 %v1672
      %vm1680 = vweird.f32 %v1673
      %vm1681 = vmor %vm1679, %vm1680
      %v1682 = vsel %vm1681, %v1673, %v1678
      %v1683 = vmul.f32 %v1666, %v1682
      %v1685 = vperm.slane %v1268, 0
      %v1687 = vmul.f32 %v1683, %v1685
      %v1689 = vperm.slane %v1269, 0
      %v1691 = vadd.f32 %v1687, %v1689
      %v1692 = vld [vmem:[%s17] sm:$0xf]
      %v1693 = vld [vmem:[%s17 + $0x4] sm:$0xf]
      %v1694 = vld [vmem:[%s17 + $0x8] sm:$0xf]
      %v1695 = vld [vmem:[%s17 + $0xc] sm:$0xf]
      %v1696 = vld [vmem:[%s18] sm:$0x1]
      %v1697 = vld [vmem:[%s19] sm:$0xf]
      %v1698 = vld [vmem:[%s19 + $0x4] sm:$0xf]
      %v1699 = vld [vmem:[%s19 + $0x8] sm:$0xf]
      %v1700 = vld [vmem:[%s19 + $0xc] sm:$0xf]
      %v1701 = vld [vmem:[%s20] sm:$0x1]
      %v1702 = vld [vmem:[%s21] sm:$0x1]
      %v1703 = vld [vmem:[%s22] sm:$0x1]
      %v1704 = vpack.c.bf16 %v1691, %v1691
      %v1706 = vperm.slane %v1696, 0
      %v1712 = vunpack.c.l.b16 %v1692
      %v1713 = vunpack.c.l.b16 %v1693
      %v1714 = vunpack.c.l.b16 %v1694
      %v1715 = vunpack.c.l.b16 %v1695
      %v1716 = vpack.c.b16 %v1713, %v1712
      %v1717 = vpack.c.b16 %v1715, %v1714
      %v1721 = vsel %vm863, %v1704, 0
      %1723 = vmatpush.bf16.msra.mxu0 0
      %1724 = vmatpush.bf16.msra.mxu0 0
      %1725 = vmatpush.bf16.msra.mxu0 0
      %1726 = vmatpush.bf16.msra.mxu0 0
      %1727 = vmatpush.bf16.msra.mxu0 0
      %1728 = vmatpush.bf16.msra.mxu0 0
      %1729 = vmatpush.bf16.msra.mxu0 %v1717
      %1730 = vmatpush.bf16.msra.mxu0 %v1716
      %1731 = vmatmul.bf16.gmra.mxu0 %v1721
      %v1732 = vpop.f32.mrf.mxu0
      %v1733 = vadd.f32 %v1706, %v1732
      %v1734 = vpop.f32.mrf.mxu0
      %1735 = vdwg.mxu0
      %v1736 = vmax.f32 %v1733, 0.0
      %v1737 = vpack.c.bf16 %v1736, %v1736
      %v1739 = vperm.slane %v1701, 0
      %v1745 = vunpack.c.l.b16 %v1697
      %v1746 = vunpack.c.l.b16 %v1698
      %v1747 = vunpack.c.l.b16 %v1699
      %v1748 = vunpack.c.l.b16 %v1700
      %v1749 = vpack.c.b16 %v1746, %v1745
      %v1750 = vpack.c.b16 %v1748, %v1747
      %v1754 = vsel %vm863, %v1737, 0
      %1756 = vmatpush.bf16.msra.mxu0 0
      %1757 = vmatpush.bf16.msra.mxu0 0
      %1758 = vmatpush.bf16.msra.mxu0 0
      %1759 = vmatpush.bf16.msra.mxu0 0
      %1760 = vmatpush.bf16.msra.mxu0 0
      %1761 = vmatpush.bf16.msra.mxu0 0
      %1762 = vmatpush.bf16.msra.mxu0 %v1750
      %1763 = vmatpush.bf16.msra.mxu0 %v1749
      %1764 = vmatmul.bf16.gmra.mxu0 %v1754
      %v1765 = vpop.f32.mrf.mxu0
      %v1766 = vadd.f32 %v1739, %v1765
      %v1767 = vpop.f32.mrf.mxu0
      %1768 = vdwg.mxu0
      %v1769 = vadd.f32 %v1691, %v1766
      %v1770 = vsel %vm863, %v1769, 0.0
      %1771 = vadd.xlane.f32.xlu0 %v1770
      %v1772 = vpop.xlane.xlu0 %1771
      %v1773 = vmul.f32 %v1772, %v1225
      %v1774 = vsub.f32 %v1769, %v1773
      %v1775 = vmul.f32 %v1774, %v1774
      %v1776 = vsel %vm863, %v1775, 0.0
      %1777 = vadd.xlane.f32.xlu0 %v1776
      %v1778 = vpop.xlane.xlu0 %1777
      %v1779 = vmul.f32 %v1778, %v1225
      %v1780 = vadd.f32 %v1779, 1e-05
      %v1781 = vrsqrt.pop %v1780
      %v1782 = vmul.f32 %v1781, %v1780
      %v1783 = vmul.f32 %v1782, %v1781
      %v1784 = vmul.f32 0.5, %v1783
      %v1785 = vsub.f32 1.5, %v1784
      %v1786 = vmul.f32 %v1781, %v1785
      %vm1787 = vweird.f32 %v1780
      %vm1788 = vweird.f32 %v1781
      %vm1789 = vmor %vm1787, %vm1788
      %v1790 = vsel %vm1789, %v1781, %v1786
      %v1791 = vmul.f32 %v1774, %v1790
      %v1793 = vperm.slane %v1702, 0
      %v1795 = vmul.f32 %v1791, %v1793
      %v1797 = vperm.slane %v1703, 0
      %v1799 = vadd.f32 %v1795, %v1797
      %v1800 = vld [vmem:[%s23] sm:$0x1]
      %v1801 = vld [vmem:[%s24] sm:$0x1]
      %v1802 = vsel %vm863, %v1799, 0.0
      %1803 = vadd.xlane.f32.xlu0 %v1802
      %v1804 = vpop.xlane.xlu0 %1803
      %v1805 = vmul.f32 %v1804, %v1225
      %v1806 = vsub.f32 %v1799, %v1805
      %v1807 = vmul.f32 %v1806, %v1806
      %v1808 = vsel %vm863, %v1807, 0.0
      %1809 = vadd.xlane.f32.xlu0 %v1808
      %v1810 = vpop.xlane.xlu0 %1809
      %v1811 = vmul.f32 %v1810, %v1225
      %v1812 = vadd.f32 %v1811, 1e-05
      %v1813 = vrsqrt.pop %v1812
      %v1814 = vmul.f32 %v1813, %v1812
      %v1815 = vmul.f32 %v1814, %v1813
      %v1816 = vmul.f32 0.5, %v1815
      %v1817 = vsub.f32 1.5, %v1816
      %v1818 = vmul.f32 %v1813, %v1817
      %vm1819 = vweird.f32 %v1812
      %vm1820 = vweird.f32 %v1813
      %vm1821 = vmor %vm1819, %vm1820
      %v1822 = vsel %vm1821, %v1813, %v1818
      %v1823 = vmul.f32 %v1806, %v1822
      %v1825 = vperm.slane %v1800, 0
      %v1827 = vmul.f32 %v1823, %v1825
      %v1829 = vperm.slane %v1801, 0
      %v1831 = vadd.f32 %v1827, %v1829
      %v1832 = vpack.c.bf16 %v1831, %v1831
      %v1833 = vld [vmem:[%s25] sm:$0xf]
      %v1834 = vld [vmem:[%s25 + $0x4] sm:$0xf]
      %v1835 = vld [vmem:[%s25 + $0x8] sm:$0xf]
      %v1836 = vld [vmem:[%s25 + $0xc] sm:$0xf]
      %v1837 = vld [vmem:[%s26] sm:$0x1]
      %v1839 = vperm.slane %v1837, 0
      %v1845 = vunpack.c.l.b16 %v1833
      %v1846 = vunpack.c.l.b16 %v1834
      %v1847 = vunpack.c.l.b16 %v1835
      %v1848 = vunpack.c.l.b16 %v1836
      %v1849 = vpack.c.b16 %v1846, %v1845
      %v1850 = vpack.c.b16 %v1848, %v1847
      %v1854 = vsel %vm863, %v1832, 0
      %1856 = vmatpush.bf16.msra.mxu0 0
      %1857 = vmatpush.bf16.msra.mxu0 0
      %1858 = vmatpush.bf16.msra.mxu0 0
      %1859 = vmatpush.bf16.msra.mxu0 0
      %1860 = vmatpush.bf16.msra.mxu0 0
      %1861 = vmatpush.bf16.msra.mxu0 0
      %1862 = vmatpush.bf16.msra.mxu0 %v1850
      %1863 = vmatpush.bf16.msra.mxu0 %v1849
      %1864 = vmatmul.bf16.gmra.mxu0 %v1854
      %v1865 = vpop.f32.mrf.mxu0
      %v1866 = vadd.f32 %v1839, %v1865
      %v1867 = vpop.f32.mrf.mxu0
      %1868 = vdwg.mxu0
      %vm1869 = vcmask 31744
      %1870 = vst.msk [vmem:[%s830] sm:$0xff] %vm1869, %v1866
      %p1871 = scmp.lt.s32.totalorder %s38, 1
      %s1872 = scalar_select %p1871, %s38, 1
      %s1873 = smul.addr %s1872, 8
      %s1874 = scalar_lea.vmem %s27, %s1873
      // Predicated region
      $region129: #{_lambda_.9} parent=127 // pred_check
        %p1875 = pneg %p633
      $region130: #{_lambda_.9} parent=127 // pred_check_branch
        %1877 = sbr.rel (%p1875) target = $region132
      $region131: #{_lambda_.9} parent=127 // pred_region
        _
      $region132: #{_lambda_.9} parent=127 // pred_fallthru
        _
    $region128: #{_lambda_.9} parent=5 // pred_fallthru
      _
    %p1878 = scmp.le.s32.totalorder 2, %s33
    // Predicated region
    $region133: #{_lambda_.9} parent=5 // pred_check
      %p1879 = pneg %p1878
    $region134: #{_lambda_.9} parent=5 // pred_check_branch
      %1881 = sbr.rel (%p1879) target = $region136
    $region135: #{_lambda_.9} parent=5 // pred_region
      %s1882 = ssub.s32 %s33, 2
      // Predicated region
      $region137: #{_lambda_.9} parent=135 // pred_check
        %p1883 = pneg %p639
      $region138: #{_lambda_.9} parent=135 // pred_check_branch
        %1885 = sbr.rel (%p1883) target = $region140
      $region139: #{_lambda_.9} parent=135 // pred_region
        %p1886 = scmp.lt.s32.totalorder %s39, 1
        %s1887 = scalar_select %p1886, %s39, 1
        %s1888 = smul.addr %s1887, 8
        %s1889 = scalar_lea.vmem %s27, %s1888
      $region140: #{_lambda_.9} parent=135 // pred_fallthru
        _
    $region136: #{_lambda_.9} parent=5 // pred_fallthru
      _
  $region6: #{_lambda_.9} parent=0 // loop_footer
    %s37 = sadd.s32 1, %s33
  $region7: #{_lambda_.9} parent=0 // loop_footer_branch
    %32 = sbr.rel target = $region3
  $region8: #{_lambda_.9} parent=0 // loop_exit
    _

</llo_original>
